<compile_context>
chip_gen: v6e
topology: v6e:2x2x1
jax: 0.10.0
libtpu: 0.0.40
codegen_flags: <defaults>
</compile_context>

<pallas_src>
import numpy as np
import jax
import jax.numpy as jnp
from jax.experimental import pallas as pl
from jax.experimental.pallas import tpu as pltpu

LATENT_DIM = 512

# ----------------------------------------------------------------------------
# Static geometry
#   fc:       z(512) -> (24, 5, 5)
#   deconv1:  24->12, k3 s1 p0 : (24,5,5)  -> (12,7,7)
#   deconv2:  12->6,  k4 s2 p1 : (12,7,7)  -> (6,14,14)
#   deconv3:   6->3,  k4 s2 p1 : (6,14,14) -> (3,28,28)
# Every intermediate lives on a 9x9 zero-padded frame holding a 7x7 (or 5x5) grid;
# a compact window of NCW = 61 = 6*9+6+1 columns covers a full 7x7 output grid
# (the wrap columns are garbage and are discarded at reassembly time).
# ----------------------------------------------------------------------------
TB = 16                       # samples per grid step, interleaved on the lane axis
FRW = 81                      # 9*9 flattened padded frame
NCW = 61                      # compact window length for a 7x7 grid on a 9-wide frame
_OFF9 = tuple(r * 9 + c for r in range(3) for c in range(3))     # {0,1,2,9,10,11,18,19,20}
_ROWMAP = {0: [(1, 0), (3, -1)], 1: [(0, 1), (2, 0)]}            # phase parity -> [(k, d)]
_PHASES = [(0, 0), (0, 1), (1, 0), (1, 1)]


# ----------------------------------------------------------------------------
# The fused deconv kernel (one grid step == TB batch elements)
# ----------------------------------------------------------------------------
def _decoder_kernel(x_ref, w1_ref, b1_ref, w2_ref, b2_ref, w3_ref, b3_ref,
                    out_ref, rhs1, xp2, rhs2, xq, rhs3):
    f32, bf16 = jnp.float32, jnp.bfloat16
    W = NCW * TB

    # ---- deconv1 (24->12, k3 s1 p0) + ReLU: one (12,216)@(216,61*TB) dot -----------
    for s, off in enumerate(_OFF9):
        rhs1[24 * s:24 * (s + 1), :] = x_ref[:, off * TB:off * TB + W]
    a1 = jnp.dot(w1_ref[...], rhs1[...], preferred_element_type=f32) + b1_ref[...]
    a1 = jnp.maximum(a1, 0.0).astype(bf16)                       # (12, 61*TB)

    # place the valid 7x7 block into deconv2's zero-padded 9x9 frame (7 slab copies)
    xp2[...] = jnp.zeros(xp2.shape, bf16)
    for y in range(7):
        xp2[:, ((y + 1) * 9 + 1) * TB:((y + 1) * 9 + 8) * TB] = \
            a1[:, (y * 9) * TB:(y * 9 + 7) * TB]

    # ---- deconv2 (12->6, k4 s2 p1) + ReLU: 4 stride phases fused on the M axis -----
    for s, off in enumerate(_OFF9):
        rhs2[12 * s:12 * (s + 1), :] = xp2[:, off * TB:off * TB + W]
    a2 = jnp.dot(w2_ref[...], rhs2[...], preferred_element_type=f32) + b2_ref[...]
    a2 = jnp.maximum(a2, 0.0).astype(bf16)                       # (24, 61*TB) = 4 phases x 6ch

    # each deconv2 phase output becomes its own zero-padded 9x9 plane (7 slab copies)
    xq[...] = jnp.zeros(xq.shape, bf16)
    for a in range(7):
        xq[:, ((a + 1) * 9 + 1) * TB:((a + 1) * 9 + 8) * TB] = \
            a2[:, (a * 9) * TB:(a * 9 + 7) * TB]

    # ---- deconv3 (6->3, k4 s2 p1) + sigmoid, evaluated in phase space ---------------
    # Output pixel (4m + 2*sy + qy, 4n + 2*sx + qx), m,n in 0..6.  For each input-parity
    # pair (sy,sx) the four output phases (qy,qx) share one stacked RHS (9 slots indexed
    # by (di,dj)) and are fused on the M axis of a single (12,54)@(54,61*TB) dot.
    for sy in range(2):
        for sx in range(2):
            for s in range(9):
                di, dj = s // 3 - 1, s % 3 - 1
                pr, dr = (sy + di) % 2, (sy + di) // 2      # source plane row parity / shift
                pc, dc = (sx + dj) % 2, (sx + dj) // 2
                plane = 2 * pr + pc
                off = (dr + 1) * 9 + (dc + 1)
                rhs3[6 * s:6 * (s + 1), :] = \
                    xq[6 * plane:6 * (plane + 1), off * TB:off * TB + W]
            pre = jnp.dot(w3_ref[...], rhs3[...], preferred_element_type=f32) + b3_ref[...]
            sig = pl.reciprocal(1.0 + jnp.exp(-pre), approx=True)   # sigmoid on the EUP
            sidx = 2 * sy + sx
            out_ref[12 * sidx:12 * (sidx + 1), :] = sig


# ----------------------------------------------------------------------------
# One-time parameter repacking (PyTorch layouts -> kernel layouts)
# ----------------------------------------------------------------------------
def prepare_params(params):
    f32, bf16 = jnp.float32, jnp.bfloat16

    # deconv1: 9 taps concatenated along K (flip baked into the tap index)
    w1 = np.asarray(params["d1_w"], np.float32)                  # (24, 12, 3, 3)
    w1cat = np.zeros((12, 9 * 24), np.float32)
    for s in range(9):
        dh, dw = s // 3, s % 3
        w1cat[:, 24 * s:24 * (s + 1)] = w1[:, :, 2 - dh, 2 - dw].T
    b1 = np.asarray(params["d1_b"], np.float32).reshape(12, 1)

    # deconv2: 4 output phases stacked on M, 9 (di,dj) slots on K
    w2 = np.asarray(params["d2_w"], np.float32)                  # (12, 6, 4, 4)
    w2big = np.zeros((24, 9 * 12), np.float32)
    for ph, (py, px) in enumerate(_PHASES):
        for kh, di in _ROWMAP[py]:
            for kw, dj in _ROWMAP[px]:
                s = (di + 1) * 3 + (dj + 1)
                w2big[6 * ph:6 * ph + 6, 12 * s:12 * s + 12] = w2[:, :, kh, kw].T
    b2big = np.tile(np.asarray(params["d2_b"], np.float32), 4).reshape(24, 1)

    # deconv3: 4 output phases stacked on M, 9 (di,dj) slots on K (planes picked in-kernel)
    w3 = np.asarray(params["d3_w"], np.float32)                  # (6, 3, 4, 4)
    w3big = np.zeros((12, 9 * 6), np.float32)
    for ph, (qy, qx) in enumerate(_PHASES):
        for kh, di in _ROWMAP[qy]:
            for kw, dj in _ROWMAP[qx]:
                s = (di + 1) * 3 + (dj + 1)
                w3big[3 * ph:3 * ph + 3, 6 * s:6 * s + 6] = w3[:, :, kh, kw].T
    b3big = np.tile(np.asarray(params["d3_b"], np.float32), 4).reshape(12, 1)

    return dict(
        wfc=jnp.asarray(params["fc_w"], f32), bfc=jnp.asarray(params["fc_b"], f32),
        w1=jnp.asarray(w1cat, bf16), b1=jnp.asarray(b1, f32),
        w2=jnp.asarray(w2big, bf16), b2=jnp.asarray(b2big, f32),
        w3=jnp.asarray(w3big, bf16), b3=jnp.asarray(b3big, f32),
    )


# ----------------------------------------------------------------------------
# pallas_call wrapper
# ----------------------------------------------------------------------------
def _decoder_pallas(prep, z):
    B = z.shape[0]
    G = -(-B // TB)                                           # grid steps (ceil)

    # FC as one XLA GEMM over the whole batch (review item 1a), then layout plumbing:
    # zero-padded 9x9 frame, batch interleaved on the lane axis (col = pos*TB + t).
    fc = jnp.dot(z.astype(jnp.float32), prep["wfc"],
                 precision=jax.lax.Precision.HIGHEST) + prep["bfc"]
    fc = fc.reshape(B, 24, 5, 5)
    fc = jnp.pad(fc, ((0, G * TB - B), (0, 0), (0, 0), (0, 0)))
    frame = jnp.zeros((G * TB, 24, 9, 9), jnp.float32).at[:, :, 2:7, 2:7].set(fc)
    x = frame.reshape(G, TB, 24, FRW).transpose(0, 2, 3, 1)   # (G, 24, 81, TB)
    x = x.reshape(G, 24, FRW * TB).astype(jnp.bfloat16)

    def res(r, c):      # VMEM-resident block: whole array, constant index map
        return pl.BlockSpec((r, c), lambda g: (0, 0))

    ko = pl.pallas_call(
        _decoder_kernel,
        out_shape=jax.ShapeDtypeStruct((G, 48, NCW * TB), jnp.float32),
        grid=(G,),
        in_specs=[
            pl.BlockSpec((None, 24, FRW * TB), lambda g: (g, 0, 0)),    # deconv1 input frame
            res(12, 216), res(12, 1),                                   # deconv1
            res(24, 108), res(24, 1),                                   # deconv2
            res(12, 54), res(12, 1),                                    # deconv3
        ],
        out_specs=pl.BlockSpec((None, 48, NCW * TB), lambda g: (g, 0, 0)),
        scratch_shapes=[
            pltpu.VMEM((216, NCW * TB), jnp.bfloat16),   # deconv1 stacked RHS
            pltpu.VMEM((12, FRW * TB), jnp.bfloat16),    # deconv2 padded input frame
            pltpu.VMEM((108, NCW * TB), jnp.bfloat16),   # deconv2 stacked RHS
            pltpu.VMEM((24, FRW * TB), jnp.bfloat16),    # deconv2 output: 4 padded phase planes
            pltpu.VMEM((54, NCW * TB), jnp.bfloat16),    # deconv3 stacked RHS
        ],
        compiler_params=pltpu.CompilerParams(dimension_semantics=("parallel",)),
    )(x, prep["w1"], prep["b1"], prep["w2"], prep["b2"], prep["w3"], prep["b3"])

    # Reassemble (sub-phase planes, compact columns) -> (B, 3, 28, 28).  Pure layout.
    o = ko.reshape(G, 2, 2, 2, 2, 3, NCW, TB)             # (G, sy, sx, qy, qx, oc, p, t)
    o = jnp.pad(o, ((0, 0),) * 6 + ((0, 2), (0, 0)))      # p: 61 -> 63 = 7*9
    o = o.reshape(G, 2, 2, 2, 2, 3, 7, 9, TB)[..., :7, :]  # (..., m, n, t)
    o = o.transpose(0, 8, 5, 6, 1, 3, 7, 2, 4)            # (G, t, oc, m, sy, qy, n, sx, qx)
    return o.reshape(G * TB, 3, 28, 28)[:B]


decoder_forward = jax.jit(_decoder_pallas)


# ----------------------------------------------------------------------------
# Parameter init + pure-JAX reference (PyTorch ConvTranspose2d semantics)
# ----------------------------------------------------------------------------
def init_params(key, latent_dim=LATENT_DIM):
    ks = jax.random.split(key, 8)
    s = 0.1
    return {
        "fc_w": s * jax.random.normal(ks[0], (latent_dim, 600), jnp.float32),
        "fc_b": s * jax.random.normal(ks[1], (600,), jnp.float32),
        "d1_w": s * jax.random.normal(ks[2], (24, 12, 3, 3), jnp.float32),
        "d1_b": s * jax.random.normal(ks[3], (12,), jnp.float32),
        "d2_w": s * jax.random.normal(ks[4], (12, 6, 4, 4), jnp.float32),
        "d2_b": s * jax.random.normal(ks[5], (6,), jnp.float32),
        "d3_w": s * jax.random.normal(ks[6], (6, 3, 4, 4), jnp.float32),
        "d3_b": s * jax.random.normal(ks[7], (3,), jnp.float32),
    }


def _ref_conv_transpose(x, w, b, stride, padding):
    Bn, IC, H, W = x.shape
    _, OC, KH, KW = w.shape
    Hd = H + (H - 1) * (stride - 1)
    Wd = W + (W - 1) * (stride - 1)
    xd = jnp.zeros((Bn, IC, Hd, Wd), x.dtype).at[:, :, ::stride, ::stride].set(x)
    ph, pw = KH - 1 - padding, KW - 1 - padding
    xp = jnp.pad(xd, ((0, 0), (0, 0), (ph, ph), (pw, pw)))
    OH, OW = Hd + 2 * ph - KH + 1, Wd + 2 * pw - KW + 1
    wf = w[:, :, ::-1, ::-1]
    out = jnp.zeros((Bn, OC, OH, OW), jnp.float32)
    hp = jax.lax.Precision.HIGHEST
    for kh in range(KH):
        for kw in range(KW):
            out = out + jnp.einsum("bihw,io->bohw", xp[:, :, kh:kh + OH, kw:kw + OW],
                                   wf[:, :, kh, kw], precision=hp)
    return out + b[None, :, None, None]


def _ref_forward(params, z):
    x = jnp.dot(z, params["fc_w"], precision=jax.lax.Precision.HIGHEST) + params["fc_b"]
    x = x.reshape(-1, 24, 5, 5)
    x = jax.nn.relu(_ref_conv_transpose(x, params["d1_w"], params["d1_b"], 1, 0))
    x = jax.nn.relu(_ref_conv_transpose(x, params["d2_w"], params["d2_b"], 2, 1))
    x = jax.nn.sigmoid(_ref_conv_transpose(x, params["d3_w"], params["d3_b"], 2, 1))
    return x


if __name__ == "__main__":
    key = jax.random.PRNGKey(0)
    pkey, zkey = jax.random.split(key)
    params = init_params(pkey, LATENT_DIM)
    prep = prepare_params(params)       # one-time weight repacking (outside the hot path)

    batch = 2
    z = jax.random.normal(zkey, (batch, LATENT_DIM), jnp.float32)

    out = decoder_forward(prep, z)
    out = jax.block_until_ready(out)
    assert out.shape == (batch, 3, 28, 28), out.shape

    ref = _ref_forward(params, z)
    max_err = float(jnp.max(jnp.abs(out - ref)))
    mean_err = float(jnp.mean(jnp.abs(out - ref)))
    # bf16 MXU operands (f32 accumulation) => slightly looser tolerance than pure f32.
    assert max_err < 3e-2, f"max abs err vs reference: {max_err}"
    assert mean_err < 3e-3, f"mean abs err vs reference: {mean_err}"
    assert bool(jnp.all(out >= -1e-3)) and bool(jnp.all(out <= 1.0 + 1e-3))
    print("KERNEL_OK")
</pallas_src>

<mosaic_0001>
module attributes {stable_mosaic.version = 11 : i64} {
  func.func @_decoder_kernel(%arg0: i32, %arg1: memref<1x24x1296xbf16, #tpu.memory_space<vmem>>, %arg2: memref<12x216xbf16, #tpu.memory_space<vmem>>, %arg3: memref<12x1xf32, #tpu.memory_space<vmem>>, %arg4: memref<24x108xbf16, #tpu.memory_space<vmem>>, %arg5: memref<24x1xf32, #tpu.memory_space<vmem>>, %arg6: memref<12x54xbf16, #tpu.memory_space<vmem>>, %arg7: memref<12x1xf32, #tpu.memory_space<vmem>>, %arg8: memref<1x48x976xf32, #tpu.memory_space<vmem>>, %arg9: memref<216x976xbf16, #tpu.memory_space<vmem>>, %arg10: memref<12x1296xbf16, #tpu.memory_space<vmem>>, %arg11: memref<108x976xbf16, #tpu.memory_space<vmem>>, %arg12: memref<24x1296xbf16, #tpu.memory_space<vmem>>, %arg13: memref<54x976xbf16, #tpu.memory_space<vmem>>) attributes {dimension_semantics = [#tpu.dimension_semantics<parallel>], iteration_bounds = array<i64: 1>, scalar_prefetch = 0 : i64, scratch_operands = 5 : i64, tpu.core_type = #tpu.core_type<tc>, window_params = [{transform_indices = @transform_0, window_bounds = array<i64: 1, 24, 1296>}, {pipeline_mode = #tpu.pipeline_mode<synchronous>, transform_indices = @transform_1, window_bounds = array<i64: 12, 216>}, {pipeline_mode = #tpu.pipeline_mode<synchronous>, transform_indices = @transform_2, window_bounds = array<i64: 12, 1>}, {pipeline_mode = #tpu.pipeline_mode<synchronous>, transform_indices = @transform_3, window_bounds = array<i64: 24, 108>}, {pipeline_mode = #tpu.pipeline_mode<synchronous>, transform_indices = @transform_4, window_bounds = array<i64: 24, 1>}, {pipeline_mode = #tpu.pipeline_mode<synchronous>, transform_indices = @transform_5, window_bounds = array<i64: 12, 54>}, {pipeline_mode = #tpu.pipeline_mode<synchronous>, transform_indices = @transform_6, window_bounds = array<i64: 12, 1>}, {transform_indices = @transform_7, window_bounds = array<i64: 1, 48, 976>}]} {
    %c0 = arith.constant 0 : index
    %c0_0 = arith.constant 0 : index
    %c0_1 = arith.constant 0 : index
    %0 = vector.load %arg1[%c0, %c0_0, %c0_1] : memref<1x24x1296xbf16, #tpu.memory_space<vmem>>, vector<1x24x976xbf16>
    %1 = vector.shape_cast %0 : vector<1x24x976xbf16> to vector<24x976xbf16>
    %c0_2 = arith.constant 0 : index
    %c0_3 = arith.constant 0 : index
    %2 = vector.load %arg9[%c0_2, %c0_3] : memref<216x976xbf16, #tpu.memory_space<vmem>>, vector<24x976xbf16>
    tpu.vector_store %arg9[%c0_2, %c0_3], %1 {strides = array<i32>} : memref<216x976xbf16, #tpu.memory_space<vmem>>, vector<24x976xbf16>,
    %c0_4 = arith.constant 0 : index
    %c0_5 = arith.constant 0 : index
    %c16 = arith.constant 16 : index
    %3 = vector.load %arg1[%c0_4, %c0_5, %c16] : memref<1x24x1296xbf16, #tpu.memory_space<vmem>>, vector<1x24x976xbf16>
    %4 = vector.shape_cast %3 : vector<1x24x976xbf16> to vector<24x976xbf16>
    %c24 = arith.constant 24 : index
    %c0_6 = arith.constant 0 : index
    %5 = vector.load %arg9[%c24, %c0_6] : memref<216x976xbf16, #tpu.memory_space<vmem>>, vector<24x976xbf16>
    tpu.vector_store %arg9[%c24, %c0_6], %4 {strides = array<i32>} : memref<216x976xbf16, #tpu.memory_space<vmem>>, vector<24x976xbf16>,
    %c0_7 = arith.constant 0 : index
    %c0_8 = arith.constant 0 : index
    %c32 = arith.constant 32 : index
    %6 = vector.load %arg1[%c0_7, %c0_8, %c32] : memref<1x24x1296xbf16, #tpu.memory_space<vmem>>, vector<1x24x976xbf16>
    %7 = vector.shape_cast %6 : vector<1x24x976xbf16> to vector<24x976xbf16>
    %c48 = arith.constant 48 : index
    %c0_9 = arith.constant 0 : index
    %8 = vector.load %arg9[%c48, %c0_9] : memref<216x976xbf16, #tpu.memory_space<vmem>>, vector<24x976xbf16>
    tpu.vector_store %arg9[%c48, %c0_9], %7 {strides = array<i32>} : memref<216x976xbf16, #tpu.memory_space<vmem>>, vector<24x976xbf16>,
    %c0_10 = arith.constant 0 : index
    %c0_11 = arith.constant 0 : index
    %c144 = arith.constant 144 : index
    %9 = vector.load %arg1[%c0_10, %c0_11, %c144] : memref<1x24x1296xbf16, #tpu.memory_space<vmem>>, vector<1x24x976xbf16>
    %10 = vector.shape_cast %9 : vector<1x24x976xbf16> to vector<24x976xbf16>
    %c72 = arith.constant 72 : index
    %c0_12 = arith.constant 0 : index
    %11 = vector.load %arg9[%c72, %c0_12] : memref<216x976xbf16, #tpu.memory_space<vmem>>, vector<24x976xbf16>
    tpu.vector_store %arg9[%c72, %c0_12], %10 {strides = array<i32>} : memref<216x976xbf16, #tpu.memory_space<vmem>>, vector<24x976xbf16>,
    %c0_13 = arith.constant 0 : index
    %c0_14 = arith.constant 0 : index
    %c160 = arith.constant 160 : index
    %12 = vector.load %arg1[%c0_13, %c0_14, %c160] : memref<1x24x1296xbf16, #tpu.memory_space<vmem>>, vector<1x24x976xbf16>
    %13 = vector.shape_cast %12 : vector<1x24x976xbf16> to vector<24x976xbf16>
    %c96 = arith.constant 96 : index
    %c0_15 = arith.constant 0 : index
    %14 = vector.load %arg9[%c96, %c0_15] : memref<216x976xbf16, #tpu.memory_space<vmem>>, vector<24x976xbf16>
    tpu.vector_store %arg9[%c96, %c0_15], %13 {strides = array<i32>} : memref<216x976xbf16, #tpu.memory_space<vmem>>, vector<24x976xbf16>,
    %c0_16 = arith.constant 0 : index
    %c0_17 = arith.constant 0 : index
    %c176 = arith.constant 176 : index
    %15 = vector.load %arg1[%c0_16, %c0_17, %c176] : memref<1x24x1296xbf16, #tpu.memory_space<vmem>>, vector<1x24x976xbf16>
    %16 = vector.shape_cast %15 : vector<1x24x976xbf16> to vector<24x976xbf16>
    %c120 = arith.constant 120 : index
    %c0_18 = arith.constant 0 : index
    %17 = vector.load %arg9[%c120, %c0_18] : memref<216x976xbf16, #tpu.memory_space<vmem>>, vector<24x976xbf16>
    tpu.vector_store %arg9[%c120, %c0_18], %16 {strides = array<i32>} : memref<216x976xbf16, #tpu.memory_space<vmem>>, vector<24x976xbf16>,
    %c0_19 = arith.constant 0 : index
    %c0_20 = arith.constant 0 : index
    %c288 = arith.constant 288 : index
    %18 = vector.load %arg1[%c0_19, %c0_20, %c288] : memref<1x24x1296xbf16, #tpu.memory_space<vmem>>, vector<1x24x976xbf16>
    %19 = vector.shape_cast %18 : vector<1x24x976xbf16> to vector<24x976xbf16>
    %c144_21 = arith.constant 144 : index
    %c0_22 = arith.constant 0 : index
    %20 = vector.load %arg9[%c144_21, %c0_22] : memref<216x976xbf16, #tpu.memory_space<vmem>>, vector<24x976xbf16>
    tpu.vector_store %arg9[%c144_21, %c0_22], %19 {strides = array<i32>} : memref<216x976xbf16, #tpu.memory_space<vmem>>, vector<24x976xbf16>,
    %c0_23 = arith.constant 0 : index
    %c0_24 = arith.constant 0 : index
    %c304 = arith.constant 304 : index
    %21 = vector.load %arg1[%c0_23, %c0_24, %c304] : memref<1x24x1296xbf16, #tpu.memory_space<vmem>>, vector<1x24x976xbf16>
    %22 = vector.shape_cast %21 : vector<1x24x976xbf16> to vector<24x976xbf16>
    %c168 = arith.constant 168 : index
    %c0_25 = arith.constant 0 : index
    %23 = vector.load %arg9[%c168, %c0_25] : memref<216x976xbf16, #tpu.memory_space<vmem>>, vector<24x976xbf16>
    tpu.vector_store %arg9[%c168, %c0_25], %22 {strides = array<i32>} : memref<216x976xbf16, #tpu.memory_space<vmem>>, vector<24x976xbf16>,
    %c0_26 = arith.constant 0 : index
    %c0_27 = arith.constant 0 : index
    %c320 = arith.constant 320 : index
    %24 = vector.load %arg1[%c0_26, %c0_27, %c320] : memref<1x24x1296xbf16, #tpu.memory_space<vmem>>, vector<1x24x976xbf16>
    %25 = vector.shape_cast %24 : vector<1x24x976xbf16> to vector<24x976xbf16>
    %c192 = arith.constant 192 : index
    %c0_28 = arith.constant 0 : index
    %26 = vector.load %arg9[%c192, %c0_28] : memref<216x976xbf16, #tpu.memory_space<vmem>>, vector<24x976xbf16>
    tpu.vector_store %arg9[%c192, %c0_28], %25 {strides = array<i32>} : memref<216x976xbf16, #tpu.memory_space<vmem>>, vector<24x976xbf16>,
    %c0_29 = arith.constant 0 : index
    %c0_30 = arith.constant 0 : index
    %27 = vector.load %arg2[%c0_29, %c0_30] : memref<12x216xbf16, #tpu.memory_space<vmem>>, vector<12x216xbf16>
    %c0_31 = arith.constant 0 : index
    %c0_32 = arith.constant 0 : index
    %28 = vector.load %arg9[%c0_31, %c0_32] : memref<216x976xbf16, #tpu.memory_space<vmem>>, vector<216x976xbf16>
    %cst = arith.constant dense<0.000000e+00> : vector<12x976xf32>
    %29 = tpu.matmul %27, %28, %cst {dimension_numbers = #tpu.dot_dimension_numbers<[1], [0], [0], [1], [0, 0, 1, 1], [], []>} : vector<12x216xbf16>, vector<216x976xbf16>, vector<12x976xf32> -> vector<12x976xf32>
    %c0_33 = arith.constant 0 : index
    %c0_34 = arith.constant 0 : index
    %30 = vector.load %arg3[%c0_33, %c0_34] : memref<12x1xf32, #tpu.memory_space<vmem>>, vector<12x1xf32>
    %31 = vector.broadcast %30 : vector<12x1xf32> to vector<12x976xf32>
    %32 = arith.addf %29, %31 : vector<12x976xf32>
    %cst_35 = arith.constant 0.000000e+00 : f32
    %33 = vector.broadcast %cst_35 : f32 to vector<12x976xf32>
    %34 = arith.maximumf %32, %33 : vector<12x976xf32>
    %35 = arith.truncf %34 : vector<12x976xf32> to vector<12x976xbf16>
    %cst_36 = arith.constant 0.000000e+00 : bf16
    %36 = vector.broadcast %cst_36 : bf16 to vector<12x1296xbf16>
    %c0_37 = arith.constant 0 : index
    %c0_38 = arith.constant 0 : index
    %37 = vector.load %arg10[%c0_37, %c0_38] : memref<12x1296xbf16, #tpu.memory_space<vmem>>, vector<12x1296xbf16>
    tpu.vector_store %arg10[%c0_37, %c0_38], %36 {strides = array<i32>} : memref<12x1296xbf16, #tpu.memory_space<vmem>>, vector<12x1296xbf16>,
    %38 = vector.extract_strided_slice %35 {offsets = [0, 0], sizes = [12, 112], strides = [1, 1]} : vector<12x976xbf16> to vector<12x112xbf16>
    %c0_39 = arith.constant 0 : index
    %c160_40 = arith.constant 160 : index
    %39 = vector.load %arg10[%c0_39, %c160_40] : memref<12x1296xbf16, #tpu.memory_space<vmem>>, vector<12x112xbf16>
    tpu.vector_store %arg10[%c0_39, %c160_40], %38 {strides = array<i32>} : memref<12x1296xbf16, #tpu.memory_space<vmem>>, vector<12x112xbf16>,
    %40 = vector.extract_strided_slice %35 {offsets = [0, 144], sizes = [12, 112], strides = [1, 1]} : vector<12x976xbf16> to vector<12x112xbf16>
    %c0_41 = arith.constant 0 : index
    %c304_42 = arith.constant 304 : index
    %41 = vector.load %arg10[%c0_41, %c304_42] : memref<12x1296xbf16, #tpu.memory_space<vmem>>, vector<12x112xbf16>
    tpu.vector_store %arg10[%c0_41, %c304_42], %40 {strides = array<i32>} : memref<12x1296xbf16, #tpu.memory_space<vmem>>, vector<12x112xbf16>,
    %42 = vector.extract_strided_slice %35 {offsets = [0, 288], sizes = [12, 112], strides = [1, 1]} : vector<12x976xbf16> to vector<12x112xbf16>
    %c0_43 = arith.constant 0 : index
    %c448 = arith.constant 448 : index
    %43 = vector.load %arg10[%c0_43, %c448] : memref<12x1296xbf16, #tpu.memory_space<vmem>>, vector<12x112xbf16>
    tpu.vector_store %arg10[%c0_43, %c448], %42 {strides = array<i32>} : memref<12x1296xbf16, #tpu.memory_space<vmem>>, vector<12x112xbf16>,
    %44 = vector.extract_strided_slice %35 {offsets = [0, 432], sizes = [12, 112], strides = [1, 1]} : vector<12x976xbf16> to vector<12x112xbf16>
    %c0_44 = arith.constant 0 : index
    %c592 = arith.constant 592 : index
    %45 = vector.load %arg10[%c0_44, %c592] : memref<12x1296xbf16, #tpu.memory_space<vmem>>, vector<12x112xbf16>
    tpu.vector_store %arg10[%c0_44, %c592], %44 {strides = array<i32>} : memref<12x1296xbf16, #tpu.memory_space<vmem>>, vector<12x112xbf16>,
    %46 = vector.extract_strided_slice %35 {offsets = [0, 576], sizes = [12, 112], strides = [1, 1]} : vector<12x976xbf16> to vector<12x112xbf16>
    %c0_45 = arith.constant 0 : index
    %c736 = arith.constant 736 : index
    %47 = vector.load %arg10[%c0_45, %c736] : memref<12x1296xbf16, #tpu.memory_space<vmem>>, vector<12x112xbf16>
    tpu.vector_store %arg10[%c0_45, %c736], %46 {strides = array<i32>} : memref<12x1296xbf16, #tpu.memory_space<vmem>>, vector<12x112xbf16>,
    %48 = vector.extract_strided_slice %35 {offsets = [0, 720], sizes = [12, 112], strides = [1, 1]} : vector<12x976xbf16> to vector<12x112xbf16>
    %c0_46 = arith.constant 0 : index
    %c880 = arith.constant 880 : index
    %49 = vector.load %arg10[%c0_46, %c880] : memref<12x1296xbf16, #tpu.memory_space<vmem>>, vector<12x112xbf16>
    tpu.vector_store %arg10[%c0_46, %c880], %48 {strides = array<i32>} : memref<12x1296xbf16, #tpu.memory_space<vmem>>, vector<12x112xbf16>,
    %50 = vector.extract_strided_slice %35 {offsets = [0, 864], sizes = [12, 112], strides = [1, 1]} : vector<12x976xbf16> to vector<12x112xbf16>
    %c0_47 = arith.constant 0 : index
    %c1024 = arith.constant 1024 : index
    %51 = vector.load %arg10[%c0_47, %c1024] : memref<12x1296xbf16, #tpu.memory_space<vmem>>, vector<12x112xbf16>
    tpu.vector_store %arg10[%c0_47, %c1024], %50 {strides = array<i32>} : memref<12x1296xbf16, #tpu.memory_space<vmem>>, vector<12x112xbf16>,
    %c0_48 = arith.constant 0 : index
    %c0_49 = arith.constant 0 : index
    %52 = vector.load %arg10[%c0_48, %c0_49] : memref<12x1296xbf16, #tpu.memory_space<vmem>>, vector<12x976xbf16>
    %c0_50 = arith.constant 0 : index
    %c0_51 = arith.constant 0 : index
    %53 = vector.load %arg11[%c0_50, %c0_51] : memref<108x976xbf16, #tpu.memory_space<vmem>>, vector<12x976xbf16>
    tpu.vector_store %arg11[%c0_50, %c0_51], %52 {strides = array<i32>} : memref<108x976xbf16, #tpu.memory_space<vmem>>, vector<12x976xbf16>,
    %c0_52 = arith.constant 0 : index
    %c16_53 = arith.constant 16 : index
    %54 = vector.load %arg10[%c0_52, %c16_53] : memref<12x1296xbf16, #tpu.memory_space<vmem>>, vector<12x976xbf16>
    %c12 = arith.constant 12 : index
    %c0_54 = arith.constant 0 : index
    %55 = vector.load %arg11[%c12, %c0_54] : memref<108x976xbf16, #tpu.memory_space<vmem>>, vector<12x976xbf16>
    tpu.vector_store %arg11[%c12, %c0_54], %54 {strides = array<i32>} : memref<108x976xbf16, #tpu.memory_space<vmem>>, vector<12x976xbf16>,
    %c0_55 = arith.constant 0 : index
    %c32_56 = arith.constant 32 : index
    %56 = vector.load %arg10[%c0_55, %c32_56] : memref<12x1296xbf16, #tpu.memory_space<vmem>>, vector<12x976xbf16>
    %c24_57 = arith.constant 24 : index
    %c0_58 = arith.constant 0 : index
    %57 = vector.load %arg11[%c24_57, %c0_58] : memref<108x976xbf16, #tpu.memory_space<vmem>>, vector<12x976xbf16>
    tpu.vector_store %arg11[%c24_57, %c0_58], %56 {strides = array<i32>} : memref<108x976xbf16, #tpu.memory_space<vmem>>, vector<12x976xbf16>,
    %c0_59 = arith.constant 0 : index
    %c144_60 = arith.constant 144 : index
    %58 = vector.load %arg10[%c0_59, %c144_60] : memref<12x1296xbf16, #tpu.memory_space<vmem>>, vector<12x976xbf16>
    %c36 = arith.constant 36 : index
    %c0_61 = arith.constant 0 : index
    %59 = vector.load %arg11[%c36, %c0_61] : memref<108x976xbf16, #tpu.memory_space<vmem>>, vector<12x976xbf16>
    tpu.vector_store %arg11[%c36, %c0_61], %58 {strides = array<i32>} : memref<108x976xbf16, #tpu.memory_space<vmem>>, vector<12x976xbf16>,
    %c0_62 = arith.constant 0 : index
    %c160_63 = arith.constant 160 : index
    %60 = vector.load %arg10[%c0_62, %c160_63] : memref<12x1296xbf16, #tpu.memory_space<vmem>>, vector<12x976xbf16>
    %c48_64 = arith.constant 48 : index
    %c0_65 = arith.constant 0 : index
    %61 = vector.load %arg11[%c48_64, %c0_65] : memref<108x976xbf16, #tpu.memory_space<vmem>>, vector<12x976xbf16>
    tpu.vector_store %arg11[%c48_64, %c0_65], %60 {strides = array<i32>} : memref<108x976xbf16, #tpu.memory_space<vmem>>, vector<12x976xbf16>,
    %c0_66 = arith.constant 0 : index
    %c176_67 = arith.constant 176 : index
    %62 = vector.load %arg10[%c0_66, %c176_67] : memref<12x1296xbf16, #tpu.memory_space<vmem>>, vector<12x976xbf16>
    %c60 = arith.constant 60 : index
    %c0_68 = arith.constant 0 : index
    %63 = vector.load %arg11[%c60, %c0_68] : memref<108x976xbf16, #tpu.memory_space<vmem>>, vector<12x976xbf16>
    tpu.vector_store %arg11[%c60, %c0_68], %62 {strides = array<i32>} : memref<108x976xbf16, #tpu.memory_space<vmem>>, vector<12x976xbf16>,
    %c0_69 = arith.constant 0 : index
    %c288_70 = arith.constant 288 : index
    %64 = vector.load %arg10[%c0_69, %c288_70] : memref<12x1296xbf16, #tpu.memory_space<vmem>>, vector<12x976xbf16>
    %c72_71 = arith.constant 72 : index
    %c0_72 = arith.constant 0 : index
    %65 = vector.load %arg11[%c72_71, %c0_72] : memref<108x976xbf16, #tpu.memory_space<vmem>>, vector<12x976xbf16>
    tpu.vector_store %arg11[%c72_71, %c0_72], %64 {strides = array<i32>} : memref<108x976xbf16, #tpu.memory_space<vmem>>, vector<12x976xbf16>,
    %c0_73 = arith.constant 0 : index
    %c304_74 = arith.constant 304 : index
    %66 = vector.load %arg10[%c0_73, %c304_74] : memref<12x1296xbf16, #tpu.memory_space<vmem>>, vector<12x976xbf16>
    %c84 = arith.constant 84 : index
    %c0_75 = arith.constant 0 : index
    %67 = vector.load %arg11[%c84, %c0_75] : memref<108x976xbf16, #tpu.memory_space<vmem>>, vector<12x976xbf16>
    tpu.vector_store %arg11[%c84, %c0_75], %66 {strides = array<i32>} : memref<108x976xbf16, #tpu.memory_space<vmem>>, vector<12x976xbf16>,
    %c0_76 = arith.constant 0 : index
    %c320_77 = arith.constant 320 : index
    %68 = vector.load %arg10[%c0_76, %c320_77] : memref<12x1296xbf16, #tpu.memory_space<vmem>>, vector<12x976xbf16>
    %c96_78 = arith.constant 96 : index
    %c0_79 = arith.constant 0 : index
    %69 = vector.load %arg11[%c96_78, %c0_79] : memref<108x976xbf16, #tpu.memory_space<vmem>>, vector<12x976xbf16>
    tpu.vector_store %arg11[%c96_78, %c0_79], %68 {strides = array<i32>} : memref<108x976xbf16, #tpu.memory_space<vmem>>, vector<12x976xbf16>,
    %c0_80 = arith.constant 0 : index
    %c0_81 = arith.constant 0 : index
    %70 = vector.load %arg4[%c0_80, %c0_81] : memref<24x108xbf16, #tpu.memory_space<vmem>>, vector<24x108xbf16>
    %c0_82 = arith.constant 0 : index
    %c0_83 = arith.constant 0 : index
    %71 = vector.load %arg11[%c0_82, %c0_83] : memref<108x976xbf16, #tpu.memory_space<vmem>>, vector<108x976xbf16>
    %cst_84 = arith.constant dense<0.000000e+00> : vector<24x976xf32>
    %72 = tpu.matmul %70, %71, %cst_84 {dimension_numbers = #tpu.dot_dimension_numbers<[1], [0], [0], [1], [0, 0, 1, 1], [], []>} : vector<24x108xbf16>, vector<108x976xbf16>, vector<24x976xf32> -> vector<24x976xf32>
    %c0_85 = arith.constant 0 : index
    %c0_86 = arith.constant 0 : index
    %73 = vector.load %arg5[%c0_85, %c0_86] : memref<24x1xf32, #tpu.memory_space<vmem>>, vector<24x1xf32>
    %74 = vector.broadcast %73 : vector<24x1xf32> to vector<24x976xf32>
    %75 = arith.addf %72, %74 : vector<24x976xf32>
    %cst_87 = arith.constant 0.000000e+00 : f32
    %76 = vector.broadcast %cst_87 : f32 to vector<24x976xf32>
    %77 = arith.maximumf %75, %76 : vector<24x976xf32>
    %78 = arith.truncf %77 : vector<24x976xf32> to vector<24x976xbf16>
    %cst_88 = arith.constant 0.000000e+00 : bf16
    %79 = vector.broadcast %cst_88 : bf16 to vector<24x1296xbf16>
    %c0_89 = arith.constant 0 : index
    %c0_90 = arith.constant 0 : index
    %80 = vector.load %arg12[%c0_89, %c0_90] : memref<24x1296xbf16, #tpu.memory_space<vmem>>, vector<24x1296xbf16>
    tpu.vector_store %arg12[%c0_89, %c0_90], %79 {strides = array<i32>} : memref<24x1296xbf16, #tpu.memory_space<vmem>>, vector<24x1296xbf16>,
    %81 = vector.extract_strided_slice %78 {offsets = [0, 0], sizes = [24, 112], strides = [1, 1]} : vector<24x976xbf16> to vector<24x112xbf16>
    %c0_91 = arith.constant 0 : index
    %c160_92 = arith.constant 160 : index
    %82 = vector.load %arg12[%c0_91, %c160_92] : memref<24x1296xbf16, #tpu.memory_space<vmem>>, vector<24x112xbf16>
    tpu.vector_store %arg12[%c0_91, %c160_92], %81 {strides = array<i32>} : memref<24x1296xbf16, #tpu.memory_space<vmem>>, vector<24x112xbf16>,
    %83 = vector.extract_strided_slice %78 {offsets = [0, 144], sizes = [24, 112], strides = [1, 1]} : vector<24x976xbf16> to vector<24x112xbf16>
    %c0_93 = arith.constant 0 : index
    %c304_94 = arith.constant 304 : index
    %84 = vector.load %arg12[%c0_93, %c304_94] : memref<24x1296xbf16, #tpu.memory_space<vmem>>, vector<24x112xbf16>
    tpu.vector_store %arg12[%c0_93, %c304_94], %83 {strides = array<i32>} : memref<24x1296xbf16, #tpu.memory_space<vmem>>, vector<24x112xbf16>,
    %85 = vector.extract_strided_slice %78 {offsets = [0, 288], sizes = [24, 112], strides = [1, 1]} : vector<24x976xbf16> to vector<24x112xbf16>
    %c0_95 = arith.constant 0 : index
    %c448_96 = arith.constant 448 : index
    %86 = vector.load %arg12[%c0_95, %c448_96] : memref<24x1296xbf16, #tpu.memory_space<vmem>>, vector<24x112xbf16>
    tpu.vector_store %arg12[%c0_95, %c448_96], %85 {strides = array<i32>} : memref<24x1296xbf16, #tpu.memory_space<vmem>>, vector<24x112xbf16>,
    %87 = vector.extract_strided_slice %78 {offsets = [0, 432], sizes = [24, 112], strides = [1, 1]} : vector<24x976xbf16> to vector<24x112xbf16>
    %c0_97 = arith.constant 0 : index
    %c592_98 = arith.constant 592 : index
    %88 = vector.load %arg12[%c0_97, %c592_98] : memref<24x1296xbf16, #tpu.memory_space<vmem>>, vector<24x112xbf16>
    tpu.vector_store %arg12[%c0_97, %c592_98], %87 {strides = array<i32>} : memref<24x1296xbf16, #tpu.memory_space<vmem>>, vector<24x112xbf16>,
    %89 = vector.extract_strided_slice %78 {offsets = [0, 576], sizes = [24, 112], strides = [1, 1]} : vector<24x976xbf16> to vector<24x112xbf16>
    %c0_99 = arith.constant 0 : index
    %c736_100 = arith.constant 736 : index
    %90 = vector.load %arg12[%c0_99, %c736_100] : memref<24x1296xbf16, #tpu.memory_space<vmem>>, vector<24x112xbf16>
    tpu.vector_store %arg12[%c0_99, %c736_100], %89 {strides = array<i32>} : memref<24x1296xbf16, #tpu.memory_space<vmem>>, vector<24x112xbf16>,
    %91 = vector.extract_strided_slice %78 {offsets = [0, 720], sizes = [24, 112], strides = [1, 1]} : vector<24x976xbf16> to vector<24x112xbf16>
    %c0_101 = arith.constant 0 : index
    %c880_102 = arith.constant 880 : index
    %92 = vector.load %arg12[%c0_101, %c880_102] : memref<24x1296xbf16, #tpu.memory_space<vmem>>, vector<24x112xbf16>
    tpu.vector_store %arg12[%c0_101, %c880_102], %91 {strides = array<i32>} : memref<24x1296xbf16, #tpu.memory_space<vmem>>, vector<24x112xbf16>,
    %93 = vector.extract_strided_slice %78 {offsets = [0, 864], sizes = [24, 112], strides = [1, 1]} : vector<24x976xbf16> to vector<24x112xbf16>
    %c0_103 = arith.constant 0 : index
    %c1024_104 = arith.constant 1024 : index
    %94 = vector.load %arg12[%c0_103, %c1024_104] : memref<24x1296xbf16, #tpu.memory_space<vmem>>, vector<24x112xbf16>
    tpu.vector_store %arg12[%c0_103, %c1024_104], %93 {strides = array<i32>} : memref<24x1296xbf16, #tpu.memory_space<vmem>>, vector<24x112xbf16>,
    %c18 = arith.constant 18 : index
    %c0_105 = arith.constant 0 : index
    %95 = vector.load %arg12[%c18, %c0_105] : memref<24x1296xbf16, #tpu.memory_space<vmem>>, vector<6x976xbf16>
    %c0_106 = arith.constant 0 : index
    %c0_107 = arith.constant 0 : index
    %96 = vector.load %arg13[%c0_106, %c0_107] : memref<54x976xbf16, #tpu.memory_space<vmem>>, vector<6x976xbf16>
    tpu.vector_store %arg13[%c0_106, %c0_107], %95 {strides = array<i32>} : memref<54x976xbf16, #tpu.memory_space<vmem>>, vector<6x976xbf16>,
    %c12_108 = arith.constant 12 : index
    %c16_109 = arith.constant 16 : index
    %97 = vector.load %arg12[%c12_108, %c16_109] : memref<24x1296xbf16, #tpu.memory_space<vmem>>, vector<6x976xbf16>
    %c6 = arith.constant 6 : index
    %c0_110 = arith.constant 0 : index
    %98 = vector.load %arg13[%c6, %c0_110] : memref<54x976xbf16, #tpu.memory_space<vmem>>, vector<6x976xbf16>
    tpu.vector_store %arg13[%c6, %c0_110], %97 {strides = array<i32>} : memref<54x976xbf16, #tpu.memory_space<vmem>>, vector<6x976xbf16>,
    %c18_111 = arith.constant 18 : index
    %c16_112 = arith.constant 16 : index
    %99 = vector.load %arg12[%c18_111, %c16_112] : memref<24x1296xbf16, #tpu.memory_space<vmem>>, vector<6x976xbf16>
    %c12_113 = arith.constant 12 : index
    %c0_114 = arith.constant 0 : index
    %100 = vector.load %arg13[%c12_113, %c0_114] : memref<54x976xbf16, #tpu.memory_space<vmem>>, vector<6x976xbf16>
    tpu.vector_store %arg13[%c12_113, %c0_114], %99 {strides = array<i32>} : memref<54x976xbf16, #tpu.memory_space<vmem>>, vector<6x976xbf16>,
    %c6_115 = arith.constant 6 : index
    %c144_116 = arith.constant 144 : index
    %101 = vector.load %arg12[%c6_115, %c144_116] : memref<24x1296xbf16, #tpu.memory_space<vmem>>, vector<6x976xbf16>
    %c18_117 = arith.constant 18 : index
    %c0_118 = arith.constant 0 : index
    %102 = vector.load %arg13[%c18_117, %c0_118] : memref<54x976xbf16, #tpu.memory_space<vmem>>, vector<6x976xbf16>
    tpu.vector_store %arg13[%c18_117, %c0_118], %101 {strides = array<i32>} : memref<54x976xbf16, #tpu.memory_space<vmem>>, vector<6x976xbf16>,
    %c0_119 = arith.constant 0 : index
    %c160_120 = arith.constant 160 : index
    %103 = vector.load %arg12[%c0_119, %c160_120] : memref<24x1296xbf16, #tpu.memory_space<vmem>>, vector<6x976xbf16>
    %c24_121 = arith.constant 24 : index
    %c0_122 = arith.constant 0 : index
    %104 = vector.load %arg13[%c24_121, %c0_122] : memref<54x976xbf16, #tpu.memory_space<vmem>>, vector<6x976xbf16>
    tpu.vector_store %arg13[%c24_121, %c0_122], %103 {strides = array<i32>} : memref<54x976xbf16, #tpu.memory_space<vmem>>, vector<6x976xbf16>,
    %c6_123 = arith.constant 6 : index
    %c160_124 = arith.constant 160 : index
    %105 = vector.load %arg12[%c6_123, %c160_124] : memref<24x1296xbf16, #tpu.memory_space<vmem>>, vector<6x976xbf16>
    %c30 = arith.constant 30 : index
    %c0_125 = arith.constant 0 : index
    %106 = vector.load %arg13[%c30, %c0_125] : memref<54x976xbf16, #tpu.memory_space<vmem>>, vector<6x976xbf16>
    tpu.vector_store %arg13[%c30, %c0_125], %105 {strides = array<i32>} : memref<54x976xbf16, #tpu.memory_space<vmem>>, vector<6x976xbf16>,
    %c18_126 = arith.constant 18 : index
    %c144_127 = arith.constant 144 : index
    %107 = vector.load %arg12[%c18_126, %c144_127] : memref<24x1296xbf16, #tpu.memory_space<vmem>>, vector<6x976xbf16>
    %c36_128 = arith.constant 36 : index
    %c0_129 = arith.constant 0 : index
    %108 = vector.load %arg13[%c36_128, %c0_129] : memref<54x976xbf16, #tpu.memory_space<vmem>>, vector<6x976xbf16>
    tpu.vector_store %arg13[%c36_128, %c0_129], %107 {strides = array<i32>} : memref<54x976xbf16, #tpu.memory_space<vmem>>, vector<6x976xbf16>,
    %c12_130 = arith.constant 12 : index
    %c160_131 = arith.constant 160 : index
    %109 = vector.load %arg12[%c12_130, %c160_131] : memref<24x1296xbf16, #tpu.memory_space<vmem>>, vector<6x976xbf16>
    %c42 = arith.constant 42 : index
    %c0_132 = arith.constant 0 : index
    %110 = vector.load %arg13[%c42, %c0_132] : memref<54x976xbf16, #tpu.memory_space<vmem>>, vector<6x976xbf16>
    tpu.vector_store %arg13[%c42, %c0_132], %109 {strides = array<i32>} : memref<54x976xbf16, #tpu.memory_space<vmem>>, vector<6x976xbf16>,
    %c18_133 = arith.constant 18 : index
    %c160_134 = arith.constant 160 : index
    %111 = vector.load %arg12[%c18_133, %c160_134] : memref<24x1296xbf16, #tpu.memory_space<vmem>>, vector<6x976xbf16>
    %c48_135 = arith.constant 48 : index
    %c0_136 = arith.constant 0 : index
    %112 = vector.load %arg13[%c48_135, %c0_136] : memref<54x976xbf16, #tpu.memory_space<vmem>>, vector<6x976xbf16>
    tpu.vector_store %arg13[%c48_135, %c0_136], %111 {strides = array<i32>} : memref<54x976xbf16, #tpu.memory_space<vmem>>, vector<6x976xbf16>,
    %c0_137 = arith.constant 0 : index
    %c0_138 = arith.constant 0 : index
    %113 = vector.load %arg6[%c0_137, %c0_138] : memref<12x54xbf16, #tpu.memory_space<vmem>>, vector<12x54xbf16>
    %c0_139 = arith.constant 0 : index
    %c0_140 = arith.constant 0 : index
    %114 = vector.load %arg13[%c0_139, %c0_140] : memref<54x976xbf16, #tpu.memory_space<vmem>>, vector<54x976xbf16>
    %cst_141 = arith.constant dense<0.000000e+00> : vector<12x976xf32>
    %115 = tpu.matmul %113, %114, %cst_141 {dimension_numbers = #tpu.dot_dimension_numbers<[1], [0], [0], [1], [0, 0, 1, 1], [], []>} : vector<12x54xbf16>, vector<54x976xbf16>, vector<12x976xf32> -> vector<12x976xf32>
    %c0_142 = arith.constant 0 : index
    %c0_143 = arith.constant 0 : index
    %116 = vector.load %arg7[%c0_142, %c0_143] : memref<12x1xf32, #tpu.memory_space<vmem>>, vector<12x1xf32>
    %117 = vector.broadcast %116 : vector<12x1xf32> to vector<12x976xf32>
    %118 = arith.addf %115, %117 : vector<12x976xf32>
    %cst_144 = arith.constant 0.000000e+00 : f32
    %119 = vector.broadcast %cst_144 : f32 to vector<12x976xf32>
    %120 = arith.subf %119, %118 : vector<12x976xf32>
    %121 = math.exp %120 : vector<12x976xf32>
    %cst_145 = arith.constant 1.000000e+00 : f32
    %122 = vector.broadcast %cst_145 : f32 to vector<12x976xf32>
    %123 = arith.addf %122, %121 : vector<12x976xf32>
    %124 = tpu.reciprocal %123 {approx = true} : vector<12x976xf32> -> vector<12x976xf32>
    %c0_146 = arith.constant 0 : index
    %c0_147 = arith.constant 0 : index
    %c0_148 = arith.constant 0 : index
    %125 = vector.load %arg8[%c0_146, %c0_147, %c0_148] : memref<1x48x976xf32, #tpu.memory_space<vmem>>, vector<1x12x976xf32>
    %126 = vector.shape_cast %125 : vector<1x12x976xf32> to vector<12x976xf32>
    %127 = vector.shape_cast %124 : vector<12x976xf32> to vector<1x12x976xf32>
    tpu.vector_store %arg8[%c0_146, %c0_147, %c0_148], %127 {strides = array<i32>} : memref<1x48x976xf32, #tpu.memory_space<vmem>>, vector<1x12x976xf32>,
    %c12_149 = arith.constant 12 : index
    %c16_150 = arith.constant 16 : index
    %128 = vector.load %arg12[%c12_149, %c16_150] : memref<24x1296xbf16, #tpu.memory_space<vmem>>, vector<6x976xbf16>
    %c0_151 = arith.constant 0 : index
    %c0_152 = arith.constant 0 : index
    %129 = vector.load %arg13[%c0_151, %c0_152] : memref<54x976xbf16, #tpu.memory_space<vmem>>, vector<6x976xbf16>
    tpu.vector_store %arg13[%c0_151, %c0_152], %128 {strides = array<i32>} : memref<54x976xbf16, #tpu.memory_space<vmem>>, vector<6x976xbf16>,
    %c18_153 = arith.constant 18 : index
    %c16_154 = arith.constant 16 : index
    %130 = vector.load %arg12[%c18_153, %c16_154] : memref<24x1296xbf16, #tpu.memory_space<vmem>>, vector<6x976xbf16>
    %c6_155 = arith.constant 6 : index
    %c0_156 = arith.constant 0 : index
    %131 = vector.load %arg13[%c6_155, %c0_156] : memref<54x976xbf16, #tpu.memory_space<vmem>>, vector<6x976xbf16>
    tpu.vector_store %arg13[%c6_155, %c0_156], %130 {strides = array<i32>} : memref<54x976xbf16, #tpu.memory_space<vmem>>, vector<6x976xbf16>,
    %c12_157 = arith.constant 12 : index
    %c32_158 = arith.constant 32 : index
    %132 = vector.load %arg12[%c12_157, %c32_158] : memref<24x1296xbf16, #tpu.memory_space<vmem>>, vector<6x976xbf16>
    %c12_159 = arith.constant 12 : index
    %c0_160 = arith.constant 0 : index
    %133 = vector.load %arg13[%c12_159, %c0_160] : memref<54x976xbf16, #tpu.memory_space<vmem>>, vector<6x976xbf16>
    tpu.vector_store %arg13[%c12_159, %c0_160], %132 {strides = array<i32>} : memref<54x976xbf16, #tpu.memory_space<vmem>>, vector<6x976xbf16>,
    %c0_161 = arith.constant 0 : index
    %c160_162 = arith.constant 160 : index
    %134 = vector.load %arg12[%c0_161, %c160_162] : memref<24x1296xbf16, #tpu.memory_space<vmem>>, vector<6x976xbf16>
    %c18_163 = arith.constant 18 : index
    %c0_164 = arith.constant 0 : index
    %135 = vector.load %arg13[%c18_163, %c0_164] : memref<54x976xbf16, #tpu.memory_space<vmem>>, vector<6x976xbf16>
    tpu.vector_store %arg13[%c18_163, %c0_164], %134 {strides = array<i32>} : memref<54x976xbf16, #tpu.memory_space<vmem>>, vector<6x976xbf16>,
    %c6_165 = arith.constant 6 : index
    %c160_166 = arith.constant 160 : index
    %136 = vector.load %arg12[%c6_165, %c160_166] : memref<24x1296xbf16, #tpu.memory_space<vmem>>, vector<6x976xbf16>
    %c24_167 = arith.constant 24 : index
    %c0_168 = arith.constant 0 : index
    %137 = vector.load %arg13[%c24_167, %c0_168] : memref<54x976xbf16, #tpu.memory_space<vmem>>, vector<6x976xbf16>
    tpu.vector_store %arg13[%c24_167, %c0_168], %136 {strides = array<i32>} : memref<54x976xbf16, #tpu.memory_space<vmem>>, vector<6x976xbf16>,
    %c0_169 = arith.constant 0 : index
    %c176_170 = arith.constant 176 : index
    %138 = vector.load %arg12[%c0_169, %c176_170] : memref<24x1296xbf16, #tpu.memory_space<vmem>>, vector<6x976xbf16>
    %c30_171 = arith.constant 30 : index
    %c0_172 = arith.constant 0 : index
    %139 = vector.load %arg13[%c30_171, %c0_172] : memref<54x976xbf16, #tpu.memory_space<vmem>>, vector<6x976xbf16>
    tpu.vector_store %arg13[%c30_171, %c0_172], %138 {strides = array<i32>} : memref<54x976xbf16, #tpu.memory_space<vmem>>, vector<6x976xbf16>,
    %c12_173 = arith.constant 12 : index
    %c160_174 = arith.constant 160 : index
    %140 = vector.load %arg12[%c12_173, %c160_174] : memref<24x1296xbf16, #tpu.memory_space<vmem>>, vector<6x976xbf16>
    %c36_175 = arith.constant 36 : index
    %c0_176 = arith.constant 0 : index
    %141 = vector.load %arg13[%c36_175, %c0_176] : memref<54x976xbf16, #tpu.memory_space<vmem>>, vector<6x976xbf16>
    tpu.vector_store %arg13[%c36_175, %c0_176], %140 {strides = array<i32>} : memref<54x976xbf16, #tpu.memory_space<vmem>>, vector<6x976xbf16>,
    %c18_177 = arith.constant 18 : index
    %c160_178 = arith.constant 160 : index
    %142 = vector.load %arg12[%c18_177, %c160_178] : memref<24x1296xbf16, #tpu.memory_space<vmem>>, vector<6x976xbf16>
    %c42_179 = arith.constant 42 : index
    %c0_180 = arith.constant 0 : index
    %143 = vector.load %arg13[%c42_179, %c0_180] : memref<54x976xbf16, #tpu.memory_space<vmem>>, vector<6x976xbf16>
    tpu.vector_store %arg13[%c42_179, %c0_180], %142 {strides = array<i32>} : memref<54x976xbf16, #tpu.memory_space<vmem>>, vector<6x976xbf16>,
    %c12_181 = arith.constant 12 : index
    %c176_182 = arith.constant 176 : index
    %144 = vector.load %arg12[%c12_181, %c176_182] : memref<24x1296xbf16, #tpu.memory_space<vmem>>, vector<6x976xbf16>
    %c48_183 = arith.constant 48 : index
    %c0_184 = arith.constant 0 : index
    %145 = vector.load %arg13[%c48_183, %c0_184] : memref<54x976xbf16, #tpu.memory_space<vmem>>, vector<6x976xbf16>
    tpu.vector_store %arg13[%c48_183, %c0_184], %144 {strides = array<i32>} : memref<54x976xbf16, #tpu.memory_space<vmem>>, vector<6x976xbf16>,
    %c0_185 = arith.constant 0 : index
    %c0_186 = arith.constant 0 : index
    %146 = vector.load %arg6[%c0_185, %c0_186] : memref<12x54xbf16, #tpu.memory_space<vmem>>, vector<12x54xbf16>
    %c0_187 = arith.constant 0 : index
    %c0_188 = arith.constant 0 : index
    %147 = vector.load %arg13[%c0_187, %c0_188] : memref<54x976xbf16, #tpu.memory_space<vmem>>, vector<54x976xbf16>
    %cst_189 = arith.constant dense<0.000000e+00> : vector<12x976xf32>
    %148 = tpu.matmul %146, %147, %cst_189 {dimension_numbers = #tpu.dot_dimension_numbers<[1], [0], [0], [1], [0, 0, 1, 1], [], []>} : vector<12x54xbf16>, vector<54x976xbf16>, vector<12x976xf32> -> vector<12x976xf32>
    %c0_190 = arith.constant 0 : index
    %c0_191 = arith.constant 0 : index
    %149 = vector.load %arg7[%c0_190, %c0_191] : memref<12x1xf32, #tpu.memory_space<vmem>>, vector<12x1xf32>
    %150 = vector.broadcast %149 : vector<12x1xf32> to vector<12x976xf32>
    %151 = arith.addf %148, %150 : vector<12x976xf32>
    %cst_192 = arith.constant 0.000000e+00 : f32
    %152 = vector.broadcast %cst_192 : f32 to vector<12x976xf32>
    %153 = arith.subf %152, %151 : vector<12x976xf32>
    %154 = math.exp %153 : vector<12x976xf32>
    %cst_193 = arith.constant 1.000000e+00 : f32
    %155 = vector.broadcast %cst_193 : f32 to vector<12x976xf32>
    %156 = arith.addf %155, %154 : vector<12x976xf32>
    %157 = tpu.reciprocal %156 {approx = true} : vector<12x976xf32> -> vector<12x976xf32>
    %c0_194 = arith.constant 0 : index
    %c12_195 = arith.constant 12 : index
    %c0_196 = arith.constant 0 : index
    %158 = vector.load %arg8[%c0_194, %c12_195, %c0_196] : memref<1x48x976xf32, #tpu.memory_space<vmem>>, vector<1x12x976xf32>
    %159 = vector.shape_cast %158 : vector<1x12x976xf32> to vector<12x976xf32>
    %160 = vector.shape_cast %157 : vector<12x976xf32> to vector<1x12x976xf32>
    tpu.vector_store %arg8[%c0_194, %c12_195, %c0_196], %160 {strides = array<i32>} : memref<1x48x976xf32, #tpu.memory_space<vmem>>, vector<1x12x976xf32>,
    %c6_197 = arith.constant 6 : index
    %c144_198 = arith.constant 144 : index
    %161 = vector.load %arg12[%c6_197, %c144_198] : memref<24x1296xbf16, #tpu.memory_space<vmem>>, vector<6x976xbf16>
    %c0_199 = arith.constant 0 : index
    %c0_200 = arith.constant 0 : index
    %162 = vector.load %arg13[%c0_199, %c0_200] : memref<54x976xbf16, #tpu.memory_space<vmem>>, vector<6x976xbf16>
    tpu.vector_store %arg13[%c0_199, %c0_200], %161 {strides = array<i32>} : memref<54x976xbf16, #tpu.memory_space<vmem>>, vector<6x976xbf16>,
    %c0_201 = arith.constant 0 : index
    %c160_202 = arith.constant 160 : index
    %163 = vector.load %arg12[%c0_201, %c160_202] : memref<24x1296xbf16, #tpu.memory_space<vmem>>, vector<6x976xbf16>
    %c6_203 = arith.constant 6 : index
    %c0_204 = arith.constant 0 : index
    %164 = vector.load %arg13[%c6_203, %c0_204] : memref<54x976xbf16, #tpu.memory_space<vmem>>, vector<6x976xbf16>
    tpu.vector_store %arg13[%c6_203, %c0_204], %163 {strides = array<i32>} : memref<54x976xbf16, #tpu.memory_space<vmem>>, vector<6x976xbf16>,
    %c6_205 = arith.constant 6 : index
    %c160_206 = arith.constant 160 : index
    %165 = vector.load %arg12[%c6_205, %c160_206] : memref<24x1296xbf16, #tpu.memory_space<vmem>>, vector<6x976xbf16>
    %c12_207 = arith.constant 12 : index
    %c0_208 = arith.constant 0 : index
    %166 = vector.load %arg13[%c12_207, %c0_208] : memref<54x976xbf16, #tpu.memory_space<vmem>>, vector<6x976xbf16>
    tpu.vector_store %arg13[%c12_207, %c0_208], %165 {strides = array<i32>} : memref<54x976xbf16, #tpu.memory_space<vmem>>, vector<6x976xbf16>,
    %c18_209 = arith.constant 18 : index
    %c144_210 = arith.constant 144 : index
    %167 = vector.load %arg12[%c18_209, %c144_210] : memref<24x1296xbf16, #tpu.memory_space<vmem>>, vector<6x976xbf16>
    %c18_211 = arith.constant 18 : index
    %c0_212 = arith.constant 0 : index
    %168 = vector.load %arg13[%c18_211, %c0_212] : memref<54x976xbf16, #tpu.memory_space<vmem>>, vector<6x976xbf16>
    tpu.vector_store %arg13[%c18_211, %c0_212], %167 {strides = array<i32>} : memref<54x976xbf16, #tpu.memory_space<vmem>>, vector<6x976xbf16>,
    %c12_213 = arith.constant 12 : index
    %c160_214 = arith.constant 160 : index
    %169 = vector.load %arg12[%c12_213, %c160_214] : memref<24x1296xbf16, #tpu.memory_space<vmem>>, vector<6x976xbf16>
    %c24_215 = arith.constant 24 : index
    %c0_216 = arith.constant 0 : index
    %170 = vector.load %arg13[%c24_215, %c0_216] : memref<54x976xbf16, #tpu.memory_space<vmem>>, vector<6x976xbf16>
    tpu.vector_store %arg13[%c24_215, %c0_216], %169 {strides = array<i32>} : memref<54x976xbf16, #tpu.memory_space<vmem>>, vector<6x976xbf16>,
    %c18_217 = arith.constant 18 : index
    %c160_218 = arith.constant 160 : index
    %171 = vector.load %arg12[%c18_217, %c160_218] : memref<24x1296xbf16, #tpu.memory_space<vmem>>, vector<6x976xbf16>
    %c30_219 = arith.constant 30 : index
    %c0_220 = arith.constant 0 : index
    %172 = vector.load %arg13[%c30_219, %c0_220] : memref<54x976xbf16, #tpu.memory_space<vmem>>, vector<6x976xbf16>
    tpu.vector_store %arg13[%c30_219, %c0_220], %171 {strides = array<i32>} : memref<54x976xbf16, #tpu.memory_space<vmem>>, vector<6x976xbf16>,
    %c6_221 = arith.constant 6 : index
    %c288_222 = arith.constant 288 : index
    %173 = vector.load %arg12[%c6_221, %c288_222] : memref<24x1296xbf16, #tpu.memory_space<vmem>>, vector<6x976xbf16>
    %c36_223 = arith.constant 36 : index
    %c0_224 = arith.constant 0 : index
    %174 = vector.load %arg13[%c36_223, %c0_224] : memref<54x976xbf16, #tpu.memory_space<vmem>>, vector<6x976xbf16>
    tpu.vector_store %arg13[%c36_223, %c0_224], %173 {strides = array<i32>} : memref<54x976xbf16, #tpu.memory_space<vmem>>, vector<6x976xbf16>,
    %c0_225 = arith.constant 0 : index
    %c304_226 = arith.constant 304 : index
    %175 = vector.load %arg12[%c0_225, %c304_226] : memref<24x1296xbf16, #tpu.memory_space<vmem>>, vector<6x976xbf16>
    %c42_227 = arith.constant 42 : index
    %c0_228 = arith.constant 0 : index
    %176 = vector.load %arg13[%c42_227, %c0_228] : memref<54x976xbf16, #tpu.memory_space<vmem>>, vector<6x976xbf16>
    tpu.vector_store %arg13[%c42_227, %c0_228], %175 {strides = array<i32>} : memref<54x976xbf16, #tpu.memory_space<vmem>>, vector<6x976xbf16>,
    %c6_229 = arith.constant 6 : index
    %c304_230 = arith.constant 304 : index
    %177 = vector.load %arg12[%c6_229, %c304_230] : memref<24x1296xbf16, #tpu.memory_space<vmem>>, vector<6x976xbf16>
    %c48_231 = arith.constant 48 : index
    %c0_232 = arith.constant 0 : index
    %178 = vector.load %arg13[%c48_231, %c0_232] : memref<54x976xbf16, #tpu.memory_space<vmem>>, vector<6x976xbf16>
    tpu.vector_store %arg13[%c48_231, %c0_232], %177 {strides = array<i32>} : memref<54x976xbf16, #tpu.memory_space<vmem>>, vector<6x976xbf16>,
    %c0_233 = arith.constant 0 : index
    %c0_234 = arith.constant 0 : index
    %179 = vector.load %arg6[%c0_233, %c0_234] : memref<12x54xbf16, #tpu.memory_space<vmem>>, vector<12x54xbf16>
    %c0_235 = arith.constant 0 : index
    %c0_236 = arith.constant 0 : index
    %180 = vector.load %arg13[%c0_235, %c0_236] : memref<54x976xbf16, #tpu.memory_space<vmem>>, vector<54x976xbf16>
    %cst_237 = arith.constant dense<0.000000e+00> : vector<12x976xf32>
    %181 = tpu.matmul %179, %180, %cst_237 {dimension_numbers = #tpu.dot_dimension_numbers<[1], [0], [0], [1], [0, 0, 1, 1], [], []>} : vector<12x54xbf16>, vector<54x976xbf16>, vector<12x976xf32> -> vector<12x976xf32>
    %c0_238 = arith.constant 0 : index
    %c0_239 = arith.constant 0 : index
    %182 = vector.load %arg7[%c0_238, %c0_239] : memref<12x1xf32, #tpu.memory_space<vmem>>, vector<12x1xf32>
    %183 = vector.broadcast %182 : vector<12x1xf32> to vector<12x976xf32>
    %184 = arith.addf %181, %183 : vector<12x976xf32>
    %cst_240 = arith.constant 0.000000e+00 : f32
    %185 = vector.broadcast %cst_240 : f32 to vector<12x976xf32>
    %186 = arith.subf %185, %184 : vector<12x976xf32>
    %187 = math.exp %186 : vector<12x976xf32>
    %cst_241 = arith.constant 1.000000e+00 : f32
    %188 = vector.broadcast %cst_241 : f32 to vector<12x976xf32>
    %189 = arith.addf %188, %187 : vector<12x976xf32>
    %190 = tpu.reciprocal %189 {approx = true} : vector<12x976xf32> -> vector<12x976xf32>
    %c0_242 = arith.constant 0 : index
    %c24_243 = arith.constant 24 : index
    %c0_244 = arith.constant 0 : index
    %191 = vector.load %arg8[%c0_242, %c24_243, %c0_244] : memref<1x48x976xf32, #tpu.memory_space<vmem>>, vector<1x12x976xf32>
    %192 = vector.shape_cast %191 : vector<1x12x976xf32> to vector<12x976xf32>
    %193 = vector.shape_cast %190 : vector<12x976xf32> to vector<1x12x976xf32>
    tpu.vector_store %arg8[%c0_242, %c24_243, %c0_244], %193 {strides = array<i32>} : memref<1x48x976xf32, #tpu.memory_space<vmem>>, vector<1x12x976xf32>,
    %c0_245 = arith.constant 0 : index
    %c160_246 = arith.constant 160 : index
    %194 = vector.load %arg12[%c0_245, %c160_246] : memref<24x1296xbf16, #tpu.memory_space<vmem>>, vector<6x976xbf16>
    %c0_247 = arith.constant 0 : index
    %c0_248 = arith.constant 0 : index
    %195 = vector.load %arg13[%c0_247, %c0_248] : memref<54x976xbf16, #tpu.memory_space<vmem>>, vector<6x976xbf16>
    tpu.vector_store %arg13[%c0_247, %c0_248], %194 {strides = array<i32>} : memref<54x976xbf16, #tpu.memory_space<vmem>>, vector<6x976xbf16>,
    %c6_249 = arith.constant 6 : index
    %c160_250 = arith.constant 160 : index
    %196 = vector.load %arg12[%c6_249, %c160_250] : memref<24x1296xbf16, #tpu.memory_space<vmem>>, vector<6x976xbf16>
    %c6_251 = arith.constant 6 : index
    %c0_252 = arith.constant 0 : index
    %197 = vector.load %arg13[%c6_251, %c0_252] : memref<54x976xbf16, #tpu.memory_space<vmem>>, vector<6x976xbf16>
    tpu.vector_store %arg13[%c6_251, %c0_252], %196 {strides = array<i32>} : memref<54x976xbf16, #tpu.memory_space<vmem>>, vector<6x976xbf16>,
    %c0_253 = arith.constant 0 : index
    %c176_254 = arith.constant 176 : index
    %198 = vector.load %arg12[%c0_253, %c176_254] : memref<24x1296xbf16, #tpu.memory_space<vmem>>, vector<6x976xbf16>
    %c12_255 = arith.constant 12 : index
    %c0_256 = arith.constant 0 : index
    %199 = vector.load %arg13[%c12_255, %c0_256] : memref<54x976xbf16, #tpu.memory_space<vmem>>, vector<6x976xbf16>
    tpu.vector_store %arg13[%c12_255, %c0_256], %198 {strides = array<i32>} : memref<54x976xbf16, #tpu.memory_space<vmem>>, vector<6x976xbf16>,
    %c12_257 = arith.constant 12 : index
    %c160_258 = arith.constant 160 : index
    %200 = vector.load %arg12[%c12_257, %c160_258] : memref<24x1296xbf16, #tpu.memory_space<vmem>>, vector<6x976xbf16>
    %c18_259 = arith.constant 18 : index
    %c0_260 = arith.constant 0 : index
    %201 = vector.load %arg13[%c18_259, %c0_260] : memref<54x976xbf16, #tpu.memory_space<vmem>>, vector<6x976xbf16>
    tpu.vector_store %arg13[%c18_259, %c0_260], %200 {strides = array<i32>} : memref<54x976xbf16, #tpu.memory_space<vmem>>, vector<6x976xbf16>,
    %c18_261 = arith.constant 18 : index
    %c160_262 = arith.constant 160 : index
    %202 = vector.load %arg12[%c18_261, %c160_262] : memref<24x1296xbf16, #tpu.memory_space<vmem>>, vector<6x976xbf16>
    %c24_263 = arith.constant 24 : index
    %c0_264 = arith.constant 0 : index
    %203 = vector.load %arg13[%c24_263, %c0_264] : memref<54x976xbf16, #tpu.memory_space<vmem>>, vector<6x976xbf16>
    tpu.vector_store %arg13[%c24_263, %c0_264], %202 {strides = array<i32>} : memref<54x976xbf16, #tpu.memory_space<vmem>>, vector<6x976xbf16>,
    %c12_265 = arith.constant 12 : index
    %c176_266 = arith.constant 176 : index
    %204 = vector.load %arg12[%c12_265, %c176_266] : memref<24x1296xbf16, #tpu.memory_space<vmem>>, vector<6x976xbf16>
    %c30_267 = arith.constant 30 : index
    %c0_268 = arith.constant 0 : index
    %205 = vector.load %arg13[%c30_267, %c0_268] : memref<54x976xbf16, #tpu.memory_space<vmem>>, vector<6x976xbf16>
    tpu.vector_store %arg13[%c30_267, %c0_268], %204 {strides = array<i32>} : memref<54x976xbf16, #tpu.memory_space<vmem>>, vector<6x976xbf16>,
    %c0_269 = arith.constant 0 : index
    %c304_270 = arith.constant 304 : index
    %206 = vector.load %arg12[%c0_269, %c304_270] : memref<24x1296xbf16, #tpu.memory_space<vmem>>, vector<6x976xbf16>
    %c36_271 = arith.constant 36 : index
    %c0_272 = arith.constant 0 : index
    %207 = vector.load %arg13[%c36_271, %c0_272] : memref<54x976xbf16, #tpu.memory_space<vmem>>, vector<6x976xbf16>
    tpu.vector_store %arg13[%c36_271, %c0_272], %206 {strides = array<i32>} : memref<54x976xbf16, #tpu.memory_space<vmem>>, vector<6x976xbf16>,
    %c6_273 = arith.constant 6 : index
    %c304_274 = arith.constant 304 : index
    %208 = vector.load %arg12[%c6_273, %c304_274] : memref<24x1296xbf16, #tpu.memory_space<vmem>>, vector<6x976xbf16>
    %c42_275 = arith.constant 42 : index
    %c0_276 = arith.constant 0 : index
    %209 = vector.load %arg13[%c42_275, %c0_276] : memref<54x976xbf16, #tpu.memory_space<vmem>>, vector<6x976xbf16>
    tpu.vector_store %arg13[%c42_275, %c0_276], %208 {strides = array<i32>} : memref<54x976xbf16, #tpu.memory_space<vmem>>, vector<6x976xbf16>,
    %c0_277 = arith.constant 0 : index
    %c320_278 = arith.constant 320 : index
    %210 = vector.load %arg12[%c0_277, %c320_278] : memref<24x1296xbf16, #tpu.memory_space<vmem>>, vector<6x976xbf16>
    %c48_279 = arith.constant 48 : index
    %c0_280 = arith.constant 0 : index
    %211 = vector.load %arg13[%c48_279, %c0_280] : memref<54x976xbf16, #tpu.memory_space<vmem>>, vector<6x976xbf16>
    tpu.vector_store %arg13[%c48_279, %c0_280], %210 {strides = array<i32>} : memref<54x976xbf16, #tpu.memory_space<vmem>>, vector<6x976xbf16>,
    %c0_281 = arith.constant 0 : index
    %c0_282 = arith.constant 0 : index
    %212 = vector.load %arg6[%c0_281, %c0_282] : memref<12x54xbf16, #tpu.memory_space<vmem>>, vector<12x54xbf16>
    %c0_283 = arith.constant 0 : index
    %c0_284 = arith.constant 0 : index
    %213 = vector.load %arg13[%c0_283, %c0_284] : memref<54x976xbf16, #tpu.memory_space<vmem>>, vector<54x976xbf16>
    %cst_285 = arith.constant dense<0.000000e+00> : vector<12x976xf32>
    %214 = tpu.matmul %212, %213, %cst_285 {dimension_numbers = #tpu.dot_dimension_numbers<[1], [0], [0], [1], [0, 0, 1, 1], [], []>} : vector<12x54xbf16>, vector<54x976xbf16>, vector<12x976xf32> -> vector<12x976xf32>
    %c0_286 = arith.constant 0 : index
    %c0_287 = arith.constant 0 : index
    %215 = vector.load %arg7[%c0_286, %c0_287] : memref<12x1xf32, #tpu.memory_space<vmem>>, vector<12x1xf32>
    %216 = vector.broadcast %215 : vector<12x1xf32> to vector<12x976xf32>
    %217 = arith.addf %214, %216 : vector<12x976xf32>
    %cst_288 = arith.constant 0.000000e+00 : f32
    %218 = vector.broadcast %cst_288 : f32 to vector<12x976xf32>
    %219 = arith.subf %218, %217 : vector<12x976xf32>
    %220 = math.exp %219 : vector<12x976xf32>
    %cst_289 = arith.constant 1.000000e+00 : f32
    %221 = vector.broadcast %cst_289 : f32 to vector<12x976xf32>
    %222 = arith.addf %221, %220 : vector<12x976xf32>
    %223 = tpu.reciprocal %222 {approx = true} : vector<12x976xf32> -> vector<12x976xf32>
    %c0_290 = arith.constant 0 : index
    %c36_291 = arith.constant 36 : index
    %c0_292 = arith.constant 0 : index
    %224 = vector.load %arg8[%c0_290, %c36_291, %c0_292] : memref<1x48x976xf32, #tpu.memory_space<vmem>>, vector<1x12x976xf32>
    %225 = vector.shape_cast %224 : vector<1x12x976xf32> to vector<12x976xf32>
    %226 = vector.shape_cast %223 : vector<12x976xf32> to vector<1x12x976xf32>
    tpu.vector_store %arg8[%c0_290, %c36_291, %c0_292], %226 {strides = array<i32>} : memref<1x48x976xf32, #tpu.memory_space<vmem>>, vector<1x12x976xf32>,
    return
  }
  func.func @transform_0(%arg0: i32) -> (i32, i32, i32) {
    %c0_i32 = arith.constant 0 : i32
    %c0_i32_0 = arith.constant 0 : i32
    %c0_i32_1 = arith.constant 0 : i32
    return %arg0, %c0_i32, %c0_i32_0 : i32, i32, i32
  }
  func.func @transform_1(%arg0: i32) -> (i32, i32) {
    %c0_i32 = arith.constant 0 : i32
    %c0_i32_0 = arith.constant 0 : i32
    %c0_i32_1 = arith.constant 0 : i32
    return %c0_i32, %c0_i32_0 : i32, i32
  }
  func.func @transform_2(%arg0: i32) -> (i32, i32) {
    %c0_i32 = arith.constant 0 : i32
    %c0_i32_0 = arith.constant 0 : i32
    %c0_i32_1 = arith.constant 0 : i32
    return %c0_i32, %c0_i32_0 : i32, i32
  }
  func.func @transform_3(%arg0: i32) -> (i32, i32) {
    %c0_i32 = arith.constant 0 : i32
    %c0_i32_0 = arith.constant 0 : i32
    %c0_i32_1 = arith.constant 0 : i32
    return %c0_i32, %c0_i32_0 : i32, i32
  }
  func.func @transform_4(%arg0: i32) -> (i32, i32) {
    %c0_i32 = arith.constant 0 : i32
    %c0_i32_0 = arith.constant 0 : i32
    %c0_i32_1 = arith.constant 0 : i32
    return %c0_i32, %c0_i32_0 : i32, i32
  }
  func.func @transform_5(%arg0: i32) -> (i32, i32) {
    %c0_i32 = arith.constant 0 : i32
    %c0_i32_0 = arith.constant 0 : i32
    %c0_i32_1 = arith.constant 0 : i32
    return %c0_i32, %c0_i32_0 : i32, i32
  }
  func.func @transform_6(%arg0: i32) -> (i32, i32) {
    %c0_i32 = arith.constant 0 : i32
    %c0_i32_0 = arith.constant 0 : i32
    %c0_i32_1 = arith.constant 0 : i32
    return %c0_i32, %c0_i32_0 : i32, i32
  }
  func.func @transform_7(%arg0: i32) -> (i32, i32, i32) {
    %c0_i32 = arith.constant 0 : i32
    %c0_i32_0 = arith.constant 0 : i32
    %c0_i32_1 = arith.constant 0 : i32
    return %arg0, %c0_i32, %c0_i32_0 : i32, i32, i32
  }
}

</mosaic_0001>

<llo_original>
// kernel: _decoder_pallas.1
$region0: #{_decoder_pallas.1}
  #allocation0 [shape = 'u32[]', space=smem, size = 0x4, offset = 0x4, fixed_abs, tag = 'smem constant byte address 0x4 - core index']
  #allocation1 [shape = 'u32[144,128]{1,0:T(1,128)}', space=vmem, size = 0x12000, scoped, tag = 'internal scratch']
  #allocation2 [shape = 'bf16[216,976]{1,0:T(8,128)(2,1)}', space=vmem, size = 0x6c000, scoped, tag = 'scratch operand']
  #allocation3 [shape = 'bf16[12,1296]{1,0:T(8,128)(2,1)}', space=vmem, size = 0xb000, scoped, tag = 'scratch operand']
  #allocation4 [shape = 'bf16[108,976]{1,0:T(8,128)(2,1)}', space=vmem, size = 0x38000, scoped, tag = 'scratch operand']
  #allocation5 [shape = 'bf16[24,1296]{1,0:T(8,128)(2,1)}', space=vmem, size = 0x10800, scoped, tag = 'scratch operand']
  #allocation6 [shape = 'bf16[54,976]{1,0:T(8,128)(2,1)}', space=vmem, size = 0x1c000, scoped, tag = 'scratch operand']
  %s0 = inlined_call_operand.vmem [shape: bf16[1,24,1296], index: 0, kind: input, shape index: {}]
  %s1 = inlined_call_operand.vmem [shape: bf16[12,216], index: 1, kind: input, shape index: {}]
  %s2 = inlined_call_operand.vmem [shape: f32[12,1], index: 2, kind: input, shape index: {}]
  %s3 = inlined_call_operand.vmem [shape: bf16[24,108], index: 3, kind: input, shape index: {}]
  %s4 = inlined_call_operand.vmem [shape: f32[24,1], index: 4, kind: input, shape index: {}]
  %s5 = inlined_call_operand.vmem [shape: bf16[12,54], index: 5, kind: input, shape index: {}]
  %s6 = inlined_call_operand.vmem [shape: f32[12,1], index: 6, kind: input, shape index: {}]
  %s7 = inlined_call_operand.vmem [shape: f32[1,48,976], index: 7, kind: output, shape index: {}]
  %s8 = sld [smem:[#allocation0]]
  $region38: #{_decoder_pallas.1} parent=0
    _
  %s10 = ssub.s32 1, %s8
  %s11 = scalar_select 0, %s10, %s8
  // Predicated region
  $region2: #{_decoder_pallas.1} parent=0 // pred_check
    _
  $region3: #{_decoder_pallas.1} parent=0 // pred_check_branch
    %13 = sbr.rel (0) target = $region5
  $region4: #{_decoder_pallas.1} parent=0 // pred_region
    _
  $region5: #{_decoder_pallas.1} parent=0 // pred_fallthru
    _
  // Predicated region
  $region6: #{_decoder_pallas.1} parent=0 // pred_check
    _
  $region7: #{_decoder_pallas.1} parent=0 // pred_check_branch
    %15 = sbr.rel (0) target = $region9
  $region8: #{_decoder_pallas.1} parent=0 // pred_region
    _
  $region9: #{_decoder_pallas.1} parent=0 // pred_fallthru
    _
  // Predicated region
  $region10: #{_decoder_pallas.1} parent=0 // pred_check
    _
  $region11: #{_decoder_pallas.1} parent=0 // pred_check_branch
    %17 = sbr.rel (0) target = $region13
  $region12: #{_decoder_pallas.1} parent=0 // pred_region
    _
  $region13: #{_decoder_pallas.1} parent=0 // pred_fallthru
    _
  // Predicated region
  $region14: #{_decoder_pallas.1} parent=0 // pred_check
    _
  $region15: #{_decoder_pallas.1} parent=0 // pred_check_branch
    %19 = sbr.rel (0) target = $region17
  $region16: #{_decoder_pallas.1} parent=0 // pred_region
    _
  $region17: #{_decoder_pallas.1} parent=0 // pred_fallthru
    _
  // Predicated region
  $region18: #{_decoder_pallas.1} parent=0 // pred_check
    _
  $region19: #{_decoder_pallas.1} parent=0 // pred_check_branch
    %21 = sbr.rel (0) target = $region21
  $region20: #{_decoder_pallas.1} parent=0 // pred_region
    _
  $region21: #{_decoder_pallas.1} parent=0 // pred_fallthru
    _
  // Predicated region
  $region22: #{_decoder_pallas.1} parent=0 // pred_check
    _
  $region23: #{_decoder_pallas.1} parent=0 // pred_check_branch
    %23 = sbr.rel (0) target = $region25
  $region24: #{_decoder_pallas.1} parent=0 // pred_region
    _
  $region25: #{_decoder_pallas.1} parent=0 // pred_fallthru
    _
  // Predicated region
  $region26: #{_decoder_pallas.1} parent=0 // pred_check
    _
  $region27: #{_decoder_pallas.1} parent=0 // pred_check_branch
    %25 = sbr.rel (0) target = $region29
  $region28: #{_decoder_pallas.1} parent=0 // pred_region
    _
  $region29: #{_decoder_pallas.1} parent=0 // pred_fallthru
    _
  %v27 = vld [vmem:[%s0] sm:$0xff]
  %v28 = vld [vmem:[%s0 + $0x8] sm:$0xff]
  %v29 = vld [vmem:[%s0 + $0x10] sm:$0xff]
  %v30 = vld [vmem:[%s0 + $0x18] sm:$0xff]
  %v31 = vld [vmem:[%s0 + $0x2c] sm:$0xff]
  %v32 = vld [vmem:[%s0 + $0x34] sm:$0xff]
  %v33 = vld [vmem:[%s0 + $0x3c] sm:$0xff]
  %v34 = vld [vmem:[%s0 + $0x44] sm:$0xff]
  %v35 = vld [vmem:[%s0 + $0x58] sm:$0xff]
  %v36 = vld [vmem:[%s0 + $0x60] sm:$0xff]
  %v37 = vld [vmem:[%s0 + $0x68] sm:$0xff]
  %v38 = vld [vmem:[%s0 + $0x70] sm:$0xff]
  %39 = vst [vmem:[#allocation2] sm:$0xff] %v27
  %40 = vst [vmem:[#allocation2 + $0x8] sm:$0xff] %v28
  %41 = vst [vmem:[#allocation2 + $0x10] sm:$0xff] %v29
  %vm42 = vcmask 1043456
  %vm43 = vcmask 654340
  %vm44 = vmor %vm43, %vm42
  %45 = vst.msk [vmem:[#allocation2 + $0x18] sm:$0xff] %vm44, %v30
  %46 = vst [vmem:[#allocation2 + $0x20] sm:$0xff] %v31
  %47 = vst [vmem:[#allocation2 + $0x28] sm:$0xff] %v32
  %48 = vst [vmem:[#allocation2 + $0x30] sm:$0xff] %v33
  %49 = vst.msk [vmem:[#allocation2 + $0x38] sm:$0xff] %vm44, %v34
  %50 = vst [vmem:[#allocation2 + $0x40] sm:$0xff] %v35
  %51 = vst [vmem:[#allocation2 + $0x48] sm:$0xff] %v36
  %52 = vst [vmem:[#allocation2 + $0x50] sm:$0xff] %v37
  %53 = vst.msk [vmem:[#allocation2 + $0x58] sm:$0xff] %vm44, %v38
  %v54 = vld [vmem:[%s0] sm:$0xff]
  %v55 = vld [vmem:[%s0 + $0x8] sm:$0xff]
  %v56 = vld [vmem:[%s0 + $0x10] sm:$0xff]
  %v57 = vld [vmem:[%s0 + $0x18] sm:$0xff]
  %v58 = vld [vmem:[%s0 + $0x2c] sm:$0xff]
  %v59 = vld [vmem:[%s0 + $0x34] sm:$0xff]
  %v60 = vld [vmem:[%s0 + $0x3c] sm:$0xff]
  %v61 = vld [vmem:[%s0 + $0x44] sm:$0xff]
  %v62 = vld [vmem:[%s0 + $0x58] sm:$0xff]
  %v63 = vld [vmem:[%s0 + $0x60] sm:$0xff]
  %v64 = vld [vmem:[%s0 + $0x68] sm:$0xff]
  %v65 = vld [vmem:[%s0 + $0x70] sm:$0xff]
  %78 = vrot.lane.b32.xlu0 %v54, 112
  %v79 = vpop.permute.xlu0 %78
  %80 = vrot.lane.b32.xlu0 %v55, 112
  %v81 = vpop.permute.xlu0 %80
  %82 = vrot.lane.b32.xlu0 %v56, 112
  %v83 = vpop.permute.xlu0 %82
  %84 = vrot.lane.b32.xlu0 %v57, 112
  %v85 = vpop.permute.xlu0 %84
  %86 = vrot.lane.b32.xlu0 %v58, 112
  %v87 = vpop.permute.xlu0 %86
  %88 = vrot.lane.b32.xlu0 %v59, 112
  %v89 = vpop.permute.xlu0 %88
  %90 = vrot.lane.b32.xlu0 %v60, 112
  %v91 = vpop.permute.xlu0 %90
  %92 = vrot.lane.b32.xlu0 %v61, 112
  %v93 = vpop.permute.xlu0 %92
  %94 = vrot.lane.b32.xlu0 %v62, 112
  %v95 = vpop.permute.xlu0 %94
  %96 = vrot.lane.b32.xlu0 %v63, 112
  %v97 = vpop.permute.xlu0 %96
  %98 = vrot.lane.b32.xlu0 %v64, 112
  %v99 = vpop.permute.xlu0 %98
  %100 = vrot.lane.b32.xlu0 %v65, 112
  %v101 = vpop.permute.xlu0 %100
  %v102 = vrot.slane %v79, 4
  %v103 = vrot.slane %v81, 4
  %v104 = vrot.slane %v83, 4
  %v105 = vrot.slane %v85, 4
  %v106 = vrot.slane %v87, 4
  %v107 = vrot.slane %v89, 4
  %v108 = vrot.slane %v91, 4
  %v109 = vrot.slane %v93, 4
  %v110 = vrot.slane %v95, 4
  %v111 = vrot.slane %v97, 4
  %v112 = vrot.slane %v99, 4
  %v113 = vrot.slane %v101, 4
  %vm114 = vcmask 1043456
  %v115 = vsel %vm114, %v102, %v103
  %vm116 = vcmask 916480
  %v117 = vsel %vm116, %v79, %v115
  %v118 = vsel %vm114, %v103, %v104
  %v119 = vsel %vm116, %v81, %v118
  %v120 = vsel %vm114, %v104, %v105
  %v121 = vsel %vm116, %v83, %v120
  %v122 = vsel %vm116, %v85, %v105
  %v123 = vsel %vm114, %v106, %v107
  %v124 = vsel %vm116, %v87, %v123
  %v125 = vsel %vm114, %v107, %v108
  %v126 = vsel %vm116, %v89, %v125
  %v127 = vsel %vm114, %v108, %v109
  %v128 = vsel %vm116, %v91, %v127
  %v129 = vsel %vm116, %v93, %v109
  %v130 = vsel %vm114, %v110, %v111
  %v131 = vsel %vm116, %v95, %v130
  %v132 = vsel %vm114, %v111, %v112
  %v133 = vsel %vm116, %v97, %v132
  %v134 = vsel %vm114, %v112, %v113
  %v135 = vsel %vm116, %v99, %v134
  %v136 = vsel %vm116, %v101, %v113
  %149 = vst [vmem:[#allocation2 + $0x60] sm:$0xff] %v117
  %150 = vst [vmem:[#allocation2 + $0x68] sm:$0xff] %v119
  %151 = vst [vmem:[#allocation2 + $0x70] sm:$0xff] %v121
  %152 = vst.msk [vmem:[#allocation2 + $0x78] sm:$0xff] %vm44, %v122
  %153 = vst [vmem:[#allocation2 + $0x80] sm:$0xff] %v124
  %154 = vst [vmem:[#allocation2 + $0x88] sm:$0xff] %v126
  %155 = vst [vmem:[#allocation2 + $0x90] sm:$0xff] %v128
  %156 = vst.msk [vmem:[#allocation2 + $0x98] sm:$0xff] %vm44, %v129
  %157 = vst [vmem:[#allocation2 + $0xa0] sm:$0xff] %v131
  %158 = vst [vmem:[#allocation2 + $0xa8] sm:$0xff] %v133
  %159 = vst [vmem:[#allocation2 + $0xb0] sm:$0xff] %v135
  %160 = vst.msk [vmem:[#allocation2 + $0xb8] sm:$0xff] %vm44, %v136
  %v161 = vld [vmem:[%s0] sm:$0xff]
  %v162 = vld [vmem:[%s0 + $0x8] sm:$0xff]
  %v163 = vld [vmem:[%s0 + $0x10] sm:$0xff]
  %v164 = vld [vmem:[%s0 + $0x18] sm:$0xff]
  %v165 = vld [vmem:[%s0 + $0x2c] sm:$0xff]
  %v166 = vld [vmem:[%s0 + $0x34] sm:$0xff]
  %v167 = vld [vmem:[%s0 + $0x3c] sm:$0xff]
  %v168 = vld [vmem:[%s0 + $0x44] sm:$0xff]
  %v169 = vld [vmem:[%s0 + $0x58] sm:$0xff]
  %v170 = vld [vmem:[%s0 + $0x60] sm:$0xff]
  %v171 = vld [vmem:[%s0 + $0x68] sm:$0xff]
  %v172 = vld [vmem:[%s0 + $0x70] sm:$0xff]
  %185 = vrot.lane.b32.xlu0 %v161, 96
  %v186 = vpop.permute.xlu0 %185
  %187 = vrot.lane.b32.xlu0 %v162, 96
  %v188 = vpop.permute.xlu0 %187
  %189 = vrot.lane.b32.xlu0 %v163, 96
  %v190 = vpop.permute.xlu0 %189
  %191 = vrot.lane.b32.xlu0 %v164, 96
  %v192 = vpop.permute.xlu0 %191
  %193 = vrot.lane.b32.xlu0 %v165, 96
  %v194 = vpop.permute.xlu0 %193
  %195 = vrot.lane.b32.xlu0 %v166, 96
  %v196 = vpop.permute.xlu0 %195
  %197 = vrot.lane.b32.xlu0 %v167, 96
  %v198 = vpop.permute.xlu0 %197
  %199 = vrot.lane.b32.xlu0 %v168, 96
  %v200 = vpop.permute.xlu0 %199
  %201 = vrot.lane.b32.xlu0 %v169, 96
  %v202 = vpop.permute.xlu0 %201
  %203 = vrot.lane.b32.xlu0 %v170, 96
  %v204 = vpop.permute.xlu0 %203
  %205 = vrot.lane.b32.xlu0 %v171, 96
  %v206 = vpop.permute.xlu0 %205
  %207 = vrot.lane.b32.xlu0 %v172, 96
  %v208 = vpop.permute.xlu0 %207
  %v209 = vrot.slane %v186, 4
  %v210 = vrot.slane %v188, 4
  %v211 = vrot.slane %v190, 4
  %v212 = vrot.slane %v192, 4
  %v213 = vrot.slane %v194, 4
  %v214 = vrot.slane %v196, 4
  %v215 = vrot.slane %v198, 4
  %v216 = vrot.slane %v200, 4
  %v217 = vrot.slane %v202, 4
  %v218 = vrot.slane %v204, 4
  %v219 = vrot.slane %v206, 4
  %v220 = vrot.slane %v208, 4
  %v221 = vsel %vm114, %v209, %v210
  %vm222 = vcmask 785408
  %v223 = vsel %vm222, %v186, %v221
  %v224 = vsel %vm114, %v210, %v211
  %v225 = vsel %vm222, %v188, %v224
  %v226 = vsel %vm114, %v211, %v212
  %v227 = vsel %vm222, %v190, %v226
  %v228 = vsel %vm222, %v192, %v212
  %v229 = vsel %vm114, %v213, %v214
  %v230 = vsel %vm222, %v194, %v229
  %v231 = vsel %vm114, %v214, %v215
  %v232 = vsel %vm222, %v196, %v231
  %v233 = vsel %vm114, %v215, %v216
  %v234 = vsel %vm222, %v198, %v233
  %v235 = vsel %vm222, %v200, %v216
  %v236 = vsel %vm114, %v217, %v218
  %v237 = vsel %vm222, %v202, %v236
  %v238 = vsel %vm114, %v218, %v219
  %v239 = vsel %vm222, %v204, %v238
  %v240 = vsel %vm114, %v219, %v220
  %v241 = vsel %vm222, %v206, %v240
  %v242 = vsel %vm222, %v208, %v220
  %255 = vst [vmem:[#allocation2 + $0xc0] sm:$0xff] %v223
  %256 = vst [vmem:[#allocation2 + $0xc8] sm:$0xff] %v225
  %257 = vst [vmem:[#allocation2 + $0xd0] sm:$0xff] %v227
  %258 = vst.msk [vmem:[#allocation2 + $0xd8] sm:$0xff] %vm44, %v228
  %259 = vst [vmem:[#allocation2 + $0xe0] sm:$0xff] %v230
  %260 = vst [vmem:[#allocation2 + $0xe8] sm:$0xff] %v232
  %261 = vst [vmem:[#allocation2 + $0xf0] sm:$0xff] %v234
  %262 = vst.msk [vmem:[#allocation2 + $0xf8] sm:$0xff] %vm44, %v235
  %263 = vst [vmem:[#allocation2 + $0x100] sm:$0xff] %v237
  %264 = vst [vmem:[#allocation2 + $0x108] sm:$0xff] %v239
  %265 = vst [vmem:[#allocation2 + $0x110] sm:$0xff] %v241
  %266 = vst.msk [vmem:[#allocation2 + $0x118] sm:$0xff] %vm44, %v242
  %v267 = vld [vmem:[%s0 + $0x4] sm:$0xff]
  %v268 = vld [vmem:[%s0 + $0xc] sm:$0xff]
  %v269 = vld [vmem:[%s0 + $0x14] sm:$0xff]
  %v270 = vld [vmem:[%s0 + $0x1c] sm:$0xff]
  %v271 = vld [vmem:[%s0 + $0x30] sm:$0xff]
  %v272 = vld [vmem:[%s0 + $0x38] sm:$0xff]
  %v273 = vld [vmem:[%s0 + $0x40] sm:$0xff]
  %v274 = vld [vmem:[%s0 + $0x48] sm:$0xff]
  %v275 = vld [vmem:[%s0 + $0x5c] sm:$0xff]
  %v276 = vld [vmem:[%s0 + $0x64] sm:$0xff]
  %v277 = vld [vmem:[%s0 + $0x6c] sm:$0xff]
  %v278 = vld [vmem:[%s0 + $0x74] sm:$0xff]
  %291 = vrot.lane.b32.xlu0 %v267, 112
  %v292 = vpop.permute.xlu0 %291
  %293 = vrot.lane.b32.xlu0 %v268, 112
  %v294 = vpop.permute.xlu0 %293
  %295 = vrot.lane.b32.xlu0 %v269, 112
  %v296 = vpop.permute.xlu0 %295
  %297 = vrot.lane.b32.xlu0 %v270, 112
  %v298 = vpop.permute.xlu0 %297
  %299 = vrot.lane.b32.xlu0 %v271, 112
  %v300 = vpop.permute.xlu0 %299
  %301 = vrot.lane.b32.xlu0 %v272, 112
  %v302 = vpop.permute.xlu0 %301
  %303 = vrot.lane.b32.xlu0 %v273, 112
  %v304 = vpop.permute.xlu0 %303
  %305 = vrot.lane.b32.xlu0 %v274, 112
  %v306 = vpop.permute.xlu0 %305
  %307 = vrot.lane.b32.xlu0 %v275, 112
  %v308 = vpop.permute.xlu0 %307
  %309 = vrot.lane.b32.xlu0 %v276, 112
  %v310 = vpop.permute.xlu0 %309
  %311 = vrot.lane.b32.xlu0 %v277, 112
  %v312 = vpop.permute.xlu0 %311
  %313 = vrot.lane.b32.xlu0 %v278, 112
  %v314 = vpop.permute.xlu0 %313
  %v315 = vrot.slane %v292, 4
  %v316 = vrot.slane %v294, 4
  %v317 = vrot.slane %v296, 4
  %v318 = vrot.slane %v298, 4
  %v319 = vrot.slane %v300, 4
  %v320 = vrot.slane %v302, 4
  %v321 = vrot.slane %v304, 4
  %v322 = vrot.slane %v306, 4
  %v323 = vrot.slane %v308, 4
  %v324 = vrot.slane %v310, 4
  %v325 = vrot.slane %v312, 4
  %v326 = vrot.slane %v314, 4
  %v327 = vsel %vm114, %v315, %v316
  %v328 = vsel %vm116, %v292, %v327
  %v329 = vsel %vm114, %v316, %v317
  %v330 = vsel %vm116, %v294, %v329
  %v331 = vsel %vm114, %v317, %v318
  %v332 = vsel %vm116, %v296, %v331
  %v333 = vsel %vm116, %v298, %v318
  %v334 = vsel %vm114, %v319, %v320
  %v335 = vsel %vm116, %v300, %v334
  %v336 = vsel %vm114, %v320, %v321
  %v337 = vsel %vm116, %v302, %v336
  %v338 = vsel %vm114, %v321, %v322
  %v339 = vsel %vm116, %v304, %v338
  %v340 = vsel %vm116, %v306, %v322
  %v341 = vsel %vm114, %v323, %v324
  %v342 = vsel %vm116, %v308, %v341
  %v343 = vsel %vm114, %v324, %v325
  %v344 = vsel %vm116, %v310, %v343
  %v345 = vsel %vm114, %v325, %v326
  %v346 = vsel %vm116, %v312, %v345
  %v347 = vsel %vm116, %v314, %v326
  %360 = vst [vmem:[#allocation2 + $0x120] sm:$0xff] %v328
  %361 = vst [vmem:[#allocation2 + $0x128] sm:$0xff] %v330
  %362 = vst [vmem:[#allocation2 + $0x130] sm:$0xff] %v332
  %363 = vst.msk [vmem:[#allocation2 + $0x138] sm:$0xff] %vm44, %v333
  %364 = vst [vmem:[#allocation2 + $0x140] sm:$0xff] %v335
  %365 = vst [vmem:[#allocation2 + $0x148] sm:$0xff] %v337
  %366 = vst [vmem:[#allocation2 + $0x150] sm:$0xff] %v339
  %367 = vst.msk [vmem:[#allocation2 + $0x158] sm:$0xff] %vm44, %v340
  %368 = vst [vmem:[#allocation2 + $0x160] sm:$0xff] %v342
  %369 = vst [vmem:[#allocation2 + $0x168] sm:$0xff] %v344
  %370 = vst [vmem:[#allocation2 + $0x170] sm:$0xff] %v346
  %371 = vst.msk [vmem:[#allocation2 + $0x178] sm:$0xff] %vm44, %v347
  %v372 = vld [vmem:[%s0 + $0x4] sm:$0xff]
  %v373 = vld [vmem:[%s0 + $0xc] sm:$0xff]
  %v374 = vld [vmem:[%s0 + $0x14] sm:$0xff]
  %v375 = vld [vmem:[%s0 + $0x1c] sm:$0xff]
  %v376 = vld [vmem:[%s0 + $0x30] sm:$0xff]
  %v377 = vld [vmem:[%s0 + $0x38] sm:$0xff]
  %v378 = vld [vmem:[%s0 + $0x40] sm:$0xff]
  %v379 = vld [vmem:[%s0 + $0x48] sm:$0xff]
  %v380 = vld [vmem:[%s0 + $0x5c] sm:$0xff]
  %v381 = vld [vmem:[%s0 + $0x64] sm:$0xff]
  %v382 = vld [vmem:[%s0 + $0x6c] sm:$0xff]
  %v383 = vld [vmem:[%s0 + $0x74] sm:$0xff]
  %396 = vrot.lane.b32.xlu0 %v372, 96
  %v397 = vpop.permute.xlu0 %396
  %398 = vrot.lane.b32.xlu0 %v373, 96
  %v399 = vpop.permute.xlu0 %398
  %400 = vrot.lane.b32.xlu0 %v374, 96
  %v401 = vpop.permute.xlu0 %400
  %402 = vrot.lane.b32.xlu0 %v375, 96
  %v403 = vpop.permute.xlu0 %402
  %404 = vrot.lane.b32.xlu0 %v376, 96
  %v405 = vpop.permute.xlu0 %404
  %406 = vrot.lane.b32.xlu0 %v377, 96
  %v407 = vpop.permute.xlu0 %406
  %408 = vrot.lane.b32.xlu0 %v378, 96
  %v409 = vpop.permute.xlu0 %408
  %410 = vrot.lane.b32.xlu0 %v379, 96
  %v411 = vpop.permute.xlu0 %410
  %412 = vrot.lane.b32.xlu0 %v380, 96
  %v413 = vpop.permute.xlu0 %412
  %414 = vrot.lane.b32.xlu0 %v381, 96
  %v415 = vpop.permute.xlu0 %414
  %416 = vrot.lane.b32.xlu0 %v382, 96
  %v417 = vpop.permute.xlu0 %416
  %418 = vrot.lane.b32.xlu0 %v383, 96
  %v419 = vpop.permute.xlu0 %418
  %v420 = vrot.slane %v397, 4
  %v421 = vrot.slane %v399, 4
  %v422 = vrot.slane %v401, 4
  %v423 = vrot.slane %v403, 4
  %v424 = vrot.slane %v405, 4
  %v425 = vrot.slane %v407, 4
  %v426 = vrot.slane %v409, 4
  %v427 = vrot.slane %v411, 4
  %v428 = vrot.slane %v413, 4
  %v429 = vrot.slane %v415, 4
  %v430 = vrot.slane %v417, 4
  %v431 = vrot.slane %v419, 4
  %v432 = vsel %vm114, %v420, %v421
  %v433 = vsel %vm222, %v397, %v432
  %v434 = vsel %vm114, %v421, %v422
  %v435 = vsel %vm222, %v399, %v434
  %v436 = vsel %vm114, %v422, %v423
  %v437 = vsel %vm222, %v401, %v436
  %v438 = vsel %vm222, %v403, %v423
  %v439 = vsel %vm114, %v424, %v425
  %v440 = vsel %vm222, %v405, %v439
  %v441 = vsel %vm114, %v425, %v426
  %v442 = vsel %vm222, %v407, %v441
  %v443 = vsel %vm114, %v426, %v427
  %v444 = vsel %vm222, %v409, %v443
  %v445 = vsel %vm222, %v411, %v427
  %v446 = vsel %vm114, %v428, %v429
  %v447 = vsel %vm222, %v413, %v446
  %v448 = vsel %vm114, %v429, %v430
  %v449 = vsel %vm222, %v415, %v448
  %v450 = vsel %vm114, %v430, %v431
  %v451 = vsel %vm222, %v417, %v450
  %v452 = vsel %vm222, %v419, %v431
  %465 = vst [vmem:[#allocation2 + $0x180] sm:$0xff] %v433
  %466 = vst [vmem:[#allocation2 + $0x188] sm:$0xff] %v435
  %467 = vst [vmem:[#allocation2 + $0x190] sm:$0xff] %v437
  %468 = vst.msk [vmem:[#allocation2 + $0x198] sm:$0xff] %vm44, %v438
  %469 = vst [vmem:[#allocation2 + $0x1a0] sm:$0xff] %v440
  %470 = vst [vmem:[#allocation2 + $0x1a8] sm:$0xff] %v442
  %471 = vst [vmem:[#allocation2 + $0x1b0] sm:$0xff] %v444
  %472 = vst.msk [vmem:[#allocation2 + $0x1b8] sm:$0xff] %vm44, %v445
  %473 = vst [vmem:[#allocation2 + $0x1c0] sm:$0xff] %v447
  %474 = vst [vmem:[#allocation2 + $0x1c8] sm:$0xff] %v449
  %475 = vst [vmem:[#allocation2 + $0x1d0] sm:$0xff] %v451
  %476 = vst.msk [vmem:[#allocation2 + $0x1d8] sm:$0xff] %vm44, %v452
  %v477 = vld [vmem:[%s0 + $0x4] sm:$0xff]
  %v478 = vld [vmem:[%s0 + $0xc] sm:$0xff]
  %v479 = vld [vmem:[%s0 + $0x14] sm:$0xff]
  %v480 = vld [vmem:[%s0 + $0x1c] sm:$0xff]
  %v481 = vld [vmem:[%s0 + $0x30] sm:$0xff]
  %v482 = vld [vmem:[%s0 + $0x38] sm:$0xff]
  %v483 = vld [vmem:[%s0 + $0x40] sm:$0xff]
  %v484 = vld [vmem:[%s0 + $0x48] sm:$0xff]
  %v485 = vld [vmem:[%s0 + $0x5c] sm:$0xff]
  %v486 = vld [vmem:[%s0 + $0x64] sm:$0xff]
  %v487 = vld [vmem:[%s0 + $0x6c] sm:$0xff]
  %v488 = vld [vmem:[%s0 + $0x74] sm:$0xff]
  %501 = vrot.lane.b32.xlu0 %v477, 80
  %v502 = vpop.permute.xlu0 %501
  %503 = vrot.lane.b32.xlu0 %v478, 80
  %v504 = vpop.permute.xlu0 %503
  %505 = vrot.lane.b32.xlu0 %v479, 80
  %v506 = vpop.permute.xlu0 %505
  %507 = vrot.lane.b32.xlu0 %v480, 80
  %v508 = vpop.permute.xlu0 %507
  %509 = vrot.lane.b32.xlu0 %v481, 80
  %v510 = vpop.permute.xlu0 %509
  %511 = vrot.lane.b32.xlu0 %v482, 80
  %v512 = vpop.permute.xlu0 %511
  %513 = vrot.lane.b32.xlu0 %v483, 80
  %v514 = vpop.permute.xlu0 %513
  %515 = vrot.lane.b32.xlu0 %v484, 80
  %v516 = vpop.permute.xlu0 %515
  %517 = vrot.lane.b32.xlu0 %v485, 80
  %v518 = vpop.permute.xlu0 %517
  %519 = vrot.lane.b32.xlu0 %v486, 80
  %v520 = vpop.permute.xlu0 %519
  %521 = vrot.lane.b32.xlu0 %v487, 80
  %v522 = vpop.permute.xlu0 %521
  %523 = vrot.lane.b32.xlu0 %v488, 80
  %v524 = vpop.permute.xlu0 %523
  %v525 = vrot.slane %v502, 4
  %v526 = vrot.slane %v504, 4
  %v527 = vrot.slane %v506, 4
  %v528 = vrot.slane %v508, 4
  %v529 = vrot.slane %v510, 4
  %v530 = vrot.slane %v512, 4
  %v531 = vrot.slane %v514, 4
  %v532 = vrot.slane %v516, 4
  %v533 = vrot.slane %v518, 4
  %v534 = vrot.slane %v520, 4
  %v535 = vrot.slane %v522, 4
  %v536 = vrot.slane %v524, 4
  %v537 = vsel %vm114, %v525, %v526
  %vm538 = vcmask 654336
  %v539 = vsel %vm538, %v502, %v537
  %v540 = vsel %vm114, %v526, %v527
  %v541 = vsel %vm538, %v504, %v540
  %v542 = vsel %vm114, %v527, %v528
  %v543 = vsel %vm538, %v506, %v542
  %v544 = vsel %vm538, %v508, %v528
  %v545 = vsel %vm114, %v529, %v530
  %v546 = vsel %vm538, %v510, %v545
  %v547 = vsel %vm114, %v530, %v531
  %v548 = vsel %vm538, %v512, %v547
  %v549 = vsel %vm114, %v531, %v532
  %v550 = vsel %vm538, %v514, %v549
  %v551 = vsel %vm538, %v516, %v532
  %v552 = vsel %vm114, %v533, %v534
  %v553 = vsel %vm538, %v518, %v552
  %v554 = vsel %vm114, %v534, %v535
  %v555 = vsel %vm538, %v520, %v554
  %v556 = vsel %vm114, %v535, %v536
  %v557 = vsel %vm538, %v522, %v556
  %v558 = vsel %vm538, %v524, %v536
  %571 = vst [vmem:[#allocation2 + $0x1e0] sm:$0xff] %v539
  %572 = vst [vmem:[#allocation2 + $0x1e8] sm:$0xff] %v541
  %573 = vst [vmem:[#allocation2 + $0x1f0] sm:$0xff] %v543
  %574 = vst.msk [vmem:[#allocation2 + $0x1f8] sm:$0xff] %vm44, %v544
  %575 = vst [vmem:[#allocation2 + $0x200] sm:$0xff] %v546
  %576 = vst [vmem:[#allocation2 + $0x208] sm:$0xff] %v548
  %577 = vst [vmem:[#allocation2 + $0x210] sm:$0xff] %v550
  %578 = vst.msk [vmem:[#allocation2 + $0x218] sm:$0xff] %vm44, %v551
  %579 = vst [vmem:[#allocation2 + $0x220] sm:$0xff] %v553
  %580 = vst [vmem:[#allocation2 + $0x228] sm:$0xff] %v555
  %581 = vst [vmem:[#allocation2 + $0x230] sm:$0xff] %v557
  %582 = vst.msk [vmem:[#allocation2 + $0x238] sm:$0xff] %vm44, %v558
  %v583 = vld [vmem:[%s0 + $0x8] sm:$0xff]
  %v584 = vld [vmem:[%s0 + $0x10] sm:$0xff]
  %v585 = vld [vmem:[%s0 + $0x18] sm:$0xff]
  %v586 = vld [vmem:[%s0 + $0x20] sm:$0xff]
  %v587 = vld [vmem:[%s0 + $0x34] sm:$0xff]
  %v588 = vld [vmem:[%s0 + $0x3c] sm:$0xff]
  %v589 = vld [vmem:[%s0 + $0x44] sm:$0xff]
  %v590 = vld [vmem:[%s0 + $0x4c] sm:$0xff]
  %v591 = vld [vmem:[%s0 + $0x60] sm:$0xff]
  %v592 = vld [vmem:[%s0 + $0x68] sm:$0xff]
  %v593 = vld [vmem:[%s0 + $0x70] sm:$0xff]
  %v594 = vld [vmem:[%s0 + $0x78] sm:$0xff]
  %607 = vrot.lane.b32.xlu0 %v583, 96
  %v608 = vpop.permute.xlu0 %607
  %609 = vrot.lane.b32.xlu0 %v584, 96
  %v610 = vpop.permute.xlu0 %609
  %611 = vrot.lane.b32.xlu0 %v585, 96
  %v612 = vpop.permute.xlu0 %611
  %613 = vrot.lane.b32.xlu0 %v586, 96
  %v614 = vpop.permute.xlu0 %613
  %615 = vrot.lane.b32.xlu0 %v587, 96
  %v616 = vpop.permute.xlu0 %615
  %617 = vrot.lane.b32.xlu0 %v588, 96
  %v618 = vpop.permute.xlu0 %617
  %619 = vrot.lane.b32.xlu0 %v589, 96
  %v620 = vpop.permute.xlu0 %619
  %621 = vrot.lane.b32.xlu0 %v590, 96
  %v622 = vpop.permute.xlu0 %621
  %623 = vrot.lane.b32.xlu0 %v591, 96
  %v624 = vpop.permute.xlu0 %623
  %625 = vrot.lane.b32.xlu0 %v592, 96
  %v626 = vpop.permute.xlu0 %625
  %627 = vrot.lane.b32.xlu0 %v593, 96
  %v628 = vpop.permute.xlu0 %627
  %629 = vrot.lane.b32.xlu0 %v594, 96
  %v630 = vpop.permute.xlu0 %629
  %v631 = vrot.slane %v608, 4
  %v632 = vrot.slane %v610, 4
  %v633 = vrot.slane %v612, 4
  %v634 = vrot.slane %v614, 4
  %v635 = vrot.slane %v616, 4
  %v636 = vrot.slane %v618, 4
  %v637 = vrot.slane %v620, 4
  %v638 = vrot.slane %v622, 4
  %v639 = vrot.slane %v624, 4
  %v640 = vrot.slane %v626, 4
  %v641 = vrot.slane %v628, 4
  %v642 = vrot.slane %v630, 4
  %v643 = vsel %vm114, %v631, %v632
  %v644 = vsel %vm222, %v608, %v643
  %v645 = vsel %vm114, %v632, %v633
  %v646 = vsel %vm222, %v610, %v645
  %v647 = vsel %vm114, %v633, %v634
  %v648 = vsel %vm222, %v612, %v647
  %v649 = vsel %vm222, %v614, %v634
  %v650 = vsel %vm114, %v635, %v636
  %v651 = vsel %vm222, %v616, %v650
  %v652 = vsel %vm114, %v636, %v637
  %v653 = vsel %vm222, %v618, %v652
  %v654 = vsel %vm114, %v637, %v638
  %v655 = vsel %vm222, %v620, %v654
  %v656 = vsel %vm222, %v622, %v638
  %v657 = vsel %vm114, %v639, %v640
  %v658 = vsel %vm222, %v624, %v657
  %v659 = vsel %vm114, %v640, %v641
  %v660 = vsel %vm222, %v626, %v659
  %v661 = vsel %vm114, %v641, %v642
  %v662 = vsel %vm222, %v628, %v661
  %v663 = vsel %vm222, %v630, %v642
  %676 = vst [vmem:[#allocation2 + $0x240] sm:$0xff] %v644
  %677 = vst [vmem:[#allocation2 + $0x248] sm:$0xff] %v646
  %678 = vst [vmem:[#allocation2 + $0x250] sm:$0xff] %v648
  %679 = vst.msk [vmem:[#allocation2 + $0x258] sm:$0xff] %vm44, %v649
  %680 = vst [vmem:[#allocation2 + $0x260] sm:$0xff] %v651
  %681 = vst [vmem:[#allocation2 + $0x268] sm:$0xff] %v653
  %682 = vst [vmem:[#allocation2 + $0x270] sm:$0xff] %v655
  %683 = vst.msk [vmem:[#allocation2 + $0x278] sm:$0xff] %vm44, %v656
  %684 = vst [vmem:[#allocation2 + $0x280] sm:$0xff] %v658
  %685 = vst [vmem:[#allocation2 + $0x288] sm:$0xff] %v660
  %686 = vst [vmem:[#allocation2 + $0x290] sm:$0xff] %v662
  %687 = vst.msk [vmem:[#allocation2 + $0x298] sm:$0xff] %vm44, %v663
  %v688 = vld [vmem:[%s0 + $0x8] sm:$0xff]
  %v689 = vld [vmem:[%s0 + $0x10] sm:$0xff]
  %v690 = vld [vmem:[%s0 + $0x18] sm:$0xff]
  %v691 = vld [vmem:[%s0 + $0x20] sm:$0xff]
  %v692 = vld [vmem:[%s0 + $0x34] sm:$0xff]
  %v693 = vld [vmem:[%s0 + $0x3c] sm:$0xff]
  %v694 = vld [vmem:[%s0 + $0x44] sm:$0xff]
  %v695 = vld [vmem:[%s0 + $0x4c] sm:$0xff]
  %v696 = vld [vmem:[%s0 + $0x60] sm:$0xff]
  %v697 = vld [vmem:[%s0 + $0x68] sm:$0xff]
  %v698 = vld [vmem:[%s0 + $0x70] sm:$0xff]
  %v699 = vld [vmem:[%s0 + $0x78] sm:$0xff]
  %712 = vrot.lane.b32.xlu0 %v688, 80
  %v713 = vpop.permute.xlu0 %712
  %714 = vrot.lane.b32.xlu0 %v689, 80
  %v715 = vpop.permute.xlu0 %714
  %716 = vrot.lane.b32.xlu0 %v690, 80
  %v717 = vpop.permute.xlu0 %716
  %718 = vrot.lane.b32.xlu0 %v691, 80
  %v719 = vpop.permute.xlu0 %718
  %720 = vrot.lane.b32.xlu0 %v692, 80
  %v721 = vpop.permute.xlu0 %720
  %722 = vrot.lane.b32.xlu0 %v693, 80
  %v723 = vpop.permute.xlu0 %722
  %724 = vrot.lane.b32.xlu0 %v694, 80
  %v725 = vpop.permute.xlu0 %724
  %726 = vrot.lane.b32.xlu0 %v695, 80
  %v727 = vpop.permute.xlu0 %726
  %728 = vrot.lane.b32.xlu0 %v696, 80
  %v729 = vpop.permute.xlu0 %728
  %730 = vrot.lane.b32.xlu0 %v697, 80
  %v731 = vpop.permute.xlu0 %730
  %732 = vrot.lane.b32.xlu0 %v698, 80
  %v733 = vpop.permute.xlu0 %732
  %734 = vrot.lane.b32.xlu0 %v699, 80
  %v735 = vpop.permute.xlu0 %734
  %v736 = vrot.slane %v713, 4
  %v737 = vrot.slane %v715, 4
  %v738 = vrot.slane %v717, 4
  %v739 = vrot.slane %v719, 4
  %v740 = vrot.slane %v721, 4
  %v741 = vrot.slane %v723, 4
  %v742 = vrot.slane %v725, 4
  %v743 = vrot.slane %v727, 4
  %v744 = vrot.slane %v729, 4
  %v745 = vrot.slane %v731, 4
  %v746 = vrot.slane %v733, 4
  %v747 = vrot.slane %v735, 4
  %v748 = vsel %vm114, %v736, %v737
  %v749 = vsel %vm538, %v713, %v748
  %v750 = vsel %vm114, %v737, %v738
  %v751 = vsel %vm538, %v715, %v750
  %v752 = vsel %vm114, %v738, %v739
  %v753 = vsel %vm538, %v717, %v752
  %v754 = vsel %vm538, %v719, %v739
  %v755 = vsel %vm114, %v740, %v741
  %v756 = vsel %vm538, %v721, %v755
  %v757 = vsel %vm114, %v741, %v742
  %v758 = vsel %vm538, %v723, %v757
  %v759 = vsel %vm114, %v742, %v743
  %v760 = vsel %vm538, %v725, %v759
  %v761 = vsel %vm538, %v727, %v743
  %v762 = vsel %vm114, %v744, %v745
  %v763 = vsel %vm538, %v729, %v762
  %v764 = vsel %vm114, %v745, %v746
  %v765 = vsel %vm538, %v731, %v764
  %v766 = vsel %vm114, %v746, %v747
  %v767 = vsel %vm538, %v733, %v766
  %v768 = vsel %vm538, %v735, %v747
  %781 = vst [vmem:[#allocation2 + $0x2a0] sm:$0xff] %v749
  %782 = vst [vmem:[#allocation2 + $0x2a8] sm:$0xff] %v751
  %783 = vst [vmem:[#allocation2 + $0x2b0] sm:$0xff] %v753
  %784 = vst.msk [vmem:[#allocation2 + $0x2b8] sm:$0xff] %vm44, %v754
  %785 = vst [vmem:[#allocation2 + $0x2c0] sm:$0xff] %v756
  %786 = vst [vmem:[#allocation2 + $0x2c8] sm:$0xff] %v758
  %787 = vst [vmem:[#allocation2 + $0x2d0] sm:$0xff] %v760
  %788 = vst.msk [vmem:[#allocation2 + $0x2d8] sm:$0xff] %vm44, %v761
  %789 = vst [vmem:[#allocation2 + $0x2e0] sm:$0xff] %v763
  %790 = vst [vmem:[#allocation2 + $0x2e8] sm:$0xff] %v765
  %791 = vst [vmem:[#allocation2 + $0x2f0] sm:$0xff] %v767
  %792 = vst.msk [vmem:[#allocation2 + $0x2f8] sm:$0xff] %vm44, %v768
  %v793 = vld [vmem:[%s0 + $0x8] sm:$0xff]
  %v794 = vld [vmem:[%s0 + $0x10] sm:$0xff]
  %v795 = vld [vmem:[%s0 + $0x18] sm:$0xff]
  %v796 = vld [vmem:[%s0 + $0x20] sm:$0xff]
  %v797 = vld [vmem:[%s0 + $0x28] sm:$0xf]
  %v798 = vld [vmem:[%s0 + $0x34] sm:$0xff]
  %v799 = vld [vmem:[%s0 + $0x3c] sm:$0xff]
  %v800 = vld [vmem:[%s0 + $0x44] sm:$0xff]
  %v801 = vld [vmem:[%s0 + $0x4c] sm:$0xff]
  %v802 = vld [vmem:[%s0 + $0x54] sm:$0xf]
  %v803 = vld [vmem:[%s0 + $0x60] sm:$0xff]
  %v804 = vld [vmem:[%s0 + $0x68] sm:$0xff]
  %v805 = vld [vmem:[%s0 + $0x70] sm:$0xff]
  %v806 = vld [vmem:[%s0 + $0x78] sm:$0xff]
  %v807 = vld [vmem:[%s0 + $0x80] sm:$0xf]
  %823 = vrot.lane.b32.xlu0 %v793, 64
  %v824 = vpop.permute.xlu0 %823
  %825 = vrot.lane.b32.xlu0 %v794, 64
  %v826 = vpop.permute.xlu0 %825
  %827 = vrot.lane.b32.xlu0 %v795, 64
  %v828 = vpop.permute.xlu0 %827
  %829 = vrot.lane.b32.xlu0 %v796, 64
  %v830 = vpop.permute.xlu0 %829
  %831 = vrot.lane.b32.xlu0 %v797, 64
  %v832 = vpop.permute.xlu0 %831
  %833 = vrot.lane.b32.xlu0 %v798, 64
  %v834 = vpop.permute.xlu0 %833
  %835 = vrot.lane.b32.xlu0 %v799, 64
  %v836 = vpop.permute.xlu0 %835
  %837 = vrot.lane.b32.xlu0 %v800, 64
  %v838 = vpop.permute.xlu0 %837
  %839 = vrot.lane.b32.xlu0 %v801, 64
  %v840 = vpop.permute.xlu0 %839
  %841 = vrot.lane.b32.xlu0 %v802, 64
  %v842 = vpop.permute.xlu0 %841
  %843 = vrot.lane.b32.xlu0 %v803, 64
  %v844 = vpop.permute.xlu0 %843
  %845 = vrot.lane.b32.xlu0 %v804, 64
  %v846 = vpop.permute.xlu0 %845
  %847 = vrot.lane.b32.xlu0 %v805, 64
  %v848 = vpop.permute.xlu0 %847
  %849 = vrot.lane.b32.xlu0 %v806, 64
  %v850 = vpop.permute.xlu0 %849
  %851 = vrot.lane.b32.xlu0 %v807, 64
  %v852 = vpop.permute.xlu0 %851
  %v853 = vrot.slane %v824, 4
  %v854 = vrot.slane %v826, 4
  %v855 = vrot.slane %v828, 4
  %v856 = vrot.slane %v830, 4
  %v857 = vrot.slane %v832, 4
  %v858 = vrot.slane %v834, 4
  %v859 = vrot.slane %v836, 4
  %v860 = vrot.slane %v838, 4
  %v861 = vrot.slane %v840, 4
  %v862 = vrot.slane %v842, 4
  %v863 = vrot.slane %v844, 4
  %v864 = vrot.slane %v846, 4
  %v865 = vrot.slane %v848, 4
  %v866 = vrot.slane %v850, 4
  %v867 = vrot.slane %v852, 4
  %v868 = vsel %vm114, %v853, %v854
  %vm869 = vcmask 523264
  %v870 = vsel %vm869, %v824, %v868
  %v871 = vsel %vm114, %v854, %v855
  %v872 = vsel %vm869, %v826, %v871
  %v873 = vsel %vm114, %v855, %v856
  %v874 = vsel %vm869, %v828, %v873
  %v875 = vsel %vm114, %v856, %v857
  %v876 = vsel %vm869, %v830, %v875
  %v877 = vsel %vm114, %v858, %v859
  %v878 = vsel %vm869, %v834, %v877
  %v879 = vsel %vm114, %v859, %v860
  %v880 = vsel %vm869, %v836, %v879
  %v881 = vsel %vm114, %v860, %v861
  %v882 = vsel %vm869, %v838, %v881
  %v883 = vsel %vm114, %v861, %v862
  %v884 = vsel %vm869, %v840, %v883
  %v885 = vsel %vm114, %v863, %v864
  %v886 = vsel %vm869, %v844, %v885
  %v887 = vsel %vm114, %v864, %v865
  %v888 = vsel %vm869, %v846, %v887
  %v889 = vsel %vm114, %v865, %v866
  %v890 = vsel %vm869, %v848, %v889
  %v891 = vsel %vm114, %v866, %v867
  %v892 = vsel %vm869, %v850, %v891
  %905 = vst [vmem:[#allocation2 + $0x300] sm:$0xff] %v870
  %906 = vst [vmem:[#allocation2 + $0x308] sm:$0xff] %v872
  %907 = vst [vmem:[#allocation2 + $0x310] sm:$0xff] %v874
  %908 = vst.msk [vmem:[#allocation2 + $0x318] sm:$0xff] %vm44, %v876
  %909 = vst [vmem:[#allocation2 + $0x320] sm:$0xff] %v878
  %910 = vst [vmem:[#allocation2 + $0x328] sm:$0xff] %v880
  %911 = vst [vmem:[#allocation2 + $0x330] sm:$0xff] %v882
  %912 = vst.msk [vmem:[#allocation2 + $0x338] sm:$0xff] %vm44, %v884
  %913 = vst [vmem:[#allocation2 + $0x340] sm:$0xff] %v886
  %914 = vst [vmem:[#allocation2 + $0x348] sm:$0xff] %v888
  %915 = vst [vmem:[#allocation2 + $0x350] sm:$0xff] %v890
  %916 = vst.msk [vmem:[#allocation2 + $0x358] sm:$0xff] %vm44, %v892
  %v917 = vld [vmem:[%s1] sm:$0xff]
  %v918 = vld [vmem:[%s1 + $0x8] sm:$0x33]
  %v919 = vld [vmem:[#allocation2] sm:$0xff]
  %v920 = vld [vmem:[#allocation2 + $0x8] sm:$0xff]
  %v921 = vld [vmem:[#allocation2 + $0x10] sm:$0xff]
  %v922 = vld [vmem:[#allocation2 + $0x18] sm:$0xff]
  %v923 = vld [vmem:[#allocation2 + $0x20] sm:$0xff]
  %v924 = vld [vmem:[#allocation2 + $0x28] sm:$0xff]
  %v925 = vld [vmem:[#allocation2 + $0x30] sm:$0xff]
  %v926 = vld [vmem:[#allocation2 + $0x38] sm:$0xff]
  %v927 = vld [vmem:[#allocation2 + $0x40] sm:$0xff]
  %v928 = vld [vmem:[#allocation2 + $0x48] sm:$0xff]
  %v929 = vld [vmem:[#allocation2 + $0x50] sm:$0xff]
  %v930 = vld [vmem:[#allocation2 + $0x58] sm:$0xff]
  %v931 = vld [vmem:[#allocation2 + $0x60] sm:$0xff]
  %v932 = vld [vmem:[#allocation2 + $0x68] sm:$0xff]
  %v933 = vld [vmem:[#allocation2 + $0x70] sm:$0xff]
  %v934 = vld [vmem:[#allocation2 + $0x78] sm:$0xff]
  %v935 = vld [vmem:[#allocation2 + $0x80] sm:$0xff]
  %v936 = vld [vmem:[#allocation2 + $0x88] sm:$0xff]
  %v937 = vld [vmem:[#allocation2 + $0x90] sm:$0xff]
  %v938 = vld [vmem:[#allocation2 + $0x98] sm:$0xff]
  %v939 = vld [vmem:[#allocation2 + $0xa0] sm:$0xff]
  %v940 = vld [vmem:[#allocation2 + $0xa8] sm:$0xff]
  %v941 = vld [vmem:[#allocation2 + $0xb0] sm:$0xff]
  %v942 = vld [vmem:[#allocation2 + $0xb8] sm:$0xff]
  %v943 = vld [vmem:[#allocation2 + $0xc0] sm:$0xff]
  %v944 = vld [vmem:[#allocation2 + $0xc8] sm:$0xff]
  %v945 = vld [vmem:[#allocation2 + $0xd0] sm:$0xff]
  %v946 = vld [vmem:[#allocation2 + $0xd8] sm:$0xff]
  %v947 = vld [vmem:[#allocation2 + $0xe0] sm:$0xff]
  %v948 = vld [vmem:[#allocation2 + $0xe8] sm:$0xff]
  %v949 = vld [vmem:[#allocation2 + $0xf0] sm:$0xff]
  %v950 = vld [vmem:[#allocation2 + $0xf8] sm:$0xff]
  %v951 = vld [vmem:[#allocation2 + $0x100] sm:$0xff]
  %v952 = vld [vmem:[#allocation2 + $0x108] sm:$0xff]
  %v953 = vld [vmem:[#allocation2 + $0x110] sm:$0xff]
  %v954 = vld [vmem:[#allocation2 + $0x118] sm:$0xff]
  %v955 = vld [vmem:[#allocation2 + $0x120] sm:$0xff]
  %v956 = vld [vmem:[#allocation2 + $0x128] sm:$0xff]
  %v957 = vld [vmem:[#allocation2 + $0x130] sm:$0xff]
  %v958 = vld [vmem:[#allocation2 + $0x138] sm:$0xff]
  %v959 = vld [vmem:[#allocation2 + $0x140] sm:$0xff]
  %v960 = vld [vmem:[#allocation2 + $0x148] sm:$0xff]
  %v961 = vld [vmem:[#allocation2 + $0x150] sm:$0xff]
  %v962 = vld [vmem:[#allocation2 + $0x158] sm:$0xff]
  %v963 = vld [vmem:[#allocation2 + $0x160] sm:$0xff]
  %v964 = vld [vmem:[#allocation2 + $0x168] sm:$0xff]
  %v965 = vld [vmem:[#allocation2 + $0x170] sm:$0xff]
  %v966 = vld [vmem:[#allocation2 + $0x178] sm:$0xff]
  %v967 = vld [vmem:[#allocation2 + $0x180] sm:$0xff]
  %v968 = vld [vmem:[#allocation2 + $0x188] sm:$0xff]
  %v969 = vld [vmem:[#allocation2 + $0x190] sm:$0xff]
  %v970 = vld [vmem:[#allocation2 + $0x198] sm:$0xff]
  %v971 = vld [vmem:[#allocation2 + $0x1a0] sm:$0xff]
  %v972 = vld [vmem:[#allocation2 + $0x1a8] sm:$0xff]
  %v973 = vld [vmem:[#allocation2 + $0x1b0] sm:$0xff]
  %v974 = vld [vmem:[#allocation2 + $0x1b8] sm:$0xff]
  %v975 = vld [vmem:[#allocation2 + $0x1c0] sm:$0xff]
  %v976 = vld [vmem:[#allocation2 + $0x1c8] sm:$0xff]
  %v977 = vld [vmem:[#allocation2 + $0x1d0] sm:$0xff]
  %v978 = vld [vmem:[#allocation2 + $0x1d8] sm:$0xff]
  %v979 = vld [vmem:[#allocation2 + $0x1e0] sm:$0xff]
  %v980 = vld [vmem:[#allocation2 + $0x1e8] sm:$0xff]
  %v981 = vld [vmem:[#allocation2 + $0x1f0] sm:$0xff]
  %v982 = vld [vmem:[#allocation2 + $0x1f8] sm:$0xff]
  %v983 = vld [vmem:[#allocation2 + $0x200] sm:$0xff]
  %v984 = vld [vmem:[#allocation2 + $0x208] sm:$0xff]
  %v985 = vld [vmem:[#allocation2 + $0x210] sm:$0xff]
  %v986 = vld [vmem:[#allocation2 + $0x218] sm:$0xff]
  %v987 = vld [vmem:[#allocation2 + $0x220] sm:$0xff]
  %v988 = vld [vmem:[#allocation2 + $0x228] sm:$0xff]
  %v989 = vld [vmem:[#allocation2 + $0x230] sm:$0xff]
  %v990 = vld [vmem:[#allocation2 + $0x238] sm:$0xff]
  %v991 = vld [vmem:[#allocation2 + $0x240] sm:$0xff]
  %v992 = vld [vmem:[#allocation2 + $0x248] sm:$0xff]
  %v993 = vld [vmem:[#allocation2 + $0x250] sm:$0xff]
  %v994 = vld [vmem:[#allocation2 + $0x258] sm:$0xff]
  %v995 = vld [vmem:[#allocation2 + $0x260] sm:$0xff]
  %v996 = vld [vmem:[#allocation2 + $0x268] sm:$0xff]
  %v997 = vld [vmem:[#allocation2 + $0x270] sm:$0xff]
  %v998 = vld [vmem:[#allocation2 + $0x278] sm:$0xff]
  %v999 = vld [vmem:[#allocation2 + $0x280] sm:$0xff]
  %v1000 = vld [vmem:[#allocation2 + $0x288] sm:$0xff]
  %v1001 = vld [vmem:[#allocation2 + $0x290] sm:$0xff]
  %v1002 = vld [vmem:[#allocation2 + $0x298] sm:$0xff]
  %v1003 = vld [vmem:[#allocation2 + $0x2a0] sm:$0xff]
  %v1004 = vld [vmem:[#allocation2 + $0x2a8] sm:$0xff]
  %v1005 = vld [vmem:[#allocation2 + $0x2b0] sm:$0xff]
  %v1006 = vld [vmem:[#allocation2 + $0x2b8] sm:$0xff]
  %v1007 = vld [vmem:[#allocation2 + $0x2c0] sm:$0xff]
  %v1008 = vld [vmem:[#allocation2 + $0x2c8] sm:$0xff]
  %v1009 = vld [vmem:[#allocation2 + $0x2d0] sm:$0xff]
  %v1010 = vld [vmem:[#allocation2 + $0x2d8] sm:$0xff]
  %v1011 = vld [vmem:[#allocation2 + $0x2e0] sm:$0xff]
  %v1012 = vld [vmem:[#allocation2 + $0x2e8] sm:$0xff]
  %v1013 = vld [vmem:[#allocation2 + $0x2f0] sm:$0xff]
  %v1014 = vld [vmem:[#allocation2 + $0x2f8] sm:$0xff]
  %v1015 = vld [vmem:[#allocation2 + $0x300] sm:$0xff]
  %v1016 = vld [vmem:[#allocation2 + $0x308] sm:$0xff]
  %v1017 = vld [vmem:[#allocation2 + $0x310] sm:$0xff]
  %v1018 = vld [vmem:[#allocation2 + $0x318] sm:$0xff]
  %v1019 = vld [vmem:[#allocation2 + $0x320] sm:$0xff]
  %v1020 = vld [vmem:[#allocation2 + $0x328] sm:$0xff]
  %v1021 = vld [vmem:[#allocation2 + $0x330] sm:$0xff]
  %v1022 = vld [vmem:[#allocation2 + $0x338] sm:$0xff]
  %v1023 = vld [vmem:[#allocation2 + $0x340] sm:$0xff]
  %v1024 = vld [vmem:[#allocation2 + $0x348] sm:$0xff]
  %v1025 = vld [vmem:[#allocation2 + $0x350] sm:$0xff]
  %v1026 = vld [vmem:[#allocation2 + $0x358] sm:$0xff]
  %v1027 = vld [vmem:[%s2] sm:$0xff]
  %v1028 = vld [vmem:[%s2 + $0x8] sm:$0xf]
  %1030 = vset.pattern.permute.xlu0 0
  %1031 = vperm.xlu0 %1030, %v1027
  %v1032 = vpop.permute.xlu0 %1031
  %1035 = vset.pattern.permute.xlu0 0
  %1036 = vperm.xlu0 %1035, %v1028
  %v1037 = vpop.permute.xlu0 %1036
  %v1041 = vunpack.c.l.b16 %v917
  %v1042 = vunpack.c.h.b16 %v917
  %v1043 = vunpack.c.l.b16 %v918
  %v1044 = vunpack.c.h.b16 %v918
  %v1045 = vpack.c.b16 %v1043, %v1041
  %v1046 = vpack.c.b16 %v1044, %v1042
  %v1156 = vunpack.c.l.b16 %v919
  %v1157 = vunpack.c.h.b16 %v919
  %v1158 = vunpack.c.l.b16 %v920
  %v1159 = vunpack.c.h.b16 %v920
  %v1160 = vunpack.c.l.b16 %v921
  %v1161 = vunpack.c.h.b16 %v921
  %v1162 = vunpack.c.l.b16 %v922
  %v1163 = vunpack.c.h.b16 %v922
  %v1164 = vunpack.c.l.b16 %v923
  %v1165 = vunpack.c.h.b16 %v923
  %v1166 = vunpack.c.l.b16 %v924
  %v1167 = vunpack.c.h.b16 %v924
  %v1168 = vunpack.c.l.b16 %v925
  %v1169 = vunpack.c.h.b16 %v925
  %v1170 = vunpack.c.l.b16 %v926
  %v1171 = vunpack.c.h.b16 %v926
  %v1172 = vunpack.c.l.b16 %v927
  %v1173 = vunpack.c.h.b16 %v927
  %v1174 = vunpack.c.l.b16 %v928
  %v1175 = vunpack.c.h.b16 %v928
  %v1176 = vunpack.c.l.b16 %v929
  %v1177 = vunpack.c.h.b16 %v929
  %v1178 = vunpack.c.l.b16 %v930
  %v1179 = vunpack.c.h.b16 %v930
  %v1180 = vunpack.c.l.b16 %v931
  %v1181 = vunpack.c.h.b16 %v931
  %v1182 = vunpack.c.l.b16 %v932
  %v1183 = vunpack.c.h.b16 %v932
  %v1184 = vunpack.c.l.b16 %v933
  %v1185 = vunpack.c.h.b16 %v933
  %v1186 = vunpack.c.l.b16 %v934
  %v1187 = vunpack.c.h.b16 %v934
  %v1188 = vunpack.c.l.b16 %v935
  %v1189 = vunpack.c.h.b16 %v935
  %v1190 = vunpack.c.l.b16 %v936
  %v1191 = vunpack.c.h.b16 %v936
  %v1192 = vunpack.c.l.b16 %v937
  %v1193 = vunpack.c.h.b16 %v937
  %v1194 = vunpack.c.l.b16 %v938
  %v1195 = vunpack.c.h.b16 %v938
  %v1196 = vunpack.c.l.b16 %v939
  %v1197 = vunpack.c.h.b16 %v939
  %v1198 = vunpack.c.l.b16 %v940
  %v1199 = vunpack.c.h.b16 %v940
  %v1200 = vunpack.c.l.b16 %v941
  %v1201 = vunpack.c.h.b16 %v941
  %v1202 = vunpack.c.l.b16 %v942
  %v1203 = vunpack.c.h.b16 %v942
  %v1204 = vunpack.c.l.b16 %v943
  %v1205 = vunpack.c.h.b16 %v943
  %v1206 = vunpack.c.l.b16 %v944
  %v1207 = vunpack.c.h.b16 %v944
  %v1208 = vunpack.c.l.b16 %v945
  %v1209 = vunpack.c.h.b16 %v945
  %v1210 = vunpack.c.l.b16 %v946
  %v1211 = vunpack.c.h.b16 %v946
  %v1212 = vunpack.c.l.b16 %v947
  %v1213 = vunpack.c.h.b16 %v947
  %v1214 = vunpack.c.l.b16 %v948
  %v1215 = vunpack.c.h.b16 %v948
  %v1216 = vunpack.c.l.b16 %v949
  %v1217 = vunpack.c.h.b16 %v949
  %v1218 = vunpack.c.l.b16 %v950
  %v1219 = vunpack.c.h.b16 %v950
  %v1220 = vunpack.c.l.b16 %v951
  %v1221 = vunpack.c.h.b16 %v951
  %v1222 = vunpack.c.l.b16 %v952
  %v1223 = vunpack.c.h.b16 %v952
  %v1224 = vunpack.c.l.b16 %v953
  %v1225 = vunpack.c.h.b16 %v953
  %v1226 = vunpack.c.l.b16 %v954
  %v1227 = vunpack.c.h.b16 %v954
  %v1228 = vunpack.c.l.b16 %v955
  %v1229 = vunpack.c.h.b16 %v955
  %v1230 = vunpack.c.l.b16 %v956
  %v1231 = vunpack.c.h.b16 %v956
  %v1232 = vunpack.c.l.b16 %v957
  %v1233 = vunpack.c.h.b16 %v957
  %v1234 = vunpack.c.l.b16 %v958
  %v1235 = vunpack.c.h.b16 %v958
  %v1236 = vunpack.c.l.b16 %v959
  %v1237 = vunpack.c.h.b16 %v959
  %v1238 = vunpack.c.l.b16 %v960
  %v1239 = vunpack.c.h.b16 %v960
  %v1240 = vunpack.c.l.b16 %v961
  %v1241 = vunpack.c.h.b16 %v961
  %v1242 = vunpack.c.l.b16 %v962
  %v1243 = vunpack.c.h.b16 %v962
  %v1244 = vunpack.c.l.b16 %v963
  %v1245 = vunpack.c.h.b16 %v963
  %v1246 = vunpack.c.l.b16 %v964
  %v1247 = vunpack.c.h.b16 %v964
  %v1248 = vunpack.c.l.b16 %v965
  %v1249 = vunpack.c.h.b16 %v965
  %v1250 = vunpack.c.l.b16 %v966
  %v1251 = vunpack.c.h.b16 %v966
  %v1252 = vunpack.c.l.b16 %v967
  %v1253 = vunpack.c.h.b16 %v967
  %v1254 = vunpack.c.l.b16 %v968
  %v1255 = vunpack.c.h.b16 %v968
  %v1256 = vunpack.c.l.b16 %v969
  %v1257 = vunpack.c.h.b16 %v969
  %v1258 = vunpack.c.l.b16 %v970
  %v1259 = vunpack.c.h.b16 %v970
  %v1260 = vunpack.c.l.b16 %v971
  %v1261 = vunpack.c.h.b16 %v971
  %v1262 = vunpack.c.l.b16 %v972
  %v1263 = vunpack.c.h.b16 %v972
  %v1264 = vunpack.c.l.b16 %v973
  %v1265 = vunpack.c.h.b16 %v973
  %v1266 = vunpack.c.l.b16 %v974
  %v1267 = vunpack.c.h.b16 %v974
  %v1268 = vunpack.c.l.b16 %v975
  %v1269 = vunpack.c.h.b16 %v975
  %v1270 = vunpack.c.l.b16 %v976
  %v1271 = vunpack.c.h.b16 %v976
  %v1272 = vunpack.c.l.b16 %v977
  %v1273 = vunpack.c.h.b16 %v977
  %v1274 = vunpack.c.l.b16 %v978
  %v1275 = vunpack.c.h.b16 %v978
  %v1276 = vunpack.c.l.b16 %v979
  %v1277 = vunpack.c.h.b16 %v979
  %v1278 = vunpack.c.l.b16 %v980
  %v1279 = vunpack.c.h.b16 %v980
  %v1280 = vunpack.c.l.b16 %v981
  %v1281 = vunpack.c.h.b16 %v981
  %v1282 = vunpack.c.l.b16 %v982
  %v1283 = vunpack.c.h.b16 %v982
  %v1284 = vunpack.c.l.b16 %v983
  %v1285 = vunpack.c.h.b16 %v983
  %v1286 = vunpack.c.l.b16 %v984
  %v1287 = vunpack.c.h.b16 %v984
  %v1288 = vunpack.c.l.b16 %v985
  %v1289 = vunpack.c.h.b16 %v985
  %v1290 = vunpack.c.l.b16 %v986
  %v1291 = vunpack.c.h.b16 %v986
  %v1292 = vunpack.c.l.b16 %v987
  %v1293 = vunpack.c.h.b16 %v987
  %v1294 = vunpack.c.l.b16 %v988
  %v1295 = vunpack.c.h.b16 %v988
  %v1296 = vunpack.c.l.b16 %v989
  %v1297 = vunpack.c.h.b16 %v989
  %v1298 = vunpack.c.l.b16 %v990
  %v1299 = vunpack.c.h.b16 %v990
  %v1300 = vunpack.c.l.b16 %v991
  %v1301 = vunpack.c.h.b16 %v991
  %v1302 = vunpack.c.l.b16 %v992
  %v1303 = vunpack.c.h.b16 %v992
  %v1304 = vunpack.c.l.b16 %v993
  %v1305 = vunpack.c.h.b16 %v993
  %v1306 = vunpack.c.l.b16 %v994
  %v1307 = vunpack.c.h.b16 %v994
  %v1308 = vunpack.c.l.b16 %v995
  %v1309 = vunpack.c.h.b16 %v995
  %v1310 = vunpack.c.l.b16 %v996
  %v1311 = vunpack.c.h.b16 %v996
  %v1312 = vunpack.c.l.b16 %v997
  %v1313 = vunpack.c.h.b16 %v997
  %v1314 = vunpack.c.l.b16 %v998
  %v1315 = vunpack.c.h.b16 %v998
  %v1316 = vunpack.c.l.b16 %v999
  %v1317 = vunpack.c.h.b16 %v999
  %v1318 = vunpack.c.l.b16 %v1000
  %v1319 = vunpack.c.h.b16 %v1000
  %v1320 = vunpack.c.l.b16 %v1001
  %v1321 = vunpack.c.h.b16 %v1001
  %v1322 = vunpack.c.l.b16 %v1002
  %v1323 = vunpack.c.h.b16 %v1002
  %v1324 = vunpack.c.l.b16 %v1003
  %v1325 = vunpack.c.h.b16 %v1003
  %v1326 = vunpack.c.l.b16 %v1004
  %v1327 = vunpack.c.h.b16 %v1004
  %v1328 = vunpack.c.l.b16 %v1005
  %v1329 = vunpack.c.h.b16 %v1005
  %v1330 = vunpack.c.l.b16 %v1006
  %v1331 = vunpack.c.h.b16 %v1006
  %v1332 = vunpack.c.l.b16 %v1007
  %v1333 = vunpack.c.h.b16 %v1007
  %v1334 = vunpack.c.l.b16 %v1008
  %v1335 = vunpack.c.h.b16 %v1008
  %v1336 = vunpack.c.l.b16 %v1009
  %v1337 = vunpack.c.h.b16 %v1009
  %v1338 = vunpack.c.l.b16 %v1010
  %v1339 = vunpack.c.h.b16 %v1010
  %v1340 = vunpack.c.l.b16 %v1011
  %v1341 = vunpack.c.h.b16 %v1011
  %v1342 = vunpack.c.l.b16 %v1012
  %v1343 = vunpack.c.h.b16 %v1012
  %v1344 = vunpack.c.l.b16 %v1013
  %v1345 = vunpack.c.h.b16 %v1013
  %v1346 = vunpack.c.l.b16 %v1014
  %v1347 = vunpack.c.h.b16 %v1014
  %v1348 = vunpack.c.l.b16 %v1015
  %v1349 = vunpack.c.h.b16 %v1015
  %v1350 = vunpack.c.l.b16 %v1016
  %v1351 = vunpack.c.h.b16 %v1016
  %v1352 = vunpack.c.l.b16 %v1017
  %v1353 = vunpack.c.h.b16 %v1017
  %v1354 = vunpack.c.l.b16 %v1018
  %v1355 = vunpack.c.h.b16 %v1018
  %v1356 = vunpack.c.l.b16 %v1019
  %v1357 = vunpack.c.h.b16 %v1019
  %v1358 = vunpack.c.l.b16 %v1020
  %v1359 = vunpack.c.h.b16 %v1020
  %v1360 = vunpack.c.l.b16 %v1021
  %v1361 = vunpack.c.h.b16 %v1021
  %v1362 = vunpack.c.l.b16 %v1022
  %v1363 = vunpack.c.h.b16 %v1022
  %v1364 = vunpack.c.l.b16 %v1023
  %v1365 = vunpack.c.h.b16 %v1023
  %v1366 = vunpack.c.l.b16 %v1024
  %v1367 = vunpack.c.h.b16 %v1024
  %v1368 = vunpack.c.l.b16 %v1025
  %v1369 = vunpack.c.h.b16 %v1025
  %v1370 = vunpack.c.l.b16 %v1026
  %v1371 = vunpack.c.h.b16 %v1026
  %v1372 = vpack.c.b16 %v1164, %v1156
  %v1373 = vpack.c.b16 %v1165, %v1157
  %v1374 = vpack.c.b16 %v1166, %v1158
  %v1375 = vpack.c.b16 %v1167, %v1159
  %v1376 = vpack.c.b16 %v1168, %v1160
  %v1377 = vpack.c.b16 %v1169, %v1161
  %v1378 = vpack.c.b16 %v1170, %v1162
  %v1379 = vpack.c.b16 %v1171, %v1163
  %v1380 = vpack.c.b16 %v1180, %v1172
  %v1381 = vpack.c.b16 %v1181, %v1173
  %v1382 = vpack.c.b16 %v1182, %v1174
  %v1383 = vpack.c.b16 %v1183, %v1175
  %v1384 = vpack.c.b16 %v1184, %v1176
  %v1385 = vpack.c.b16 %v1185, %v1177
  %v1386 = vpack.c.b16 %v1186, %v1178
  %v1387 = vpack.c.b16 %v1187, %v1179
  %v1388 = vpack.c.b16 %v1196, %v1188
  %v1389 = vpack.c.b16 %v1197, %v1189
  %v1390 = vpack.c.b16 %v1198, %v1190
  %v1391 = vpack.c.b16 %v1199, %v1191
  %v1392 = vpack.c.b16 %v1200, %v1192
  %v1393 = vpack.c.b16 %v1201, %v1193
  %v1394 = vpack.c.b16 %v1202, %v1194
  %v1395 = vpack.c.b16 %v1203, %v1195
  %v1396 = vpack.c.b16 %v1212, %v1204
  %v1397 = vpack.c.b16 %v1213, %v1205
  %v1398 = vpack.c.b16 %v1214, %v1206
  %v1399 = vpack.c.b16 %v1215, %v1207
  %v1400 = vpack.c.b16 %v1216, %v1208
  %v1401 = vpack.c.b16 %v1217, %v1209
  %v1402 = vpack.c.b16 %v1218, %v1210
  %v1403 = vpack.c.b16 %v1219, %v1211
  %v1404 = vpack.c.b16 %v1228, %v1220
  %v1405 = vpack.c.b16 %v1229, %v1221
  %v1406 = vpack.c.b16 %v1230, %v1222
  %v1407 = vpack.c.b16 %v1231, %v1223
  %v1408 = vpack.c.b16 %v1232, %v1224
  %v1409 = vpack.c.b16 %v1233, %v1225
  %v1410 = vpack.c.b16 %v1234, %v1226
  %v1411 = vpack.c.b16 %v1235, %v1227
  %v1412 = vpack.c.b16 %v1244, %v1236
  %v1413 = vpack.c.b16 %v1245, %v1237
  %v1414 = vpack.c.b16 %v1246, %v1238
  %v1415 = vpack.c.b16 %v1247, %v1239
  %v1416 = vpack.c.b16 %v1248, %v1240
  %v1417 = vpack.c.b16 %v1249, %v1241
  %v1418 = vpack.c.b16 %v1250, %v1242
  %v1419 = vpack.c.b16 %v1251, %v1243
  %v1420 = vpack.c.b16 %v1260, %v1252
  %v1421 = vpack.c.b16 %v1261, %v1253
  %v1422 = vpack.c.b16 %v1262, %v1254
  %v1423 = vpack.c.b16 %v1263, %v1255
  %v1424 = vpack.c.b16 %v1264, %v1256
  %v1425 = vpack.c.b16 %v1265, %v1257
  %v1426 = vpack.c.b16 %v1266, %v1258
  %v1427 = vpack.c.b16 %v1267, %v1259
  %v1428 = vpack.c.b16 %v1276, %v1268
  %v1429 = vpack.c.b16 %v1277, %v1269
  %v1430 = vpack.c.b16 %v1278, %v1270
  %v1431 = vpack.c.b16 %v1279, %v1271
  %v1432 = vpack.c.b16 %v1280, %v1272
  %v1433 = vpack.c.b16 %v1281, %v1273
  %v1434 = vpack.c.b16 %v1282, %v1274
  %v1435 = vpack.c.b16 %v1283, %v1275
  %v1436 = vpack.c.b16 %v1292, %v1284
  %v1437 = vpack.c.b16 %v1293, %v1285
  %v1438 = vpack.c.b16 %v1294, %v1286
  %v1439 = vpack.c.b16 %v1295, %v1287
  %v1440 = vpack.c.b16 %v1296, %v1288
  %v1441 = vpack.c.b16 %v1297, %v1289
  %v1442 = vpack.c.b16 %v1298, %v1290
  %v1443 = vpack.c.b16 %v1299, %v1291
  %v1444 = vpack.c.b16 %v1308, %v1300
  %v1445 = vpack.c.b16 %v1309, %v1301
  %v1446 = vpack.c.b16 %v1310, %v1302
  %v1447 = vpack.c.b16 %v1311, %v1303
  %v1448 = vpack.c.b16 %v1312, %v1304
  %v1449 = vpack.c.b16 %v1313, %v1305
  %v1450 = vpack.c.b16 %v1314, %v1306
  %v1451 = vpack.c.b16 %v1315, %v1307
  %v1452 = vpack.c.b16 %v1324, %v1316
  %v1453 = vpack.c.b16 %v1325, %v1317
  %v1454 = vpack.c.b16 %v1326, %v1318
  %v1455 = vpack.c.b16 %v1327, %v1319
  %v1456 = vpack.c.b16 %v1328, %v1320
  %v1457 = vpack.c.b16 %v1329, %v1321
  %v1458 = vpack.c.b16 %v1330, %v1322
  %v1459 = vpack.c.b16 %v1331, %v1323
  %v1460 = vpack.c.b16 %v1340, %v1332
  %v1461 = vpack.c.b16 %v1341, %v1333
  %v1462 = vpack.c.b16 %v1342, %v1334
  %v1463 = vpack.c.b16 %v1343, %v1335
  %v1464 = vpack.c.b16 %v1344, %v1336
  %v1465 = vpack.c.b16 %v1345, %v1337
  %v1466 = vpack.c.b16 %v1346, %v1338
  %v1467 = vpack.c.b16 %v1347, %v1339
  %v1468 = vpack.c.b16 %v1356, %v1348
  %v1469 = vpack.c.b16 %v1357, %v1349
  %v1470 = vpack.c.b16 %v1358, %v1350
  %v1471 = vpack.c.b16 %v1359, %v1351
  %v1472 = vpack.c.b16 %v1360, %v1352
  %v1473 = vpack.c.b16 %v1361, %v1353
  %v1474 = vpack.c.b16 %v1362, %v1354
  %v1475 = vpack.c.b16 %v1363, %v1355
  %v1476 = vpack.c.b16 %v1364, %v1364
  %v1477 = vpack.c.b16 %v1365, %v1365
  %v1478 = vpack.c.b16 %v1366, %v1366
  %v1479 = vpack.c.b16 %v1367, %v1367
  %v1480 = vpack.c.b16 %v1368, %v1368
  %v1481 = vpack.c.b16 %v1369, %v1369
  %v1482 = vpack.c.b16 %v1370, %v1370
  %v1483 = vpack.c.b16 %v1371, %v1371
  %vm1588 = vcmask 719872
  %v1590 = vsel %vm1588, %v1046, 0
  %v1593 = vsel %vm42, %v1476, 0
  %v1596 = vsel %vm42, %v1477, 0
  %v1599 = vsel %vm42, %v1478, 0
  %v1602 = vsel %vm42, %v1479, 0
  %v1605 = vsel %vm42, %v1480, 0
  %v1608 = vsel %vm42, %v1481, 0
  %v1611 = vsel %vm42, %v1482, 0
  %v1614 = vsel %vm42, %v1483, 0
  %1616 = vmatprep.subr.bf16.mxu0 %v1429
  %1617 = vmatpush1.bf16.msra.mxu0 %v1428
  %1618 = vmatprep.subr.bf16.mxu0 %v1421
  %1619 = vmatpush1.bf16.msra.mxu0 %v1420
  %1620 = vmatprep.subr.bf16.mxu0 %v1413
  %1621 = vmatpush1.bf16.msra.mxu0 %v1412
  %1622 = vmatprep.subr.bf16.mxu0 %v1405
  %1623 = vmatpush1.bf16.msra.mxu0 %v1404
  %1624 = vmatprep.subr.bf16.mxu0 %v1397
  %1625 = vmatpush1.bf16.msra.mxu0 %v1396
  %1626 = vmatprep.subr.bf16.mxu0 %v1389
  %1627 = vmatpush1.bf16.msra.mxu0 %v1388
  %1628 = vmatprep.subr.bf16.mxu0 %v1381
  %1629 = vmatpush1.bf16.msra.mxu0 %v1380
  %1630 = vmatprep.subr.bf16.mxu0 %v1373
  %1631 = vmatpush1.bf16.msra.mxu0 %v1372
  %1632 = vmatprep.subr.bf16.mxu0 0
  %1633 = vmatpush2.bf16.msra.mxu0 0
  %1634 = vmatprep.subr.bf16.mxu0 0
  %1635 = vmatpush2.bf16.msra.mxu0 0
  %1636 = vmatprep.subr.bf16.mxu0 %v1596
  %1637 = vmatpush2.bf16.msra.mxu0 %v1593
  %1638 = vmatprep.subr.bf16.mxu0 %v1469
  %1639 = vmatpush2.bf16.msra.mxu0 %v1468
  %1640 = vmatprep.subr.bf16.mxu0 %v1461
  %1641 = vmatpush2.bf16.msra.mxu0 %v1460
  %1642 = vmatprep.subr.bf16.mxu0 %v1453
  %1643 = vmatpush2.bf16.msra.mxu0 %v1452
  %1644 = vmatprep.subr.bf16.mxu0 %v1445
  %1645 = vmatpush2.bf16.msra.mxu0 %v1444
  %1646 = vmatprep.subr.bf16.mxu0 %v1437
  %1647 = vmatpush2.bf16.msra.mxu0 %v1436
  %1648 = vmatprep.mubr.bf16.mxu0 %v1590
  %1649 = vmatmul.mubr.bf16.gmra.mxu0 %v1045
  %v1650 = vpop.f32.mrf.mxu0
  %v1651 = vadd.f32 %v1032, %v1650
  %v1652 = vpop.f32.mrf.mxu0
  %v1653 = vadd.f32 %v1032, %v1652
  %v1654 = vpop.f32.mrf.mxu0
  %v1655 = vadd.f32 %v1037, %v1654
  %v1656 = vpop.f32.mrf.mxu0
  %v1657 = vadd.f32 %v1037, %v1656
  %1658 = vdwg.mxu0
  %1659 = vmatprep.subr.bf16.mxu0 %v1431
  %1660 = vmatpush1.bf16.msra.mxu0 %v1430
  %1661 = vmatprep.subr.bf16.mxu0 %v1423
  %1662 = vmatpush1.bf16.msra.mxu0 %v1422
  %1663 = vmatprep.subr.bf16.mxu0 %v1415
  %1664 = vmatpush1.bf16.msra.mxu0 %v1414
  %1665 = vmatprep.subr.bf16.mxu0 %v1407
  %1666 = vmatpush1.bf16.msra.mxu0 %v1406
  %1667 = vmatprep.subr.bf16.mxu0 %v1399
  %1668 = vmatpush1.bf16.msra.mxu0 %v1398
  %1669 = vmatprep.subr.bf16.mxu0 %v1391
  %1670 = vmatpush1.bf16.msra.mxu0 %v1390
  %1671 = vmatprep.subr.bf16.mxu0 %v1383
  %1672 = vmatpush1.bf16.msra.mxu0 %v1382
  %1673 = vmatprep.subr.bf16.mxu0 %v1375
  %1674 = vmatpush1.bf16.msra.mxu0 %v1374
  %1675 = vmatprep.subr.bf16.mxu0 0
  %1676 = vmatpush2.bf16.msra.mxu0 0
  %1677 = vmatprep.subr.bf16.mxu0 0
  %1678 = vmatpush2.bf16.msra.mxu0 0
  %1679 = vmatprep.subr.bf16.mxu0 %v1602
  %1680 = vmatpush2.bf16.msra.mxu0 %v1599
  %1681 = vmatprep.subr.bf16.mxu0 %v1471
  %1682 = vmatpush2.bf16.msra.mxu0 %v1470
  %1683 = vmatprep.subr.bf16.mxu0 %v1463
  %1684 = vmatpush2.bf16.msra.mxu0 %v1462
  %1685 = vmatprep.subr.bf16.mxu0 %v1455
  %1686 = vmatpush2.bf16.msra.mxu0 %v1454
  %1687 = vmatprep.subr.bf16.mxu0 %v1447
  %1688 = vmatpush2.bf16.msra.mxu0 %v1446
  %1689 = vmatprep.subr.bf16.mxu0 %v1439
  %1690 = vmatpush2.bf16.msra.mxu0 %v1438
  %1691 = vmatprep.mubr.bf16.mxu0 %v1590
  %1692 = vmatmul.mubr.bf16.gmra.mxu0 %v1045
  %v1693 = vpop.f32.mrf.mxu0
  %v1694 = vadd.f32 %v1032, %v1693
  %v1695 = vpop.f32.mrf.mxu0
  %v1696 = vadd.f32 %v1032, %v1695
  %v1697 = vpop.f32.mrf.mxu0
  %v1698 = vadd.f32 %v1037, %v1697
  %v1699 = vpop.f32.mrf.mxu0
  %v1700 = vadd.f32 %v1037, %v1699
  %1701 = vdwg.mxu0
  %1702 = vmatprep.subr.bf16.mxu0 %v1433
  %1703 = vmatpush1.bf16.msra.mxu0 %v1432
  %1704 = vmatprep.subr.bf16.mxu0 %v1425
  %1705 = vmatpush1.bf16.msra.mxu0 %v1424
  %1706 = vmatprep.subr.bf16.mxu0 %v1417
  %1707 = vmatpush1.bf16.msra.mxu0 %v1416
  %1708 = vmatprep.subr.bf16.mxu0 %v1409
  %1709 = vmatpush1.bf16.msra.mxu0 %v1408
  %1710 = vmatprep.subr.bf16.mxu0 %v1401
  %1711 = vmatpush1.bf16.msra.mxu0 %v1400
  %1712 = vmatprep.subr.bf16.mxu0 %v1393
  %1713 = vmatpush1.bf16.msra.mxu0 %v1392
  %1714 = vmatprep.subr.bf16.mxu0 %v1385
  %1715 = vmatpush1.bf16.msra.mxu0 %v1384
  %1716 = vmatprep.subr.bf16.mxu0 %v1377
  %1717 = vmatpush1.bf16.msra.mxu0 %v1376
  %1718 = vmatprep.subr.bf16.mxu0 0
  %1719 = vmatpush2.bf16.msra.mxu0 0
  %1720 = vmatprep.subr.bf16.mxu0 0
  %1721 = vmatpush2.bf16.msra.mxu0 0
  %1722 = vmatprep.subr.bf16.mxu0 %v1608
  %1723 = vmatpush2.bf16.msra.mxu0 %v1605
  %1724 = vmatprep.subr.bf16.mxu0 %v1473
  %1725 = vmatpush2.bf16.msra.mxu0 %v1472
  %1726 = vmatprep.subr.bf16.mxu0 %v1465
  %1727 = vmatpush2.bf16.msra.mxu0 %v1464
  %1728 = vmatprep.subr.bf16.mxu0 %v1457
  %1729 = vmatpush2.bf16.msra.mxu0 %v1456
  %1730 = vmatprep.subr.bf16.mxu0 %v1449
  %1731 = vmatpush2.bf16.msra.mxu0 %v1448
  %1732 = vmatprep.subr.bf16.mxu0 %v1441
  %1733 = vmatpush2.bf16.msra.mxu0 %v1440
  %1734 = vmatprep.mubr.bf16.mxu0 %v1590
  %1735 = vmatmul.mubr.bf16.gmra.mxu0 %v1045
  %v1736 = vpop.f32.mrf.mxu0
  %v1737 = vadd.f32 %v1032, %v1736
  %v1738 = vpop.f32.mrf.mxu0
  %v1739 = vadd.f32 %v1032, %v1738
  %v1740 = vpop.f32.mrf.mxu0
  %v1741 = vadd.f32 %v1037, %v1740
  %v1742 = vpop.f32.mrf.mxu0
  %v1743 = vadd.f32 %v1037, %v1742
  %1744 = vdwg.mxu0
  %1745 = vmatprep.subr.bf16.mxu0 %v1435
  %1746 = vmatpush1.bf16.msra.mxu0 %v1434
  %1747 = vmatprep.subr.bf16.mxu0 %v1427
  %1748 = vmatpush1.bf16.msra.mxu0 %v1426
  %1749 = vmatprep.subr.bf16.mxu0 %v1419
  %1750 = vmatpush1.bf16.msra.mxu0 %v1418
  %1751 = vmatprep.subr.bf16.mxu0 %v1411
  %1752 = vmatpush1.bf16.msra.mxu0 %v1410
  %1753 = vmatprep.subr.bf16.mxu0 %v1403
  %1754 = vmatpush1.bf16.msra.mxu0 %v1402
  %1755 = vmatprep.subr.bf16.mxu0 %v1395
  %1756 = vmatpush1.bf16.msra.mxu0 %v1394
  %1757 = vmatprep.subr.bf16.mxu0 %v1387
  %1758 = vmatpush1.bf16.msra.mxu0 %v1386
  %1759 = vmatprep.subr.bf16.mxu0 %v1379
  %1760 = vmatpush1.bf16.msra.mxu0 %v1378
  %1761 = vmatprep.subr.bf16.mxu0 0
  %1762 = vmatpush2.bf16.msra.mxu0 0
  %1763 = vmatprep.subr.bf16.mxu0 0
  %1764 = vmatpush2.bf16.msra.mxu0 0
  %1765 = vmatprep.subr.bf16.mxu0 %v1614
  %1766 = vmatpush2.bf16.msra.mxu0 %v1611
  %1767 = vmatprep.subr.bf16.mxu0 %v1475
  %1768 = vmatpush2.bf16.msra.mxu0 %v1474
  %1769 = vmatprep.subr.bf16.mxu0 %v1467
  %1770 = vmatpush2.bf16.msra.mxu0 %v1466
  %1771 = vmatprep.subr.bf16.mxu0 %v1459
  %1772 = vmatpush2.bf16.msra.mxu0 %v1458
  %1773 = vmatprep.subr.bf16.mxu0 %v1451
  %1774 = vmatpush2.bf16.msra.mxu0 %v1450
  %1775 = vmatprep.subr.bf16.mxu0 %v1443
  %1776 = vmatpush2.bf16.msra.mxu0 %v1442
  %1777 = vmatprep.mubr.bf16.mxu0 %v1590
  %1778 = vmatmul.mubr.bf16.gmra.mxu0 %v1045
  %v1779 = vpop.f32.mrf.mxu0
  %v1780 = vadd.f32 %v1032, %v1779
  %v1781 = vpop.f32.mrf.mxu0
  %v1782 = vadd.f32 %v1032, %v1781
  %v1783 = vpop.f32.mrf.mxu0
  %v1784 = vadd.f32 %v1037, %v1783
  %v1785 = vpop.f32.mrf.mxu0
  %v1786 = vadd.f32 %v1037, %v1785
  %1787 = vdwg.mxu0
  %v1788 = vmax.f32 %v1651, 0.0
  %v1789 = vmax.f32 %v1653, 0.0
  %v1790 = vmax.f32 %v1694, 0.0
  %v1791 = vmax.f32 %v1696, 0.0
  %v1792 = vmax.f32 %v1737, 0.0
  %v1793 = vmax.f32 %v1739, 0.0
  %v1794 = vmax.f32 %v1780, 0.0
  %v1795 = vmax.f32 %v1782, 0.0
  %v1796 = vmax.f32 %v1655, 0.0
  %v1797 = vmax.f32 %v1657, 0.0
  %v1798 = vmax.f32 %v1698, 0.0
  %v1799 = vmax.f32 %v1700, 0.0
  %v1800 = vmax.f32 %v1741, 0.0
  %v1801 = vmax.f32 %v1743, 0.0
  %v1802 = vmax.f32 %v1784, 0.0
  %v1803 = vmax.f32 %v1786, 0.0
  %v1804 = vpack.c.bf16 %v1796, %v1788
  %v1805 = vpack.c.bf16 %v1797, %v1789
  %v1806 = vpack.c.bf16 %v1798, %v1790
  %v1807 = vpack.c.bf16 %v1799, %v1791
  %v1808 = vpack.c.bf16 %v1800, %v1792
  %v1809 = vpack.c.bf16 %v1801, %v1793
  %v1810 = vpack.c.bf16 %v1802, %v1794
  %v1811 = vpack.c.bf16 %v1803, %v1795
  %1812 = vst [vmem:[#allocation3] sm:$0xff] 0
  %1813 = vst [vmem:[#allocation3 + $0x8] sm:$0xff] 0
  %1814 = vst [vmem:[#allocation3 + $0x10] sm:$0xff] 0
  %1815 = vst [vmem:[#allocation3 + $0x18] sm:$0xff] 0
  %1816 = vst [vmem:[#allocation3 + $0x20] sm:$0xff] 0
  %vm1817 = vcmask 125952
  %1818 = vst.msk [vmem:[#allocation3 + $0x28] sm:$0xf] %vm1817, 0
  %1819 = vst [vmem:[#allocation3 + $0x2c] sm:$0x33] 0
  %1820 = vst [vmem:[#allocation3 + $0x34] sm:$0x33] 0
  %1821 = vst [vmem:[#allocation3 + $0x3c] sm:$0x33] 0
  %1822 = vst [vmem:[#allocation3 + $0x44] sm:$0x33] 0
  %1823 = vst [vmem:[#allocation3 + $0x4c] sm:$0x33] 0
  %vm1824 = vcmask 123904
  %1825 = vst.msk [vmem:[#allocation3 + $0x54] sm:$0x3] %vm1824, 0
  %v1827 = vunpack.c.l.b16 %v1804
  %v1828 = vunpack.c.h.b16 %v1804
  %v1829 = vpack.c.b16 %v1827, %v1827
  %v1830 = vpack.c.b16 %v1828, %v1828
  %1831 = vrot.lane.b32.xlu0 %v1829, 32
  %v1832 = vpop.permute.xlu0 %1831
  %1833 = vrot.lane.b32.xlu0 %v1830, 32
  %v1834 = vpop.permute.xlu0 %1833
  %v1835 = vrot.slane %v1832, 4
  %v1836 = vrot.slane %v1834, 4
  %vm1837 = vcmask 261120
  %v1838 = vsel %vm1837, %v1835, %v1832
  %v1839 = vsel %vm1837, %v1836, %v1834
  %vm1842 = vcmask 1043712
  %vm1843 = vcmask 130052
  %vm1844 = vmor %vm1843, %vm1842
  %1845 = vst.msk [vmem:[#allocation3 + $0x4] sm:$0xff] %vm1844, %v1838
  %vm1846 = vcmask 1041664
  %vm1847 = vcmask 128004
  %vm1848 = vmor %vm1847, %vm1846
  %1849 = vst.msk [vmem:[#allocation3 + $0x30] sm:$0x33] %vm1848, %v1839
  %v1851 = vunpack.c.l.b16 %v1805
  %v1852 = vunpack.c.h.b16 %v1805
  %v1853 = vpack.c.b16 %v1851, %v1851
  %v1854 = vpack.c.b16 %v1852, %v1852
  %1855 = vrot.lane.b32.xlu0 %v1853, 32
  %v1856 = vpop.permute.xlu0 %1855
  %1857 = vrot.lane.b32.xlu0 %v1854, 32
  %v1858 = vpop.permute.xlu0 %1857
  %v1859 = vrot.slane %v1856, 4
  %v1860 = vrot.slane %v1858, 4
  %v1861 = vsel %vm1837, %v1859, %v1856
  %v1862 = vsel %vm1837, %v1860, %v1858
  %vm1865 = vcmask 1043840
  %vm1866 = vcmask 261124
  %vm1867 = vmor %vm1866, %vm1865
  %1868 = vst.msk [vmem:[#allocation3 + $0x8] sm:$0xff] %vm1867, %v1861
  %vm1869 = vcmask 1041792
  %vm1870 = vcmask 259076
  %vm1871 = vmor %vm1870, %vm1869
  %1872 = vst.msk [vmem:[#allocation3 + $0x34] sm:$0x33] %vm1871, %v1862
  %v1875 = vunpack.c.l.b16 %v1806
  %v1876 = vunpack.c.l.b16 %v1807
  %v1877 = vunpack.c.h.b16 %v1806
  %v1878 = vunpack.c.h.b16 %v1807
  %v1879 = vpack.c.b16 %v1876, %v1875
  %v1880 = vpack.c.b16 %v1878, %v1877
  %1881 = vrot.lane.b32.xlu0 %v1879, 32
  %v1882 = vpop.permute.xlu0 %1881
  %1883 = vrot.lane.b32.xlu0 %v1880, 32
  %v1884 = vpop.permute.xlu0 %1883
  %v1885 = vrot.slane %v1882, 4
  %v1886 = vrot.slane %v1884, 4
  %v1887 = vsel %vm1837, %v1885, %v1882
  %v1888 = vsel %vm1837, %v1886, %v1884
  %vm1891 = vcmask 1043968
  %vm1892 = vcmask 392196
  %vm1893 = vmor %vm1892, %vm1891
  %1894 = vst.msk [vmem:[#allocation3 + $0xc] sm:$0xff] %vm1893, %v1887
  %vm1895 = vcmask 1041920
  %vm1896 = vcmask 390148
  %vm1897 = vmor %vm1896, %vm1895
  %1898 = vst.msk [vmem:[#allocation3 + $0x38] sm:$0x33] %vm1897, %v1888
  %v1900 = vunpack.c.l.b16 %v1808
  %v1901 = vunpack.c.h.b16 %v1808
  %v1902 = vpack.c.b16 %v1900, %v1876
  %v1903 = vpack.c.b16 %v1901, %v1878
  %1904 = vrot.lane.b32.xlu0 %v1902, 32
  %v1905 = vpop.permute.xlu0 %1904
  %1906 = vrot.lane.b32.xlu0 %v1903, 32
  %v1907 = vpop.permute.xlu0 %1906
  %v1908 = vrot.slane %v1905, 4
  %v1909 = vrot.slane %v1907, 4
  %v1910 = vsel %vm1837, %v1908, %v1905
  %v1911 = vsel %vm1837, %v1909, %v1907
  %vm1914 = vcmask 1044096
  %vm1915 = vcmask 523268
  %vm1916 = vmor %vm1915, %vm1914
  %1917 = vst.msk [vmem:[#allocation3 + $0x10] sm:$0xff] %vm1916, %v1910
  %vm1918 = vcmask 1042048
  %vm1919 = vcmask 521220
  %vm1920 = vmor %vm1919, %vm1918
  %1921 = vst.msk [vmem:[#allocation3 + $0x3c] sm:$0x33] %vm1920, %v1911
  %v1923 = vunpack.c.l.b16 %v1809
  %v1924 = vunpack.c.h.b16 %v1809
  %v1925 = vpack.c.b16 %v1923, %v1900
  %v1926 = vpack.c.b16 %v1924, %v1901
  %1927 = vrot.lane.b32.xlu0 %v1925, 32
  %v1928 = vpop.permute.xlu0 %1927
  %1929 = vrot.lane.b32.xlu0 %v1926, 32
  %v1930 = vpop.permute.xlu0 %1929
  %v1931 = vrot.slane %v1928, 4
  %v1932 = vrot.slane %v1930, 4
  %v1933 = vsel %vm1837, %v1931, %v1928
  %v1934 = vsel %vm1837, %v1932, %v1930
  %vm1937 = vcmask 1044224
  %vm1938 = vmor %vm43, %vm1937
  %1939 = vst.msk [vmem:[#allocation3 + $0x14] sm:$0xff] %vm1938, %v1933
  %vm1940 = vcmask 1042176
  %vm1941 = vcmask 652292
  %vm1942 = vmor %vm1941, %vm1940
  %1943 = vst.msk [vmem:[#allocation3 + $0x40] sm:$0x33] %vm1942, %v1934
  %v1945 = vunpack.c.l.b16 %v1810
  %v1946 = vunpack.c.h.b16 %v1810
  %v1947 = vpack.c.b16 %v1945, %v1923
  %v1948 = vpack.c.b16 %v1946, %v1924
  %1949 = vrot.lane.b32.xlu0 %v1947, 32
  %v1950 = vpop.permute.xlu0 %1949
  %1951 = vrot.lane.b32.xlu0 %v1948, 32
  %v1952 = vpop.permute.xlu0 %1951
  %v1953 = vrot.slane %v1950, 4
  %v1954 = vrot.slane %v1952, 4
  %v1955 = vsel %vm1837, %v1953, %v1950
  %v1956 = vsel %vm1837, %v1954, %v1952
  %vm1959 = vcmask 1044352
  %vm1960 = vcmask 785412
  %vm1961 = vmor %vm1960, %vm1959
  %1962 = vst.msk [vmem:[#allocation3 + $0x18] sm:$0xff] %vm1961, %v1955
  %vm1963 = vcmask 1042304
  %vm1964 = vcmask 783364
  %vm1965 = vmor %vm1964, %vm1963
  %1966 = vst.msk [vmem:[#allocation3 + $0x44] sm:$0x33] %vm1965, %v1956
  %v1968 = vunpack.c.l.b16 %v1811
  %v1969 = vunpack.c.h.b16 %v1811
  %v1970 = vpack.c.b16 %v1968, %v1945
  %v1971 = vpack.c.b16 %v1969, %v1946
  %1972 = vrot.lane.b32.xlu0 %v1970, 32
  %v1973 = vpop.permute.xlu0 %1972
  %1974 = vrot.lane.b32.xlu0 %v1971, 32
  %v1975 = vpop.permute.xlu0 %1974
  %v1976 = vrot.slane %v1973, 4
  %v1977 = vrot.slane %v1975, 4
  %v1978 = vsel %vm1837, %v1973, %v1976
  %v1979 = vsel %vm1837, %v1975, %v1977
  %vm1982 = vcmask 912384
  %1983 = vst.msk [vmem:[#allocation3 + $0x20] sm:$0xf] %vm1982, %v1978
  %vm1984 = vcmask 910336
  %1985 = vst.msk [vmem:[#allocation3 + $0x4c] sm:$0x3] %vm1984, %v1979
  %v1986 = vld [vmem:[#allocation3] sm:$0xff]
  %v1987 = vld [vmem:[#allocation3 + $0x8] sm:$0xff]
  %v1988 = vld [vmem:[#allocation3 + $0x10] sm:$0xff]
  %v1989 = vld [vmem:[#allocation3 + $0x18] sm:$0xff]
  %v1990 = vld [vmem:[#allocation3 + $0x2c] sm:$0x33]
  %v1991 = vld [vmem:[#allocation3 + $0x34] sm:$0x33]
  %v1992 = vld [vmem:[#allocation3 + $0x3c] sm:$0x33]
  %v1993 = vld [vmem:[#allocation3 + $0x44] sm:$0x33]
  %1994 = vst [vmem:[#allocation4] sm:$0xff] %v1986
  %1995 = vst [vmem:[#allocation4 + $0x8] sm:$0xff] %v1987
  %1996 = vst [vmem:[#allocation4 + $0x10] sm:$0xff] %v1988
  %1997 = vst.msk [vmem:[#allocation4 + $0x18] sm:$0xff] %vm44, %v1989
  %1998 = vst [vmem:[#allocation4 + $0x20] sm:$0x33] %v1990
  %1999 = vst [vmem:[#allocation4 + $0x28] sm:$0x33] %v1991
  %2000 = vst [vmem:[#allocation4 + $0x30] sm:$0x33] %v1992
  %vm2001 = vcmask 1041408
  %vm2002 = vmor %vm1941, %vm2001
  %2003 = vst.msk [vmem:[#allocation4 + $0x38] sm:$0x33] %vm2002, %v1993
  %v2004 = vld [vmem:[#allocation3] sm:$0xff]
  %v2005 = vld [vmem:[#allocation3 + $0x8] sm:$0xff]
  %v2006 = vld [vmem:[#allocation3 + $0x10] sm:$0xff]
  %v2007 = vld [vmem:[#allocation3 + $0x18] sm:$0xff]
  %v2008 = vld [vmem:[#allocation3 + $0x2c] sm:$0x33]
  %v2009 = vld [vmem:[#allocation3 + $0x34] sm:$0x33]
  %v2010 = vld [vmem:[#allocation3 + $0x3c] sm:$0x33]
  %v2011 = vld [vmem:[#allocation3 + $0x44] sm:$0x33]
  %vm2020 = vcmask 1041408
  %vm2021 = vcmask 1045508
  %vm2022 = vmor %vm2020, %vm2021
  %v2023 = vrot.slane %v2004, 6
  %v2024 = vrot.slane %v2005, 6
  %v2025 = vrot.slane %v2006, 6
  %v2026 = vrot.slane %v2007, 6
  %v2027 = vrot.slane %v2023, 4
  %v2028 = vrot.slane %v2008, 6
  %v2029 = vsel %vm2022, %v2027, %v2028
  %v2030 = vrot.slane %v2024, 4
  %v2031 = vrot.slane %v2009, 6
  %v2032 = vsel %vm2022, %v2030, %v2031
  %v2033 = vrot.slane %v2025, 4
  %v2034 = vrot.slane %v2010, 6
  %v2035 = vsel %vm2022, %v2033, %v2034
  %v2036 = vrot.slane %v2026, 4
  %v2037 = vrot.slane %v2011, 6
  %v2038 = vsel %vm2022, %v2036, %v2037
  %2039 = vrot.lane.b32.xlu0 %v2023, 112
  %v2040 = vpop.permute.xlu0 %2039
  %2041 = vrot.lane.b32.xlu0 %v2024, 112
  %v2042 = vpop.permute.xlu0 %2041
  %2043 = vrot.lane.b32.xlu0 %v2025, 112
  %v2044 = vpop.permute.xlu0 %2043
  %2045 = vrot.lane.b32.xlu0 %v2026, 112
  %v2046 = vpop.permute.xlu0 %2045
  %2047 = vrot.lane.b32.xlu0 %v2029, 112
  %v2048 = vpop.permute.xlu0 %2047
  %2049 = vrot.lane.b32.xlu0 %v2032, 112
  %v2050 = vpop.permute.xlu0 %2049
  %2051 = vrot.lane.b32.xlu0 %v2035, 112
  %v2052 = vpop.permute.xlu0 %2051
  %2053 = vrot.lane.b32.xlu0 %v2038, 112
  %v2054 = vpop.permute.xlu0 %2053
  %v2055 = vrot.slane %v2040, 4
  %v2056 = vrot.slane %v2042, 4
  %v2057 = vrot.slane %v2044, 4
  %v2058 = vrot.slane %v2046, 4
  %v2059 = vrot.slane %v2048, 4
  %v2060 = vrot.slane %v2050, 4
  %v2061 = vrot.slane %v2052, 4
  %v2062 = vrot.slane %v2054, 4
  %v2063 = vsel %vm114, %v2055, %v2056
  %v2064 = vsel %vm116, %v2040, %v2063
  %v2065 = vsel %vm114, %v2056, %v2057
  %v2066 = vsel %vm116, %v2042, %v2065
  %v2067 = vsel %vm114, %v2057, %v2058
  %v2068 = vsel %vm116, %v2044, %v2067
  %v2069 = vsel %vm116, %v2046, %v2058
  %v2070 = vsel %vm114, %v2059, %v2060
  %v2071 = vsel %vm116, %v2048, %v2070
  %v2072 = vsel %vm114, %v2060, %v2061
  %v2073 = vsel %vm116, %v2050, %v2072
  %v2074 = vsel %vm114, %v2061, %v2062
  %v2075 = vsel %vm116, %v2052, %v2074
  %v2076 = vsel %vm116, %v2054, %v2062
  %2085 = vst [vmem:[#allocation4 + $0x20] sm:$0xcc] %v2064
  %2086 = vst [vmem:[#allocation4 + $0x28] sm:$0xcc] %v2066
  %2087 = vst [vmem:[#allocation4 + $0x30] sm:$0xcc] %v2068
  %vm2088 = vcmask 1043458
  %vm2089 = vcmask 654342
  %vm2090 = vmor %vm2089, %vm2088
  %2091 = vst.msk [vmem:[#allocation4 + $0x38] sm:$0xcc] %vm2090, %v2069
  %2092 = vst [vmem:[#allocation4 + $0x40] sm:$0xff] %v2071
  %2093 = vst [vmem:[#allocation4 + $0x48] sm:$0xff] %v2073
  %2094 = vst [vmem:[#allocation4 + $0x50] sm:$0xff] %v2075
  %2095 = vst.msk [vmem:[#allocation4 + $0x58] sm:$0xff] %vm44, %v2076
  %v2096 = vld [vmem:[#allocation3] sm:$0xff]
  %v2097 = vld [vmem:[#allocation3 + $0x8] sm:$0xff]
  %v2098 = vld [vmem:[#allocation3 + $0x10] sm:$0xff]
  %v2099 = vld [vmem:[#allocation3 + $0x18] sm:$0xff]
  %v2100 = vld [vmem:[#allocation3 + $0x2c] sm:$0x33]
  %v2101 = vld [vmem:[#allocation3 + $0x34] sm:$0x33]
  %v2102 = vld [vmem:[#allocation3 + $0x3c] sm:$0x33]
  %v2103 = vld [vmem:[#allocation3 + $0x44] sm:$0x33]
  %2112 = vrot.lane.b32.xlu0 %v2096, 96
  %v2113 = vpop.permute.xlu0 %2112
  %2114 = vrot.lane.b32.xlu0 %v2097, 96
  %v2115 = vpop.permute.xlu0 %2114
  %2116 = vrot.lane.b32.xlu0 %v2098, 96
  %v2117 = vpop.permute.xlu0 %2116
  %2118 = vrot.lane.b32.xlu0 %v2099, 96
  %v2119 = vpop.permute.xlu0 %2118
  %2120 = vrot.lane.b32.xlu0 %v2100, 96
  %v2121 = vpop.permute.xlu0 %2120
  %2122 = vrot.lane.b32.xlu0 %v2101, 96
  %v2123 = vpop.permute.xlu0 %2122
  %2124 = vrot.lane.b32.xlu0 %v2102, 96
  %v2125 = vpop.permute.xlu0 %2124
  %2126 = vrot.lane.b32.xlu0 %v2103, 96
  %v2127 = vpop.permute.xlu0 %2126
  %v2128 = vrot.slane %v2113, 4
  %v2129 = vrot.slane %v2115, 4
  %v2130 = vrot.slane %v2117, 4
  %v2131 = vrot.slane %v2119, 4
  %v2132 = vrot.slane %v2121, 4
  %v2133 = vrot.slane %v2123, 4
  %v2134 = vrot.slane %v2125, 4
  %v2135 = vrot.slane %v2127, 4
  %v2136 = vsel %vm114, %v2128, %v2129
  %v2137 = vsel %vm222, %v2113, %v2136
  %v2138 = vsel %vm114, %v2129, %v2130
  %v2139 = vsel %vm222, %v2115, %v2138
  %v2140 = vsel %vm114, %v2130, %v2131
  %v2141 = vsel %vm222, %v2117, %v2140
  %v2142 = vsel %vm222, %v2119, %v2131
  %v2143 = vsel %vm114, %v2132, %v2133
  %v2144 = vsel %vm222, %v2121, %v2143
  %v2145 = vsel %vm114, %v2133, %v2134
  %v2146 = vsel %vm222, %v2123, %v2145
  %v2147 = vsel %vm114, %v2134, %v2135
  %v2148 = vsel %vm222, %v2125, %v2147
  %v2149 = vsel %vm222, %v2127, %v2135
  %2158 = vst [vmem:[#allocation4 + $0x60] sm:$0xff] %v2137
  %2159 = vst [vmem:[#allocation4 + $0x68] sm:$0xff] %v2139
  %2160 = vst [vmem:[#allocation4 + $0x70] sm:$0xff] %v2141
  %2161 = vst.msk [vmem:[#allocation4 + $0x78] sm:$0xff] %vm44, %v2142
  %2162 = vst [vmem:[#allocation4 + $0x80] sm:$0x33] %v2144
  %2163 = vst [vmem:[#allocation4 + $0x88] sm:$0x33] %v2146
  %2164 = vst [vmem:[#allocation4 + $0x90] sm:$0x33] %v2148
  %2165 = vst.msk [vmem:[#allocation4 + $0x98] sm:$0x33] %vm2002, %v2149
  %v2166 = vld [vmem:[#allocation3 + $0x4] sm:$0xff]
  %v2167 = vld [vmem:[#allocation3 + $0xc] sm:$0xff]
  %v2168 = vld [vmem:[#allocation3 + $0x14] sm:$0xff]
  %v2169 = vld [vmem:[#allocation3 + $0x1c] sm:$0xff]
  %v2170 = vld [vmem:[#allocation3 + $0x30] sm:$0x33]
  %v2171 = vld [vmem:[#allocation3 + $0x38] sm:$0x33]
  %v2172 = vld [vmem:[#allocation3 + $0x40] sm:$0x33]
  %v2173 = vld [vmem:[#allocation3 + $0x48] sm:$0x33]
  %v2182 = vrot.slane %v2166, 6
  %v2183 = vrot.slane %v2167, 6
  %v2184 = vrot.slane %v2168, 6
  %v2185 = vrot.slane %v2169, 6
  %v2186 = vrot.slane %v2182, 4
  %v2187 = vrot.slane %v2170, 6
  %v2188 = vsel %vm2022, %v2186, %v2187
  %v2189 = vrot.slane %v2183, 4
  %v2190 = vrot.slane %v2171, 6
  %v2191 = vsel %vm2022, %v2189, %v2190
  %v2192 = vrot.slane %v2184, 4
  %v2193 = vrot.slane %v2172, 6
  %v2194 = vsel %vm2022, %v2192, %v2193
  %v2195 = vrot.slane %v2185, 4
  %v2196 = vrot.slane %v2173, 6
  %v2197 = vsel %vm2022, %v2195, %v2196
  %2198 = vrot.lane.b32.xlu0 %v2182, 112
  %v2199 = vpop.permute.xlu0 %2198
  %2200 = vrot.lane.b32.xlu0 %v2183, 112
  %v2201 = vpop.permute.xlu0 %2200
  %2202 = vrot.lane.b32.xlu0 %v2184, 112
  %v2203 = vpop.permute.xlu0 %2202
  %2204 = vrot.lane.b32.xlu0 %v2185, 112
  %v2205 = vpop.permute.xlu0 %2204
  %2206 = vrot.lane.b32.xlu0 %v2188, 112
  %v2207 = vpop.permute.xlu0 %2206
  %2208 = vrot.lane.b32.xlu0 %v2191, 112
  %v2209 = vpop.permute.xlu0 %2208
  %2210 = vrot.lane.b32.xlu0 %v2194, 112
  %v2211 = vpop.permute.xlu0 %2210
  %2212 = vrot.lane.b32.xlu0 %v2197, 112
  %v2213 = vpop.permute.xlu0 %2212
  %v2214 = vrot.slane %v2199, 4
  %v2215 = vrot.slane %v2201, 4
  %v2216 = vrot.slane %v2203, 4
  %v2217 = vrot.slane %v2205, 4
  %v2218 = vrot.slane %v2207, 4
  %v2219 = vrot.slane %v2209, 4
  %v2220 = vrot.slane %v2211, 4
  %v2221 = vrot.slane %v2213, 4
  %v2222 = vsel %vm114, %v2214, %v2215
  %v2223 = vsel %vm116, %v2199, %v2222
  %v2224 = vsel %vm114, %v2215, %v2216
  %v2225 = vsel %vm116, %v2201, %v2224
  %v2226 = vsel %vm114, %v2216, %v2217
  %v2227 = vsel %vm116, %v2203, %v2226
  %v2228 = vsel %vm116, %v2205, %v2217
  %v2229 = vsel %vm114, %v2218, %v2219
  %v2230 = vsel %vm116, %v2207, %v2229
  %v2231 = vsel %vm114, %v2219, %v2220
  %v2232 = vsel %vm116, %v2209, %v2231
  %v2233 = vsel %vm114, %v2220, %v2221
  %v2234 = vsel %vm116, %v2211, %v2233
  %v2235 = vsel %vm116, %v2213, %v2221
  %2244 = vst [vmem:[#allocation4 + $0x80] sm:$0xcc] %v2223
  %2245 = vst [vmem:[#allocation4 + $0x88] sm:$0xcc] %v2225
  %2246 = vst [vmem:[#allocation4 + $0x90] sm:$0xcc] %v2227
  %2247 = vst.msk [vmem:[#allocation4 + $0x98] sm:$0xcc] %vm2090, %v2228
  %2248 = vst [vmem:[#allocation4 + $0xa0] sm:$0xff] %v2230
  %2249 = vst [vmem:[#allocation4 + $0xa8] sm:$0xff] %v2232
  %2250 = vst [vmem:[#allocation4 + $0xb0] sm:$0xff] %v2234
  %2251 = vst.msk [vmem:[#allocation4 + $0xb8] sm:$0xff] %vm44, %v2235
  %v2252 = vld [vmem:[#allocation3 + $0x4] sm:$0xff]
  %v2253 = vld [vmem:[#allocation3 + $0xc] sm:$0xff]
  %v2254 = vld [vmem:[#allocation3 + $0x14] sm:$0xff]
  %v2255 = vld [vmem:[#allocation3 + $0x1c] sm:$0xff]
  %v2256 = vld [vmem:[#allocation3 + $0x30] sm:$0x33]
  %v2257 = vld [vmem:[#allocation3 + $0x38] sm:$0x33]
  %v2258 = vld [vmem:[#allocation3 + $0x40] sm:$0x33]
  %v2259 = vld [vmem:[#allocation3 + $0x48] sm:$0x33]
  %2268 = vrot.lane.b32.xlu0 %v2252, 96
  %v2269 = vpop.permute.xlu0 %2268
  %2270 = vrot.lane.b32.xlu0 %v2253, 96
  %v2271 = vpop.permute.xlu0 %2270
  %2272 = vrot.lane.b32.xlu0 %v2254, 96
  %v2273 = vpop.permute.xlu0 %2272
  %2274 = vrot.lane.b32.xlu0 %v2255, 96
  %v2275 = vpop.permute.xlu0 %2274
  %2276 = vrot.lane.b32.xlu0 %v2256, 96
  %v2277 = vpop.permute.xlu0 %2276
  %2278 = vrot.lane.b32.xlu0 %v2257, 96
  %v2279 = vpop.permute.xlu0 %2278
  %2280 = vrot.lane.b32.xlu0 %v2258, 96
  %v2281 = vpop.permute.xlu0 %2280
  %2282 = vrot.lane.b32.xlu0 %v2259, 96
  %v2283 = vpop.permute.xlu0 %2282
  %v2284 = vrot.slane %v2269, 4
  %v2285 = vrot.slane %v2271, 4
  %v2286 = vrot.slane %v2273, 4
  %v2287 = vrot.slane %v2275, 4
  %v2288 = vrot.slane %v2277, 4
  %v2289 = vrot.slane %v2279, 4
  %v2290 = vrot.slane %v2281, 4
  %v2291 = vrot.slane %v2283, 4
  %v2292 = vsel %vm114, %v2284, %v2285
  %v2293 = vsel %vm222, %v2269, %v2292
  %v2294 = vsel %vm114, %v2285, %v2286
  %v2295 = vsel %vm222, %v2271, %v2294
  %v2296 = vsel %vm114, %v2286, %v2287
  %v2297 = vsel %vm222, %v2273, %v2296
  %v2298 = vsel %vm222, %v2275, %v2287
  %v2299 = vsel %vm114, %v2288, %v2289
  %v2300 = vsel %vm222, %v2277, %v2299
  %v2301 = vsel %vm114, %v2289, %v2290
  %v2302 = vsel %vm222, %v2279, %v2301
  %v2303 = vsel %vm114, %v2290, %v2291
  %v2304 = vsel %vm222, %v2281, %v2303
  %v2305 = vsel %vm222, %v2283, %v2291
  %2314 = vst [vmem:[#allocation4 + $0xc0] sm:$0xff] %v2293
  %2315 = vst [vmem:[#allocation4 + $0xc8] sm:$0xff] %v2295
  %2316 = vst [vmem:[#allocation4 + $0xd0] sm:$0xff] %v2297
  %2317 = vst.msk [vmem:[#allocation4 + $0xd8] sm:$0xff] %vm44, %v2298
  %2318 = vst [vmem:[#allocation4 + $0xe0] sm:$0x33] %v2300
  %2319 = vst [vmem:[#allocation4 + $0xe8] sm:$0x33] %v2302
  %2320 = vst [vmem:[#allocation4 + $0xf0] sm:$0x33] %v2304
  %2321 = vst.msk [vmem:[#allocation4 + $0xf8] sm:$0x33] %vm2002, %v2305
  %v2322 = vld [vmem:[#allocation3 + $0x4] sm:$0xff]
  %v2323 = vld [vmem:[#allocation3 + $0xc] sm:$0xff]
  %v2324 = vld [vmem:[#allocation3 + $0x14] sm:$0xff]
  %v2325 = vld [vmem:[#allocation3 + $0x1c] sm:$0xff]
  %v2326 = vld [vmem:[#allocation3 + $0x30] sm:$0x33]
  %v2327 = vld [vmem:[#allocation3 + $0x38] sm:$0x33]
  %v2328 = vld [vmem:[#allocation3 + $0x40] sm:$0x33]
  %v2329 = vld [vmem:[#allocation3 + $0x48] sm:$0x33]
  %v2338 = vrot.slane %v2322, 6
  %v2339 = vrot.slane %v2323, 6
  %v2340 = vrot.slane %v2324, 6
  %v2341 = vrot.slane %v2325, 6
  %v2342 = vrot.slane %v2338, 4
  %v2343 = vrot.slane %v2326, 6
  %v2344 = vsel %vm2022, %v2342, %v2343
  %v2345 = vrot.slane %v2339, 4
  %v2346 = vrot.slane %v2327, 6
  %v2347 = vsel %vm2022, %v2345, %v2346
  %v2348 = vrot.slane %v2340, 4
  %v2349 = vrot.slane %v2328, 6
  %v2350 = vsel %vm2022, %v2348, %v2349
  %v2351 = vrot.slane %v2341, 4
  %v2352 = vrot.slane %v2329, 6
  %v2353 = vsel %vm2022, %v2351, %v2352
  %2354 = vrot.lane.b32.xlu0 %v2338, 80
  %v2355 = vpop.permute.xlu0 %2354
  %2356 = vrot.lane.b32.xlu0 %v2339, 80
  %v2357 = vpop.permute.xlu0 %2356
  %2358 = vrot.lane.b32.xlu0 %v2340, 80
  %v2359 = vpop.permute.xlu0 %2358
  %2360 = vrot.lane.b32.xlu0 %v2341, 80
  %v2361 = vpop.permute.xlu0 %2360
  %2362 = vrot.lane.b32.xlu0 %v2344, 80
  %v2363 = vpop.permute.xlu0 %2362
  %2364 = vrot.lane.b32.xlu0 %v2347, 80
  %v2365 = vpop.permute.xlu0 %2364
  %2366 = vrot.lane.b32.xlu0 %v2350, 80
  %v2367 = vpop.permute.xlu0 %2366
  %2368 = vrot.lane.b32.xlu0 %v2353, 80
  %v2369 = vpop.permute.xlu0 %2368
  %v2370 = vrot.slane %v2355, 4
  %v2371 = vrot.slane %v2357, 4
  %v2372 = vrot.slane %v2359, 4
  %v2373 = vrot.slane %v2361, 4
  %v2374 = vrot.slane %v2363, 4
  %v2375 = vrot.slane %v2365, 4
  %v2376 = vrot.slane %v2367, 4
  %v2377 = vrot.slane %v2369, 4
  %v2378 = vsel %vm114, %v2370, %v2371
  %v2379 = vsel %vm538, %v2355, %v2378
  %v2380 = vsel %vm114, %v2371, %v2372
  %v2381 = vsel %vm538, %v2357, %v2380
  %v2382 = vsel %vm114, %v2372, %v2373
  %v2383 = vsel %vm538, %v2359, %v2382
  %v2384 = vsel %vm538, %v2361, %v2373
  %v2385 = vsel %vm114, %v2374, %v2375
  %v2386 = vsel %vm538, %v2363, %v2385
  %v2387 = vsel %vm114, %v2375, %v2376
  %v2388 = vsel %vm538, %v2365, %v2387
  %v2389 = vsel %vm114, %v2376, %v2377
  %v2390 = vsel %vm538, %v2367, %v2389
  %v2391 = vsel %vm538, %v2369, %v2377
  %2400 = vst [vmem:[#allocation4 + $0xe0] sm:$0xcc] %v2379
  %2401 = vst [vmem:[#allocation4 + $0xe8] sm:$0xcc] %v2381
  %2402 = vst [vmem:[#allocation4 + $0xf0] sm:$0xcc] %v2383
  %2403 = vst.msk [vmem:[#allocation4 + $0xf8] sm:$0xcc] %vm2090, %v2384
  %2404 = vst [vmem:[#allocation4 + $0x100] sm:$0xff] %v2386
  %2405 = vst [vmem:[#allocation4 + $0x108] sm:$0xff] %v2388
  %2406 = vst [vmem:[#allocation4 + $0x110] sm:$0xff] %v2390
  %2407 = vst.msk [vmem:[#allocation4 + $0x118] sm:$0xff] %vm44, %v2391
  %v2408 = vld [vmem:[#allocation3 + $0x8] sm:$0xff]
  %v2409 = vld [vmem:[#allocation3 + $0x10] sm:$0xff]
  %v2410 = vld [vmem:[#allocation3 + $0x18] sm:$0xff]
  %v2411 = vld [vmem:[#allocation3 + $0x20] sm:$0xff]
  %v2412 = vld [vmem:[#allocation3 + $0x34] sm:$0x33]
  %v2413 = vld [vmem:[#allocation3 + $0x3c] sm:$0x33]
  %v2414 = vld [vmem:[#allocation3 + $0x44] sm:$0x33]
  %v2415 = vld [vmem:[#allocation3 + $0x4c] sm:$0x33]
  %2424 = vrot.lane.b32.xlu0 %v2408, 96
  %v2425 = vpop.permute.xlu0 %2424
  %2426 = vrot.lane.b32.xlu0 %v2409, 96
  %v2427 = vpop.permute.xlu0 %2426
  %2428 = vrot.lane.b32.xlu0 %v2410, 96
  %v2429 = vpop.permute.xlu0 %2428
  %2430 = vrot.lane.b32.xlu0 %v2411, 96
  %v2431 = vpop.permute.xlu0 %2430
  %2432 = vrot.lane.b32.xlu0 %v2412, 96
  %v2433 = vpop.permute.xlu0 %2432
  %2434 = vrot.lane.b32.xlu0 %v2413, 96
  %v2435 = vpop.permute.xlu0 %2434
  %2436 = vrot.lane.b32.xlu0 %v2414, 96
  %v2437 = vpop.permute.xlu0 %2436
  %2438 = vrot.lane.b32.xlu0 %v2415, 96
  %v2439 = vpop.permute.xlu0 %2438
  %v2440 = vrot.slane %v2425, 4
  %v2441 = vrot.slane %v2427, 4
  %v2442 = vrot.slane %v2429, 4
  %v2443 = vrot.slane %v2431, 4
  %v2444 = vrot.slane %v2433, 4
  %v2445 = vrot.slane %v2435, 4
  %v2446 = vrot.slane %v2437, 4
  %v2447 = vrot.slane %v2439, 4
  %v2448 = vsel %vm114, %v2440, %v2441
  %v2449 = vsel %vm222, %v2425, %v2448
  %v2450 = vsel %vm114, %v2441, %v2442
  %v2451 = vsel %vm222, %v2427, %v2450
  %v2452 = vsel %vm114, %v2442, %v2443
  %v2453 = vsel %vm222, %v2429, %v2452
  %v2454 = vsel %vm222, %v2431, %v2443
  %v2455 = vsel %vm114, %v2444, %v2445
  %v2456 = vsel %vm222, %v2433, %v2455
  %v2457 = vsel %vm114, %v2445, %v2446
  %v2458 = vsel %vm222, %v2435, %v2457
  %v2459 = vsel %vm114, %v2446, %v2447
  %v2460 = vsel %vm222, %v2437, %v2459
  %v2461 = vsel %vm222, %v2439, %v2447
  %2470 = vst [vmem:[#allocation4 + $0x120] sm:$0xff] %v2449
  %2471 = vst [vmem:[#allocation4 + $0x128] sm:$0xff] %v2451
  %2472 = vst [vmem:[#allocation4 + $0x130] sm:$0xff] %v2453
  %2473 = vst.msk [vmem:[#allocation4 + $0x138] sm:$0xff] %vm44, %v2454
  %2474 = vst [vmem:[#allocation4 + $0x140] sm:$0x33] %v2456
  %2475 = vst [vmem:[#allocation4 + $0x148] sm:$0x33] %v2458
  %2476 = vst [vmem:[#allocation4 + $0x150] sm:$0x33] %v2460
  %2477 = vst.msk [vmem:[#allocation4 + $0x158] sm:$0x33] %vm2002, %v2461
  %v2478 = vld [vmem:[#allocation3 + $0x8] sm:$0xff]
  %v2479 = vld [vmem:[#allocation3 + $0x10] sm:$0xff]
  %v2480 = vld [vmem:[#allocation3 + $0x18] sm:$0xff]
  %v2481 = vld [vmem:[#allocation3 + $0x20] sm:$0xff]
  %v2482 = vld [vmem:[#allocation3 + $0x34] sm:$0x33]
  %v2483 = vld [vmem:[#allocation3 + $0x3c] sm:$0x33]
  %v2484 = vld [vmem:[#allocation3 + $0x44] sm:$0x33]
  %v2485 = vld [vmem:[#allocation3 + $0x4c] sm:$0x33]
  %v2494 = vrot.slane %v2478, 6
  %v2495 = vrot.slane %v2479, 6
  %v2496 = vrot.slane %v2480, 6
  %v2497 = vrot.slane %v2481, 6
  %v2498 = vrot.slane %v2494, 4
  %v2499 = vrot.slane %v2482, 6
  %v2500 = vsel %vm2022, %v2498, %v2499
  %v2501 = vrot.slane %v2495, 4
  %v2502 = vrot.slane %v2483, 6
  %v2503 = vsel %vm2022, %v2501, %v2502
  %v2504 = vrot.slane %v2496, 4
  %v2505 = vrot.slane %v2484, 6
  %v2506 = vsel %vm2022, %v2504, %v2505
  %v2507 = vrot.slane %v2497, 4
  %v2508 = vrot.slane %v2485, 6
  %v2509 = vsel %vm2022, %v2507, %v2508
  %2510 = vrot.lane.b32.xlu0 %v2494, 80
  %v2511 = vpop.permute.xlu0 %2510
  %2512 = vrot.lane.b32.xlu0 %v2495, 80
  %v2513 = vpop.permute.xlu0 %2512
  %2514 = vrot.lane.b32.xlu0 %v2496, 80
  %v2515 = vpop.permute.xlu0 %2514
  %2516 = vrot.lane.b32.xlu0 %v2497, 80
  %v2517 = vpop.permute.xlu0 %2516
  %2518 = vrot.lane.b32.xlu0 %v2500, 80
  %v2519 = vpop.permute.xlu0 %2518
  %2520 = vrot.lane.b32.xlu0 %v2503, 80
  %v2521 = vpop.permute.xlu0 %2520
  %2522 = vrot.lane.b32.xlu0 %v2506, 80
  %v2523 = vpop.permute.xlu0 %2522
  %2524 = vrot.lane.b32.xlu0 %v2509, 80
  %v2525 = vpop.permute.xlu0 %2524
  %v2526 = vrot.slane %v2511, 4
  %v2527 = vrot.slane %v2513, 4
  %v2528 = vrot.slane %v2515, 4
  %v2529 = vrot.slane %v2517, 4
  %v2530 = vrot.slane %v2519, 4
  %v2531 = vrot.slane %v2521, 4
  %v2532 = vrot.slane %v2523, 4
  %v2533 = vrot.slane %v2525, 4
  %v2534 = vsel %vm114, %v2526, %v2527
  %v2535 = vsel %vm538, %v2511, %v2534
  %v2536 = vsel %vm114, %v2527, %v2528
  %v2537 = vsel %vm538, %v2513, %v2536
  %v2538 = vsel %vm114, %v2528, %v2529
  %v2539 = vsel %vm538, %v2515, %v2538
  %v2540 = vsel %vm538, %v2517, %v2529
  %v2541 = vsel %vm114, %v2530, %v2531
  %v2542 = vsel %vm538, %v2519, %v2541
  %v2543 = vsel %vm114, %v2531, %v2532
  %v2544 = vsel %vm538, %v2521, %v2543
  %v2545 = vsel %vm114, %v2532, %v2533
  %v2546 = vsel %vm538, %v2523, %v2545
  %v2547 = vsel %vm538, %v2525, %v2533
  %2556 = vst [vmem:[#allocation4 + $0x140] sm:$0xcc] %v2535
  %2557 = vst [vmem:[#allocation4 + $0x148] sm:$0xcc] %v2537
  %2558 = vst [vmem:[#allocation4 + $0x150] sm:$0xcc] %v2539
  %2559 = vst.msk [vmem:[#allocation4 + $0x158] sm:$0xcc] %vm2090, %v2540
  %2560 = vst [vmem:[#allocation4 + $0x160] sm:$0xff] %v2542
  %2561 = vst [vmem:[#allocation4 + $0x168] sm:$0xff] %v2544
  %2562 = vst [vmem:[#allocation4 + $0x170] sm:$0xff] %v2546
  %2563 = vst.msk [vmem:[#allocation4 + $0x178] sm:$0xff] %vm44, %v2547
  %v2564 = vld [vmem:[#allocation3 + $0x8] sm:$0xff]
  %v2565 = vld [vmem:[#allocation3 + $0x10] sm:$0xff]
  %v2566 = vld [vmem:[#allocation3 + $0x18] sm:$0xff]
  %v2567 = vld [vmem:[#allocation3 + $0x20] sm:$0xff]
  %v2568 = vld [vmem:[#allocation3 + $0x28] sm:$0xf]
  %v2569 = vld [vmem:[#allocation3 + $0x34] sm:$0x33]
  %v2570 = vld [vmem:[#allocation3 + $0x3c] sm:$0x33]
  %v2571 = vld [vmem:[#allocation3 + $0x44] sm:$0x33]
  %v2572 = vld [vmem:[#allocation3 + $0x4c] sm:$0x33]
  %v2573 = vld [vmem:[#allocation3 + $0x54] sm:$0x3]
  %2584 = vrot.lane.b32.xlu0 %v2564, 64
  %v2585 = vpop.permute.xlu0 %2584
  %2586 = vrot.lane.b32.xlu0 %v2565, 64
  %v2587 = vpop.permute.xlu0 %2586
  %2588 = vrot.lane.b32.xlu0 %v2566, 64
  %v2589 = vpop.permute.xlu0 %2588
  %2590 = vrot.lane.b32.xlu0 %v2567, 64
  %v2591 = vpop.permute.xlu0 %2590
  %2592 = vrot.lane.b32.xlu0 %v2568, 64
  %v2593 = vpop.permute.xlu0 %2592
  %2594 = vrot.lane.b32.xlu0 %v2569, 64
  %v2595 = vpop.permute.xlu0 %2594
  %2596 = vrot.lane.b32.xlu0 %v2570, 64
  %v2597 = vpop.permute.xlu0 %2596
  %2598 = vrot.lane.b32.xlu0 %v2571, 64
  %v2599 = vpop.permute.xlu0 %2598
  %2600 = vrot.lane.b32.xlu0 %v2572, 64
  %v2601 = vpop.permute.xlu0 %2600
  %2602 = vrot.lane.b32.xlu0 %v2573, 64
  %v2603 = vpop.permute.xlu0 %2602
  %v2604 = vrot.slane %v2585, 4
  %v2605 = vrot.slane %v2587, 4
  %v2606 = vrot.slane %v2589, 4
  %v2607 = vrot.slane %v2591, 4
  %v2608 = vrot.slane %v2593, 4
  %v2609 = vrot.slane %v2595, 4
  %v2610 = vrot.slane %v2597, 4
  %v2611 = vrot.slane %v2599, 4
  %v2612 = vrot.slane %v2601, 4
  %v2613 = vrot.slane %v2603, 4
  %v2614 = vsel %vm114, %v2604, %v2605
  %v2615 = vsel %vm869, %v2585, %v2614
  %v2616 = vsel %vm114, %v2605, %v2606
  %v2617 = vsel %vm869, %v2587, %v2616
  %v2618 = vsel %vm114, %v2606, %v2607
  %v2619 = vsel %vm869, %v2589, %v2618
  %v2620 = vsel %vm114, %v2607, %v2608
  %v2621 = vsel %vm869, %v2591, %v2620
  %v2622 = vsel %vm114, %v2609, %v2610
  %v2623 = vsel %vm869, %v2595, %v2622
  %v2624 = vsel %vm114, %v2610, %v2611
  %v2625 = vsel %vm869, %v2597, %v2624
  %v2626 = vsel %vm114, %v2611, %v2612
  %v2627 = vsel %vm869, %v2599, %v2626
  %v2628 = vsel %vm114, %v2612, %v2613
  %v2629 = vsel %vm869, %v2601, %v2628
  %2638 = vst [vmem:[#allocation4 + $0x180] sm:$0xff] %v2615
  %2639 = vst [vmem:[#allocation4 + $0x188] sm:$0xff] %v2617
  %2640 = vst [vmem:[#allocation4 + $0x190] sm:$0xff] %v2619
  %2641 = vst.msk [vmem:[#allocation4 + $0x198] sm:$0xff] %vm44, %v2621
  %2642 = vst [vmem:[#allocation4 + $0x1a0] sm:$0x33] %v2623
  %2643 = vst [vmem:[#allocation4 + $0x1a8] sm:$0x33] %v2625
  %2644 = vst [vmem:[#allocation4 + $0x1b0] sm:$0x33] %v2627
  %2645 = vst.msk [vmem:[#allocation4 + $0x1b8] sm:$0x33] %vm2002, %v2629
  %v2646 = vld [vmem:[%s3] sm:$0xf]
  %v2647 = vld [vmem:[%s3 + $0x4] sm:$0xf]
  %v2648 = vld [vmem:[%s3 + $0x8] sm:$0xf]
  %v2649 = vld [vmem:[#allocation4] sm:$0xff]
  %v2650 = vld [vmem:[#allocation4 + $0x8] sm:$0xff]
  %v2651 = vld [vmem:[#allocation4 + $0x10] sm:$0xff]
  %v2652 = vld [vmem:[#allocation4 + $0x18] sm:$0xff]
  %v2653 = vld [vmem:[#allocation4 + $0x20] sm:$0xff]
  %v2654 = vld [vmem:[#allocation4 + $0x28] sm:$0xff]
  %v2655 = vld [vmem:[#allocation4 + $0x30] sm:$0xff]
  %v2656 = vld [vmem:[#allocation4 + $0x38] sm:$0xff]
  %v2657 = vld [vmem:[#allocation4 + $0x40] sm:$0xff]
  %v2658 = vld [vmem:[#allocation4 + $0x48] sm:$0xff]
  %v2659 = vld [vmem:[#allocation4 + $0x50] sm:$0xff]
  %v2660 = vld [vmem:[#allocation4 + $0x58] sm:$0xff]
  %v2661 = vld [vmem:[#allocation4 + $0x60] sm:$0xff]
  %v2662 = vld [vmem:[#allocation4 + $0x68] sm:$0xff]
  %v2663 = vld [vmem:[#allocation4 + $0x70] sm:$0xff]
  %v2664 = vld [vmem:[#allocation4 + $0x78] sm:$0xff]
  %v2665 = vld [vmem:[#allocation4 + $0x80] sm:$0xff]
  %v2666 = vld [vmem:[#allocation4 + $0x88] sm:$0xff]
  %v2667 = vld [vmem:[#allocation4 + $0x90] sm:$0xff]
  %v2668 = vld [vmem:[#allocation4 + $0x98] sm:$0xff]
  %v2669 = vld [vmem:[#allocation4 + $0xa0] sm:$0xff]
  %v2670 = vld [vmem:[#allocation4 + $0xa8] sm:$0xff]
  %v2671 = vld [vmem:[#allocation4 + $0xb0] sm:$0xff]
  %v2672 = vld [vmem:[#allocation4 + $0xb8] sm:$0xff]
  %v2673 = vld [vmem:[#allocation4 + $0xc0] sm:$0xff]
  %v2674 = vld [vmem:[#allocation4 + $0xc8] sm:$0xff]
  %v2675 = vld [vmem:[#allocation4 + $0xd0] sm:$0xff]
  %v2676 = vld [vmem:[#allocation4 + $0xd8] sm:$0xff]
  %v2677 = vld [vmem:[#allocation4 + $0xe0] sm:$0xff]
  %v2678 = vld [vmem:[#allocation4 + $0xe8] sm:$0xff]
  %v2679 = vld [vmem:[#allocation4 + $0xf0] sm:$0xff]
  %v2680 = vld [vmem:[#allocation4 + $0xf8] sm:$0xff]
  %v2681 = vld [vmem:[#allocation4 + $0x100] sm:$0xff]
  %v2682 = vld [vmem:[#allocation4 + $0x108] sm:$0xff]
  %v2683 = vld [vmem:[#allocation4 + $0x110] sm:$0xff]
  %v2684 = vld [vmem:[#allocation4 + $0x118] sm:$0xff]
  %v2685 = vld [vmem:[#allocation4 + $0x120] sm:$0xff]
  %v2686 = vld [vmem:[#allocation4 + $0x128] sm:$0xff]
  %v2687 = vld [vmem:[#allocation4 + $0x130] sm:$0xff]
  %v2688 = vld [vmem:[#allocation4 + $0x138] sm:$0xff]
  %v2689 = vld [vmem:[#allocation4 + $0x140] sm:$0xff]
  %v2690 = vld [vmem:[#allocation4 + $0x148] sm:$0xff]
  %v2691 = vld [vmem:[#allocation4 + $0x150] sm:$0xff]
  %v2692 = vld [vmem:[#allocation4 + $0x158] sm:$0xff]
  %v2693 = vld [vmem:[#allocation4 + $0x160] sm:$0xff]
  %v2694 = vld [vmem:[#allocation4 + $0x168] sm:$0xff]
  %v2695 = vld [vmem:[#allocation4 + $0x170] sm:$0xff]
  %v2696 = vld [vmem:[#allocation4 + $0x178] sm:$0xff]
  %v2697 = vld [vmem:[#allocation4 + $0x180] sm:$0xff]
  %v2698 = vld [vmem:[#allocation4 + $0x188] sm:$0xff]
  %v2699 = vld [vmem:[#allocation4 + $0x190] sm:$0xff]
  %v2700 = vld [vmem:[#allocation4 + $0x198] sm:$0xff]
  %v2701 = vld [vmem:[#allocation4 + $0x1a0] sm:$0x33]
  %v2702 = vld [vmem:[#allocation4 + $0x1a8] sm:$0x33]
  %v2703 = vld [vmem:[#allocation4 + $0x1b0] sm:$0x33]
  %v2704 = vld [vmem:[#allocation4 + $0x1b8] sm:$0x33]
  %v2705 = vld [vmem:[%s4] sm:$0xff]
  %v2706 = vld [vmem:[%s4 + $0x8] sm:$0xff]
  %v2707 = vld [vmem:[%s4 + $0x10] sm:$0xff]
  %2709 = vset.pattern.permute.xlu0 0
  %2710 = vperm.xlu0 %2709, %v2705
  %v2711 = vpop.permute.xlu0 %2710
  %2714 = vset.pattern.permute.xlu0 0
  %2715 = vperm.xlu0 %2714, %v2706
  %v2716 = vpop.permute.xlu0 %2715
  %2719 = vset.pattern.permute.xlu0 0
  %2720 = vperm.xlu0 %2719, %v2707
  %v2721 = vpop.permute.xlu0 %2720
  %v2726 = vunpack.c.l.b16 %v2646
  %v2727 = vunpack.c.l.b16 %v2647
  %v2728 = vunpack.c.l.b16 %v2648
  %v2729 = vpack.c.b16 %v2727, %v2726
  %v2730 = vpack.c.b16 %v2728, %v2728
  %v2787 = vunpack.c.l.b16 %v2649
  %v2788 = vunpack.c.h.b16 %v2649
  %v2789 = vunpack.c.l.b16 %v2650
  %v2790 = vunpack.c.h.b16 %v2650
  %v2791 = vunpack.c.l.b16 %v2651
  %v2792 = vunpack.c.h.b16 %v2651
  %v2793 = vunpack.c.l.b16 %v2652
  %v2794 = vunpack.c.h.b16 %v2652
  %v2795 = vunpack.c.l.b16 %v2653
  %v2796 = vunpack.c.h.b16 %v2653
  %v2797 = vunpack.c.l.b16 %v2654
  %v2798 = vunpack.c.h.b16 %v2654
  %v2799 = vunpack.c.l.b16 %v2655
  %v2800 = vunpack.c.h.b16 %v2655
  %v2801 = vunpack.c.l.b16 %v2656
  %v2802 = vunpack.c.h.b16 %v2656
  %v2803 = vunpack.c.l.b16 %v2657
  %v2804 = vunpack.c.h.b16 %v2657
  %v2805 = vunpack.c.l.b16 %v2658
  %v2806 = vunpack.c.h.b16 %v2658
  %v2807 = vunpack.c.l.b16 %v2659
  %v2808 = vunpack.c.h.b16 %v2659
  %v2809 = vunpack.c.l.b16 %v2660
  %v2810 = vunpack.c.h.b16 %v2660
  %v2811 = vunpack.c.l.b16 %v2661
  %v2812 = vunpack.c.h.b16 %v2661
  %v2813 = vunpack.c.l.b16 %v2662
  %v2814 = vunpack.c.h.b16 %v2662
  %v2815 = vunpack.c.l.b16 %v2663
  %v2816 = vunpack.c.h.b16 %v2663
  %v2817 = vunpack.c.l.b16 %v2664
  %v2818 = vunpack.c.h.b16 %v2664
  %v2819 = vunpack.c.l.b16 %v2665
  %v2820 = vunpack.c.h.b16 %v2665
  %v2821 = vunpack.c.l.b16 %v2666
  %v2822 = vunpack.c.h.b16 %v2666
  %v2823 = vunpack.c.l.b16 %v2667
  %v2824 = vunpack.c.h.b16 %v2667
  %v2825 = vunpack.c.l.b16 %v2668
  %v2826 = vunpack.c.h.b16 %v2668
  %v2827 = vunpack.c.l.b16 %v2669
  %v2828 = vunpack.c.h.b16 %v2669
  %v2829 = vunpack.c.l.b16 %v2670
  %v2830 = vunpack.c.h.b16 %v2670
  %v2831 = vunpack.c.l.b16 %v2671
  %v2832 = vunpack.c.h.b16 %v2671
  %v2833 = vunpack.c.l.b16 %v2672
  %v2834 = vunpack.c.h.b16 %v2672
  %v2835 = vunpack.c.l.b16 %v2673
  %v2836 = vunpack.c.h.b16 %v2673
  %v2837 = vunpack.c.l.b16 %v2674
  %v2838 = vunpack.c.h.b16 %v2674
  %v2839 = vunpack.c.l.b16 %v2675
  %v2840 = vunpack.c.h.b16 %v2675
  %v2841 = vunpack.c.l.b16 %v2676
  %v2842 = vunpack.c.h.b16 %v2676
  %v2843 = vunpack.c.l.b16 %v2677
  %v2844 = vunpack.c.h.b16 %v2677
  %v2845 = vunpack.c.l.b16 %v2678
  %v2846 = vunpack.c.h.b16 %v2678
  %v2847 = vunpack.c.l.b16 %v2679
  %v2848 = vunpack.c.h.b16 %v2679
  %v2849 = vunpack.c.l.b16 %v2680
  %v2850 = vunpack.c.h.b16 %v2680
  %v2851 = vunpack.c.l.b16 %v2681
  %v2852 = vunpack.c.h.b16 %v2681
  %v2853 = vunpack.c.l.b16 %v2682
  %v2854 = vunpack.c.h.b16 %v2682
  %v2855 = vunpack.c.l.b16 %v2683
  %v2856 = vunpack.c.h.b16 %v2683
  %v2857 = vunpack.c.l.b16 %v2684
  %v2858 = vunpack.c.h.b16 %v2684
  %v2859 = vunpack.c.l.b16 %v2685
  %v2860 = vunpack.c.h.b16 %v2685
  %v2861 = vunpack.c.l.b16 %v2686
  %v2862 = vunpack.c.h.b16 %v2686
  %v2863 = vunpack.c.l.b16 %v2687
  %v2864 = vunpack.c.h.b16 %v2687
  %v2865 = vunpack.c.l.b16 %v2688
  %v2866 = vunpack.c.h.b16 %v2688
  %v2867 = vunpack.c.l.b16 %v2689
  %v2868 = vunpack.c.h.b16 %v2689
  %v2869 = vunpack.c.l.b16 %v2690
  %v2870 = vunpack.c.h.b16 %v2690
  %v2871 = vunpack.c.l.b16 %v2691
  %v2872 = vunpack.c.h.b16 %v2691
  %v2873 = vunpack.c.l.b16 %v2692
  %v2874 = vunpack.c.h.b16 %v2692
  %v2875 = vunpack.c.l.b16 %v2693
  %v2876 = vunpack.c.h.b16 %v2693
  %v2877 = vunpack.c.l.b16 %v2694
  %v2878 = vunpack.c.h.b16 %v2694
  %v2879 = vunpack.c.l.b16 %v2695
  %v2880 = vunpack.c.h.b16 %v2695
  %v2881 = vunpack.c.l.b16 %v2696
  %v2882 = vunpack.c.h.b16 %v2696
  %v2883 = vunpack.c.l.b16 %v2697
  %v2884 = vunpack.c.h.b16 %v2697
  %v2885 = vunpack.c.l.b16 %v2698
  %v2886 = vunpack.c.h.b16 %v2698
  %v2887 = vunpack.c.l.b16 %v2699
  %v2888 = vunpack.c.h.b16 %v2699
  %v2889 = vunpack.c.l.b16 %v2700
  %v2890 = vunpack.c.h.b16 %v2700
  %v2891 = vunpack.c.l.b16 %v2701
  %v2892 = vunpack.c.h.b16 %v2701
  %v2893 = vunpack.c.l.b16 %v2702
  %v2894 = vunpack.c.h.b16 %v2702
  %v2895 = vunpack.c.l.b16 %v2703
  %v2896 = vunpack.c.h.b16 %v2703
  %v2897 = vunpack.c.l.b16 %v2704
  %v2898 = vunpack.c.h.b16 %v2704
  %v2899 = vpack.c.b16 %v2795, %v2787
  %v2900 = vpack.c.b16 %v2796, %v2788
  %v2901 = vpack.c.b16 %v2797, %v2789
  %v2902 = vpack.c.b16 %v2798, %v2790
  %v2903 = vpack.c.b16 %v2799, %v2791
  %v2904 = vpack.c.b16 %v2800, %v2792
  %v2905 = vpack.c.b16 %v2801, %v2793
  %v2906 = vpack.c.b16 %v2802, %v2794
  %v2907 = vpack.c.b16 %v2811, %v2803
  %v2908 = vpack.c.b16 %v2812, %v2804
  %v2909 = vpack.c.b16 %v2813, %v2805
  %v2910 = vpack.c.b16 %v2814, %v2806
  %v2911 = vpack.c.b16 %v2815, %v2807
  %v2912 = vpack.c.b16 %v2816, %v2808
  %v2913 = vpack.c.b16 %v2817, %v2809
  %v2914 = vpack.c.b16 %v2818, %v2810
  %v2915 = vpack.c.b16 %v2827, %v2819
  %v2916 = vpack.c.b16 %v2828, %v2820
  %v2917 = vpack.c.b16 %v2829, %v2821
  %v2918 = vpack.c.b16 %v2830, %v2822
  %v2919 = vpack.c.b16 %v2831, %v2823
  %v2920 = vpack.c.b16 %v2832, %v2824
  %v2921 = vpack.c.b16 %v2833, %v2825
  %v2922 = vpack.c.b16 %v2834, %v2826
  %v2923 = vpack.c.b16 %v2843, %v2835
  %v2924 = vpack.c.b16 %v2844, %v2836
  %v2925 = vpack.c.b16 %v2845, %v2837
  %v2926 = vpack.c.b16 %v2846, %v2838
  %v2927 = vpack.c.b16 %v2847, %v2839
  %v2928 = vpack.c.b16 %v2848, %v2840
  %v2929 = vpack.c.b16 %v2849, %v2841
  %v2930 = vpack.c.b16 %v2850, %v2842
  %v2931 = vpack.c.b16 %v2859, %v2851
  %v2932 = vpack.c.b16 %v2860, %v2852
  %v2933 = vpack.c.b16 %v2861, %v2853
  %v2934 = vpack.c.b16 %v2862, %v2854
  %v2935 = vpack.c.b16 %v2863, %v2855
  %v2936 = vpack.c.b16 %v2864, %v2856
  %v2937 = vpack.c.b16 %v2865, %v2857
  %v2938 = vpack.c.b16 %v2866, %v2858
  %v2939 = vpack.c.b16 %v2875, %v2867
  %v2940 = vpack.c.b16 %v2876, %v2868
  %v2941 = vpack.c.b16 %v2877, %v2869
  %v2942 = vpack.c.b16 %v2878, %v2870
  %v2943 = vpack.c.b16 %v2879, %v2871
  %v2944 = vpack.c.b16 %v2880, %v2872
  %v2945 = vpack.c.b16 %v2881, %v2873
  %v2946 = vpack.c.b16 %v2882, %v2874
  %v2947 = vpack.c.b16 %v2891, %v2883
  %v2948 = vpack.c.b16 %v2892, %v2884
  %v2949 = vpack.c.b16 %v2893, %v2885
  %v2950 = vpack.c.b16 %v2894, %v2886
  %v2951 = vpack.c.b16 %v2895, %v2887
  %v2952 = vpack.c.b16 %v2896, %v2888
  %v2953 = vpack.c.b16 %v2897, %v2889
  %v2954 = vpack.c.b16 %v2898, %v2890
  %vm3003 = vcmask 883712
  %v3005 = vsel %vm3003, %v2729, 0
  %v3008 = vsel %vm3003, %v2730, 0
  %vm3010 = vcmask 1045504
  %v3012 = vsel %vm3010, %v2947, 0
  %v3015 = vsel %vm3010, %v2948, 0
  %v3018 = vsel %vm3010, %v2949, 0
  %v3021 = vsel %vm3010, %v2950, 0
  %v3024 = vsel %vm3010, %v2951, 0
  %v3027 = vsel %vm3010, %v2952, 0
  %v3030 = vsel %vm3010, %v2953, 0
  %v3033 = vsel %vm3010, %v2954, 0
  %3035 = vmatprep.subr.bf16.mxu0 0
  %3036 = vmatpush1.bf16.msra.mxu0 0
  %3037 = vmatprep.subr.bf16.mxu0 %v3015
  %3038 = vmatpush1.bf16.msra.mxu0 %v3012
  %3039 = vmatprep.subr.bf16.mxu0 %v2940
  %3040 = vmatpush1.bf16.msra.mxu0 %v2939
  %3041 = vmatprep.subr.bf16.mxu0 %v2932
  %3042 = vmatpush1.bf16.msra.mxu0 %v2931
  %3043 = vmatprep.subr.bf16.mxu0 %v2924
  %3044 = vmatpush1.bf16.msra.mxu0 %v2923
  %3045 = vmatprep.subr.bf16.mxu0 %v2916
  %3046 = vmatpush1.bf16.msra.mxu0 %v2915
  %3047 = vmatprep.subr.bf16.mxu0 %v2908
  %3048 = vmatpush1.bf16.msra.mxu0 %v2907
  %3049 = vmatprep.subr.bf16.mxu0 %v2900
  %3050 = vmatpush1.bf16.msra.mxu0 %v2899
  %3051 = vmatprep.subr.bf16.mxu0 0
  %3052 = vmatpush2.bf16.msra.mxu0 0
  %3053 = vmatprep.subr.bf16.mxu0 0
  %3054 = vmatpush2.bf16.msra.mxu0 0
  %3055 = vmatprep.subr.bf16.mxu0 0
  %3056 = vmatpush2.bf16.msra.mxu0 0
  %3057 = vmatprep.subr.bf16.mxu0 0
  %3058 = vmatpush2.bf16.msra.mxu0 0
  %3059 = vmatprep.subr.bf16.mxu0 0
  %3060 = vmatpush2.bf16.msra.mxu0 0
  %3061 = vmatprep.subr.bf16.mxu0 0
  %3062 = vmatpush2.bf16.msra.mxu0 0
  %3063 = vmatprep.subr.bf16.mxu0 0
  %3064 = vmatpush2.bf16.msra.mxu0 0
  %3065 = vmatprep.subr.bf16.mxu0 0
  %3066 = vmatpush2.bf16.msra.mxu0 0
  %3067 = vmatprep.mubr.bf16.mxu0 0
  %3068 = vmatmul.mubr.bf16.gmra.mxu0 %v3005
  %v3069 = vpop.f32.mrf.mxu0
  %v3070 = vadd.f32 %v2711, %v3069
  %v3071 = vpop.f32.mrf.mxu0
  %v3072 = vadd.f32 %v2711, %v3071
  %v3073 = vpop.f32.mrf.mxu0
  %v3074 = vadd.f32 %v2716, %v3073
  %v3075 = vpop.f32.mrf.mxu0
  %v3076 = vadd.f32 %v2716, %v3075
  %3077 = vmatprep.mubr.bf16.mxu0 0
  %3078 = vmatmul.mubr.bf16.gmra.mxu0 %v3008
  %v3079 = vpop.f32.mrf.mxu0
  %v3080 = vadd.f32 %v2721, %v3079
  %v3081 = vpop.f32.mrf.mxu0
  %v3082 = vadd.f32 %v2721, %v3081
  %v3083 = vpop.f32.mrf.mxu0
  %v3084 = vpop.f32.mrf.mxu0
  %3085 = vdwg.mxu0
  %3086 = vmatprep.subr.bf16.mxu0 0
  %3087 = vmatpush1.bf16.msra.mxu0 0
  %3088 = vmatprep.subr.bf16.mxu0 %v3021
  %3089 = vmatpush1.bf16.msra.mxu0 %v3018
  %3090 = vmatprep.subr.bf16.mxu0 %v2942
  %3091 = vmatpush1.bf16.msra.mxu0 %v2941
  %3092 = vmatprep.subr.bf16.mxu0 %v2934
  %3093 = vmatpush1.bf16.msra.mxu0 %v2933
  %3094 = vmatprep.subr.bf16.mxu0 %v2926
  %3095 = vmatpush1.bf16.msra.mxu0 %v2925
  %3096 = vmatprep.subr.bf16.mxu0 %v2918
  %3097 = vmatpush1.bf16.msra.mxu0 %v2917
  %3098 = vmatprep.subr.bf16.mxu0 %v2910
  %3099 = vmatpush1.bf16.msra.mxu0 %v2909
  %3100 = vmatprep.subr.bf16.mxu0 %v2902
  %3101 = vmatpush1.bf16.msra.mxu0 %v2901
  %3102 = vmatprep.subr.bf16.mxu0 0
  %3103 = vmatpush2.bf16.msra.mxu0 0
  %3104 = vmatprep.subr.bf16.mxu0 0
  %3105 = vmatpush2.bf16.msra.mxu0 0
  %3106 = vmatprep.subr.bf16.mxu0 0
  %3107 = vmatpush2.bf16.msra.mxu0 0
  %3108 = vmatprep.subr.bf16.mxu0 0
  %3109 = vmatpush2.bf16.msra.mxu0 0
  %3110 = vmatprep.subr.bf16.mxu0 0
  %3111 = vmatpush2.bf16.msra.mxu0 0
  %3112 = vmatprep.subr.bf16.mxu0 0
  %3113 = vmatpush2.bf16.msra.mxu0 0
  %3114 = vmatprep.subr.bf16.mxu0 0
  %3115 = vmatpush2.bf16.msra.mxu0 0
  %3116 = vmatprep.subr.bf16.mxu0 0
  %3117 = vmatpush2.bf16.msra.mxu0 0
  %3118 = vmatprep.mubr.bf16.mxu0 0
  %3119 = vmatmul.mubr.bf16.gmra.mxu0 %v3005
  %v3120 = vpop.f32.mrf.mxu0
  %v3121 = vadd.f32 %v2711, %v3120
  %v3122 = vpop.f32.mrf.mxu0
  %v3123 = vadd.f32 %v2711, %v3122
  %v3124 = vpop.f32.mrf.mxu0
  %v3125 = vadd.f32 %v2716, %v3124
  %v3126 = vpop.f32.mrf.mxu0
  %v3127 = vadd.f32 %v2716, %v3126
  %3128 = vmatprep.mubr.bf16.mxu0 0
  %3129 = vmatmul.mubr.bf16.gmra.mxu0 %v3008
  %v3130 = vpop.f32.mrf.mxu0
  %v3131 = vadd.f32 %v2721, %v3130
  %v3132 = vpop.f32.mrf.mxu0
  %v3133 = vadd.f32 %v2721, %v3132
  %v3134 = vpop.f32.mrf.mxu0
  %v3135 = vpop.f32.mrf.mxu0
  %3136 = vdwg.mxu0
  %3137 = vmatprep.subr.bf16.mxu0 0
  %3138 = vmatpush1.bf16.msra.mxu0 0
  %3139 = vmatprep.subr.bf16.mxu0 %v3027
  %3140 = vmatpush1.bf16.msra.mxu0 %v3024
  %3141 = vmatprep.subr.bf16.mxu0 %v2944
  %3142 = vmatpush1.bf16.msra.mxu0 %v2943
  %3143 = vmatprep.subr.bf16.mxu0 %v2936
  %3144 = vmatpush1.bf16.msra.mxu0 %v2935
  %3145 = vmatprep.subr.bf16.mxu0 %v2928
  %3146 = vmatpush1.bf16.msra.mxu0 %v2927
  %3147 = vmatprep.subr.bf16.mxu0 %v2920
  %3148 = vmatpush1.bf16.msra.mxu0 %v2919
  %3149 = vmatprep.subr.bf16.mxu0 %v2912
  %3150 = vmatpush1.bf16.msra.mxu0 %v2911
  %3151 = vmatprep.subr.bf16.mxu0 %v2904
  %3152 = vmatpush1.bf16.msra.mxu0 %v2903
  %3153 = vmatprep.subr.bf16.mxu0 0
  %3154 = vmatpush2.bf16.msra.mxu0 0
  %3155 = vmatprep.subr.bf16.mxu0 0
  %3156 = vmatpush2.bf16.msra.mxu0 0
  %3157 = vmatprep.subr.bf16.mxu0 0
  %3158 = vmatpush2.bf16.msra.mxu0 0
  %3159 = vmatprep.subr.bf16.mxu0 0
  %3160 = vmatpush2.bf16.msra.mxu0 0
  %3161 = vmatprep.subr.bf16.mxu0 0
  %3162 = vmatpush2.bf16.msra.mxu0 0
  %3163 = vmatprep.subr.bf16.mxu0 0
  %3164 = vmatpush2.bf16.msra.mxu0 0
  %3165 = vmatprep.subr.bf16.mxu0 0
  %3166 = vmatpush2.bf16.msra.mxu0 0
  %3167 = vmatprep.subr.bf16.mxu0 0
  %3168 = vmatpush2.bf16.msra.mxu0 0
  %3169 = vmatprep.mubr.bf16.mxu0 0
  %3170 = vmatmul.mubr.bf16.gmra.mxu0 %v3005
  %v3171 = vpop.f32.mrf.mxu0
  %v3172 = vadd.f32 %v2711, %v3171
  %v3173 = vpop.f32.mrf.mxu0
  %v3174 = vadd.f32 %v2711, %v3173
  %v3175 = vpop.f32.mrf.mxu0
  %v3176 = vadd.f32 %v2716, %v3175
  %v3177 = vpop.f32.mrf.mxu0
  %v3178 = vadd.f32 %v2716, %v3177
  %3179 = vmatprep.mubr.bf16.mxu0 0
  %3180 = vmatmul.mubr.bf16.gmra.mxu0 %v3008
  %v3181 = vpop.f32.mrf.mxu0
  %v3182 = vadd.f32 %v2721, %v3181
  %v3183 = vpop.f32.mrf.mxu0
  %v3184 = vadd.f32 %v2721, %v3183
  %v3185 = vpop.f32.mrf.mxu0
  %v3186 = vpop.f32.mrf.mxu0
  %3187 = vdwg.mxu0
  %3188 = vmatprep.subr.bf16.mxu0 0
  %3189 = vmatpush1.bf16.msra.mxu0 0
  %3190 = vmatprep.subr.bf16.mxu0 %v3033
  %3191 = vmatpush1.bf16.msra.mxu0 %v3030
  %3192 = vmatprep.subr.bf16.mxu0 %v2946
  %3193 = vmatpush1.bf16.msra.mxu0 %v2945
  %3194 = vmatprep.subr.bf16.mxu0 %v2938
  %3195 = vmatpush1.bf16.msra.mxu0 %v2937
  %3196 = vmatprep.subr.bf16.mxu0 %v2930
  %3197 = vmatpush1.bf16.msra.mxu0 %v2929
  %3198 = vmatprep.subr.bf16.mxu0 %v2922
  %3199 = vmatpush1.bf16.msra.mxu0 %v2921
  %3200 = vmatprep.subr.bf16.mxu0 %v2914
  %3201 = vmatpush1.bf16.msra.mxu0 %v2913
  %3202 = vmatprep.subr.bf16.mxu0 %v2906
  %3203 = vmatpush1.bf16.msra.mxu0 %v2905
  %3204 = vmatprep.subr.bf16.mxu0 0
  %3205 = vmatpush2.bf16.msra.mxu0 0
  %3206 = vmatprep.subr.bf16.mxu0 0
  %3207 = vmatpush2.bf16.msra.mxu0 0
  %3208 = vmatprep.subr.bf16.mxu0 0
  %3209 = vmatpush2.bf16.msra.mxu0 0
  %3210 = vmatprep.subr.bf16.mxu0 0
  %3211 = vmatpush2.bf16.msra.mxu0 0
  %3212 = vmatprep.subr.bf16.mxu0 0
  %3213 = vmatpush2.bf16.msra.mxu0 0
  %3214 = vmatprep.subr.bf16.mxu0 0
  %3215 = vmatpush2.bf16.msra.mxu0 0
  %3216 = vmatprep.subr.bf16.mxu0 0
  %3217 = vmatpush2.bf16.msra.mxu0 0
  %3218 = vmatprep.subr.bf16.mxu0 0
  %3219 = vmatpush2.bf16.msra.mxu0 0
  %3220 = vmatprep.mubr.bf16.mxu0 0
  %3221 = vmatmul.mubr.bf16.gmra.mxu0 %v3005
  %v3222 = vpop.f32.mrf.mxu0
  %v3223 = vadd.f32 %v2711, %v3222
  %v3224 = vpop.f32.mrf.mxu0
  %v3225 = vadd.f32 %v2711, %v3224
  %v3226 = vpop.f32.mrf.mxu0
  %v3227 = vadd.f32 %v2716, %v3226
  %v3228 = vpop.f32.mrf.mxu0
  %v3229 = vadd.f32 %v2716, %v3228
  %3230 = vmatprep.mubr.bf16.mxu0 0
  %3231 = vmatmul.mubr.bf16.gmra.mxu0 %v3008
  %v3232 = vpop.f32.mrf.mxu0
  %v3233 = vadd.f32 %v2721, %v3232
  %v3234 = vpop.f32.mrf.mxu0
  %v3235 = vadd.f32 %v2721, %v3234
  %v3236 = vpop.f32.mrf.mxu0
  %v3237 = vpop.f32.mrf.mxu0
  %3238 = vdwg.mxu0
  %v3239 = vmax.f32 %v3070, 0.0
  %v3240 = vmax.f32 %v3072, 0.0
  %v3241 = vmax.f32 %v3121, 0.0
  %v3242 = vmax.f32 %v3123, 0.0
  %v3243 = vmax.f32 %v3172, 0.0
  %v3244 = vmax.f32 %v3174, 0.0
  %v3245 = vmax.f32 %v3223, 0.0
  %v3246 = vmax.f32 %v3225, 0.0
  %v3247 = vmax.f32 %v3074, 0.0
  %v3248 = vmax.f32 %v3076, 0.0
  %v3249 = vmax.f32 %v3125, 0.0
  %v3250 = vmax.f32 %v3127, 0.0
  %v3251 = vmax.f32 %v3176, 0.0
  %v3252 = vmax.f32 %v3178, 0.0
  %v3253 = vmax.f32 %v3227, 0.0
  %v3254 = vmax.f32 %v3229, 0.0
  %v3255 = vmax.f32 %v3080, 0.0
  %v3256 = vmax.f32 %v3082, 0.0
  %v3257 = vmax.f32 %v3131, 0.0
  %v3258 = vmax.f32 %v3133, 0.0
  %v3259 = vmax.f32 %v3182, 0.0
  %v3260 = vmax.f32 %v3184, 0.0
  %v3261 = vmax.f32 %v3233, 0.0
  %v3262 = vmax.f32 %v3235, 0.0
  %v3263 = vpack.c.bf16 %v3247, %v3239
  %v3264 = vpack.c.bf16 %v3248, %v3240
  %v3265 = vpack.c.bf16 %v3249, %v3241
  %v3266 = vpack.c.bf16 %v3250, %v3242
  %v3267 = vpack.c.bf16 %v3251, %v3243
  %v3268 = vpack.c.bf16 %v3252, %v3244
  %v3269 = vpack.c.bf16 %v3253, %v3245
  %v3270 = vpack.c.bf16 %v3254, %v3246
  %v3271 = vpack.c.bf16 %v3255, %v3255
  %v3272 = vpack.c.bf16 %v3256, %v3256
  %v3273 = vpack.c.bf16 %v3257, %v3257
  %v3274 = vpack.c.bf16 %v3258, %v3258
  %v3275 = vpack.c.bf16 %v3259, %v3259
  %v3276 = vpack.c.bf16 %v3260, %v3260
  %v3277 = vpack.c.bf16 %v3261, %v3261
  %v3278 = vpack.c.bf16 %v3262, %v3262
  %3279 = vst [vmem:[#allocation5] sm:$0xff] 0
  %3280 = vst [vmem:[#allocation5 + $0x8] sm:$0xff] 0
  %3281 = vst [vmem:[#allocation5 + $0x10] sm:$0xff] 0
  %3282 = vst [vmem:[#allocation5 + $0x18] sm:$0xff] 0
  %3283 = vst [vmem:[#allocation5 + $0x20] sm:$0xff] 0
  %3284 = vst.msk [vmem:[#allocation5 + $0x28] sm:$0xf] %vm1817, 0
  %3285 = vst [vmem:[#allocation5 + $0x2c] sm:$0xff] 0
  %3286 = vst [vmem:[#allocation5 + $0x34] sm:$0xff] 0
  %3287 = vst [vmem:[#allocation5 + $0x3c] sm:$0xff] 0
  %3288 = vst [vmem:[#allocation5 + $0x44] sm:$0xff] 0
  %3289 = vst [vmem:[#allocation5 + $0x4c] sm:$0xff] 0
  %3290 = vst.msk [vmem:[#allocation5 + $0x54] sm:$0xf] %vm1817, 0
  %3291 = vst [vmem:[#allocation5 + $0x58] sm:$0xff] 0
  %3292 = vst [vmem:[#allocation5 + $0x60] sm:$0xff] 0
  %3293 = vst [vmem:[#allocation5 + $0x68] sm:$0xff] 0
  %3294 = vst [vmem:[#allocation5 + $0x70] sm:$0xff] 0
  %3295 = vst [vmem:[#allocation5 + $0x78] sm:$0xff] 0
  %3296 = vst.msk [vmem:[#allocation5 + $0x80] sm:$0xf] %vm1817, 0
  %v3299 = vunpack.c.l.b16 %v3263
  %v3300 = vunpack.c.h.b16 %v3263
  %v3301 = vunpack.c.l.b16 %v3271
  %v3302 = vpack.c.b16 %v3299, %v3299
  %v3303 = vpack.c.b16 %v3300, %v3300
  %v3304 = vpack.c.b16 %v3301, %v3301
  %3305 = vrot.lane.b32.xlu0 %v3302, 32
  %v3306 = vpop.permute.xlu0 %3305
  %3307 = vrot.lane.b32.xlu0 %v3303, 32
  %v3308 = vpop.permute.xlu0 %3307
  %3309 = vrot.lane.b32.xlu0 %v3304, 32
  %v3310 = vpop.permute.xlu0 %3309
  %v3311 = vrot.slane %v3306, 4
  %v3312 = vrot.slane %v3308, 4
  %v3313 = vrot.slane %v3310, 4
  %v3314 = vsel %vm1837, %v3311, %v3306
  %v3315 = vsel %vm1837, %v3312, %v3308
  %v3316 = vsel %vm1837, %v3313, %v3310
  %3320 = vst.msk [vmem:[#allocation5 + $0x4] sm:$0xff] %vm1844, %v3314
  %3321 = vst.msk [vmem:[#allocation5 + $0x30] sm:$0xff] %vm1844, %v3315
  %3322 = vst.msk [vmem:[#allocation5 + $0x5c] sm:$0xff] %vm1844, %v3316
  %v3325 = vunpack.c.l.b16 %v3264
  %v3326 = vunpack.c.h.b16 %v3264
  %v3327 = vunpack.c.l.b16 %v3272
  %v3328 = vpack.c.b16 %v3325, %v3325
  %v3329 = vpack.c.b16 %v3326, %v3326
  %v3330 = vpack.c.b16 %v3327, %v3327
  %3331 = vrot.lane.b32.xlu0 %v3328, 32
  %v3332 = vpop.permute.xlu0 %3331
  %3333 = vrot.lane.b32.xlu0 %v3329, 32
  %v3334 = vpop.permute.xlu0 %3333
  %3335 = vrot.lane.b32.xlu0 %v3330, 32
  %v3336 = vpop.permute.xlu0 %3335
  %v3337 = vrot.slane %v3332, 4
  %v3338 = vrot.slane %v3334, 4
  %v3339 = vrot.slane %v3336, 4
  %v3340 = vsel %vm1837, %v3337, %v3332
  %v3341 = vsel %vm1837, %v3338, %v3334
  %v3342 = vsel %vm1837, %v3339, %v3336
  %3346 = vst.msk [vmem:[#allocation5 + $0x8] sm:$0xff] %vm1867, %v3340
  %3347 = vst.msk [vmem:[#allocation5 + $0x34] sm:$0xff] %vm1867, %v3341
  %3348 = vst.msk [vmem:[#allocation5 + $0x60] sm:$0xff] %vm1867, %v3342
  %v3353 = vunpack.c.l.b16 %v3265
  %v3354 = vunpack.c.l.b16 %v3266
  %v3355 = vunpack.c.h.b16 %v3265
  %v3356 = vunpack.c.h.b16 %v3266
  %v3357 = vunpack.c.l.b16 %v3273
  %v3358 = vunpack.c.l.b16 %v3274
  %v3359 = vpack.c.b16 %v3354, %v3353
  %v3360 = vpack.c.b16 %v3356, %v3355
  %v3361 = vpack.c.b16 %v3358, %v3357
  %3362 = vrot.lane.b32.xlu0 %v3359, 32
  %v3363 = vpop.permute.xlu0 %3362
  %3364 = vrot.lane.b32.xlu0 %v3360, 32
  %v3365 = vpop.permute.xlu0 %3364
  %3366 = vrot.lane.b32.xlu0 %v3361, 32
  %v3367 = vpop.permute.xlu0 %3366
  %v3368 = vrot.slane %v3363, 4
  %v3369 = vrot.slane %v3365, 4
  %v3370 = vrot.slane %v3367, 4
  %v3371 = vsel %vm1837, %v3368, %v3363
  %v3372 = vsel %vm1837, %v3369, %v3365
  %v3373 = vsel %vm1837, %v3370, %v3367
  %3377 = vst.msk [vmem:[#allocation5 + $0xc] sm:$0xff] %vm1893, %v3371
  %3378 = vst.msk [vmem:[#allocation5 + $0x38] sm:$0xff] %vm1893, %v3372
  %3379 = vst.msk [vmem:[#allocation5 + $0x64] sm:$0xff] %vm1893, %v3373
  %v3382 = vunpack.c.l.b16 %v3267
  %v3383 = vunpack.c.h.b16 %v3267
  %v3384 = vunpack.c.l.b16 %v3275
  %v3385 = vpack.c.b16 %v3382, %v3354
  %v3386 = vpack.c.b16 %v3383, %v3356
  %v3387 = vpack.c.b16 %v3384, %v3358
  %3388 = vrot.lane.b32.xlu0 %v3385, 32
  %v3389 = vpop.permute.xlu0 %3388
  %3390 = vrot.lane.b32.xlu0 %v3386, 32
  %v3391 = vpop.permute.xlu0 %3390
  %3392 = vrot.lane.b32.xlu0 %v3387, 32
  %v3393 = vpop.permute.xlu0 %3392
  %v3394 = vrot.slane %v3389, 4
  %v3395 = vrot.slane %v3391, 4
  %v3396 = vrot.slane %v3393, 4
  %v3397 = vsel %vm1837, %v3394, %v3389
  %v3398 = vsel %vm1837, %v3395, %v3391
  %v3399 = vsel %vm1837, %v3396, %v3393
  %3403 = vst.msk [vmem:[#allocation5 + $0x10] sm:$0xff] %vm1916, %v3397
  %3404 = vst.msk [vmem:[#allocation5 + $0x3c] sm:$0xff] %vm1916, %v3398
  %3405 = vst.msk [vmem:[#allocation5 + $0x68] sm:$0xff] %vm1916, %v3399
  %v3408 = vunpack.c.l.b16 %v3268
  %v3409 = vunpack.c.h.b16 %v3268
  %v3410 = vunpack.c.l.b16 %v3276
  %v3411 = vpack.c.b16 %v3408, %v3382
  %v3412 = vpack.c.b16 %v3409, %v3383
  %v3413 = vpack.c.b16 %v3410, %v3384
  %3414 = vrot.lane.b32.xlu0 %v3411, 32
  %v3415 = vpop.permute.xlu0 %3414
  %3416 = vrot.lane.b32.xlu0 %v3412, 32
  %v3417 = vpop.permute.xlu0 %3416
  %3418 = vrot.lane.b32.xlu0 %v3413, 32
  %v3419 = vpop.permute.xlu0 %3418
  %v3420 = vrot.slane %v3415, 4
  %v3421 = vrot.slane %v3417, 4
  %v3422 = vrot.slane %v3419, 4
  %v3423 = vsel %vm1837, %v3420, %v3415
  %v3424 = vsel %vm1837, %v3421, %v3417
  %v3425 = vsel %vm1837, %v3422, %v3419
  %3429 = vst.msk [vmem:[#allocation5 + $0x14] sm:$0xff] %vm1938, %v3423
  %3430 = vst.msk [vmem:[#allocation5 + $0x40] sm:$0xff] %vm1938, %v3424
  %3431 = vst.msk [vmem:[#allocation5 + $0x6c] sm:$0xff] %vm1938, %v3425
  %v3434 = vunpack.c.l.b16 %v3269
  %v3435 = vunpack.c.h.b16 %v3269
  %v3436 = vunpack.c.l.b16 %v3277
  %v3437 = vpack.c.b16 %v3434, %v3408
  %v3438 = vpack.c.b16 %v3435, %v3409
  %v3439 = vpack.c.b16 %v3436, %v3410
  %3440 = vrot.lane.b32.xlu0 %v3437, 32
  %v3441 = vpop.permute.xlu0 %3440
  %3442 = vrot.lane.b32.xlu0 %v3438, 32
  %v3443 = vpop.permute.xlu0 %3442
  %3444 = vrot.lane.b32.xlu0 %v3439, 32
  %v3445 = vpop.permute.xlu0 %3444
  %v3446 = vrot.slane %v3441, 4
  %v3447 = vrot.slane %v3443, 4
  %v3448 = vrot.slane %v3445, 4
  %v3449 = vsel %vm1837, %v3446, %v3441
  %v3450 = vsel %vm1837, %v3447, %v3443
  %v3451 = vsel %vm1837, %v3448, %v3445
  %3455 = vst.msk [vmem:[#allocation5 + $0x18] sm:$0xff] %vm1961, %v3449
  %3456 = vst.msk [vmem:[#allocation5 + $0x44] sm:$0xff] %vm1961, %v3450
  %3457 = vst.msk [vmem:[#allocation5 + $0x70] sm:$0xff] %vm1961, %v3451
  %v3460 = vunpack.c.l.b16 %v3270
  %v3461 = vunpack.c.h.b16 %v3270
  %v3462 = vunpack.c.l.b16 %v3278
  %v3463 = vpack.c.b16 %v3460, %v3434
  %v3464 = vpack.c.b16 %v3461, %v3435
  %v3465 = vpack.c.b16 %v3462, %v3436
  %3466 = vrot.lane.b32.xlu0 %v3463, 32
  %v3467 = vpop.permute.xlu0 %3466
  %3468 = vrot.lane.b32.xlu0 %v3464, 32
  %v3469 = vpop.permute.xlu0 %3468
  %3470 = vrot.lane.b32.xlu0 %v3465, 32
  %v3471 = vpop.permute.xlu0 %3470
  %v3472 = vrot.slane %v3467, 4
  %v3473 = vrot.slane %v3469, 4
  %v3474 = vrot.slane %v3471, 4
  %v3475 = vsel %vm1837, %v3467, %v3472
  %v3476 = vsel %vm1837, %v3469, %v3473
  %v3477 = vsel %vm1837, %v3471, %v3474
  %3481 = vst.msk [vmem:[#allocation5 + $0x20] sm:$0xf] %vm1982, %v3475
  %3482 = vst.msk [vmem:[#allocation5 + $0x4c] sm:$0xf] %vm1982, %v3476
  %3483 = vst.msk [vmem:[#allocation5 + $0x78] sm:$0xf] %vm1982, %v3477
  %v3484 = vld [vmem:[#allocation5 + $0x58] sm:$0xee]
  %v3485 = vld [vmem:[#allocation5 + $0x60] sm:$0xee]
  %v3486 = vld [vmem:[#allocation5 + $0x68] sm:$0xee]
  %v3487 = vld [vmem:[#allocation5 + $0x70] sm:$0xee]
  %v3492 = vrot.slane %v3484, 5
  %v3493 = vrot.slane %v3492, 4
  %v3494 = vrot.slane %v3485, 5
  %v3495 = vrot.slane %v3494, 4
  %v3496 = vrot.slane %v3486, 5
  %v3497 = vrot.slane %v3496, 4
  %v3498 = vrot.slane %v3487, 5
  %v3499 = vrot.slane %v3498, 4
  %3504 = vst [vmem:[#allocation6] sm:$0x77] %v3493
  %3505 = vst [vmem:[#allocation6 + $0x8] sm:$0x77] %v3495
  %3506 = vst [vmem:[#allocation6 + $0x10] sm:$0x77] %v3497
  %vm3507 = vcmask 1042432
  %vm3508 = vcmask 653316
  %vm3509 = vmor %vm3508, %vm3507
  %3510 = vst.msk [vmem:[#allocation6 + $0x18] sm:$0x77] %vm3509, %v3499
  %v3511 = vld [vmem:[#allocation5 + $0x2c] sm:$0xcc]
  %v3512 = vld [vmem:[#allocation5 + $0x34] sm:$0xcc]
  %v3513 = vld [vmem:[#allocation5 + $0x3c] sm:$0xcc]
  %v3514 = vld [vmem:[#allocation5 + $0x44] sm:$0xcc]
  %v3515 = vld [vmem:[#allocation5 + $0x58] sm:$0x11]
  %v3516 = vld [vmem:[#allocation5 + $0x60] sm:$0x11]
  %v3517 = vld [vmem:[#allocation5 + $0x68] sm:$0x11]
  %v3518 = vld [vmem:[#allocation5 + $0x70] sm:$0x11]
  %vm3527 = vcmask 1040384
  %vm3528 = vcmask 1044484
  %vm3529 = vmor %vm3527, %vm3528
  %v3530 = vrot.slane %v3511, 7
  %v3531 = vrot.slane %v3512, 7
  %v3532 = vrot.slane %v3513, 7
  %v3533 = vrot.slane %v3514, 7
  %v3534 = vrot.slane %v3530, 4
  %v3535 = vrot.slane %v3515, 7
  %v3536 = vsel %vm3529, %v3534, %v3535
  %v3537 = vrot.slane %v3531, 4
  %v3538 = vrot.slane %v3516, 7
  %v3539 = vsel %vm3529, %v3537, %v3538
  %v3540 = vrot.slane %v3532, 4
  %v3541 = vrot.slane %v3517, 7
  %v3542 = vsel %vm3529, %v3540, %v3541
  %v3543 = vrot.slane %v3533, 4
  %v3544 = vrot.slane %v3518, 7
  %v3545 = vsel %vm3529, %v3543, %v3544
  %3546 = vrot.lane.b32.xlu0 %v3530, 112
  %v3547 = vpop.permute.xlu0 %3546
  %3548 = vrot.lane.b32.xlu0 %v3531, 112
  %v3549 = vpop.permute.xlu0 %3548
  %3550 = vrot.lane.b32.xlu0 %v3532, 112
  %v3551 = vpop.permute.xlu0 %3550
  %3552 = vrot.lane.b32.xlu0 %v3533, 112
  %v3553 = vpop.permute.xlu0 %3552
  %3554 = vrot.lane.b32.xlu0 %v3536, 112
  %v3555 = vpop.permute.xlu0 %3554
  %3556 = vrot.lane.b32.xlu0 %v3539, 112
  %v3557 = vpop.permute.xlu0 %3556
  %3558 = vrot.lane.b32.xlu0 %v3542, 112
  %v3559 = vpop.permute.xlu0 %3558
  %3560 = vrot.lane.b32.xlu0 %v3545, 112
  %v3561 = vpop.permute.xlu0 %3560
  %v3562 = vrot.slane %v3547, 4
  %v3563 = vrot.slane %v3549, 4
  %v3564 = vrot.slane %v3551, 4
  %v3565 = vrot.slane %v3553, 4
  %v3566 = vrot.slane %v3555, 4
  %v3567 = vrot.slane %v3557, 4
  %v3568 = vrot.slane %v3559, 4
  %v3569 = vrot.slane %v3561, 4
  %v3570 = vsel %vm114, %v3562, %v3563
  %v3571 = vsel %vm116, %v3547, %v3570
  %v3572 = vsel %vm114, %v3563, %v3564
  %v3573 = vsel %vm116, %v3549, %v3572
  %v3574 = vsel %vm114, %v3564, %v3565
  %v3575 = vsel %vm116, %v3551, %v3574
  %v3576 = vsel %vm116, %v3553, %v3565
  %v3577 = vsel %vm114, %v3566, %v3567
  %v3578 = vsel %vm116, %v3555, %v3577
  %v3579 = vsel %vm114, %v3567, %v3568
  %v3580 = vsel %vm116, %v3557, %v3579
  %v3581 = vsel %vm114, %v3568, %v3569
  %v3582 = vsel %vm116, %v3559, %v3581
  %v3583 = vsel %vm116, %v3561, %v3569
  %3592 = vst [vmem:[#allocation6] sm:$0x88] %v3571
  %3593 = vst [vmem:[#allocation6 + $0x8] sm:$0x88] %v3573
  %3594 = vst [vmem:[#allocation6 + $0x10] sm:$0x88] %v3575
  %vm3595 = vcmask 1043459
  %vm3596 = vcmask 654343
  %vm3597 = vmor %vm3596, %vm3595
  %3598 = vst.msk [vmem:[#allocation6 + $0x18] sm:$0x88] %vm3597, %v3576
  %3599 = vst [vmem:[#allocation6 + $0x20] sm:$0x33] %v3578
  %3600 = vst [vmem:[#allocation6 + $0x28] sm:$0x33] %v3580
  %3601 = vst [vmem:[#allocation6 + $0x30] sm:$0x33] %v3582
  %3602 = vst.msk [vmem:[#allocation6 + $0x38] sm:$0x33] %vm2002, %v3583
  %v3603 = vld [vmem:[#allocation5 + $0x58] sm:$0xee]
  %v3604 = vld [vmem:[#allocation5 + $0x60] sm:$0xee]
  %v3605 = vld [vmem:[#allocation5 + $0x68] sm:$0xee]
  %v3606 = vld [vmem:[#allocation5 + $0x70] sm:$0xee]
  %v3611 = vrot.slane %v3603, 7
  %v3612 = vrot.slane %v3604, 7
  %v3613 = vrot.slane %v3605, 7
  %v3614 = vrot.slane %v3606, 7
  %v3615 = vrot.slane %v3611, 4
  %v3616 = vrot.slane %v3612, 4
  %v3617 = vrot.slane %v3613, 4
  %v3618 = vrot.slane %v3614, 4
  %3619 = vrot.lane.b32.xlu0 %v3611, 112
  %v3620 = vpop.permute.xlu0 %3619
  %3621 = vrot.lane.b32.xlu0 %v3612, 112
  %v3622 = vpop.permute.xlu0 %3621
  %3623 = vrot.lane.b32.xlu0 %v3613, 112
  %v3624 = vpop.permute.xlu0 %3623
  %3625 = vrot.lane.b32.xlu0 %v3614, 112
  %v3626 = vpop.permute.xlu0 %3625
  %3627 = vrot.lane.b32.xlu0 %v3615, 112
  %v3628 = vpop.permute.xlu0 %3627
  %3629 = vrot.lane.b32.xlu0 %v3616, 112
  %v3630 = vpop.permute.xlu0 %3629
  %3631 = vrot.lane.b32.xlu0 %v3617, 112
  %v3632 = vpop.permute.xlu0 %3631
  %3633 = vrot.lane.b32.xlu0 %v3618, 112
  %v3634 = vpop.permute.xlu0 %3633
  %v3635 = vrot.slane %v3620, 4
  %v3636 = vrot.slane %v3622, 4
  %v3637 = vrot.slane %v3624, 4
  %v3638 = vrot.slane %v3626, 4
  %v3639 = vrot.slane %v3628, 4
  %v3640 = vrot.slane %v3630, 4
  %v3641 = vrot.slane %v3632, 4
  %v3642 = vrot.slane %v3634, 4
  %v3643 = vsel %vm114, %v3635, %v3636
  %v3644 = vsel %vm116, %v3620, %v3643
  %v3645 = vsel %vm114, %v3636, %v3637
  %v3646 = vsel %vm116, %v3622, %v3645
  %v3647 = vsel %vm114, %v3637, %v3638
  %v3648 = vsel %vm116, %v3624, %v3647
  %v3649 = vsel %vm116, %v3626, %v3638
  %v3650 = vsel %vm114, %v3639, %v3640
  %v3651 = vsel %vm116, %v3628, %v3650
  %v3652 = vsel %vm114, %v3640, %v3641
  %v3653 = vsel %vm116, %v3630, %v3652
  %v3654 = vsel %vm114, %v3641, %v3642
  %v3655 = vsel %vm116, %v3632, %v3654
  %v3656 = vsel %vm116, %v3634, %v3642
  %3665 = vst [vmem:[#allocation6 + $0x20] sm:$0xcc] %v3644
  %3666 = vst [vmem:[#allocation6 + $0x28] sm:$0xcc] %v3646
  %3667 = vst [vmem:[#allocation6 + $0x30] sm:$0xcc] %v3648
  %3668 = vst.msk [vmem:[#allocation6 + $0x38] sm:$0xcc] %vm2090, %v3649
  %3669 = vst [vmem:[#allocation6 + $0x40] sm:$0x11] %v3651
  %3670 = vst [vmem:[#allocation6 + $0x48] sm:$0x11] %v3653
  %3671 = vst [vmem:[#allocation6 + $0x50] sm:$0x11] %v3655
  %vm3672 = vcmask 1040384
  %vm3673 = vcmask 651268
  %vm3674 = vmor %vm3673, %vm3672
  %3675 = vst.msk [vmem:[#allocation6 + $0x58] sm:$0x11] %vm3674, %v3656
  %v3676 = vld [vmem:[#allocation5 + $0x4] sm:$0x88]
  %v3677 = vld [vmem:[#allocation5 + $0xc] sm:$0x88]
  %v3678 = vld [vmem:[#allocation5 + $0x14] sm:$0x88]
  %v3679 = vld [vmem:[#allocation5 + $0x1c] sm:$0x88]
  %v3680 = vld [vmem:[#allocation5 + $0x30] sm:$0x33]
  %v3681 = vld [vmem:[#allocation5 + $0x38] sm:$0x33]
  %v3682 = vld [vmem:[#allocation5 + $0x40] sm:$0x33]
  %v3683 = vld [vmem:[#allocation5 + $0x48] sm:$0x33]
  %v3692 = vrot.slane %v3676, 6
  %v3693 = vrot.slane %v3692, 4
  %v3694 = vrot.slane %v3680, 6
  %v3695 = vsel %vm2022, %v3693, %v3694
  %v3696 = vrot.slane %v3677, 6
  %v3697 = vrot.slane %v3696, 4
  %v3698 = vrot.slane %v3681, 6
  %v3699 = vsel %vm2022, %v3697, %v3698
  %v3700 = vrot.slane %v3678, 6
  %v3701 = vrot.slane %v3700, 4
  %v3702 = vrot.slane %v3682, 6
  %v3703 = vsel %vm2022, %v3701, %v3702
  %v3704 = vrot.slane %v3679, 6
  %v3705 = vrot.slane %v3704, 4
  %v3706 = vrot.slane %v3683, 6
  %v3707 = vsel %vm2022, %v3705, %v3706
  %3708 = vrot.lane.b32.xlu0 %v3695, 112
  %v3709 = vpop.permute.xlu0 %3708
  %3710 = vrot.lane.b32.xlu0 %v3699, 112
  %v3711 = vpop.permute.xlu0 %3710
  %3712 = vrot.lane.b32.xlu0 %v3703, 112
  %v3713 = vpop.permute.xlu0 %3712
  %3714 = vrot.lane.b32.xlu0 %v3707, 112
  %v3715 = vpop.permute.xlu0 %3714
  %v3716 = vrot.slane %v3709, 4
  %v3717 = vrot.slane %v3711, 4
  %v3718 = vrot.slane %v3713, 4
  %v3719 = vrot.slane %v3715, 4
  %v3720 = vsel %vm114, %v3716, %v3717
  %v3721 = vsel %vm116, %v3709, %v3720
  %v3722 = vsel %vm114, %v3717, %v3718
  %v3723 = vsel %vm116, %v3711, %v3722
  %v3724 = vsel %vm114, %v3718, %v3719
  %v3725 = vsel %vm116, %v3713, %v3724
  %v3726 = vsel %vm116, %v3715, %v3719
  %3731 = vst [vmem:[#allocation6 + $0x40] sm:$0xee] %v3721
  %3732 = vst [vmem:[#allocation6 + $0x48] sm:$0xee] %v3723
  %3733 = vst [vmem:[#allocation6 + $0x50] sm:$0xee] %v3725
  %vm3734 = vcmask 1043457
  %vm3735 = vcmask 654341
  %vm3736 = vmor %vm3735, %vm3734
  %3737 = vst.msk [vmem:[#allocation6 + $0x58] sm:$0xee] %vm3736, %v3726
  %v3738 = vld [vmem:[#allocation5 + $0x4] sm:$0x77]
  %v3739 = vld [vmem:[#allocation5 + $0xc] sm:$0x77]
  %v3740 = vld [vmem:[#allocation5 + $0x14] sm:$0x77]
  %v3741 = vld [vmem:[#allocation5 + $0x1c] sm:$0x77]
  %3746 = vrot.lane.b32.xlu0 %v3738, 96
  %v3747 = vpop.permute.xlu0 %3746
  %3748 = vrot.lane.b32.xlu0 %v3739, 96
  %v3749 = vpop.permute.xlu0 %3748
  %3750 = vrot.lane.b32.xlu0 %v3740, 96
  %v3751 = vpop.permute.xlu0 %3750
  %3752 = vrot.lane.b32.xlu0 %v3741, 96
  %v3753 = vpop.permute.xlu0 %3752
  %v3754 = vrot.slane %v3747, 4
  %v3755 = vrot.slane %v3749, 4
  %v3756 = vrot.slane %v3751, 4
  %v3757 = vrot.slane %v3753, 4
  %v3758 = vsel %vm114, %v3754, %v3755
  %v3759 = vsel %vm222, %v3747, %v3758
  %v3760 = vsel %vm114, %v3755, %v3756
  %v3761 = vsel %vm222, %v3749, %v3760
  %v3762 = vsel %vm114, %v3756, %v3757
  %v3763 = vsel %vm222, %v3751, %v3762
  %v3764 = vsel %vm222, %v3753, %v3757
  %3769 = vst [vmem:[#allocation6 + $0x60] sm:$0x77] %v3759
  %3770 = vst [vmem:[#allocation6 + $0x68] sm:$0x77] %v3761
  %3771 = vst [vmem:[#allocation6 + $0x70] sm:$0x77] %v3763
  %3772 = vst.msk [vmem:[#allocation6 + $0x78] sm:$0x77] %vm3509, %v3764
  %v3773 = vld [vmem:[#allocation5 + $0x4] sm:$0x88]
  %v3774 = vld [vmem:[#allocation5 + $0xc] sm:$0x88]
  %v3775 = vld [vmem:[#allocation5 + $0x14] sm:$0x88]
  %v3776 = vld [vmem:[#allocation5 + $0x1c] sm:$0x88]
  %v3777 = vld [vmem:[#allocation5 + $0x30] sm:$0x33]
  %v3778 = vld [vmem:[#allocation5 + $0x38] sm:$0x33]
  %v3779 = vld [vmem:[#allocation5 + $0x40] sm:$0x33]
  %v3780 = vld [vmem:[#allocation5 + $0x48] sm:$0x33]
  %3789 = vrot.lane.b32.xlu0 %v3773, 96
  %v3790 = vpop.permute.xlu0 %3789
  %3791 = vrot.lane.b32.xlu0 %v3774, 96
  %v3792 = vpop.permute.xlu0 %3791
  %3793 = vrot.lane.b32.xlu0 %v3775, 96
  %v3794 = vpop.permute.xlu0 %3793
  %3795 = vrot.lane.b32.xlu0 %v3776, 96
  %v3796 = vpop.permute.xlu0 %3795
  %3797 = vrot.lane.b32.xlu0 %v3777, 96
  %v3798 = vpop.permute.xlu0 %3797
  %3799 = vrot.lane.b32.xlu0 %v3778, 96
  %v3800 = vpop.permute.xlu0 %3799
  %3801 = vrot.lane.b32.xlu0 %v3779, 96
  %v3802 = vpop.permute.xlu0 %3801
  %3803 = vrot.lane.b32.xlu0 %v3780, 96
  %v3804 = vpop.permute.xlu0 %3803
  %v3805 = vrot.slane %v3790, 4
  %v3806 = vrot.slane %v3792, 4
  %v3807 = vrot.slane %v3794, 4
  %v3808 = vrot.slane %v3796, 4
  %v3809 = vrot.slane %v3798, 4
  %v3810 = vrot.slane %v3800, 4
  %v3811 = vrot.slane %v3802, 4
  %v3812 = vrot.slane %v3804, 4
  %v3813 = vsel %vm114, %v3805, %v3806
  %v3814 = vsel %vm222, %v3790, %v3813
  %v3815 = vsel %vm114, %v3806, %v3807
  %v3816 = vsel %vm222, %v3792, %v3815
  %v3817 = vsel %vm114, %v3807, %v3808
  %v3818 = vsel %vm222, %v3794, %v3817
  %v3819 = vsel %vm222, %v3796, %v3808
  %v3820 = vsel %vm114, %v3809, %v3810
  %v3821 = vsel %vm222, %v3798, %v3820
  %v3822 = vsel %vm114, %v3810, %v3811
  %v3823 = vsel %vm222, %v3800, %v3822
  %v3824 = vsel %vm114, %v3811, %v3812
  %v3825 = vsel %vm222, %v3802, %v3824
  %v3826 = vsel %vm222, %v3804, %v3812
  %3835 = vst [vmem:[#allocation6 + $0x60] sm:$0x88] %v3814
  %3836 = vst [vmem:[#allocation6 + $0x68] sm:$0x88] %v3816
  %3837 = vst [vmem:[#allocation6 + $0x70] sm:$0x88] %v3818
  %3838 = vst.msk [vmem:[#allocation6 + $0x78] sm:$0x88] %vm3597, %v3819
  %3839 = vst [vmem:[#allocation6 + $0x80] sm:$0x33] %v3821
  %3840 = vst [vmem:[#allocation6 + $0x88] sm:$0x33] %v3823
  %3841 = vst [vmem:[#allocation6 + $0x90] sm:$0x33] %v3825
  %3842 = vst.msk [vmem:[#allocation6 + $0x98] sm:$0x33] %vm2002, %v3826
  %v3843 = vld [vmem:[#allocation5 + $0x5c] sm:$0xee]
  %v3844 = vld [vmem:[#allocation5 + $0x64] sm:$0xee]
  %v3845 = vld [vmem:[#allocation5 + $0x6c] sm:$0xee]
  %v3846 = vld [vmem:[#allocation5 + $0x74] sm:$0xee]
  %v3851 = vrot.slane %v3843, 7
  %v3852 = vrot.slane %v3844, 7
  %v3853 = vrot.slane %v3845, 7
  %v3854 = vrot.slane %v3846, 7
  %v3855 = vrot.slane %v3851, 4
  %v3856 = vrot.slane %v3852, 4
  %v3857 = vrot.slane %v3853, 4
  %v3858 = vrot.slane %v3854, 4
  %3859 = vrot.lane.b32.xlu0 %v3851, 112
  %v3860 = vpop.permute.xlu0 %3859
  %3861 = vrot.lane.b32.xlu0 %v3852, 112
  %v3862 = vpop.permute.xlu0 %3861
  %3863 = vrot.lane.b32.xlu0 %v3853, 112
  %v3864 = vpop.permute.xlu0 %3863
  %3865 = vrot.lane.b32.xlu0 %v3854, 112
  %v3866 = vpop.permute.xlu0 %3865
  %3867 = vrot.lane.b32.xlu0 %v3855, 112
  %v3868 = vpop.permute.xlu0 %3867
  %3869 = vrot.lane.b32.xlu0 %v3856, 112
  %v3870 = vpop.permute.xlu0 %3869
  %3871 = vrot.lane.b32.xlu0 %v3857, 112
  %v3872 = vpop.permute.xlu0 %3871
  %3873 = vrot.lane.b32.xlu0 %v3858, 112
  %v3874 = vpop.permute.xlu0 %3873
  %v3875 = vrot.slane %v3860, 4
  %v3876 = vrot.slane %v3862, 4
  %v3877 = vrot.slane %v3864, 4
  %v3878 = vrot.slane %v3866, 4
  %v3879 = vrot.slane %v3868, 4
  %v3880 = vrot.slane %v3870, 4
  %v3881 = vrot.slane %v3872, 4
  %v3882 = vrot.slane %v3874, 4
  %v3883 = vsel %vm114, %v3875, %v3876
  %v3884 = vsel %vm116, %v3860, %v3883
  %v3885 = vsel %vm114, %v3876, %v3877
  %v3886 = vsel %vm116, %v3862, %v3885
  %v3887 = vsel %vm114, %v3877, %v3878
  %v3888 = vsel %vm116, %v3864, %v3887
  %v3889 = vsel %vm116, %v3866, %v3878
  %v3890 = vsel %vm114, %v3879, %v3880
  %v3891 = vsel %vm116, %v3868, %v3890
  %v3892 = vsel %vm114, %v3880, %v3881
  %v3893 = vsel %vm116, %v3870, %v3892
  %v3894 = vsel %vm114, %v3881, %v3882
  %v3895 = vsel %vm116, %v3872, %v3894
  %v3896 = vsel %vm116, %v3874, %v3882
  %3905 = vst [vmem:[#allocation6 + $0x80] sm:$0xcc] %v3884
  %3906 = vst [vmem:[#allocation6 + $0x88] sm:$0xcc] %v3886
  %3907 = vst [vmem:[#allocation6 + $0x90] sm:$0xcc] %v3888
  %3908 = vst.msk [vmem:[#allocation6 + $0x98] sm:$0xcc] %vm2090, %v3889
  %3909 = vst [vmem:[#allocation6 + $0xa0] sm:$0x11] %v3891
  %3910 = vst [vmem:[#allocation6 + $0xa8] sm:$0x11] %v3893
  %3911 = vst [vmem:[#allocation6 + $0xb0] sm:$0x11] %v3895
  %3912 = vst.msk [vmem:[#allocation6 + $0xb8] sm:$0x11] %vm3674, %v3896
  %v3913 = vld [vmem:[#allocation5 + $0x30] sm:$0xcc]
  %v3914 = vld [vmem:[#allocation5 + $0x38] sm:$0xcc]
  %v3915 = vld [vmem:[#allocation5 + $0x40] sm:$0xcc]
  %v3916 = vld [vmem:[#allocation5 + $0x48] sm:$0xcc]
  %v3917 = vld [vmem:[#allocation5 + $0x5c] sm:$0x11]
  %v3918 = vld [vmem:[#allocation5 + $0x64] sm:$0x11]
  %v3919 = vld [vmem:[#allocation5 + $0x6c] sm:$0x11]
  %v3920 = vld [vmem:[#allocation5 + $0x74] sm:$0x11]
  %vm3929 = vcmask 1042432
  %vm3930 = vcmask 1046532
  %vm3931 = vmor %vm3929, %vm3930
  %v3932 = vrot.slane %v3913, 5
  %v3933 = vrot.slane %v3932, 4
  %v3934 = vrot.slane %v3917, 5
  %v3935 = vsel %vm3931, %v3933, %v3934
  %v3936 = vrot.slane %v3914, 5
  %v3937 = vrot.slane %v3936, 4
  %v3938 = vrot.slane %v3918, 5
  %v3939 = vsel %vm3931, %v3937, %v3938
  %v3940 = vrot.slane %v3915, 5
  %v3941 = vrot.slane %v3940, 4
  %v3942 = vrot.slane %v3919, 5
  %v3943 = vsel %vm3931, %v3941, %v3942
  %v3944 = vrot.slane %v3916, 5
  %v3945 = vrot.slane %v3944, 4
  %v3946 = vrot.slane %v3920, 5
  %v3947 = vsel %vm3931, %v3945, %v3946
  %3948 = vrot.lane.b32.xlu0 %v3935, 96
  %v3949 = vpop.permute.xlu0 %3948
  %3950 = vrot.lane.b32.xlu0 %v3939, 96
  %v3951 = vpop.permute.xlu0 %3950
  %3952 = vrot.lane.b32.xlu0 %v3943, 96
  %v3953 = vpop.permute.xlu0 %3952
  %3954 = vrot.lane.b32.xlu0 %v3947, 96
  %v3955 = vpop.permute.xlu0 %3954
  %v3956 = vrot.slane %v3949, 4
  %v3957 = vrot.slane %v3951, 4
  %v3958 = vrot.slane %v3953, 4
  %v3959 = vrot.slane %v3955, 4
  %v3960 = vsel %vm114, %v3956, %v3957
  %v3961 = vsel %vm222, %v3949, %v3960
  %v3962 = vsel %vm114, %v3957, %v3958
  %v3963 = vsel %vm222, %v3951, %v3962
  %v3964 = vsel %vm114, %v3958, %v3959
  %v3965 = vsel %vm222, %v3953, %v3964
  %v3966 = vsel %vm222, %v3955, %v3959
  %3971 = vst [vmem:[#allocation6 + $0xa0] sm:$0xee] %v3961
  %3972 = vst [vmem:[#allocation6 + $0xa8] sm:$0xee] %v3963
  %3973 = vst [vmem:[#allocation6 + $0xb0] sm:$0xee] %v3965
  %3974 = vst.msk [vmem:[#allocation6 + $0xb8] sm:$0xee] %vm3736, %v3966
  %v3975 = vld [vmem:[#allocation5 + $0x5c] sm:$0xee]
  %v3976 = vld [vmem:[#allocation5 + $0x64] sm:$0xee]
  %v3977 = vld [vmem:[#allocation5 + $0x6c] sm:$0xee]
  %v3978 = vld [vmem:[#allocation5 + $0x74] sm:$0xee]
  %v3983 = vrot.slane %v3975, 5
  %v3984 = vrot.slane %v3983, 4
  %v3985 = vrot.slane %v3976, 5
  %v3986 = vrot.slane %v3985, 4
  %v3987 = vrot.slane %v3977, 5
  %v3988 = vrot.slane %v3987, 4
  %v3989 = vrot.slane %v3978, 5
  %v3990 = vrot.slane %v3989, 4
  %3991 = vrot.lane.b32.xlu0 %v3984, 96
  %v3992 = vpop.permute.xlu0 %3991
  %3993 = vrot.lane.b32.xlu0 %v3986, 96
  %v3994 = vpop.permute.xlu0 %3993
  %3995 = vrot.lane.b32.xlu0 %v3988, 96
  %v3996 = vpop.permute.xlu0 %3995
  %3997 = vrot.lane.b32.xlu0 %v3990, 96
  %v3998 = vpop.permute.xlu0 %3997
  %v3999 = vrot.slane %v3992, 4
  %v4000 = vrot.slane %v3994, 4
  %v4001 = vrot.slane %v3996, 4
  %v4002 = vrot.slane %v3998, 4
  %v4003 = vsel %vm114, %v3999, %v4000
  %v4004 = vsel %vm222, %v3992, %v4003
  %v4005 = vsel %vm114, %v4000, %v4001
  %v4006 = vsel %vm222, %v3994, %v4005
  %v4007 = vsel %vm114, %v4001, %v4002
  %v4008 = vsel %vm222, %v3996, %v4007
  %v4009 = vsel %vm222, %v3998, %v4002
  %4014 = vst [vmem:[#allocation6 + $0xc0] sm:$0x77] %v4004
  %4015 = vst [vmem:[#allocation6 + $0xc8] sm:$0x77] %v4006
  %4016 = vst [vmem:[#allocation6 + $0xd0] sm:$0x77] %v4008
  %4017 = vst.msk [vmem:[#allocation6 + $0xd8] sm:$0x77] %vm3509, %v4009
  %v4018 = vld [vmem:[%s5] sm:$0xf]
  %v4019 = vld [vmem:[%s5 + $0x4] sm:$0x3]
  %v4020 = vld [vmem:[#allocation6] sm:$0xff]
  %v4021 = vld [vmem:[#allocation6 + $0x8] sm:$0xff]
  %v4022 = vld [vmem:[#allocation6 + $0x10] sm:$0xff]
  %v4023 = vld [vmem:[#allocation6 + $0x18] sm:$0xff]
  %v4024 = vld [vmem:[#allocation6 + $0x20] sm:$0xff]
  %v4025 = vld [vmem:[#allocation6 + $0x28] sm:$0xff]
  %v4026 = vld [vmem:[#allocation6 + $0x30] sm:$0xff]
  %v4027 = vld [vmem:[#allocation6 + $0x38] sm:$0xff]
  %v4028 = vld [vmem:[#allocation6 + $0x40] sm:$0xff]
  %v4029 = vld [vmem:[#allocation6 + $0x48] sm:$0xff]
  %v4030 = vld [vmem:[#allocation6 + $0x50] sm:$0xff]
  %v4031 = vld [vmem:[#allocation6 + $0x58] sm:$0xff]
  %v4032 = vld [vmem:[#allocation6 + $0x60] sm:$0xff]
  %v4033 = vld [vmem:[#allocation6 + $0x68] sm:$0xff]
  %v4034 = vld [vmem:[#allocation6 + $0x70] sm:$0xff]
  %v4035 = vld [vmem:[#allocation6 + $0x78] sm:$0xff]
  %v4036 = vld [vmem:[#allocation6 + $0x80] sm:$0xff]
  %v4037 = vld [vmem:[#allocation6 + $0x88] sm:$0xff]
  %v4038 = vld [vmem:[#allocation6 + $0x90] sm:$0xff]
  %v4039 = vld [vmem:[#allocation6 + $0x98] sm:$0xff]
  %v4040 = vld [vmem:[#allocation6 + $0xa0] sm:$0xff]
  %v4041 = vld [vmem:[#allocation6 + $0xa8] sm:$0xff]
  %v4042 = vld [vmem:[#allocation6 + $0xb0] sm:$0xff]
  %v4043 = vld [vmem:[#allocation6 + $0xb8] sm:$0xff]
  %v4044 = vld [vmem:[#allocation6 + $0xc0] sm:$0x77]
  %v4045 = vld [vmem:[#allocation6 + $0xc8] sm:$0x77]
  %v4046 = vld [vmem:[#allocation6 + $0xd0] sm:$0x77]
  %v4047 = vld [vmem:[#allocation6 + $0xd8] sm:$0x77]
  %v4048 = vld [vmem:[%s6] sm:$0xff]
  %v4049 = vld [vmem:[%s6 + $0x8] sm:$0xf]
  %4051 = vset.pattern.permute.xlu0 0
  %4052 = vperm.xlu0 %4051, %v4048
  %v4053 = vpop.permute.xlu0 %4052
  %4056 = vset.pattern.permute.xlu0 0
  %4057 = vperm.xlu0 %4056, %v4049
  %v4058 = vpop.permute.xlu0 %4057
  %v4062 = vunpack.c.l.b16 %v4018
  %v4063 = vunpack.c.l.b16 %v4019
  %v4064 = vpack.c.b16 %v4063, %v4062
  %v4093 = vunpack.c.l.b16 %v4020
  %v4094 = vunpack.c.h.b16 %v4020
  %v4095 = vunpack.c.l.b16 %v4021
  %v4096 = vunpack.c.h.b16 %v4021
  %v4097 = vunpack.c.l.b16 %v4022
  %v4098 = vunpack.c.h.b16 %v4022
  %v4099 = vunpack.c.l.b16 %v4023
  %v4100 = vunpack.c.h.b16 %v4023
  %v4101 = vunpack.c.l.b16 %v4024
  %v4102 = vunpack.c.h.b16 %v4024
  %v4103 = vunpack.c.l.b16 %v4025
  %v4104 = vunpack.c.h.b16 %v4025
  %v4105 = vunpack.c.l.b16 %v4026
  %v4106 = vunpack.c.h.b16 %v4026
  %v4107 = vunpack.c.l.b16 %v4027
  %v4108 = vunpack.c.h.b16 %v4027
  %v4109 = vunpack.c.l.b16 %v4028
  %v4110 = vunpack.c.h.b16 %v4028
  %v4111 = vunpack.c.l.b16 %v4029
  %v4112 = vunpack.c.h.b16 %v4029
  %v4113 = vunpack.c.l.b16 %v4030
  %v4114 = vunpack.c.h.b16 %v4030
  %v4115 = vunpack.c.l.b16 %v4031
  %v4116 = vunpack.c.h.b16 %v4031
  %v4117 = vunpack.c.l.b16 %v4032
  %v4118 = vunpack.c.h.b16 %v4032
  %v4119 = vunpack.c.l.b16 %v4033
  %v4120 = vunpack.c.h.b16 %v4033
  %v4121 = vunpack.c.l.b16 %v4034
  %v4122 = vunpack.c.h.b16 %v4034
  %v4123 = vunpack.c.l.b16 %v4035
  %v4124 = vunpack.c.h.b16 %v4035
  %v4125 = vunpack.c.l.b16 %v4036
  %v4126 = vunpack.c.h.b16 %v4036
  %v4127 = vunpack.c.l.b16 %v4037
  %v4128 = vunpack.c.h.b16 %v4037
  %v4129 = vunpack.c.l.b16 %v4038
  %v4130 = vunpack.c.h.b16 %v4038
  %v4131 = vunpack.c.l.b16 %v4039
  %v4132 = vunpack.c.h.b16 %v4039
  %v4133 = vunpack.c.l.b16 %v4040
  %v4134 = vunpack.c.h.b16 %v4040
  %v4135 = vunpack.c.l.b16 %v4041
  %v4136 = vunpack.c.h.b16 %v4041
  %v4137 = vunpack.c.l.b16 %v4042
  %v4138 = vunpack.c.h.b16 %v4042
  %v4139 = vunpack.c.l.b16 %v4043
  %v4140 = vunpack.c.h.b16 %v4043
  %v4141 = vunpack.c.l.b16 %v4044
  %v4142 = vunpack.c.h.b16 %v4044
  %v4143 = vunpack.c.l.b16 %v4045
  %v4144 = vunpack.c.h.b16 %v4045
  %v4145 = vunpack.c.l.b16 %v4046
  %v4146 = vunpack.c.h.b16 %v4046
  %v4147 = vunpack.c.l.b16 %v4047
  %v4148 = vunpack.c.h.b16 %v4047
  %v4149 = vpack.c.b16 %v4101, %v4093
  %v4150 = vpack.c.b16 %v4102, %v4094
  %v4151 = vpack.c.b16 %v4103, %v4095
  %v4152 = vpack.c.b16 %v4104, %v4096
  %v4153 = vpack.c.b16 %v4105, %v4097
  %v4154 = vpack.c.b16 %v4106, %v4098
  %v4155 = vpack.c.b16 %v4107, %v4099
  %v4156 = vpack.c.b16 %v4108, %v4100
  %v4157 = vpack.c.b16 %v4117, %v4109
  %v4158 = vpack.c.b16 %v4118, %v4110
  %v4159 = vpack.c.b16 %v4119, %v4111
  %v4160 = vpack.c.b16 %v4120, %v4112
  %v4161 = vpack.c.b16 %v4121, %v4113
  %v4162 = vpack.c.b16 %v4122, %v4114
  %v4163 = vpack.c.b16 %v4123, %v4115
  %v4164 = vpack.c.b16 %v4124, %v4116
  %v4165 = vpack.c.b16 %v4133, %v4125
  %v4166 = vpack.c.b16 %v4134, %v4126
  %v4167 = vpack.c.b16 %v4135, %v4127
  %v4168 = vpack.c.b16 %v4136, %v4128
  %v4169 = vpack.c.b16 %v4137, %v4129
  %v4170 = vpack.c.b16 %v4138, %v4130
  %v4171 = vpack.c.b16 %v4139, %v4131
  %v4172 = vpack.c.b16 %v4140, %v4132
  %v4173 = vpack.c.b16 %v4141, %v4141
  %v4174 = vpack.c.b16 %v4142, %v4142
  %v4175 = vpack.c.b16 %v4143, %v4143
  %v4176 = vpack.c.b16 %v4144, %v4144
  %v4177 = vpack.c.b16 %v4145, %v4145
  %v4178 = vpack.c.b16 %v4146, %v4146
  %v4179 = vpack.c.b16 %v4147, %v4147
  %v4180 = vpack.c.b16 %v4148, %v4148
  %vm4205 = vcmask 441344
  %v4207 = vsel %vm4205, %v4064, 0
  %v4210 = vsel %vm3507, %v4173, 0
  %v4213 = vsel %vm3507, %v4174, 0
  %v4216 = vsel %vm3507, %v4175, 0
  %v4219 = vsel %vm3507, %v4176, 0
  %v4222 = vsel %vm3507, %v4177, 0
  %v4225 = vsel %vm3507, %v4178, 0
  %v4228 = vsel %vm3507, %v4179, 0
  %v4231 = vsel %vm3507, %v4180, 0
  %4233 = vmatprep.subr.bf16.mxu0 0
  %4234 = vmatpush1.bf16.msra.mxu0 0
  %4235 = vmatprep.subr.bf16.mxu0 0
  %4236 = vmatpush1.bf16.msra.mxu0 0
  %4237 = vmatprep.subr.bf16.mxu0 0
  %4238 = vmatpush1.bf16.msra.mxu0 0
  %4239 = vmatprep.subr.bf16.mxu0 0
  %4240 = vmatpush1.bf16.msra.mxu0 0
  %4241 = vmatprep.subr.bf16.mxu0 %v4213
  %4242 = vmatpush1.bf16.msra.mxu0 %v4210
  %4243 = vmatprep.subr.bf16.mxu0 %v4166
  %4244 = vmatpush1.bf16.msra.mxu0 %v4165
  %4245 = vmatprep.subr.bf16.mxu0 %v4158
  %4246 = vmatpush1.bf16.msra.mxu0 %v4157
  %4247 = vmatprep.subr.bf16.mxu0 %v4150
  %4248 = vmatpush1.bf16.msra.mxu0 %v4149
  %4249 = vmatprep.subr.bf16.mxu0 0
  %4250 = vmatpush2.bf16.msra.mxu0 0
  %4251 = vmatprep.subr.bf16.mxu0 0
  %4252 = vmatpush2.bf16.msra.mxu0 0
  %4253 = vmatprep.subr.bf16.mxu0 0
  %4254 = vmatpush2.bf16.msra.mxu0 0
  %4255 = vmatprep.subr.bf16.mxu0 0
  %4256 = vmatpush2.bf16.msra.mxu0 0
  %4257 = vmatprep.subr.bf16.mxu0 0
  %4258 = vmatpush2.bf16.msra.mxu0 0
  %4259 = vmatprep.subr.bf16.mxu0 0
  %4260 = vmatpush2.bf16.msra.mxu0 0
  %4261 = vmatprep.subr.bf16.mxu0 0
  %4262 = vmatpush2.bf16.msra.mxu0 0
  %4263 = vmatprep.subr.bf16.mxu0 0
  %4264 = vmatpush2.bf16.msra.mxu0 0
  %4265 = vmatprep.mubr.bf16.mxu0 0
  %4266 = vmatmul.mubr.bf16.gmra.mxu0 %v4207
  %v4267 = vpop.f32.mrf.mxu0
  %v4268 = vadd.f32 %v4053, %v4267
  %v4269 = vpop.f32.mrf.mxu0
  %v4270 = vadd.f32 %v4053, %v4269
  %v4271 = vpop.f32.mrf.mxu0
  %v4272 = vadd.f32 %v4058, %v4271
  %v4273 = vpop.f32.mrf.mxu0
  %v4274 = vadd.f32 %v4058, %v4273
  %4275 = vdwg.mxu0
  %4276 = vmatprep.subr.bf16.mxu0 0
  %4277 = vmatpush1.bf16.msra.mxu0 0
  %4278 = vmatprep.subr.bf16.mxu0 0
  %4279 = vmatpush1.bf16.msra.mxu0 0
  %4280 = vmatprep.subr.bf16.mxu0 0
  %4281 = vmatpush1.bf16.msra.mxu0 0
  %4282 = vmatprep.subr.bf16.mxu0 0
  %4283 = vmatpush1.bf16.msra.mxu0 0
  %4284 = vmatprep.subr.bf16.mxu0 %v4219
  %4285 = vmatpush1.bf16.msra.mxu0 %v4216
  %4286 = vmatprep.subr.bf16.mxu0 %v4168
  %4287 = vmatpush1.bf16.msra.mxu0 %v4167
  %4288 = vmatprep.subr.bf16.mxu0 %v4160
  %4289 = vmatpush1.bf16.msra.mxu0 %v4159
  %4290 = vmatprep.subr.bf16.mxu0 %v4152
  %4291 = vmatpush1.bf16.msra.mxu0 %v4151
  %4292 = vmatprep.subr.bf16.mxu0 0
  %4293 = vmatpush2.bf16.msra.mxu0 0
  %4294 = vmatprep.subr.bf16.mxu0 0
  %4295 = vmatpush2.bf16.msra.mxu0 0
  %4296 = vmatprep.subr.bf16.mxu0 0
  %4297 = vmatpush2.bf16.msra.mxu0 0
  %4298 = vmatprep.subr.bf16.mxu0 0
  %4299 = vmatpush2.bf16.msra.mxu0 0
  %4300 = vmatprep.subr.bf16.mxu0 0
  %4301 = vmatpush2.bf16.msra.mxu0 0
  %4302 = vmatprep.subr.bf16.mxu0 0
  %4303 = vmatpush2.bf16.msra.mxu0 0
  %4304 = vmatprep.subr.bf16.mxu0 0
  %4305 = vmatpush2.bf16.msra.mxu0 0
  %4306 = vmatprep.subr.bf16.mxu0 0
  %4307 = vmatpush2.bf16.msra.mxu0 0
  %4308 = vmatprep.mubr.bf16.mxu0 0
  %4309 = vmatmul.mubr.bf16.gmra.mxu0 %v4207
  %v4310 = vpop.f32.mrf.mxu0
  %v4311 = vadd.f32 %v4053, %v4310
  %v4312 = vpop.f32.mrf.mxu0
  %v4313 = vadd.f32 %v4053, %v4312
  %v4314 = vpop.f32.mrf.mxu0
  %v4315 = vadd.f32 %v4058, %v4314
  %v4316 = vpop.f32.mrf.mxu0
  %v4317 = vadd.f32 %v4058, %v4316
  %4318 = vdwg.mxu0
  %4319 = vmatprep.subr.bf16.mxu0 0
  %4320 = vmatpush1.bf16.msra.mxu0 0
  %4321 = vmatprep.subr.bf16.mxu0 0
  %4322 = vmatpush1.bf16.msra.mxu0 0
  %4323 = vmatprep.subr.bf16.mxu0 0
  %4324 = vmatpush1.bf16.msra.mxu0 0
  %4325 = vmatprep.subr.bf16.mxu0 0
  %4326 = vmatpush1.bf16.msra.mxu0 0
  %4327 = vmatprep.subr.bf16.mxu0 %v4225
  %4328 = vmatpush1.bf16.msra.mxu0 %v4222
  %4329 = vmatprep.subr.bf16.mxu0 %v4170
  %4330 = vmatpush1.bf16.msra.mxu0 %v4169
  %4331 = vmatprep.subr.bf16.mxu0 %v4162
  %4332 = vmatpush1.bf16.msra.mxu0 %v4161
  %4333 = vmatprep.subr.bf16.mxu0 %v4154
  %4334 = vmatpush1.bf16.msra.mxu0 %v4153
  %4335 = vmatprep.subr.bf16.mxu0 0
  %4336 = vmatpush2.bf16.msra.mxu0 0
  %4337 = vmatprep.subr.bf16.mxu0 0
  %4338 = vmatpush2.bf16.msra.mxu0 0
  %4339 = vmatprep.subr.bf16.mxu0 0
  %4340 = vmatpush2.bf16.msra.mxu0 0
  %4341 = vmatprep.subr.bf16.mxu0 0
  %4342 = vmatpush2.bf16.msra.mxu0 0
  %4343 = vmatprep.subr.bf16.mxu0 0
  %4344 = vmatpush2.bf16.msra.mxu0 0
  %4345 = vmatprep.subr.bf16.mxu0 0
  %4346 = vmatpush2.bf16.msra.mxu0 0
  %4347 = vmatprep.subr.bf16.mxu0 0
  %4348 = vmatpush2.bf16.msra.mxu0 0
  %4349 = vmatprep.subr.bf16.mxu0 0
  %4350 = vmatpush2.bf16.msra.mxu0 0
  %4351 = vmatprep.mubr.bf16.mxu0 0
  %4352 = vmatmul.mubr.bf16.gmra.mxu0 %v4207
  %v4353 = vpop.f32.mrf.mxu0
  %v4354 = vadd.f32 %v4053, %v4353
  %v4355 = vpop.f32.mrf.mxu0
  %v4356 = vadd.f32 %v4053, %v4355
  %v4357 = vpop.f32.mrf.mxu0
  %v4358 = vadd.f32 %v4058, %v4357
  %v4359 = vpop.f32.mrf.mxu0
  %v4360 = vadd.f32 %v4058, %v4359
  %4361 = vdwg.mxu0
  %4362 = vmatprep.subr.bf16.mxu0 0
  %4363 = vmatpush1.bf16.msra.mxu0 0
  %4364 = vmatprep.subr.bf16.mxu0 0
  %4365 = vmatpush1.bf16.msra.mxu0 0
  %4366 = vmatprep.subr.bf16.mxu0 0
  %4367 = vmatpush1.bf16.msra.mxu0 0
  %4368 = vmatprep.subr.bf16.mxu0 0
  %4369 = vmatpush1.bf16.msra.mxu0 0
  %4370 = vmatprep.subr.bf16.mxu0 %v4231
  %4371 = vmatpush1.bf16.msra.mxu0 %v4228
  %4372 = vmatprep.subr.bf16.mxu0 %v4172
  %4373 = vmatpush1.bf16.msra.mxu0 %v4171
  %4374 = vmatprep.subr.bf16.mxu0 %v4164
  %4375 = vmatpush1.bf16.msra.mxu0 %v4163
  %4376 = vmatprep.subr.bf16.mxu0 %v4156
  %4377 = vmatpush1.bf16.msra.mxu0 %v4155
  %4378 = vmatprep.subr.bf16.mxu0 0
  %4379 = vmatpush2.bf16.msra.mxu0 0
  %4380 = vmatprep.subr.bf16.mxu0 0
  %4381 = vmatpush2.bf16.msra.mxu0 0
  %4382 = vmatprep.subr.bf16.mxu0 0
  %4383 = vmatpush2.bf16.msra.mxu0 0
  %4384 = vmatprep.subr.bf16.mxu0 0
  %4385 = vmatpush2.bf16.msra.mxu0 0
  %4386 = vmatprep.subr.bf16.mxu0 0
  %4387 = vmatpush2.bf16.msra.mxu0 0
  %4388 = vmatprep.subr.bf16.mxu0 0
  %4389 = vmatpush2.bf16.msra.mxu0 0
  %4390 = vmatprep.subr.bf16.mxu0 0
  %4391 = vmatpush2.bf16.msra.mxu0 0
  %4392 = vmatprep.subr.bf16.mxu0 0
  %4393 = vmatpush2.bf16.msra.mxu0 0
  %4394 = vmatprep.mubr.bf16.mxu0 0
  %4395 = vmatmul.mubr.bf16.gmra.mxu0 %v4207
  %v4396 = vpop.f32.mrf.mxu0
  %v4397 = vadd.f32 %v4053, %v4396
  %v4398 = vpop.f32.mrf.mxu0
  %v4399 = vadd.f32 %v4053, %v4398
  %v4400 = vpop.f32.mrf.mxu0
  %v4401 = vadd.f32 %v4058, %v4400
  %v4402 = vpop.f32.mrf.mxu0
  %v4403 = vadd.f32 %v4058, %v4402
  %4404 = vdwg.mxu0
  %v4405 = vsub.f32 0.0, %v4268
  %v4406 = vsub.f32 0.0, %v4270
  %v4407 = vsub.f32 0.0, %v4311
  %v4408 = vsub.f32 0.0, %v4313
  %v4409 = vsub.f32 0.0, %v4354
  %v4410 = vsub.f32 0.0, %v4356
  %v4411 = vsub.f32 0.0, %v4397
  %v4412 = vsub.f32 0.0, %v4399
  %v4413 = vsub.f32 0.0, %v4272
  %v4414 = vsub.f32 0.0, %v4274
  %v4415 = vsub.f32 0.0, %v4315
  %v4416 = vsub.f32 0.0, %v4317
  %v4417 = vsub.f32 0.0, %v4358
  %v4418 = vsub.f32 0.0, %v4360
  %v4419 = vsub.f32 0.0, %v4401
  %v4420 = vsub.f32 0.0, %v4403
  %v4421 = vmul.f32 %v4405, 1.442695
  %v4422 = vpow.pop %v4421
  %v4423 = vmul.f32 %v4406, 1.442695
  %v4424 = vpow.pop %v4423
  %v4425 = vmul.f32 %v4407, 1.442695
  %v4426 = vpow.pop %v4425
  %v4427 = vmul.f32 %v4408, 1.442695
  %v4428 = vpow.pop %v4427
  %v4429 = vmul.f32 %v4409, 1.442695
  %v4430 = vpow.pop %v4429
  %v4431 = vmul.f32 %v4410, 1.442695
  %v4432 = vpow.pop %v4431
  %v4433 = vmul.f32 %v4411, 1.442695
  %v4434 = vpow.pop %v4433
  %v4435 = vmul.f32 %v4412, 1.442695
  %v4436 = vpow.pop %v4435
  %v4437 = vmul.f32 %v4413, 1.442695
  %v4438 = vpow.pop %v4437
  %v4439 = vmul.f32 %v4414, 1.442695
  %v4440 = vpow.pop %v4439
  %v4441 = vmul.f32 %v4415, 1.442695
  %v4442 = vpow.pop %v4441
  %v4443 = vmul.f32 %v4416, 1.442695
  %v4444 = vpow.pop %v4443
  %v4445 = vmul.f32 %v4417, 1.442695
  %v4446 = vpow.pop %v4445
  %v4447 = vmul.f32 %v4418, 1.442695
  %v4448 = vpow.pop %v4447
  %v4449 = vmul.f32 %v4419, 1.442695
  %v4450 = vpow.pop %v4449
  %v4451 = vmul.f32 %v4420, 1.442695
  %v4452 = vpow.pop %v4451
  %v4453 = vadd.f32 %v4422, 1.0
  %v4454 = vadd.f32 %v4424, 1.0
  %v4455 = vadd.f32 %v4426, 1.0
  %v4456 = vadd.f32 %v4428, 1.0
  %v4457 = vadd.f32 %v4430, 1.0
  %v4458 = vadd.f32 %v4432, 1.0
  %v4459 = vadd.f32 %v4434, 1.0
  %v4460 = vadd.f32 %v4436, 1.0
  %v4461 = vadd.f32 %v4438, 1.0
  %v4462 = vadd.f32 %v4440, 1.0
  %v4463 = vadd.f32 %v4442, 1.0
  %v4464 = vadd.f32 %v4444, 1.0
  %v4465 = vadd.f32 %v4446, 1.0
  %v4466 = vadd.f32 %v4448, 1.0
  %v4467 = vadd.f32 %v4450, 1.0
  %v4468 = vadd.f32 %v4452, 1.0
  %v4469 = vrcp.pop %v4453
  %v4470 = vrcp.pop %v4454
  %v4471 = vrcp.pop %v4455
  %v4472 = vrcp.pop %v4456
  %v4473 = vrcp.pop %v4457
  %v4474 = vrcp.pop %v4458
  %v4475 = vrcp.pop %v4459
  %v4476 = vrcp.pop %v4460
  %v4477 = vrcp.pop %v4461
  %v4478 = vrcp.pop %v4462
  %v4479 = vrcp.pop %v4463
  %v4480 = vrcp.pop %v4464
  %v4481 = vrcp.pop %v4465
  %v4482 = vrcp.pop %v4466
  %v4483 = vrcp.pop %v4467
  %v4484 = vrcp.pop %v4468
  %4485 = vst [vmem:[%s7] sm:$0xff] %v4469
  %4486 = vst [vmem:[%s7 + $0x8] sm:$0xff] %v4470
  %4487 = vst [vmem:[%s7 + $0x10] sm:$0xff] %v4471
  %4488 = vst [vmem:[%s7 + $0x18] sm:$0xff] %v4472
  %4489 = vst [vmem:[%s7 + $0x20] sm:$0xff] %v4473
  %4490 = vst [vmem:[%s7 + $0x28] sm:$0xff] %v4474
  %4491 = vst [vmem:[%s7 + $0x30] sm:$0xff] %v4475
  %vm4492 = vcmask 654336
  %4493 = vst.msk [vmem:[%s7 + $0x38] sm:$0xff] %vm4492, %v4476
  %4494 = vst [vmem:[%s7 + $0x40] sm:$0xf] %v4477
  %4495 = vst [vmem:[%s7 + $0x48] sm:$0xf] %v4478
  %4496 = vst [vmem:[%s7 + $0x50] sm:$0xf] %v4479
  %4497 = vst [vmem:[%s7 + $0x58] sm:$0xf] %v4480
  %4498 = vst [vmem:[%s7 + $0x60] sm:$0xf] %v4481
  %4499 = vst [vmem:[%s7 + $0x68] sm:$0xf] %v4482
  %4500 = vst [vmem:[%s7 + $0x70] sm:$0xf] %v4483
  %vm4501 = vcmask 650240
  %4502 = vst.msk [vmem:[%s7 + $0x78] sm:$0xf] %vm4501, %v4484
  %v4503 = vld [vmem:[#allocation5 + $0x2c] sm:$0xcc]
  %v4504 = vld [vmem:[#allocation5 + $0x34] sm:$0xcc]
  %v4505 = vld [vmem:[#allocation5 + $0x3c] sm:$0xcc]
  %v4506 = vld [vmem:[#allocation5 + $0x44] sm:$0xcc]
  %v4507 = vld [vmem:[#allocation5 + $0x58] sm:$0x11]
  %v4508 = vld [vmem:[#allocation5 + $0x60] sm:$0x11]
  %v4509 = vld [vmem:[#allocation5 + $0x68] sm:$0x11]
  %v4510 = vld [vmem:[#allocation5 + $0x70] sm:$0x11]
  %v4519 = vrot.slane %v4503, 6
  %v4520 = vrot.slane %v4519, 4
  %v4521 = vrot.slane %v4507, 6
  %v4522 = vsel %vm2022, %v4520, %v4521
  %v4523 = vrot.slane %v4504, 6
  %v4524 = vrot.slane %v4523, 4
  %v4525 = vrot.slane %v4508, 6
  %v4526 = vsel %vm2022, %v4524, %v4525
  %v4527 = vrot.slane %v4505, 6
  %v4528 = vrot.slane %v4527, 4
  %v4529 = vrot.slane %v4509, 6
  %v4530 = vsel %vm2022, %v4528, %v4529
  %v4531 = vrot.slane %v4506, 6
  %v4532 = vrot.slane %v4531, 4
  %v4533 = vrot.slane %v4510, 6
  %v4534 = vsel %vm2022, %v4532, %v4533
  %4535 = vrot.lane.b32.xlu0 %v4522, 112
  %v4536 = vpop.permute.xlu0 %4535
  %4537 = vrot.lane.b32.xlu0 %v4526, 112
  %v4538 = vpop.permute.xlu0 %4537
  %4539 = vrot.lane.b32.xlu0 %v4530, 112
  %v4540 = vpop.permute.xlu0 %4539
  %4541 = vrot.lane.b32.xlu0 %v4534, 112
  %v4542 = vpop.permute.xlu0 %4541
  %v4543 = vrot.slane %v4536, 4
  %v4544 = vrot.slane %v4538, 4
  %v4545 = vrot.slane %v4540, 4
  %v4546 = vrot.slane %v4542, 4
  %v4547 = vsel %vm114, %v4543, %v4544
  %v4548 = vsel %vm116, %v4536, %v4547
  %v4549 = vsel %vm114, %v4544, %v4545
  %v4550 = vsel %vm116, %v4538, %v4549
  %v4551 = vsel %vm114, %v4545, %v4546
  %v4552 = vsel %vm116, %v4540, %v4551
  %v4553 = vsel %vm116, %v4542, %v4546
  %4558 = vst [vmem:[#allocation6] sm:$0x77] %v4548
  %4559 = vst [vmem:[#allocation6 + $0x8] sm:$0x77] %v4550
  %4560 = vst [vmem:[#allocation6 + $0x10] sm:$0x77] %v4552
  %4561 = vst.msk [vmem:[#allocation6 + $0x18] sm:$0x77] %vm3509, %v4553
  %v4562 = vld [vmem:[#allocation5 + $0x58] sm:$0xee]
  %v4563 = vld [vmem:[#allocation5 + $0x60] sm:$0xee]
  %v4564 = vld [vmem:[#allocation5 + $0x68] sm:$0xee]
  %v4565 = vld [vmem:[#allocation5 + $0x70] sm:$0xee]
  %v4570 = vrot.slane %v4562, 6
  %v4571 = vrot.slane %v4563, 6
  %v4572 = vrot.slane %v4564, 6
  %v4573 = vrot.slane %v4565, 6
  %v4574 = vrot.slane %v4570, 4
  %v4575 = vrot.slane %v4571, 4
  %v4576 = vrot.slane %v4572, 4
  %v4577 = vrot.slane %v4573, 4
  %4578 = vrot.lane.b32.xlu0 %v4570, 112
  %v4579 = vpop.permute.xlu0 %4578
  %4580 = vrot.lane.b32.xlu0 %v4571, 112
  %v4581 = vpop.permute.xlu0 %4580
  %4582 = vrot.lane.b32.xlu0 %v4572, 112
  %v4583 = vpop.permute.xlu0 %4582
  %4584 = vrot.lane.b32.xlu0 %v4573, 112
  %v4585 = vpop.permute.xlu0 %4584
  %4586 = vrot.lane.b32.xlu0 %v4574, 112
  %v4587 = vpop.permute.xlu0 %4586
  %4588 = vrot.lane.b32.xlu0 %v4575, 112
  %v4589 = vpop.permute.xlu0 %4588
  %4590 = vrot.lane.b32.xlu0 %v4576, 112
  %v4591 = vpop.permute.xlu0 %4590
  %4592 = vrot.lane.b32.xlu0 %v4577, 112
  %v4593 = vpop.permute.xlu0 %4592
  %v4594 = vrot.slane %v4579, 4
  %v4595 = vrot.slane %v4581, 4
  %v4596 = vrot.slane %v4583, 4
  %v4597 = vrot.slane %v4585, 4
  %v4598 = vrot.slane %v4587, 4
  %v4599 = vrot.slane %v4589, 4
  %v4600 = vrot.slane %v4591, 4
  %v4601 = vrot.slane %v4593, 4
  %v4602 = vsel %vm114, %v4594, %v4595
  %v4603 = vsel %vm116, %v4579, %v4602
  %v4604 = vsel %vm114, %v4595, %v4596
  %v4605 = vsel %vm116, %v4581, %v4604
  %v4606 = vsel %vm114, %v4596, %v4597
  %v4607 = vsel %vm116, %v4583, %v4606
  %v4608 = vsel %vm116, %v4585, %v4597
  %v4609 = vsel %vm114, %v4598, %v4599
  %v4610 = vsel %vm116, %v4587, %v4609
  %v4611 = vsel %vm114, %v4599, %v4600
  %v4612 = vsel %vm116, %v4589, %v4611
  %v4613 = vsel %vm114, %v4600, %v4601
  %v4614 = vsel %vm116, %v4591, %v4613
  %v4615 = vsel %vm116, %v4593, %v4601
  %4624 = vst [vmem:[#allocation6] sm:$0x88] %v4603
  %4625 = vst [vmem:[#allocation6 + $0x8] sm:$0x88] %v4605
  %4626 = vst [vmem:[#allocation6 + $0x10] sm:$0x88] %v4607
  %4627 = vst.msk [vmem:[#allocation6 + $0x18] sm:$0x88] %vm3597, %v4608
  %4628 = vst [vmem:[#allocation6 + $0x20] sm:$0x33] %v4610
  %4629 = vst [vmem:[#allocation6 + $0x28] sm:$0x33] %v4612
  %4630 = vst [vmem:[#allocation6 + $0x30] sm:$0x33] %v4614
  %4631 = vst.msk [vmem:[#allocation6 + $0x38] sm:$0x33] %vm2002, %v4615
  %v4632 = vld [vmem:[#allocation5 + $0x2c] sm:$0xcc]
  %v4633 = vld [vmem:[#allocation5 + $0x34] sm:$0xcc]
  %v4634 = vld [vmem:[#allocation5 + $0x3c] sm:$0xcc]
  %v4635 = vld [vmem:[#allocation5 + $0x44] sm:$0xcc]
  %v4636 = vld [vmem:[#allocation5 + $0x58] sm:$0x11]
  %v4637 = vld [vmem:[#allocation5 + $0x60] sm:$0x11]
  %v4638 = vld [vmem:[#allocation5 + $0x68] sm:$0x11]
  %v4639 = vld [vmem:[#allocation5 + $0x70] sm:$0x11]
  %4648 = vrot.lane.b32.xlu0 %v4632, 96
  %v4649 = vpop.permute.xlu0 %4648
  %4650 = vrot.lane.b32.xlu0 %v4633, 96
  %v4651 = vpop.permute.xlu0 %4650
  %4652 = vrot.lane.b32.xlu0 %v4634, 96
  %v4653 = vpop.permute.xlu0 %4652
  %4654 = vrot.lane.b32.xlu0 %v4635, 96
  %v4655 = vpop.permute.xlu0 %4654
  %4656 = vrot.lane.b32.xlu0 %v4636, 96
  %v4657 = vpop.permute.xlu0 %4656
  %4658 = vrot.lane.b32.xlu0 %v4637, 96
  %v4659 = vpop.permute.xlu0 %4658
  %4660 = vrot.lane.b32.xlu0 %v4638, 96
  %v4661 = vpop.permute.xlu0 %4660
  %4662 = vrot.lane.b32.xlu0 %v4639, 96
  %v4663 = vpop.permute.xlu0 %4662
  %v4664 = vrot.slane %v4649, 4
  %v4665 = vrot.slane %v4651, 4
  %v4666 = vrot.slane %v4653, 4
  %v4667 = vrot.slane %v4655, 4
  %v4668 = vrot.slane %v4657, 4
  %v4669 = vrot.slane %v4659, 4
  %v4670 = vrot.slane %v4661, 4
  %v4671 = vrot.slane %v4663, 4
  %v4672 = vsel %vm114, %v4664, %v4665
  %v4673 = vsel %vm222, %v4649, %v4672
  %v4674 = vsel %vm114, %v4665, %v4666
  %v4675 = vsel %vm222, %v4651, %v4674
  %v4676 = vsel %vm114, %v4666, %v4667
  %v4677 = vsel %vm222, %v4653, %v4676
  %v4678 = vsel %vm222, %v4655, %v4667
  %v4679 = vsel %vm114, %v4668, %v4669
  %v4680 = vsel %vm222, %v4657, %v4679
  %v4681 = vsel %vm114, %v4669, %v4670
  %v4682 = vsel %vm222, %v4659, %v4681
  %v4683 = vsel %vm114, %v4670, %v4671
  %v4684 = vsel %vm222, %v4661, %v4683
  %v4685 = vsel %vm222, %v4663, %v4671
  %4694 = vst [vmem:[#allocation6 + $0x20] sm:$0xcc] %v4673
  %4695 = vst [vmem:[#allocation6 + $0x28] sm:$0xcc] %v4675
  %4696 = vst [vmem:[#allocation6 + $0x30] sm:$0xcc] %v4677
  %4697 = vst.msk [vmem:[#allocation6 + $0x38] sm:$0xcc] %vm2090, %v4678
  %4698 = vst [vmem:[#allocation6 + $0x40] sm:$0x11] %v4680
  %4699 = vst [vmem:[#allocation6 + $0x48] sm:$0x11] %v4682
  %4700 = vst [vmem:[#allocation6 + $0x50] sm:$0x11] %v4684
  %4701 = vst.msk [vmem:[#allocation6 + $0x58] sm:$0x11] %vm3674, %v4685
  %v4702 = vld [vmem:[#allocation5 + $0x4] sm:$0x77]
  %v4703 = vld [vmem:[#allocation5 + $0xc] sm:$0x77]
  %v4704 = vld [vmem:[#allocation5 + $0x14] sm:$0x77]
  %v4705 = vld [vmem:[#allocation5 + $0x1c] sm:$0x77]
  %v4710 = vrot.slane %v4702, 7
  %v4711 = vrot.slane %v4703, 7
  %v4712 = vrot.slane %v4704, 7
  %v4713 = vrot.slane %v4705, 7
  %4714 = vrot.lane.b32.xlu0 %v4710, 96
  %v4715 = vpop.permute.xlu0 %4714
  %4716 = vrot.lane.b32.xlu0 %v4711, 96
  %v4717 = vpop.permute.xlu0 %4716
  %4718 = vrot.lane.b32.xlu0 %v4712, 96
  %v4719 = vpop.permute.xlu0 %4718
  %4720 = vrot.lane.b32.xlu0 %v4713, 96
  %v4721 = vpop.permute.xlu0 %4720
  %v4722 = vrot.slane %v4715, 4
  %v4723 = vrot.slane %v4717, 4
  %v4724 = vrot.slane %v4719, 4
  %v4725 = vrot.slane %v4721, 4
  %v4726 = vsel %vm114, %v4722, %v4723
  %v4727 = vsel %vm222, %v4715, %v4726
  %v4728 = vsel %vm114, %v4723, %v4724
  %v4729 = vsel %vm222, %v4717, %v4728
  %v4730 = vsel %vm114, %v4724, %v4725
  %v4731 = vsel %vm222, %v4719, %v4730
  %v4732 = vsel %vm222, %v4721, %v4725
  %4737 = vst [vmem:[#allocation6 + $0x40] sm:$0xee] %v4727
  %4738 = vst [vmem:[#allocation6 + $0x48] sm:$0xee] %v4729
  %4739 = vst [vmem:[#allocation6 + $0x50] sm:$0xee] %v4731
  %4740 = vst.msk [vmem:[#allocation6 + $0x58] sm:$0xee] %vm3736, %v4732
  %v4741 = vld [vmem:[#allocation5 + $0x4] sm:$0x88]
  %v4742 = vld [vmem:[#allocation5 + $0xc] sm:$0x88]
  %v4743 = vld [vmem:[#allocation5 + $0x14] sm:$0x88]
  %v4744 = vld [vmem:[#allocation5 + $0x1c] sm:$0x88]
  %v4745 = vld [vmem:[#allocation5 + $0x30] sm:$0x33]
  %v4746 = vld [vmem:[#allocation5 + $0x38] sm:$0x33]
  %v4747 = vld [vmem:[#allocation5 + $0x40] sm:$0x33]
  %v4748 = vld [vmem:[#allocation5 + $0x48] sm:$0x33]
  %v4757 = vrot.slane %v4741, 7
  %v4758 = vrot.slane %v4757, 4
  %v4759 = vrot.slane %v4745, 7
  %v4760 = vsel %vm3529, %v4758, %v4759
  %v4761 = vrot.slane %v4742, 7
  %v4762 = vrot.slane %v4761, 4
  %v4763 = vrot.slane %v4746, 7
  %v4764 = vsel %vm3529, %v4762, %v4763
  %v4765 = vrot.slane %v4743, 7
  %v4766 = vrot.slane %v4765, 4
  %v4767 = vrot.slane %v4747, 7
  %v4768 = vsel %vm3529, %v4766, %v4767
  %v4769 = vrot.slane %v4744, 7
  %v4770 = vrot.slane %v4769, 4
  %v4771 = vrot.slane %v4748, 7
  %v4772 = vsel %vm3529, %v4770, %v4771
  %4773 = vrot.lane.b32.xlu0 %v4760, 96
  %v4774 = vpop.permute.xlu0 %4773
  %4775 = vrot.lane.b32.xlu0 %v4764, 96
  %v4776 = vpop.permute.xlu0 %4775
  %4777 = vrot.lane.b32.xlu0 %v4768, 96
  %v4778 = vpop.permute.xlu0 %4777
  %4779 = vrot.lane.b32.xlu0 %v4772, 96
  %v4780 = vpop.permute.xlu0 %4779
  %v4781 = vrot.slane %v4774, 4
  %v4782 = vrot.slane %v4776, 4
  %v4783 = vrot.slane %v4778, 4
  %v4784 = vrot.slane %v4780, 4
  %v4785 = vsel %vm114, %v4781, %v4782
  %v4786 = vsel %vm222, %v4774, %v4785
  %v4787 = vsel %vm114, %v4782, %v4783
  %v4788 = vsel %vm222, %v4776, %v4787
  %v4789 = vsel %vm114, %v4783, %v4784
  %v4790 = vsel %vm222, %v4778, %v4789
  %v4791 = vsel %vm222, %v4780, %v4784
  %4796 = vst [vmem:[#allocation6 + $0x60] sm:$0x77] %v4786
  %4797 = vst [vmem:[#allocation6 + $0x68] sm:$0x77] %v4788
  %4798 = vst [vmem:[#allocation6 + $0x70] sm:$0x77] %v4790
  %4799 = vst.msk [vmem:[#allocation6 + $0x78] sm:$0x77] %vm3509, %v4791
  %v4800 = vld [vmem:[#allocation5 + $0x4] sm:$0x77]
  %v4801 = vld [vmem:[#allocation5 + $0xc] sm:$0x77]
  %v4802 = vld [vmem:[#allocation5 + $0x14] sm:$0x77]
  %v4803 = vld [vmem:[#allocation5 + $0x1c] sm:$0x77]
  %v4808 = vrot.slane %v4800, 5
  %v4809 = vrot.slane %v4801, 5
  %v4810 = vrot.slane %v4802, 5
  %v4811 = vrot.slane %v4803, 5
  %v4812 = vrot.slane %v4808, 4
  %v4813 = vrot.slane %v4809, 4
  %v4814 = vrot.slane %v4810, 4
  %v4815 = vrot.slane %v4811, 4
  %4816 = vrot.lane.b32.xlu0 %v4808, 80
  %v4817 = vpop.permute.xlu0 %4816
  %4818 = vrot.lane.b32.xlu0 %v4809, 80
  %v4819 = vpop.permute.xlu0 %4818
  %4820 = vrot.lane.b32.xlu0 %v4810, 80
  %v4821 = vpop.permute.xlu0 %4820
  %4822 = vrot.lane.b32.xlu0 %v4811, 80
  %v4823 = vpop.permute.xlu0 %4822
  %4824 = vrot.lane.b32.xlu0 %v4812, 80
  %v4825 = vpop.permute.xlu0 %4824
  %4826 = vrot.lane.b32.xlu0 %v4813, 80
  %v4827 = vpop.permute.xlu0 %4826
  %4828 = vrot.lane.b32.xlu0 %v4814, 80
  %v4829 = vpop.permute.xlu0 %4828
  %4830 = vrot.lane.b32.xlu0 %v4815, 80
  %v4831 = vpop.permute.xlu0 %4830
  %v4832 = vrot.slane %v4817, 4
  %v4833 = vrot.slane %v4819, 4
  %v4834 = vrot.slane %v4821, 4
  %v4835 = vrot.slane %v4823, 4
  %v4836 = vrot.slane %v4825, 4
  %v4837 = vrot.slane %v4827, 4
  %v4838 = vrot.slane %v4829, 4
  %v4839 = vrot.slane %v4831, 4
  %v4840 = vsel %vm114, %v4832, %v4833
  %v4841 = vsel %vm538, %v4817, %v4840
  %v4842 = vsel %vm114, %v4833, %v4834
  %v4843 = vsel %vm538, %v4819, %v4842
  %v4844 = vsel %vm114, %v4834, %v4835
  %v4845 = vsel %vm538, %v4821, %v4844
  %v4846 = vsel %vm538, %v4823, %v4835
  %v4847 = vsel %vm114, %v4836, %v4837
  %v4848 = vsel %vm538, %v4825, %v4847
  %v4849 = vsel %vm114, %v4837, %v4838
  %v4850 = vsel %vm538, %v4827, %v4849
  %v4851 = vsel %vm114, %v4838, %v4839
  %v4852 = vsel %vm538, %v4829, %v4851
  %v4853 = vsel %vm538, %v4831, %v4839
  %4862 = vst [vmem:[#allocation6 + $0x60] sm:$0x88] %v4841
  %4863 = vst [vmem:[#allocation6 + $0x68] sm:$0x88] %v4843
  %4864 = vst [vmem:[#allocation6 + $0x70] sm:$0x88] %v4845
  %4865 = vst.msk [vmem:[#allocation6 + $0x78] sm:$0x88] %vm3597, %v4846
  %4866 = vst [vmem:[#allocation6 + $0x80] sm:$0x33] %v4848
  %4867 = vst [vmem:[#allocation6 + $0x88] sm:$0x33] %v4850
  %4868 = vst [vmem:[#allocation6 + $0x90] sm:$0x33] %v4852
  %4869 = vst.msk [vmem:[#allocation6 + $0x98] sm:$0x33] %vm2002, %v4853
  %v4870 = vld [vmem:[#allocation5 + $0x30] sm:$0xcc]
  %v4871 = vld [vmem:[#allocation5 + $0x38] sm:$0xcc]
  %v4872 = vld [vmem:[#allocation5 + $0x40] sm:$0xcc]
  %v4873 = vld [vmem:[#allocation5 + $0x48] sm:$0xcc]
  %v4874 = vld [vmem:[#allocation5 + $0x5c] sm:$0x11]
  %v4875 = vld [vmem:[#allocation5 + $0x64] sm:$0x11]
  %v4876 = vld [vmem:[#allocation5 + $0x6c] sm:$0x11]
  %v4877 = vld [vmem:[#allocation5 + $0x74] sm:$0x11]
  %4886 = vrot.lane.b32.xlu0 %v4870, 96
  %v4887 = vpop.permute.xlu0 %4886
  %4888 = vrot.lane.b32.xlu0 %v4871, 96
  %v4889 = vpop.permute.xlu0 %4888
  %4890 = vrot.lane.b32.xlu0 %v4872, 96
  %v4891 = vpop.permute.xlu0 %4890
  %4892 = vrot.lane.b32.xlu0 %v4873, 96
  %v4893 = vpop.permute.xlu0 %4892
  %4894 = vrot.lane.b32.xlu0 %v4874, 96
  %v4895 = vpop.permute.xlu0 %4894
  %4896 = vrot.lane.b32.xlu0 %v4875, 96
  %v4897 = vpop.permute.xlu0 %4896
  %4898 = vrot.lane.b32.xlu0 %v4876, 96
  %v4899 = vpop.permute.xlu0 %4898
  %4900 = vrot.lane.b32.xlu0 %v4877, 96
  %v4901 = vpop.permute.xlu0 %4900
  %v4902 = vrot.slane %v4887, 4
  %v4903 = vrot.slane %v4889, 4
  %v4904 = vrot.slane %v4891, 4
  %v4905 = vrot.slane %v4893, 4
  %v4906 = vrot.slane %v4895, 4
  %v4907 = vrot.slane %v4897, 4
  %v4908 = vrot.slane %v4899, 4
  %v4909 = vrot.slane %v4901, 4
  %v4910 = vsel %vm114, %v4902, %v4903
  %v4911 = vsel %vm222, %v4887, %v4910
  %v4912 = vsel %vm114, %v4903, %v4904
  %v4913 = vsel %vm222, %v4889, %v4912
  %v4914 = vsel %vm114, %v4904, %v4905
  %v4915 = vsel %vm222, %v4891, %v4914
  %v4916 = vsel %vm222, %v4893, %v4905
  %v4917 = vsel %vm114, %v4906, %v4907
  %v4918 = vsel %vm222, %v4895, %v4917
  %v4919 = vsel %vm114, %v4907, %v4908
  %v4920 = vsel %vm222, %v4897, %v4919
  %v4921 = vsel %vm114, %v4908, %v4909
  %v4922 = vsel %vm222, %v4899, %v4921
  %v4923 = vsel %vm222, %v4901, %v4909
  %4932 = vst [vmem:[#allocation6 + $0x80] sm:$0xcc] %v4911
  %4933 = vst [vmem:[#allocation6 + $0x88] sm:$0xcc] %v4913
  %4934 = vst [vmem:[#allocation6 + $0x90] sm:$0xcc] %v4915
  %4935 = vst.msk [vmem:[#allocation6 + $0x98] sm:$0xcc] %vm2090, %v4916
  %4936 = vst [vmem:[#allocation6 + $0xa0] sm:$0x11] %v4918
  %4937 = vst [vmem:[#allocation6 + $0xa8] sm:$0x11] %v4920
  %4938 = vst [vmem:[#allocation6 + $0xb0] sm:$0x11] %v4922
  %4939 = vst.msk [vmem:[#allocation6 + $0xb8] sm:$0x11] %vm3674, %v4923
  %v4940 = vld [vmem:[#allocation5 + $0x5c] sm:$0xee]
  %v4941 = vld [vmem:[#allocation5 + $0x64] sm:$0xee]
  %v4942 = vld [vmem:[#allocation5 + $0x6c] sm:$0xee]
  %v4943 = vld [vmem:[#allocation5 + $0x74] sm:$0xee]
  %4948 = vrot.lane.b32.xlu0 %v4940, 96
  %v4949 = vpop.permute.xlu0 %4948
  %4950 = vrot.lane.b32.xlu0 %v4941, 96
  %v4951 = vpop.permute.xlu0 %4950
  %4952 = vrot.lane.b32.xlu0 %v4942, 96
  %v4953 = vpop.permute.xlu0 %4952
  %4954 = vrot.lane.b32.xlu0 %v4943, 96
  %v4955 = vpop.permute.xlu0 %4954
  %v4956 = vrot.slane %v4949, 4
  %v4957 = vrot.slane %v4951, 4
  %v4958 = vrot.slane %v4953, 4
  %v4959 = vrot.slane %v4955, 4
  %v4960 = vsel %vm114, %v4956, %v4957
  %v4961 = vsel %vm222, %v4949, %v4960
  %v4962 = vsel %vm114, %v4957, %v4958
  %v4963 = vsel %vm222, %v4951, %v4962
  %v4964 = vsel %vm114, %v4958, %v4959
  %v4965 = vsel %vm222, %v4953, %v4964
  %v4966 = vsel %vm222, %v4955, %v4959
  %4971 = vst [vmem:[#allocation6 + $0xa0] sm:$0xee] %v4961
  %4972 = vst [vmem:[#allocation6 + $0xa8] sm:$0xee] %v4963
  %4973 = vst [vmem:[#allocation6 + $0xb0] sm:$0xee] %v4965
  %4974 = vst.msk [vmem:[#allocation6 + $0xb8] sm:$0xee] %vm3736, %v4966
  %v4975 = vld [vmem:[#allocation5 + $0x30] sm:$0xcc]
  %v4976 = vld [vmem:[#allocation5 + $0x38] sm:$0xcc]
  %v4977 = vld [vmem:[#allocation5 + $0x40] sm:$0xcc]
  %v4978 = vld [vmem:[#allocation5 + $0x48] sm:$0xcc]
  %v4979 = vld [vmem:[#allocation5 + $0x5c] sm:$0x11]
  %v4980 = vld [vmem:[#allocation5 + $0x64] sm:$0x11]
  %v4981 = vld [vmem:[#allocation5 + $0x6c] sm:$0x11]
  %v4982 = vld [vmem:[#allocation5 + $0x74] sm:$0x11]
  %v4991 = vrot.slane %v4975, 6
  %v4992 = vrot.slane %v4991, 4
  %v4993 = vrot.slane %v4979, 6
  %v4994 = vsel %vm2022, %v4992, %v4993
  %v4995 = vrot.slane %v4976, 6
  %v4996 = vrot.slane %v4995, 4
  %v4997 = vrot.slane %v4980, 6
  %v4998 = vsel %vm2022, %v4996, %v4997
  %v4999 = vrot.slane %v4977, 6
  %v5000 = vrot.slane %v4999, 4
  %v5001 = vrot.slane %v4981, 6
  %v5002 = vsel %vm2022, %v5000, %v5001
  %v5003 = vrot.slane %v4978, 6
  %v5004 = vrot.slane %v5003, 4
  %v5005 = vrot.slane %v4982, 6
  %v5006 = vsel %vm2022, %v5004, %v5005
  %5007 = vrot.lane.b32.xlu0 %v4994, 80
  %v5008 = vpop.permute.xlu0 %5007
  %5009 = vrot.lane.b32.xlu0 %v4998, 80
  %v5010 = vpop.permute.xlu0 %5009
  %5011 = vrot.lane.b32.xlu0 %v5002, 80
  %v5012 = vpop.permute.xlu0 %5011
  %5013 = vrot.lane.b32.xlu0 %v5006, 80
  %v5014 = vpop.permute.xlu0 %5013
  %v5015 = vrot.slane %v5008, 4
  %v5016 = vrot.slane %v5010, 4
  %v5017 = vrot.slane %v5012, 4
  %v5018 = vrot.slane %v5014, 4
  %v5019 = vsel %vm114, %v5015, %v5016
  %v5020 = vsel %vm538, %v5008, %v5019
  %v5021 = vsel %vm114, %v5016, %v5017
  %v5022 = vsel %vm538, %v5010, %v5021
  %v5023 = vsel %vm114, %v5017, %v5018
  %v5024 = vsel %vm538, %v5012, %v5023
  %v5025 = vsel %vm538, %v5014, %v5018
  %5030 = vst [vmem:[#allocation6 + $0xc0] sm:$0x77] %v5020
  %5031 = vst [vmem:[#allocation6 + $0xc8] sm:$0x77] %v5022
  %5032 = vst [vmem:[#allocation6 + $0xd0] sm:$0x77] %v5024
  %5033 = vst.msk [vmem:[#allocation6 + $0xd8] sm:$0x77] %vm3509, %v5025
  %v5034 = vld [vmem:[%s5] sm:$0xf]
  %v5035 = vld [vmem:[%s5 + $0x4] sm:$0x3]
  %v5036 = vld [vmem:[#allocation6] sm:$0xff]
  %v5037 = vld [vmem:[#allocation6 + $0x8] sm:$0xff]
  %v5038 = vld [vmem:[#allocation6 + $0x10] sm:$0xff]
  %v5039 = vld [vmem:[#allocation6 + $0x18] sm:$0xff]
  %v5040 = vld [vmem:[#allocation6 + $0x20] sm:$0xff]
  %v5041 = vld [vmem:[#allocation6 + $0x28] sm:$0xff]
  %v5042 = vld [vmem:[#allocation6 + $0x30] sm:$0xff]
  %v5043 = vld [vmem:[#allocation6 + $0x38] sm:$0xff]
  %v5044 = vld [vmem:[#allocation6 + $0x40] sm:$0xff]
  %v5045 = vld [vmem:[#allocation6 + $0x48] sm:$0xff]
  %v5046 = vld [vmem:[#allocation6 + $0x50] sm:$0xff]
  %v5047 = vld [vmem:[#allocation6 + $0x58] sm:$0xff]
  %v5048 = vld [vmem:[#allocation6 + $0x60] sm:$0xff]
  %v5049 = vld [vmem:[#allocation6 + $0x68] sm:$0xff]
  %v5050 = vld [vmem:[#allocation6 + $0x70] sm:$0xff]
  %v5051 = vld [vmem:[#allocation6 + $0x78] sm:$0xff]
  %v5052 = vld [vmem:[#allocation6 + $0x80] sm:$0xff]
  %v5053 = vld [vmem:[#allocation6 + $0x88] sm:$0xff]
  %v5054 = vld [vmem:[#allocation6 + $0x90] sm:$0xff]
  %v5055 = vld [vmem:[#allocation6 + $0x98] sm:$0xff]
  %v5056 = vld [vmem:[#allocation6 + $0xa0] sm:$0xff]
  %v5057 = vld [vmem:[#allocation6 + $0xa8] sm:$0xff]
  %v5058 = vld [vmem:[#allocation6 + $0xb0] sm:$0xff]
  %v5059 = vld [vmem:[#allocation6 + $0xb8] sm:$0xff]
  %v5060 = vld [vmem:[#allocation6 + $0xc0] sm:$0x77]
  %v5061 = vld [vmem:[#allocation6 + $0xc8] sm:$0x77]
  %v5062 = vld [vmem:[#allocation6 + $0xd0] sm:$0x77]
  %v5063 = vld [vmem:[#allocation6 + $0xd8] sm:$0x77]
  %v5064 = vld [vmem:[%s6] sm:$0xff]
  %v5065 = vld [vmem:[%s6 + $0x8] sm:$0xf]
  %5067 = vset.pattern.permute.xlu0 0
  %5068 = vperm.xlu0 %5067, %v5064
  %v5069 = vpop.permute.xlu0 %5068
  %5072 = vset.pattern.permute.xlu0 0
  %5073 = vperm.xlu0 %5072, %v5065
  %v5074 = vpop.permute.xlu0 %5073
  %v5078 = vunpack.c.l.b16 %v5034
  %v5079 = vunpack.c.l.b16 %v5035
  %v5080 = vpack.c.b16 %v5079, %v5078
  %v5109 = vunpack.c.l.b16 %v5036
  %v5110 = vunpack.c.h.b16 %v5036
  %v5111 = vunpack.c.l.b16 %v5037
  %v5112 = vunpack.c.h.b16 %v5037
  %v5113 = vunpack.c.l.b16 %v5038
  %v5114 = vunpack.c.h.b16 %v5038
  %v5115 = vunpack.c.l.b16 %v5039
  %v5116 = vunpack.c.h.b16 %v5039
  %v5117 = vunpack.c.l.b16 %v5040
  %v5118 = vunpack.c.h.b16 %v5040
  %v5119 = vunpack.c.l.b16 %v5041
  %v5120 = vunpack.c.h.b16 %v5041
  %v5121 = vunpack.c.l.b16 %v5042
  %v5122 = vunpack.c.h.b16 %v5042
  %v5123 = vunpack.c.l.b16 %v5043
  %v5124 = vunpack.c.h.b16 %v5043
  %v5125 = vunpack.c.l.b16 %v5044
  %v5126 = vunpack.c.h.b16 %v5044
  %v5127 = vunpack.c.l.b16 %v5045
  %v5128 = vunpack.c.h.b16 %v5045
  %v5129 = vunpack.c.l.b16 %v5046
  %v5130 = vunpack.c.h.b16 %v5046
  %v5131 = vunpack.c.l.b16 %v5047
  %v5132 = vunpack.c.h.b16 %v5047
  %v5133 = vunpack.c.l.b16 %v5048
  %v5134 = vunpack.c.h.b16 %v5048
  %v5135 = vunpack.c.l.b16 %v5049
  %v5136 = vunpack.c.h.b16 %v5049
  %v5137 = vunpack.c.l.b16 %v5050
  %v5138 = vunpack.c.h.b16 %v5050
  %v5139 = vunpack.c.l.b16 %v5051
  %v5140 = vunpack.c.h.b16 %v5051
  %v5141 = vunpack.c.l.b16 %v5052
  %v5142 = vunpack.c.h.b16 %v5052
  %v5143 = vunpack.c.l.b16 %v5053
  %v5144 = vunpack.c.h.b16 %v5053
  %v5145 = vunpack.c.l.b16 %v5054
  %v5146 = vunpack.c.h.b16 %v5054
  %v5147 = vunpack.c.l.b16 %v5055
  %v5148 = vunpack.c.h.b16 %v5055
  %v5149 = vunpack.c.l.b16 %v5056
  %v5150 = vunpack.c.h.b16 %v5056
  %v5151 = vunpack.c.l.b16 %v5057
  %v5152 = vunpack.c.h.b16 %v5057
  %v5153 = vunpack.c.l.b16 %v5058
  %v5154 = vunpack.c.h.b16 %v5058
  %v5155 = vunpack.c.l.b16 %v5059
  %v5156 = vunpack.c.h.b16 %v5059
  %v5157 = vunpack.c.l.b16 %v5060
  %v5158 = vunpack.c.h.b16 %v5060
  %v5159 = vunpack.c.l.b16 %v5061
  %v5160 = vunpack.c.h.b16 %v5061
  %v5161 = vunpack.c.l.b16 %v5062
  %v5162 = vunpack.c.h.b16 %v5062
  %v5163 = vunpack.c.l.b16 %v5063
  %v5164 = vunpack.c.h.b16 %v5063
  %v5165 = vpack.c.b16 %v5117, %v5109
  %v5166 = vpack.c.b16 %v5118, %v5110
  %v5167 = vpack.c.b16 %v5119, %v5111
  %v5168 = vpack.c.b16 %v5120, %v5112
  %v5169 = vpack.c.b16 %v5121, %v5113
  %v5170 = vpack.c.b16 %v5122, %v5114
  %v5171 = vpack.c.b16 %v5123, %v5115
  %v5172 = vpack.c.b16 %v5124, %v5116
  %v5173 = vpack.c.b16 %v5133, %v5125
  %v5174 = vpack.c.b16 %v5134, %v5126
  %v5175 = vpack.c.b16 %v5135, %v5127
  %v5176 = vpack.c.b16 %v5136, %v5128
  %v5177 = vpack.c.b16 %v5137, %v5129
  %v5178 = vpack.c.b16 %v5138, %v5130
  %v5179 = vpack.c.b16 %v5139, %v5131
  %v5180 = vpack.c.b16 %v5140, %v5132
  %v5181 = vpack.c.b16 %v5149, %v5141
  %v5182 = vpack.c.b16 %v5150, %v5142
  %v5183 = vpack.c.b16 %v5151, %v5143
  %v5184 = vpack.c.b16 %v5152, %v5144
  %v5185 = vpack.c.b16 %v5153, %v5145
  %v5186 = vpack.c.b16 %v5154, %v5146
  %v5187 = vpack.c.b16 %v5155, %v5147
  %v5188 = vpack.c.b16 %v5156, %v5148
  %v5189 = vpack.c.b16 %v5157, %v5157
  %v5190 = vpack.c.b16 %v5158, %v5158
  %v5191 = vpack.c.b16 %v5159, %v5159
  %v5192 = vpack.c.b16 %v5160, %v5160
  %v5193 = vpack.c.b16 %v5161, %v5161
  %v5194 = vpack.c.b16 %v5162, %v5162
  %v5195 = vpack.c.b16 %v5163, %v5163
  %v5196 = vpack.c.b16 %v5164, %v5164
  %v5222 = vsel %vm4205, %v5080, 0
  %v5225 = vsel %vm3507, %v5189, 0
  %v5228 = vsel %vm3507, %v5190, 0
  %v5231 = vsel %vm3507, %v5191, 0
  %v5234 = vsel %vm3507, %v5192, 0
  %v5237 = vsel %vm3507, %v5193, 0
  %v5240 = vsel %vm3507, %v5194, 0
  %v5243 = vsel %vm3507, %v5195, 0
  %v5246 = vsel %vm3507, %v5196, 0
  %5248 = vmatprep.subr.bf16.mxu0 0
  %5249 = vmatpush1.bf16.msra.mxu0 0
  %5250 = vmatprep.subr.bf16.mxu0 0
  %5251 = vmatpush1.bf16.msra.mxu0 0
  %5252 = vmatprep.subr.bf16.mxu0 0
  %5253 = vmatpush1.bf16.msra.mxu0 0
  %5254 = vmatprep.subr.bf16.mxu0 0
  %5255 = vmatpush1.bf16.msra.mxu0 0
  %5256 = vmatprep.subr.bf16.mxu0 %v5228
  %5257 = vmatpush1.bf16.msra.mxu0 %v5225
  %5258 = vmatprep.subr.bf16.mxu0 %v5182
  %5259 = vmatpush1.bf16.msra.mxu0 %v5181
  %5260 = vmatprep.subr.bf16.mxu0 %v5174
  %5261 = vmatpush1.bf16.msra.mxu0 %v5173
  %5262 = vmatprep.subr.bf16.mxu0 %v5166
  %5263 = vmatpush1.bf16.msra.mxu0 %v5165
  %5264 = vmatprep.subr.bf16.mxu0 0
  %5265 = vmatpush2.bf16.msra.mxu0 0
  %5266 = vmatprep.subr.bf16.mxu0 0
  %5267 = vmatpush2.bf16.msra.mxu0 0
  %5268 = vmatprep.subr.bf16.mxu0 0
  %5269 = vmatpush2.bf16.msra.mxu0 0
  %5270 = vmatprep.subr.bf16.mxu0 0
  %5271 = vmatpush2.bf16.msra.mxu0 0
  %5272 = vmatprep.subr.bf16.mxu0 0
  %5273 = vmatpush2.bf16.msra.mxu0 0
  %5274 = vmatprep.subr.bf16.mxu0 0
  %5275 = vmatpush2.bf16.msra.mxu0 0
  %5276 = vmatprep.subr.bf16.mxu0 0
  %5277 = vmatpush2.bf16.msra.mxu0 0
  %5278 = vmatprep.subr.bf16.mxu0 0
  %5279 = vmatpush2.bf16.msra.mxu0 0
  %5280 = vmatprep.mubr.bf16.mxu0 0
  %5281 = vmatmul.mubr.bf16.gmra.mxu0 %v5222
  %v5282 = vpop.f32.mrf.mxu0
  %v5283 = vadd.f32 %v5069, %v5282
  %v5284 = vpop.f32.mrf.mxu0
  %v5285 = vadd.f32 %v5069, %v5284
  %v5286 = vpop.f32.mrf.mxu0
  %v5287 = vadd.f32 %v5074, %v5286
  %v5288 = vpop.f32.mrf.mxu0
  %v5289 = vadd.f32 %v5074, %v5288
  %5290 = vdwg.mxu0
  %5291 = vmatprep.subr.bf16.mxu0 0
  %5292 = vmatpush1.bf16.msra.mxu0 0
  %5293 = vmatprep.subr.bf16.mxu0 0
  %5294 = vmatpush1.bf16.msra.mxu0 0
  %5295 = vmatprep.subr.bf16.mxu0 0
  %5296 = vmatpush1.bf16.msra.mxu0 0
  %5297 = vmatprep.subr.bf16.mxu0 0
  %5298 = vmatpush1.bf16.msra.mxu0 0
  %5299 = vmatprep.subr.bf16.mxu0 %v5234
  %5300 = vmatpush1.bf16.msra.mxu0 %v5231
  %5301 = vmatprep.subr.bf16.mxu0 %v5184
  %5302 = vmatpush1.bf16.msra.mxu0 %v5183
  %5303 = vmatprep.subr.bf16.mxu0 %v5176
  %5304 = vmatpush1.bf16.msra.mxu0 %v5175
  %5305 = vmatprep.subr.bf16.mxu0 %v5168
  %5306 = vmatpush1.bf16.msra.mxu0 %v5167
  %5307 = vmatprep.subr.bf16.mxu0 0
  %5308 = vmatpush2.bf16.msra.mxu0 0
  %5309 = vmatprep.subr.bf16.mxu0 0
  %5310 = vmatpush2.bf16.msra.mxu0 0
  %5311 = vmatprep.subr.bf16.mxu0 0
  %5312 = vmatpush2.bf16.msra.mxu0 0
  %5313 = vmatprep.subr.bf16.mxu0 0
  %5314 = vmatpush2.bf16.msra.mxu0 0
  %5315 = vmatprep.subr.bf16.mxu0 0
  %5316 = vmatpush2.bf16.msra.mxu0 0
  %5317 = vmatprep.subr.bf16.mxu0 0
  %5318 = vmatpush2.bf16.msra.mxu0 0
  %5319 = vmatprep.subr.bf16.mxu0 0
  %5320 = vmatpush2.bf16.msra.mxu0 0
  %5321 = vmatprep.subr.bf16.mxu0 0
  %5322 = vmatpush2.bf16.msra.mxu0 0
  %5323 = vmatprep.mubr.bf16.mxu0 0
  %5324 = vmatmul.mubr.bf16.gmra.mxu0 %v5222
  %v5325 = vpop.f32.mrf.mxu0
  %v5326 = vadd.f32 %v5069, %v5325
  %v5327 = vpop.f32.mrf.mxu0
  %v5328 = vadd.f32 %v5069, %v5327
  %v5329 = vpop.f32.mrf.mxu0
  %v5330 = vadd.f32 %v5074, %v5329
  %v5331 = vpop.f32.mrf.mxu0
  %v5332 = vadd.f32 %v5074, %v5331
  %5333 = vdwg.mxu0
  %5334 = vmatprep.subr.bf16.mxu0 0
  %5335 = vmatpush1.bf16.msra.mxu0 0
  %5336 = vmatprep.subr.bf16.mxu0 0
  %5337 = vmatpush1.bf16.msra.mxu0 0
  %5338 = vmatprep.subr.bf16.mxu0 0
  %5339 = vmatpush1.bf16.msra.mxu0 0
  %5340 = vmatprep.subr.bf16.mxu0 0
  %5341 = vmatpush1.bf16.msra.mxu0 0
  %5342 = vmatprep.subr.bf16.mxu0 %v5240
  %5343 = vmatpush1.bf16.msra.mxu0 %v5237
  %5344 = vmatprep.subr.bf16.mxu0 %v5186
  %5345 = vmatpush1.bf16.msra.mxu0 %v5185
  %5346 = vmatprep.subr.bf16.mxu0 %v5178
  %5347 = vmatpush1.bf16.msra.mxu0 %v5177
  %5348 = vmatprep.subr.bf16.mxu0 %v5170
  %5349 = vmatpush1.bf16.msra.mxu0 %v5169
  %5350 = vmatprep.subr.bf16.mxu0 0
  %5351 = vmatpush2.bf16.msra.mxu0 0
  %5352 = vmatprep.subr.bf16.mxu0 0
  %5353 = vmatpush2.bf16.msra.mxu0 0
  %5354 = vmatprep.subr.bf16.mxu0 0
  %5355 = vmatpush2.bf16.msra.mxu0 0
  %5356 = vmatprep.subr.bf16.mxu0 0
  %5357 = vmatpush2.bf16.msra.mxu0 0
  %5358 = vmatprep.subr.bf16.mxu0 0
  %5359 = vmatpush2.bf16.msra.mxu0 0
  %5360 = vmatprep.subr.bf16.mxu0 0
  %5361 = vmatpush2.bf16.msra.mxu0 0
  %5362 = vmatprep.subr.bf16.mxu0 0
  %5363 = vmatpush2.bf16.msra.mxu0 0
  %5364 = vmatprep.subr.bf16.mxu0 0
  %5365 = vmatpush2.bf16.msra.mxu0 0
  %5366 = vmatprep.mubr.bf16.mxu0 0
  %5367 = vmatmul.mubr.bf16.gmra.mxu0 %v5222
  %v5368 = vpop.f32.mrf.mxu0
  %v5369 = vadd.f32 %v5069, %v5368
  %v5370 = vpop.f32.mrf.mxu0
  %v5371 = vadd.f32 %v5069, %v5370
  %v5372 = vpop.f32.mrf.mxu0
  %v5373 = vadd.f32 %v5074, %v5372
  %v5374 = vpop.f32.mrf.mxu0
  %v5375 = vadd.f32 %v5074, %v5374
  %5376 = vdwg.mxu0
  %5377 = vmatprep.subr.bf16.mxu0 0
  %5378 = vmatpush1.bf16.msra.mxu0 0
  %5379 = vmatprep.subr.bf16.mxu0 0
  %5380 = vmatpush1.bf16.msra.mxu0 0
  %5381 = vmatprep.subr.bf16.mxu0 0
  %5382 = vmatpush1.bf16.msra.mxu0 0
  %5383 = vmatprep.subr.bf16.mxu0 0
  %5384 = vmatpush1.bf16.msra.mxu0 0
  %5385 = vmatprep.subr.bf16.mxu0 %v5246
  %5386 = vmatpush1.bf16.msra.mxu0 %v5243
  %5387 = vmatprep.subr.bf16.mxu0 %v5188
  %5388 = vmatpush1.bf16.msra.mxu0 %v5187
  %5389 = vmatprep.subr.bf16.mxu0 %v5180
  %5390 = vmatpush1.bf16.msra.mxu0 %v5179
  %5391 = vmatprep.subr.bf16.mxu0 %v5172
  %5392 = vmatpush1.bf16.msra.mxu0 %v5171
  %5393 = vmatprep.subr.bf16.mxu0 0
  %5394 = vmatpush2.bf16.msra.mxu0 0
  %5395 = vmatprep.subr.bf16.mxu0 0
  %5396 = vmatpush2.bf16.msra.mxu0 0
  %5397 = vmatprep.subr.bf16.mxu0 0
  %5398 = vmatpush2.bf16.msra.mxu0 0
  %5399 = vmatprep.subr.bf16.mxu0 0
  %5400 = vmatpush2.bf16.msra.mxu0 0
  %5401 = vmatprep.subr.bf16.mxu0 0
  %5402 = vmatpush2.bf16.msra.mxu0 0
  %5403 = vmatprep.subr.bf16.mxu0 0
  %5404 = vmatpush2.bf16.msra.mxu0 0
  %5405 = vmatprep.subr.bf16.mxu0 0
  %5406 = vmatpush2.bf16.msra.mxu0 0
  %5407 = vmatprep.subr.bf16.mxu0 0
  %5408 = vmatpush2.bf16.msra.mxu0 0
  %5409 = vmatprep.mubr.bf16.mxu0 0
  %5410 = vmatmul.mubr.bf16.gmra.mxu0 %v5222
  %v5411 = vpop.f32.mrf.mxu0
  %v5412 = vadd.f32 %v5069, %v5411
  %v5413 = vpop.f32.mrf.mxu0
  %v5414 = vadd.f32 %v5069, %v5413
  %v5415 = vpop.f32.mrf.mxu0
  %v5416 = vadd.f32 %v5074, %v5415
  %v5417 = vpop.f32.mrf.mxu0
  %v5418 = vadd.f32 %v5074, %v5417
  %5419 = vdwg.mxu0
  %v5420 = vsub.f32 0.0, %v5283
  %v5421 = vsub.f32 0.0, %v5285
  %v5422 = vsub.f32 0.0, %v5326
  %v5423 = vsub.f32 0.0, %v5328
  %v5424 = vsub.f32 0.0, %v5369
  %v5425 = vsub.f32 0.0, %v5371
  %v5426 = vsub.f32 0.0, %v5412
  %v5427 = vsub.f32 0.0, %v5414
  %v5428 = vsub.f32 0.0, %v5287
  %v5429 = vsub.f32 0.0, %v5289
  %v5430 = vsub.f32 0.0, %v5330
  %v5431 = vsub.f32 0.0, %v5332
  %v5432 = vsub.f32 0.0, %v5373
  %v5433 = vsub.f32 0.0, %v5375
  %v5434 = vsub.f32 0.0, %v5416
  %v5435 = vsub.f32 0.0, %v5418
  %v5436 = vmul.f32 %v5420, 1.442695
  %v5437 = vpow.pop %v5436
  %v5438 = vmul.f32 %v5421, 1.442695
  %v5439 = vpow.pop %v5438
  %v5440 = vmul.f32 %v5422, 1.442695
  %v5441 = vpow.pop %v5440
  %v5442 = vmul.f32 %v5423, 1.442695
  %v5443 = vpow.pop %v5442
  %v5444 = vmul.f32 %v5424, 1.442695
  %v5445 = vpow.pop %v5444
  %v5446 = vmul.f32 %v5425, 1.442695
  %v5447 = vpow.pop %v5446
  %v5448 = vmul.f32 %v5426, 1.442695
  %v5449 = vpow.pop %v5448
  %v5450 = vmul.f32 %v5427, 1.442695
  %v5451 = vpow.pop %v5450
  %v5452 = vmul.f32 %v5428, 1.442695
  %v5453 = vpow.pop %v5452
  %v5454 = vmul.f32 %v5429, 1.442695
  %v5455 = vpow.pop %v5454
  %v5456 = vmul.f32 %v5430, 1.442695
  %v5457 = vpow.pop %v5456
  %v5458 = vmul.f32 %v5431, 1.442695
  %v5459 = vpow.pop %v5458
  %v5460 = vmul.f32 %v5432, 1.442695
  %v5461 = vpow.pop %v5460
  %v5462 = vmul.f32 %v5433, 1.442695
  %v5463 = vpow.pop %v5462
  %v5464 = vmul.f32 %v5434, 1.442695
  %v5465 = vpow.pop %v5464
  %v5466 = vmul.f32 %v5435, 1.442695
  %v5467 = vpow.pop %v5466
  %v5468 = vadd.f32 %v5437, 1.0
  %v5469 = vadd.f32 %v5439, 1.0
  %v5470 = vadd.f32 %v5441, 1.0
  %v5471 = vadd.f32 %v5443, 1.0
  %v5472 = vadd.f32 %v5445, 1.0
  %v5473 = vadd.f32 %v5447, 1.0
  %v5474 = vadd.f32 %v5449, 1.0
  %v5475 = vadd.f32 %v5451, 1.0
  %v5476 = vadd.f32 %v5453, 1.0
  %v5477 = vadd.f32 %v5455, 1.0
  %v5478 = vadd.f32 %v5457, 1.0
  %v5479 = vadd.f32 %v5459, 1.0
  %v5480 = vadd.f32 %v5461, 1.0
  %v5481 = vadd.f32 %v5463, 1.0
  %v5482 = vadd.f32 %v5465, 1.0
  %v5483 = vadd.f32 %v5467, 1.0
  %v5484 = vrcp.pop %v5468
  %v5485 = vrcp.pop %v5469
  %v5486 = vrcp.pop %v5470
  %v5487 = vrcp.pop %v5471
  %v5488 = vrcp.pop %v5472
  %v5489 = vrcp.pop %v5473
  %v5490 = vrcp.pop %v5474
  %v5491 = vrcp.pop %v5475
  %v5492 = vrcp.pop %v5476
  %v5493 = vrcp.pop %v5477
  %v5494 = vrcp.pop %v5478
  %v5495 = vrcp.pop %v5479
  %v5496 = vrcp.pop %v5480
  %v5497 = vrcp.pop %v5481
  %v5498 = vrcp.pop %v5482
  %v5499 = vrcp.pop %v5483
  %v5516 = vrot.slane %v5484, 4
  %v5517 = vrot.slane %v5485, 4
  %v5518 = vrot.slane %v5486, 4
  %v5519 = vrot.slane %v5487, 4
  %v5520 = vrot.slane %v5488, 4
  %v5521 = vrot.slane %v5489, 4
  %v5522 = vrot.slane %v5490, 4
  %v5523 = vrot.slane %v5491, 4
  %v5524 = vrot.slane %v5492, 4
  %v5525 = vsel %vm42, %v5516, %v5524
  %v5526 = vrot.slane %v5493, 4
  %v5527 = vsel %vm42, %v5517, %v5526
  %v5528 = vrot.slane %v5494, 4
  %v5529 = vsel %vm42, %v5518, %v5528
  %v5530 = vrot.slane %v5495, 4
  %v5531 = vsel %vm42, %v5519, %v5530
  %v5532 = vrot.slane %v5496, 4
  %v5533 = vsel %vm42, %v5520, %v5532
  %v5534 = vrot.slane %v5497, 4
  %v5535 = vsel %vm42, %v5521, %v5534
  %v5536 = vrot.slane %v5498, 4
  %v5537 = vsel %vm42, %v5522, %v5536
  %v5538 = vrot.slane %v5499, 4
  %v5539 = vsel %vm42, %v5523, %v5538
  %5556 = vst [vmem:[%s7 + $0x40] sm:$0xf0] %v5516
  %5557 = vst [vmem:[%s7 + $0x48] sm:$0xf0] %v5517
  %5558 = vst [vmem:[%s7 + $0x50] sm:$0xf0] %v5518
  %5559 = vst [vmem:[%s7 + $0x58] sm:$0xf0] %v5519
  %5560 = vst [vmem:[%s7 + $0x60] sm:$0xf0] %v5520
  %5561 = vst [vmem:[%s7 + $0x68] sm:$0xf0] %v5521
  %5562 = vst [vmem:[%s7 + $0x70] sm:$0xf0] %v5522
  %5563 = vst.msk [vmem:[%s7 + $0x78] sm:$0xf0] %vm43, %v5523
  %5564 = vst [vmem:[%s7 + $0x80] sm:$0xff] %v5525
  %5565 = vst [vmem:[%s7 + $0x88] sm:$0xff] %v5527
  %5566 = vst [vmem:[%s7 + $0x90] sm:$0xff] %v5529
  %5567 = vst [vmem:[%s7 + $0x98] sm:$0xff] %v5531
  %5568 = vst [vmem:[%s7 + $0xa0] sm:$0xff] %v5533
  %5569 = vst [vmem:[%s7 + $0xa8] sm:$0xff] %v5535
  %5570 = vst [vmem:[%s7 + $0xb0] sm:$0xff] %v5537
  %5571 = vst.msk [vmem:[%s7 + $0xb8] sm:$0xff] %vm4492, %v5539
  %v5572 = vld [vmem:[#allocation5 + $0x4] sm:$0x88]
  %v5573 = vld [vmem:[#allocation5 + $0xc] sm:$0x88]
  %v5574 = vld [vmem:[#allocation5 + $0x14] sm:$0x88]
  %v5575 = vld [vmem:[#allocation5 + $0x1c] sm:$0x88]
  %v5576 = vld [vmem:[#allocation5 + $0x30] sm:$0x33]
  %v5577 = vld [vmem:[#allocation5 + $0x38] sm:$0x33]
  %v5578 = vld [vmem:[#allocation5 + $0x40] sm:$0x33]
  %v5579 = vld [vmem:[#allocation5 + $0x48] sm:$0x33]
  %v5588 = vrot.slane %v5572, 7
  %v5589 = vrot.slane %v5588, 4
  %v5590 = vrot.slane %v5576, 7
  %v5591 = vsel %vm3529, %v5589, %v5590
  %v5592 = vrot.slane %v5573, 7
  %v5593 = vrot.slane %v5592, 4
  %v5594 = vrot.slane %v5577, 7
  %v5595 = vsel %vm3529, %v5593, %v5594
  %v5596 = vrot.slane %v5574, 7
  %v5597 = vrot.slane %v5596, 4
  %v5598 = vrot.slane %v5578, 7
  %v5599 = vsel %vm3529, %v5597, %v5598
  %v5600 = vrot.slane %v5575, 7
  %v5601 = vrot.slane %v5600, 4
  %v5602 = vrot.slane %v5579, 7
  %v5603 = vsel %vm3529, %v5601, %v5602
  %5604 = vrot.lane.b32.xlu0 %v5591, 112
  %v5605 = vpop.permute.xlu0 %5604
  %5606 = vrot.lane.b32.xlu0 %v5595, 112
  %v5607 = vpop.permute.xlu0 %5606
  %5608 = vrot.lane.b32.xlu0 %v5599, 112
  %v5609 = vpop.permute.xlu0 %5608
  %5610 = vrot.lane.b32.xlu0 %v5603, 112
  %v5611 = vpop.permute.xlu0 %5610
  %v5612 = vrot.slane %v5605, 4
  %v5613 = vrot.slane %v5607, 4
  %v5614 = vrot.slane %v5609, 4
  %v5615 = vrot.slane %v5611, 4
  %v5616 = vsel %vm114, %v5612, %v5613
  %v5617 = vsel %vm116, %v5605, %v5616
  %v5618 = vsel %vm114, %v5613, %v5614
  %v5619 = vsel %vm116, %v5607, %v5618
  %v5620 = vsel %vm114, %v5614, %v5615
  %v5621 = vsel %vm116, %v5609, %v5620
  %v5622 = vsel %vm116, %v5611, %v5615
  %5627 = vst [vmem:[#allocation6] sm:$0x77] %v5617
  %5628 = vst [vmem:[#allocation6 + $0x8] sm:$0x77] %v5619
  %5629 = vst [vmem:[#allocation6 + $0x10] sm:$0x77] %v5621
  %5630 = vst.msk [vmem:[#allocation6 + $0x18] sm:$0x77] %vm3509, %v5622
  %v5631 = vld [vmem:[#allocation5 + $0x4] sm:$0x77]
  %v5632 = vld [vmem:[#allocation5 + $0xc] sm:$0x77]
  %v5633 = vld [vmem:[#allocation5 + $0x14] sm:$0x77]
  %v5634 = vld [vmem:[#allocation5 + $0x1c] sm:$0x77]
  %v5639 = vrot.slane %v5631, 5
  %v5640 = vrot.slane %v5632, 5
  %v5641 = vrot.slane %v5633, 5
  %v5642 = vrot.slane %v5634, 5
  %v5643 = vrot.slane %v5639, 4
  %v5644 = vrot.slane %v5640, 4
  %v5645 = vrot.slane %v5641, 4
  %v5646 = vrot.slane %v5642, 4
  %5647 = vrot.lane.b32.xlu0 %v5639, 96
  %v5648 = vpop.permute.xlu0 %5647
  %5649 = vrot.lane.b32.xlu0 %v5640, 96
  %v5650 = vpop.permute.xlu0 %5649
  %5651 = vrot.lane.b32.xlu0 %v5641, 96
  %v5652 = vpop.permute.xlu0 %5651
  %5653 = vrot.lane.b32.xlu0 %v5642, 96
  %v5654 = vpop.permute.xlu0 %5653
  %5655 = vrot.lane.b32.xlu0 %v5643, 96
  %v5656 = vpop.permute.xlu0 %5655
  %5657 = vrot.lane.b32.xlu0 %v5644, 96
  %v5658 = vpop.permute.xlu0 %5657
  %5659 = vrot.lane.b32.xlu0 %v5645, 96
  %v5660 = vpop.permute.xlu0 %5659
  %5661 = vrot.lane.b32.xlu0 %v5646, 96
  %v5662 = vpop.permute.xlu0 %5661
  %v5663 = vrot.slane %v5648, 4
  %v5664 = vrot.slane %v5650, 4
  %v5665 = vrot.slane %v5652, 4
  %v5666 = vrot.slane %v5654, 4
  %v5667 = vrot.slane %v5656, 4
  %v5668 = vrot.slane %v5658, 4
  %v5669 = vrot.slane %v5660, 4
  %v5670 = vrot.slane %v5662, 4
  %v5671 = vsel %vm114, %v5663, %v5664
  %v5672 = vsel %vm222, %v5648, %v5671
  %v5673 = vsel %vm114, %v5664, %v5665
  %v5674 = vsel %vm222, %v5650, %v5673
  %v5675 = vsel %vm114, %v5665, %v5666
  %v5676 = vsel %vm222, %v5652, %v5675
  %v5677 = vsel %vm222, %v5654, %v5666
  %v5678 = vsel %vm114, %v5667, %v5668
  %v5679 = vsel %vm222, %v5656, %v5678
  %v5680 = vsel %vm114, %v5668, %v5669
  %v5681 = vsel %vm222, %v5658, %v5680
  %v5682 = vsel %vm114, %v5669, %v5670
  %v5683 = vsel %vm222, %v5660, %v5682
  %v5684 = vsel %vm222, %v5662, %v5670
  %5693 = vst [vmem:[#allocation6] sm:$0x88] %v5672
  %5694 = vst [vmem:[#allocation6 + $0x8] sm:$0x88] %v5674
  %5695 = vst [vmem:[#allocation6 + $0x10] sm:$0x88] %v5676
  %5696 = vst.msk [vmem:[#allocation6 + $0x18] sm:$0x88] %vm3597, %v5677
  %5697 = vst [vmem:[#allocation6 + $0x20] sm:$0x33] %v5679
  %5698 = vst [vmem:[#allocation6 + $0x28] sm:$0x33] %v5681
  %5699 = vst [vmem:[#allocation6 + $0x30] sm:$0x33] %v5683
  %5700 = vst.msk [vmem:[#allocation6 + $0x38] sm:$0x33] %vm2002, %v5684
  %v5701 = vld [vmem:[#allocation5 + $0x4] sm:$0x88]
  %v5702 = vld [vmem:[#allocation5 + $0xc] sm:$0x88]
  %v5703 = vld [vmem:[#allocation5 + $0x14] sm:$0x88]
  %v5704 = vld [vmem:[#allocation5 + $0x1c] sm:$0x88]
  %v5705 = vld [vmem:[#allocation5 + $0x30] sm:$0x33]
  %v5706 = vld [vmem:[#allocation5 + $0x38] sm:$0x33]
  %v5707 = vld [vmem:[#allocation5 + $0x40] sm:$0x33]
  %v5708 = vld [vmem:[#allocation5 + $0x48] sm:$0x33]
  %v5717 = vrot.slane %v5701, 5
  %v5718 = vrot.slane %v5717, 4
  %v5719 = vrot.slane %v5705, 5
  %v5720 = vsel %vm3931, %v5718, %v5719
  %v5721 = vrot.slane %v5702, 5
  %v5722 = vrot.slane %v5721, 4
  %v5723 = vrot.slane %v5706, 5
  %v5724 = vsel %vm3931, %v5722, %v5723
  %v5725 = vrot.slane %v5703, 5
  %v5726 = vrot.slane %v5725, 4
  %v5727 = vrot.slane %v5707, 5
  %v5728 = vsel %vm3931, %v5726, %v5727
  %v5729 = vrot.slane %v5704, 5
  %v5730 = vrot.slane %v5729, 4
  %v5731 = vrot.slane %v5708, 5
  %v5732 = vsel %vm3931, %v5730, %v5731
  %v5733 = vrot.slane %v5719, 4
  %v5734 = vrot.slane %v5723, 4
  %v5735 = vrot.slane %v5727, 4
  %v5736 = vrot.slane %v5731, 4
  %5737 = vrot.lane.b32.xlu0 %v5720, 96
  %v5738 = vpop.permute.xlu0 %5737
  %5739 = vrot.lane.b32.xlu0 %v5724, 96
  %v5740 = vpop.permute.xlu0 %5739
  %5741 = vrot.lane.b32.xlu0 %v5728, 96
  %v5742 = vpop.permute.xlu0 %5741
  %5743 = vrot.lane.b32.xlu0 %v5732, 96
  %v5744 = vpop.permute.xlu0 %5743
  %5745 = vrot.lane.b32.xlu0 %v5733, 96
  %v5746 = vpop.permute.xlu0 %5745
  %5747 = vrot.lane.b32.xlu0 %v5734, 96
  %v5748 = vpop.permute.xlu0 %5747
  %5749 = vrot.lane.b32.xlu0 %v5735, 96
  %v5750 = vpop.permute.xlu0 %5749
  %5751 = vrot.lane.b32.xlu0 %v5736, 96
  %v5752 = vpop.permute.xlu0 %5751
  %v5753 = vrot.slane %v5738, 4
  %v5754 = vrot.slane %v5740, 4
  %v5755 = vrot.slane %v5742, 4
  %v5756 = vrot.slane %v5744, 4
  %v5757 = vrot.slane %v5746, 4
  %v5758 = vrot.slane %v5748, 4
  %v5759 = vrot.slane %v5750, 4
  %v5760 = vrot.slane %v5752, 4
  %v5761 = vsel %vm114, %v5753, %v5754
  %v5762 = vsel %vm222, %v5738, %v5761
  %v5763 = vsel %vm114, %v5754, %v5755
  %v5764 = vsel %vm222, %v5740, %v5763
  %v5765 = vsel %vm114, %v5755, %v5756
  %v5766 = vsel %vm222, %v5742, %v5765
  %v5767 = vsel %vm222, %v5744, %v5756
  %v5768 = vsel %vm114, %v5757, %v5758
  %v5769 = vsel %vm222, %v5746, %v5768
  %v5770 = vsel %vm114, %v5758, %v5759
  %v5771 = vsel %vm222, %v5748, %v5770
  %v5772 = vsel %vm114, %v5759, %v5760
  %v5773 = vsel %vm222, %v5750, %v5772
  %v5774 = vsel %vm222, %v5752, %v5760
  %5783 = vst [vmem:[#allocation6 + $0x20] sm:$0xcc] %v5762
  %5784 = vst [vmem:[#allocation6 + $0x28] sm:$0xcc] %v5764
  %5785 = vst [vmem:[#allocation6 + $0x30] sm:$0xcc] %v5766
  %5786 = vst.msk [vmem:[#allocation6 + $0x38] sm:$0xcc] %vm2090, %v5767
  %5787 = vst [vmem:[#allocation6 + $0x40] sm:$0x11] %v5769
  %5788 = vst [vmem:[#allocation6 + $0x48] sm:$0x11] %v5771
  %5789 = vst [vmem:[#allocation6 + $0x50] sm:$0x11] %v5773
  %5790 = vst.msk [vmem:[#allocation6 + $0x58] sm:$0x11] %vm3674, %v5774
  %v5791 = vld [vmem:[#allocation5 + $0x5c] sm:$0xee]
  %v5792 = vld [vmem:[#allocation5 + $0x64] sm:$0xee]
  %v5793 = vld [vmem:[#allocation5 + $0x6c] sm:$0xee]
  %v5794 = vld [vmem:[#allocation5 + $0x74] sm:$0xee]
  %5799 = vrot.lane.b32.xlu0 %v5791, 112
  %v5800 = vpop.permute.xlu0 %5799
  %5801 = vrot.lane.b32.xlu0 %v5792, 112
  %v5802 = vpop.permute.xlu0 %5801
  %5803 = vrot.lane.b32.xlu0 %v5793, 112
  %v5804 = vpop.permute.xlu0 %5803
  %5805 = vrot.lane.b32.xlu0 %v5794, 112
  %v5806 = vpop.permute.xlu0 %5805
  %v5807 = vrot.slane %v5800, 4
  %v5808 = vrot.slane %v5802, 4
  %v5809 = vrot.slane %v5804, 4
  %v5810 = vrot.slane %v5806, 4
  %v5811 = vsel %vm114, %v5807, %v5808
  %v5812 = vsel %vm116, %v5800, %v5811
  %v5813 = vsel %vm114, %v5808, %v5809
  %v5814 = vsel %vm116, %v5802, %v5813
  %v5815 = vsel %vm114, %v5809, %v5810
  %v5816 = vsel %vm116, %v5804, %v5815
  %v5817 = vsel %vm116, %v5806, %v5810
  %5822 = vst [vmem:[#allocation6 + $0x40] sm:$0xee] %v5812
  %5823 = vst [vmem:[#allocation6 + $0x48] sm:$0xee] %v5814
  %5824 = vst [vmem:[#allocation6 + $0x50] sm:$0xee] %v5816
  %5825 = vst.msk [vmem:[#allocation6 + $0x58] sm:$0xee] %vm3736, %v5817
  %v5826 = vld [vmem:[#allocation5 + $0x30] sm:$0xcc]
  %v5827 = vld [vmem:[#allocation5 + $0x38] sm:$0xcc]
  %v5828 = vld [vmem:[#allocation5 + $0x40] sm:$0xcc]
  %v5829 = vld [vmem:[#allocation5 + $0x48] sm:$0xcc]
  %v5830 = vld [vmem:[#allocation5 + $0x5c] sm:$0x11]
  %v5831 = vld [vmem:[#allocation5 + $0x64] sm:$0x11]
  %v5832 = vld [vmem:[#allocation5 + $0x6c] sm:$0x11]
  %v5833 = vld [vmem:[#allocation5 + $0x74] sm:$0x11]
  %v5842 = vrot.slane %v5826, 6
  %v5843 = vrot.slane %v5842, 4
  %v5844 = vrot.slane %v5830, 6
  %v5845 = vsel %vm2022, %v5843, %v5844
  %v5846 = vrot.slane %v5827, 6
  %v5847 = vrot.slane %v5846, 4
  %v5848 = vrot.slane %v5831, 6
  %v5849 = vsel %vm2022, %v5847, %v5848
  %v5850 = vrot.slane %v5828, 6
  %v5851 = vrot.slane %v5850, 4
  %v5852 = vrot.slane %v5832, 6
  %v5853 = vsel %vm2022, %v5851, %v5852
  %v5854 = vrot.slane %v5829, 6
  %v5855 = vrot.slane %v5854, 4
  %v5856 = vrot.slane %v5833, 6
  %v5857 = vsel %vm2022, %v5855, %v5856
  %5858 = vrot.lane.b32.xlu0 %v5845, 96
  %v5859 = vpop.permute.xlu0 %5858
  %5860 = vrot.lane.b32.xlu0 %v5849, 96
  %v5861 = vpop.permute.xlu0 %5860
  %5862 = vrot.lane.b32.xlu0 %v5853, 96
  %v5863 = vpop.permute.xlu0 %5862
  %5864 = vrot.lane.b32.xlu0 %v5857, 96
  %v5865 = vpop.permute.xlu0 %5864
  %v5866 = vrot.slane %v5859, 4
  %v5867 = vrot.slane %v5861, 4
  %v5868 = vrot.slane %v5863, 4
  %v5869 = vrot.slane %v5865, 4
  %v5870 = vsel %vm114, %v5866, %v5867
  %v5871 = vsel %vm222, %v5859, %v5870
  %v5872 = vsel %vm114, %v5867, %v5868
  %v5873 = vsel %vm222, %v5861, %v5872
  %v5874 = vsel %vm114, %v5868, %v5869
  %v5875 = vsel %vm222, %v5863, %v5874
  %v5876 = vsel %vm222, %v5865, %v5869
  %5881 = vst [vmem:[#allocation6 + $0x60] sm:$0x77] %v5871
  %5882 = vst [vmem:[#allocation6 + $0x68] sm:$0x77] %v5873
  %5883 = vst [vmem:[#allocation6 + $0x70] sm:$0x77] %v5875
  %5884 = vst.msk [vmem:[#allocation6 + $0x78] sm:$0x77] %vm3509, %v5876
  %v5885 = vld [vmem:[#allocation5 + $0x5c] sm:$0xee]
  %v5886 = vld [vmem:[#allocation5 + $0x64] sm:$0xee]
  %v5887 = vld [vmem:[#allocation5 + $0x6c] sm:$0xee]
  %v5888 = vld [vmem:[#allocation5 + $0x74] sm:$0xee]
  %v5893 = vrot.slane %v5885, 6
  %v5894 = vrot.slane %v5886, 6
  %v5895 = vrot.slane %v5887, 6
  %v5896 = vrot.slane %v5888, 6
  %v5897 = vrot.slane %v5893, 4
  %v5898 = vrot.slane %v5894, 4
  %v5899 = vrot.slane %v5895, 4
  %v5900 = vrot.slane %v5896, 4
  %5901 = vrot.lane.b32.xlu0 %v5893, 96
  %v5902 = vpop.permute.xlu0 %5901
  %5903 = vrot.lane.b32.xlu0 %v5894, 96
  %v5904 = vpop.permute.xlu0 %5903
  %5905 = vrot.lane.b32.xlu0 %v5895, 96
  %v5906 = vpop.permute.xlu0 %5905
  %5907 = vrot.lane.b32.xlu0 %v5896, 96
  %v5908 = vpop.permute.xlu0 %5907
  %5909 = vrot.lane.b32.xlu0 %v5897, 96
  %v5910 = vpop.permute.xlu0 %5909
  %5911 = vrot.lane.b32.xlu0 %v5898, 96
  %v5912 = vpop.permute.xlu0 %5911
  %5913 = vrot.lane.b32.xlu0 %v5899, 96
  %v5914 = vpop.permute.xlu0 %5913
  %5915 = vrot.lane.b32.xlu0 %v5900, 96
  %v5916 = vpop.permute.xlu0 %5915
  %v5917 = vrot.slane %v5902, 4
  %v5918 = vrot.slane %v5904, 4
  %v5919 = vrot.slane %v5906, 4
  %v5920 = vrot.slane %v5908, 4
  %v5921 = vrot.slane %v5910, 4
  %v5922 = vrot.slane %v5912, 4
  %v5923 = vrot.slane %v5914, 4
  %v5924 = vrot.slane %v5916, 4
  %v5925 = vsel %vm114, %v5917, %v5918
  %v5926 = vsel %vm222, %v5902, %v5925
  %v5927 = vsel %vm114, %v5918, %v5919
  %v5928 = vsel %vm222, %v5904, %v5927
  %v5929 = vsel %vm114, %v5919, %v5920
  %v5930 = vsel %vm222, %v5906, %v5929
  %v5931 = vsel %vm222, %v5908, %v5920
  %v5932 = vsel %vm114, %v5921, %v5922
  %v5933 = vsel %vm222, %v5910, %v5932
  %v5934 = vsel %vm114, %v5922, %v5923
  %v5935 = vsel %vm222, %v5912, %v5934
  %v5936 = vsel %vm114, %v5923, %v5924
  %v5937 = vsel %vm222, %v5914, %v5936
  %v5938 = vsel %vm222, %v5916, %v5924
  %5947 = vst [vmem:[#allocation6 + $0x60] sm:$0x88] %v5926
  %5948 = vst [vmem:[#allocation6 + $0x68] sm:$0x88] %v5928
  %5949 = vst [vmem:[#allocation6 + $0x70] sm:$0x88] %v5930
  %5950 = vst.msk [vmem:[#allocation6 + $0x78] sm:$0x88] %vm3597, %v5931
  %5951 = vst [vmem:[#allocation6 + $0x80] sm:$0x33] %v5933
  %5952 = vst [vmem:[#allocation6 + $0x88] sm:$0x33] %v5935
  %5953 = vst [vmem:[#allocation6 + $0x90] sm:$0x33] %v5937
  %5954 = vst.msk [vmem:[#allocation6 + $0x98] sm:$0x33] %vm2002, %v5938
  %v5955 = vld [vmem:[#allocation5 + $0x8] sm:$0x88]
  %v5956 = vld [vmem:[#allocation5 + $0x10] sm:$0x88]
  %v5957 = vld [vmem:[#allocation5 + $0x18] sm:$0x88]
  %v5958 = vld [vmem:[#allocation5 + $0x20] sm:$0x88]
  %v5959 = vld [vmem:[#allocation5 + $0x34] sm:$0x33]
  %v5960 = vld [vmem:[#allocation5 + $0x3c] sm:$0x33]
  %v5961 = vld [vmem:[#allocation5 + $0x44] sm:$0x33]
  %v5962 = vld [vmem:[#allocation5 + $0x4c] sm:$0x33]
  %v5971 = vrot.slane %v5955, 5
  %v5972 = vrot.slane %v5971, 4
  %v5973 = vrot.slane %v5959, 5
  %v5974 = vsel %vm3931, %v5972, %v5973
  %v5975 = vrot.slane %v5956, 5
  %v5976 = vrot.slane %v5975, 4
  %v5977 = vrot.slane %v5960, 5
  %v5978 = vsel %vm3931, %v5976, %v5977
  %v5979 = vrot.slane %v5957, 5
  %v5980 = vrot.slane %v5979, 4
  %v5981 = vrot.slane %v5961, 5
  %v5982 = vsel %vm3931, %v5980, %v5981
  %v5983 = vrot.slane %v5958, 5
  %v5984 = vrot.slane %v5983, 4
  %v5985 = vrot.slane %v5962, 5
  %v5986 = vsel %vm3931, %v5984, %v5985
  %v5987 = vrot.slane %v5973, 4
  %v5988 = vrot.slane %v5977, 4
  %v5989 = vrot.slane %v5981, 4
  %v5990 = vrot.slane %v5985, 4
  %5991 = vrot.lane.b32.xlu0 %v5974, 96
  %v5992 = vpop.permute.xlu0 %5991
  %5993 = vrot.lane.b32.xlu0 %v5978, 96
  %v5994 = vpop.permute.xlu0 %5993
  %5995 = vrot.lane.b32.xlu0 %v5982, 96
  %v5996 = vpop.permute.xlu0 %5995
  %5997 = vrot.lane.b32.xlu0 %v5986, 96
  %v5998 = vpop.permute.xlu0 %5997
  %5999 = vrot.lane.b32.xlu0 %v5987, 96
  %v6000 = vpop.permute.xlu0 %5999
  %6001 = vrot.lane.b32.xlu0 %v5988, 96
  %v6002 = vpop.permute.xlu0 %6001
  %6003 = vrot.lane.b32.xlu0 %v5989, 96
  %v6004 = vpop.permute.xlu0 %6003
  %6005 = vrot.lane.b32.xlu0 %v5990, 96
  %v6006 = vpop.permute.xlu0 %6005
  %v6007 = vrot.slane %v5992, 4
  %v6008 = vrot.slane %v5994, 4
  %v6009 = vrot.slane %v5996, 4
  %v6010 = vrot.slane %v5998, 4
  %v6011 = vrot.slane %v6000, 4
  %v6012 = vrot.slane %v6002, 4
  %v6013 = vrot.slane %v6004, 4
  %v6014 = vrot.slane %v6006, 4
  %v6015 = vsel %vm114, %v6007, %v6008
  %v6016 = vsel %vm222, %v5992, %v6015
  %v6017 = vsel %vm114, %v6008, %v6009
  %v6018 = vsel %vm222, %v5994, %v6017
  %v6019 = vsel %vm114, %v6009, %v6010
  %v6020 = vsel %vm222, %v5996, %v6019
  %v6021 = vsel %vm222, %v5998, %v6010
  %v6022 = vsel %vm114, %v6011, %v6012
  %v6023 = vsel %vm222, %v6000, %v6022
  %v6024 = vsel %vm114, %v6012, %v6013
  %v6025 = vsel %vm222, %v6002, %v6024
  %v6026 = vsel %vm114, %v6013, %v6014
  %v6027 = vsel %vm222, %v6004, %v6026
  %v6028 = vsel %vm222, %v6006, %v6014
  %6037 = vst [vmem:[#allocation6 + $0x80] sm:$0xcc] %v6016
  %6038 = vst [vmem:[#allocation6 + $0x88] sm:$0xcc] %v6018
  %6039 = vst [vmem:[#allocation6 + $0x90] sm:$0xcc] %v6020
  %6040 = vst.msk [vmem:[#allocation6 + $0x98] sm:$0xcc] %vm2090, %v6021
  %6041 = vst [vmem:[#allocation6 + $0xa0] sm:$0x11] %v6023
  %6042 = vst [vmem:[#allocation6 + $0xa8] sm:$0x11] %v6025
  %6043 = vst [vmem:[#allocation6 + $0xb0] sm:$0x11] %v6027
  %6044 = vst.msk [vmem:[#allocation6 + $0xb8] sm:$0x11] %vm3674, %v6028
  %v6045 = vld [vmem:[#allocation5 + $0x8] sm:$0x77]
  %v6046 = vld [vmem:[#allocation5 + $0x10] sm:$0x77]
  %v6047 = vld [vmem:[#allocation5 + $0x18] sm:$0x77]
  %v6048 = vld [vmem:[#allocation5 + $0x20] sm:$0x77]
  %v6053 = vrot.slane %v6045, 7
  %v6054 = vrot.slane %v6046, 7
  %v6055 = vrot.slane %v6047, 7
  %v6056 = vrot.slane %v6048, 7
  %6057 = vrot.lane.b32.xlu0 %v6053, 80
  %v6058 = vpop.permute.xlu0 %6057
  %6059 = vrot.lane.b32.xlu0 %v6054, 80
  %v6060 = vpop.permute.xlu0 %6059
  %6061 = vrot.lane.b32.xlu0 %v6055, 80
  %v6062 = vpop.permute.xlu0 %6061
  %6063 = vrot.lane.b32.xlu0 %v6056, 80
  %v6064 = vpop.permute.xlu0 %6063
  %v6065 = vrot.slane %v6058, 4
  %v6066 = vrot.slane %v6060, 4
  %v6067 = vrot.slane %v6062, 4
  %v6068 = vrot.slane %v6064, 4
  %v6069 = vsel %vm114, %v6065, %v6066
  %v6070 = vsel %vm538, %v6058, %v6069
  %v6071 = vsel %vm114, %v6066, %v6067
  %v6072 = vsel %vm538, %v6060, %v6071
  %v6073 = vsel %vm114, %v6067, %v6068
  %v6074 = vsel %vm538, %v6062, %v6073
  %v6075 = vsel %vm538, %v6064, %v6068
  %6080 = vst [vmem:[#allocation6 + $0xa0] sm:$0xee] %v6070
  %6081 = vst [vmem:[#allocation6 + $0xa8] sm:$0xee] %v6072
  %6082 = vst [vmem:[#allocation6 + $0xb0] sm:$0xee] %v6074
  %6083 = vst.msk [vmem:[#allocation6 + $0xb8] sm:$0xee] %vm3736, %v6075
  %v6084 = vld [vmem:[#allocation5 + $0x8] sm:$0x88]
  %v6085 = vld [vmem:[#allocation5 + $0x10] sm:$0x88]
  %v6086 = vld [vmem:[#allocation5 + $0x18] sm:$0x88]
  %v6087 = vld [vmem:[#allocation5 + $0x20] sm:$0x88]
  %v6088 = vld [vmem:[#allocation5 + $0x34] sm:$0x33]
  %v6089 = vld [vmem:[#allocation5 + $0x3c] sm:$0x33]
  %v6090 = vld [vmem:[#allocation5 + $0x44] sm:$0x33]
  %v6091 = vld [vmem:[#allocation5 + $0x4c] sm:$0x33]
  %v6100 = vrot.slane %v6084, 7
  %v6101 = vrot.slane %v6100, 4
  %v6102 = vrot.slane %v6088, 7
  %v6103 = vsel %vm3529, %v6101, %v6102
  %v6104 = vrot.slane %v6085, 7
  %v6105 = vrot.slane %v6104, 4
  %v6106 = vrot.slane %v6089, 7
  %v6107 = vsel %vm3529, %v6105, %v6106
  %v6108 = vrot.slane %v6086, 7
  %v6109 = vrot.slane %v6108, 4
  %v6110 = vrot.slane %v6090, 7
  %v6111 = vsel %vm3529, %v6109, %v6110
  %v6112 = vrot.slane %v6087, 7
  %v6113 = vrot.slane %v6112, 4
  %v6114 = vrot.slane %v6091, 7
  %v6115 = vsel %vm3529, %v6113, %v6114
  %6116 = vrot.lane.b32.xlu0 %v6103, 80
  %v6117 = vpop.permute.xlu0 %6116
  %6118 = vrot.lane.b32.xlu0 %v6107, 80
  %v6119 = vpop.permute.xlu0 %6118
  %6120 = vrot.lane.b32.xlu0 %v6111, 80
  %v6121 = vpop.permute.xlu0 %6120
  %6122 = vrot.lane.b32.xlu0 %v6115, 80
  %v6123 = vpop.permute.xlu0 %6122
  %v6124 = vrot.slane %v6117, 4
  %v6125 = vrot.slane %v6119, 4
  %v6126 = vrot.slane %v6121, 4
  %v6127 = vrot.slane %v6123, 4
  %v6128 = vsel %vm114, %v6124, %v6125
  %v6129 = vsel %vm538, %v6117, %v6128
  %v6130 = vsel %vm114, %v6125, %v6126
  %v6131 = vsel %vm538, %v6119, %v6130
  %v6132 = vsel %vm114, %v6126, %v6127
  %v6133 = vsel %vm538, %v6121, %v6132
  %v6134 = vsel %vm538, %v6123, %v6127
  %6139 = vst [vmem:[#allocation6 + $0xc0] sm:$0x77] %v6129
  %6140 = vst [vmem:[#allocation6 + $0xc8] sm:$0x77] %v6131
  %6141 = vst [vmem:[#allocation6 + $0xd0] sm:$0x77] %v6133
  %6142 = vst.msk [vmem:[#allocation6 + $0xd8] sm:$0x77] %vm3509, %v6134
  %v6143 = vld [vmem:[%s5] sm:$0xf]
  %v6144 = vld [vmem:[%s5 + $0x4] sm:$0x3]
  %v6145 = vld [vmem:[#allocation6] sm:$0xff]
  %v6146 = vld [vmem:[#allocation6 + $0x8] sm:$0xff]
  %v6147 = vld [vmem:[#allocation6 + $0x10] sm:$0xff]
  %v6148 = vld [vmem:[#allocation6 + $0x18] sm:$0xff]
  %v6149 = vld [vmem:[#allocation6 + $0x20] sm:$0xff]
  %v6150 = vld [vmem:[#allocation6 + $0x28] sm:$0xff]
  %v6151 = vld [vmem:[#allocation6 + $0x30] sm:$0xff]
  %v6152 = vld [vmem:[#allocation6 + $0x38] sm:$0xff]
  %v6153 = vld [vmem:[#allocation6 + $0x40] sm:$0xff]
  %v6154 = vld [vmem:[#allocation6 + $0x48] sm:$0xff]
  %v6155 = vld [vmem:[#allocation6 + $0x50] sm:$0xff]
  %v6156 = vld [vmem:[#allocation6 + $0x58] sm:$0xff]
  %v6157 = vld [vmem:[#allocation6 + $0x60] sm:$0xff]
  %v6158 = vld [vmem:[#allocation6 + $0x68] sm:$0xff]
  %v6159 = vld [vmem:[#allocation6 + $0x70] sm:$0xff]
  %v6160 = vld [vmem:[#allocation6 + $0x78] sm:$0xff]
  %v6161 = vld [vmem:[#allocation6 + $0x80] sm:$0xff]
  %v6162 = vld [vmem:[#allocation6 + $0x88] sm:$0xff]
  %v6163 = vld [vmem:[#allocation6 + $0x90] sm:$0xff]
  %v6164 = vld [vmem:[#allocation6 + $0x98] sm:$0xff]
  %v6165 = vld [vmem:[#allocation6 + $0xa0] sm:$0xff]
  %v6166 = vld [vmem:[#allocation6 + $0xa8] sm:$0xff]
  %v6167 = vld [vmem:[#allocation6 + $0xb0] sm:$0xff]
  %v6168 = vld [vmem:[#allocation6 + $0xb8] sm:$0xff]
  %v6169 = vld [vmem:[#allocation6 + $0xc0] sm:$0x77]
  %v6170 = vld [vmem:[#allocation6 + $0xc8] sm:$0x77]
  %v6171 = vld [vmem:[#allocation6 + $0xd0] sm:$0x77]
  %v6172 = vld [vmem:[#allocation6 + $0xd8] sm:$0x77]
  %v6173 = vld [vmem:[%s6] sm:$0xff]
  %v6174 = vld [vmem:[%s6 + $0x8] sm:$0xf]
  %6176 = vset.pattern.permute.xlu0 0
  %6177 = vperm.xlu0 %6176, %v6173
  %v6178 = vpop.permute.xlu0 %6177
  %6181 = vset.pattern.permute.xlu0 0
  %6182 = vperm.xlu0 %6181, %v6174
  %v6183 = vpop.permute.xlu0 %6182
  %v6187 = vunpack.c.l.b16 %v6143
  %v6188 = vunpack.c.l.b16 %v6144
  %v6189 = vpack.c.b16 %v6188, %v6187
  %v6218 = vunpack.c.l.b16 %v6145
  %v6219 = vunpack.c.h.b16 %v6145
  %v6220 = vunpack.c.l.b16 %v6146
  %v6221 = vunpack.c.h.b16 %v6146
  %v6222 = vunpack.c.l.b16 %v6147
  %v6223 = vunpack.c.h.b16 %v6147
  %v6224 = vunpack.c.l.b16 %v6148
  %v6225 = vunpack.c.h.b16 %v6148
  %v6226 = vunpack.c.l.b16 %v6149
  %v6227 = vunpack.c.h.b16 %v6149
  %v6228 = vunpack.c.l.b16 %v6150
  %v6229 = vunpack.c.h.b16 %v6150
  %v6230 = vunpack.c.l.b16 %v6151
  %v6231 = vunpack.c.h.b16 %v6151
  %v6232 = vunpack.c.l.b16 %v6152
  %v6233 = vunpack.c.h.b16 %v6152
  %v6234 = vunpack.c.l.b16 %v6153
  %v6235 = vunpack.c.h.b16 %v6153
  %v6236 = vunpack.c.l.b16 %v6154
  %v6237 = vunpack.c.h.b16 %v6154
  %v6238 = vunpack.c.l.b16 %v6155
  %v6239 = vunpack.c.h.b16 %v6155
  %v6240 = vunpack.c.l.b16 %v6156
  %v6241 = vunpack.c.h.b16 %v6156
  %v6242 = vunpack.c.l.b16 %v6157
  %v6243 = vunpack.c.h.b16 %v6157
  %v6244 = vunpack.c.l.b16 %v6158
  %v6245 = vunpack.c.h.b16 %v6158
  %v6246 = vunpack.c.l.b16 %v6159
  %v6247 = vunpack.c.h.b16 %v6159
  %v6248 = vunpack.c.l.b16 %v6160
  %v6249 = vunpack.c.h.b16 %v6160
  %v6250 = vunpack.c.l.b16 %v6161
  %v6251 = vunpack.c.h.b16 %v6161
  %v6252 = vunpack.c.l.b16 %v6162
  %v6253 = vunpack.c.h.b16 %v6162
  %v6254 = vunpack.c.l.b16 %v6163
  %v6255 = vunpack.c.h.b16 %v6163
  %v6256 = vunpack.c.l.b16 %v6164
  %v6257 = vunpack.c.h.b16 %v6164
  %v6258 = vunpack.c.l.b16 %v6165
  %v6259 = vunpack.c.h.b16 %v6165
  %v6260 = vunpack.c.l.b16 %v6166
  %v6261 = vunpack.c.h.b16 %v6166
  %v6262 = vunpack.c.l.b16 %v6167
  %v6263 = vunpack.c.h.b16 %v6167
  %v6264 = vunpack.c.l.b16 %v6168
  %v6265 = vunpack.c.h.b16 %v6168
  %v6266 = vunpack.c.l.b16 %v6169
  %v6267 = vunpack.c.h.b16 %v6169
  %v6268 = vunpack.c.l.b16 %v6170
  %v6269 = vunpack.c.h.b16 %v6170
  %v6270 = vunpack.c.l.b16 %v6171
  %v6271 = vunpack.c.h.b16 %v6171
  %v6272 = vunpack.c.l.b16 %v6172
  %v6273 = vunpack.c.h.b16 %v6172
  %v6274 = vpack.c.b16 %v6226, %v6218
  %v6275 = vpack.c.b16 %v6227, %v6219
  %v6276 = vpack.c.b16 %v6228, %v6220
  %v6277 = vpack.c.b16 %v6229, %v6221
  %v6278 = vpack.c.b16 %v6230, %v6222
  %v6279 = vpack.c.b16 %v6231, %v6223
  %v6280 = vpack.c.b16 %v6232, %v6224
  %v6281 = vpack.c.b16 %v6233, %v6225
  %v6282 = vpack.c.b16 %v6242, %v6234
  %v6283 = vpack.c.b16 %v6243, %v6235
  %v6284 = vpack.c.b16 %v6244, %v6236
  %v6285 = vpack.c.b16 %v6245, %v6237
  %v6286 = vpack.c.b16 %v6246, %v6238
  %v6287 = vpack.c.b16 %v6247, %v6239
  %v6288 = vpack.c.b16 %v6248, %v6240
  %v6289 = vpack.c.b16 %v6249, %v6241
  %v6290 = vpack.c.b16 %v6258, %v6250
  %v6291 = vpack.c.b16 %v6259, %v6251
  %v6292 = vpack.c.b16 %v6260, %v6252
  %v6293 = vpack.c.b16 %v6261, %v6253
  %v6294 = vpack.c.b16 %v6262, %v6254
  %v6295 = vpack.c.b16 %v6263, %v6255
  %v6296 = vpack.c.b16 %v6264, %v6256
  %v6297 = vpack.c.b16 %v6265, %v6257
  %v6298 = vpack.c.b16 %v6266, %v6266
  %v6299 = vpack.c.b16 %v6267, %v6267
  %v6300 = vpack.c.b16 %v6268, %v6268
  %v6301 = vpack.c.b16 %v6269, %v6269
  %v6302 = vpack.c.b16 %v6270, %v6270
  %v6303 = vpack.c.b16 %v6271, %v6271
  %v6304 = vpack.c.b16 %v6272, %v6272
  %v6305 = vpack.c.b16 %v6273, %v6273
  %v6331 = vsel %vm4205, %v6189, 0
  %v6334 = vsel %vm3507, %v6298, 0
  %v6337 = vsel %vm3507, %v6299, 0
  %v6340 = vsel %vm3507, %v6300, 0
  %v6343 = vsel %vm3507, %v6301, 0
  %v6346 = vsel %vm3507, %v6302, 0
  %v6349 = vsel %vm3507, %v6303, 0
  %v6352 = vsel %vm3507, %v6304, 0
  %v6355 = vsel %vm3507, %v6305, 0
  %6357 = vmatprep.subr.bf16.mxu0 0
  %6358 = vmatpush1.bf16.msra.mxu0 0
  %6359 = vmatprep.subr.bf16.mxu0 0
  %6360 = vmatpush1.bf16.msra.mxu0 0
  %6361 = vmatprep.subr.bf16.mxu0 0
  %6362 = vmatpush1.bf16.msra.mxu0 0
  %6363 = vmatprep.subr.bf16.mxu0 0
  %6364 = vmatpush1.bf16.msra.mxu0 0
  %6365 = vmatprep.subr.bf16.mxu0 %v6337
  %6366 = vmatpush1.bf16.msra.mxu0 %v6334
  %6367 = vmatprep.subr.bf16.mxu0 %v6291
  %6368 = vmatpush1.bf16.msra.mxu0 %v6290
  %6369 = vmatprep.subr.bf16.mxu0 %v6283
  %6370 = vmatpush1.bf16.msra.mxu0 %v6282
  %6371 = vmatprep.subr.bf16.mxu0 %v6275
  %6372 = vmatpush1.bf16.msra.mxu0 %v6274
  %6373 = vmatprep.subr.bf16.mxu0 0
  %6374 = vmatpush2.bf16.msra.mxu0 0
  %6375 = vmatprep.subr.bf16.mxu0 0
  %6376 = vmatpush2.bf16.msra.mxu0 0
  %6377 = vmatprep.subr.bf16.mxu0 0
  %6378 = vmatpush2.bf16.msra.mxu0 0
  %6379 = vmatprep.subr.bf16.mxu0 0
  %6380 = vmatpush2.bf16.msra.mxu0 0
  %6381 = vmatprep.subr.bf16.mxu0 0
  %6382 = vmatpush2.bf16.msra.mxu0 0
  %6383 = vmatprep.subr.bf16.mxu0 0
  %6384 = vmatpush2.bf16.msra.mxu0 0
  %6385 = vmatprep.subr.bf16.mxu0 0
  %6386 = vmatpush2.bf16.msra.mxu0 0
  %6387 = vmatprep.subr.bf16.mxu0 0
  %6388 = vmatpush2.bf16.msra.mxu0 0
  %6389 = vmatprep.mubr.bf16.mxu0 0
  %6390 = vmatmul.mubr.bf16.gmra.mxu0 %v6331
  %v6391 = vpop.f32.mrf.mxu0
  %v6392 = vadd.f32 %v6178, %v6391
  %v6393 = vpop.f32.mrf.mxu0
  %v6394 = vadd.f32 %v6178, %v6393
  %v6395 = vpop.f32.mrf.mxu0
  %v6396 = vadd.f32 %v6183, %v6395
  %v6397 = vpop.f32.mrf.mxu0
  %v6398 = vadd.f32 %v6183, %v6397
  %6399 = vdwg.mxu0
  %6400 = vmatprep.subr.bf16.mxu0 0
  %6401 = vmatpush1.bf16.msra.mxu0 0
  %6402 = vmatprep.subr.bf16.mxu0 0
  %6403 = vmatpush1.bf16.msra.mxu0 0
  %6404 = vmatprep.subr.bf16.mxu0 0
  %6405 = vmatpush1.bf16.msra.mxu0 0
  %6406 = vmatprep.subr.bf16.mxu0 0
  %6407 = vmatpush1.bf16.msra.mxu0 0
  %6408 = vmatprep.subr.bf16.mxu0 %v6343
  %6409 = vmatpush1.bf16.msra.mxu0 %v6340
  %6410 = vmatprep.subr.bf16.mxu0 %v6293
  %6411 = vmatpush1.bf16.msra.mxu0 %v6292
  %6412 = vmatprep.subr.bf16.mxu0 %v6285
  %6413 = vmatpush1.bf16.msra.mxu0 %v6284
  %6414 = vmatprep.subr.bf16.mxu0 %v6277
  %6415 = vmatpush1.bf16.msra.mxu0 %v6276
  %6416 = vmatprep.subr.bf16.mxu0 0
  %6417 = vmatpush2.bf16.msra.mxu0 0
  %6418 = vmatprep.subr.bf16.mxu0 0
  %6419 = vmatpush2.bf16.msra.mxu0 0
  %6420 = vmatprep.subr.bf16.mxu0 0
  %6421 = vmatpush2.bf16.msra.mxu0 0
  %6422 = vmatprep.subr.bf16.mxu0 0
  %6423 = vmatpush2.bf16.msra.mxu0 0
  %6424 = vmatprep.subr.bf16.mxu0 0
  %6425 = vmatpush2.bf16.msra.mxu0 0
  %6426 = vmatprep.subr.bf16.mxu0 0
  %6427 = vmatpush2.bf16.msra.mxu0 0
  %6428 = vmatprep.subr.bf16.mxu0 0
  %6429 = vmatpush2.bf16.msra.mxu0 0
  %6430 = vmatprep.subr.bf16.mxu0 0
  %6431 = vmatpush2.bf16.msra.mxu0 0
  %6432 = vmatprep.mubr.bf16.mxu0 0
  %6433 = vmatmul.mubr.bf16.gmra.mxu0 %v6331
  %v6434 = vpop.f32.mrf.mxu0
  %v6435 = vadd.f32 %v6178, %v6434
  %v6436 = vpop.f32.mrf.mxu0
  %v6437 = vadd.f32 %v6178, %v6436
  %v6438 = vpop.f32.mrf.mxu0
  %v6439 = vadd.f32 %v6183, %v6438
  %v6440 = vpop.f32.mrf.mxu0
  %v6441 = vadd.f32 %v6183, %v6440
  %6442 = vdwg.mxu0
  %6443 = vmatprep.subr.bf16.mxu0 0
  %6444 = vmatpush1.bf16.msra.mxu0 0
  %6445 = vmatprep.subr.bf16.mxu0 0
  %6446 = vmatpush1.bf16.msra.mxu0 0
  %6447 = vmatprep.subr.bf16.mxu0 0
  %6448 = vmatpush1.bf16.msra.mxu0 0
  %6449 = vmatprep.subr.bf16.mxu0 0
  %6450 = vmatpush1.bf16.msra.mxu0 0
  %6451 = vmatprep.subr.bf16.mxu0 %v6349
  %6452 = vmatpush1.bf16.msra.mxu0 %v6346
  %6453 = vmatprep.subr.bf16.mxu0 %v6295
  %6454 = vmatpush1.bf16.msra.mxu0 %v6294
  %6455 = vmatprep.subr.bf16.mxu0 %v6287
  %6456 = vmatpush1.bf16.msra.mxu0 %v6286
  %6457 = vmatprep.subr.bf16.mxu0 %v6279
  %6458 = vmatpush1.bf16.msra.mxu0 %v6278
  %6459 = vmatprep.subr.bf16.mxu0 0
  %6460 = vmatpush2.bf16.msra.mxu0 0
  %6461 = vmatprep.subr.bf16.mxu0 0
  %6462 = vmatpush2.bf16.msra.mxu0 0
  %6463 = vmatprep.subr.bf16.mxu0 0
  %6464 = vmatpush2.bf16.msra.mxu0 0
  %6465 = vmatprep.subr.bf16.mxu0 0
  %6466 = vmatpush2.bf16.msra.mxu0 0
  %6467 = vmatprep.subr.bf16.mxu0 0
  %6468 = vmatpush2.bf16.msra.mxu0 0
  %6469 = vmatprep.subr.bf16.mxu0 0
  %6470 = vmatpush2.bf16.msra.mxu0 0
  %6471 = vmatprep.subr.bf16.mxu0 0
  %6472 = vmatpush2.bf16.msra.mxu0 0
  %6473 = vmatprep.subr.bf16.mxu0 0
  %6474 = vmatpush2.bf16.msra.mxu0 0
  %6475 = vmatprep.mubr.bf16.mxu0 0
  %6476 = vmatmul.mubr.bf16.gmra.mxu0 %v6331
  %v6477 = vpop.f32.mrf.mxu0
  %v6478 = vadd.f32 %v6178, %v6477
  %v6479 = vpop.f32.mrf.mxu0
  %v6480 = vadd.f32 %v6178, %v6479
  %v6481 = vpop.f32.mrf.mxu0
  %v6482 = vadd.f32 %v6183, %v6481
  %v6483 = vpop.f32.mrf.mxu0
  %v6484 = vadd.f32 %v6183, %v6483
  %6485 = vdwg.mxu0
  %6486 = vmatprep.subr.bf16.mxu0 0
  %6487 = vmatpush1.bf16.msra.mxu0 0
  %6488 = vmatprep.subr.bf16.mxu0 0
  %6489 = vmatpush1.bf16.msra.mxu0 0
  %6490 = vmatprep.subr.bf16.mxu0 0
  %6491 = vmatpush1.bf16.msra.mxu0 0
  %6492 = vmatprep.subr.bf16.mxu0 0
  %6493 = vmatpush1.bf16.msra.mxu0 0
  %6494 = vmatprep.subr.bf16.mxu0 %v6355
  %6495 = vmatpush1.bf16.msra.mxu0 %v6352
  %6496 = vmatprep.subr.bf16.mxu0 %v6297
  %6497 = vmatpush1.bf16.msra.mxu0 %v6296
  %6498 = vmatprep.subr.bf16.mxu0 %v6289
  %6499 = vmatpush1.bf16.msra.mxu0 %v6288
  %6500 = vmatprep.subr.bf16.mxu0 %v6281
  %6501 = vmatpush1.bf16.msra.mxu0 %v6280
  %6502 = vmatprep.subr.bf16.mxu0 0
  %6503 = vmatpush2.bf16.msra.mxu0 0
  %6504 = vmatprep.subr.bf16.mxu0 0
  %6505 = vmatpush2.bf16.msra.mxu0 0
  %6506 = vmatprep.subr.bf16.mxu0 0
  %6507 = vmatpush2.bf16.msra.mxu0 0
  %6508 = vmatprep.subr.bf16.mxu0 0
  %6509 = vmatpush2.bf16.msra.mxu0 0
  %6510 = vmatprep.subr.bf16.mxu0 0
  %6511 = vmatpush2.bf16.msra.mxu0 0
  %6512 = vmatprep.subr.bf16.mxu0 0
  %6513 = vmatpush2.bf16.msra.mxu0 0
  %6514 = vmatprep.subr.bf16.mxu0 0
  %6515 = vmatpush2.bf16.msra.mxu0 0
  %6516 = vmatprep.subr.bf16.mxu0 0
  %6517 = vmatpush2.bf16.msra.mxu0 0
  %6518 = vmatprep.mubr.bf16.mxu0 0
  %6519 = vmatmul.mubr.bf16.gmra.mxu0 %v6331
  %v6520 = vpop.f32.mrf.mxu0
  %v6521 = vadd.f32 %v6178, %v6520
  %v6522 = vpop.f32.mrf.mxu0
  %v6523 = vadd.f32 %v6178, %v6522
  %v6524 = vpop.f32.mrf.mxu0
  %v6525 = vadd.f32 %v6183, %v6524
  %v6526 = vpop.f32.mrf.mxu0
  %v6527 = vadd.f32 %v6183, %v6526
  %6528 = vdwg.mxu0
  %v6529 = vsub.f32 0.0, %v6392
  %v6530 = vsub.f32 0.0, %v6394
  %v6531 = vsub.f32 0.0, %v6435
  %v6532 = vsub.f32 0.0, %v6437
  %v6533 = vsub.f32 0.0, %v6478
  %v6534 = vsub.f32 0.0, %v6480
  %v6535 = vsub.f32 0.0, %v6521
  %v6536 = vsub.f32 0.0, %v6523
  %v6537 = vsub.f32 0.0, %v6396
  %v6538 = vsub.f32 0.0, %v6398
  %v6539 = vsub.f32 0.0, %v6439
  %v6540 = vsub.f32 0.0, %v6441
  %v6541 = vsub.f32 0.0, %v6482
  %v6542 = vsub.f32 0.0, %v6484
  %v6543 = vsub.f32 0.0, %v6525
  %v6544 = vsub.f32 0.0, %v6527
  %v6545 = vmul.f32 %v6529, 1.442695
  %v6546 = vpow.pop %v6545
  %v6547 = vmul.f32 %v6530, 1.442695
  %v6548 = vpow.pop %v6547
  %v6549 = vmul.f32 %v6531, 1.442695
  %v6550 = vpow.pop %v6549
  %v6551 = vmul.f32 %v6532, 1.442695
  %v6552 = vpow.pop %v6551
  %v6553 = vmul.f32 %v6533, 1.442695
  %v6554 = vpow.pop %v6553
  %v6555 = vmul.f32 %v6534, 1.442695
  %v6556 = vpow.pop %v6555
  %v6557 = vmul.f32 %v6535, 1.442695
  %v6558 = vpow.pop %v6557
  %v6559 = vmul.f32 %v6536, 1.442695
  %v6560 = vpow.pop %v6559
  %v6561 = vmul.f32 %v6537, 1.442695
  %v6562 = vpow.pop %v6561
  %v6563 = vmul.f32 %v6538, 1.442695
  %v6564 = vpow.pop %v6563
  %v6565 = vmul.f32 %v6539, 1.442695
  %v6566 = vpow.pop %v6565
  %v6567 = vmul.f32 %v6540, 1.442695
  %v6568 = vpow.pop %v6567
  %v6569 = vmul.f32 %v6541, 1.442695
  %v6570 = vpow.pop %v6569
  %v6571 = vmul.f32 %v6542, 1.442695
  %v6572 = vpow.pop %v6571
  %v6573 = vmul.f32 %v6543, 1.442695
  %v6574 = vpow.pop %v6573
  %v6575 = vmul.f32 %v6544, 1.442695
  %v6576 = vpow.pop %v6575
  %v6577 = vadd.f32 %v6546, 1.0
  %v6578 = vadd.f32 %v6548, 1.0
  %v6579 = vadd.f32 %v6550, 1.0
  %v6580 = vadd.f32 %v6552, 1.0
  %v6581 = vadd.f32 %v6554, 1.0
  %v6582 = vadd.f32 %v6556, 1.0
  %v6583 = vadd.f32 %v6558, 1.0
  %v6584 = vadd.f32 %v6560, 1.0
  %v6585 = vadd.f32 %v6562, 1.0
  %v6586 = vadd.f32 %v6564, 1.0
  %v6587 = vadd.f32 %v6566, 1.0
  %v6588 = vadd.f32 %v6568, 1.0
  %v6589 = vadd.f32 %v6570, 1.0
  %v6590 = vadd.f32 %v6572, 1.0
  %v6591 = vadd.f32 %v6574, 1.0
  %v6592 = vadd.f32 %v6576, 1.0
  %v6593 = vrcp.pop %v6577
  %v6594 = vrcp.pop %v6578
  %v6595 = vrcp.pop %v6579
  %v6596 = vrcp.pop %v6580
  %v6597 = vrcp.pop %v6581
  %v6598 = vrcp.pop %v6582
  %v6599 = vrcp.pop %v6583
  %v6600 = vrcp.pop %v6584
  %v6601 = vrcp.pop %v6585
  %v6602 = vrcp.pop %v6586
  %v6603 = vrcp.pop %v6587
  %v6604 = vrcp.pop %v6588
  %v6605 = vrcp.pop %v6589
  %v6606 = vrcp.pop %v6590
  %v6607 = vrcp.pop %v6591
  %v6608 = vrcp.pop %v6592
  %6609 = vst [vmem:[%s7 + $0xc0] sm:$0xff] %v6593
  %6610 = vst [vmem:[%s7 + $0xc8] sm:$0xff] %v6594
  %6611 = vst [vmem:[%s7 + $0xd0] sm:$0xff] %v6595
  %6612 = vst [vmem:[%s7 + $0xd8] sm:$0xff] %v6596
  %6613 = vst [vmem:[%s7 + $0xe0] sm:$0xff] %v6597
  %6614 = vst [vmem:[%s7 + $0xe8] sm:$0xff] %v6598
  %6615 = vst [vmem:[%s7 + $0xf0] sm:$0xff] %v6599
  %6616 = vst.msk [vmem:[%s7 + $0xf8] sm:$0xff] %vm4492, %v6600
  %6617 = vst [vmem:[%s7 + $0x100] sm:$0xf] %v6601
  %6618 = vst [vmem:[%s7 + $0x108] sm:$0xf] %v6602
  %6619 = vst [vmem:[%s7 + $0x110] sm:$0xf] %v6603
  %6620 = vst [vmem:[%s7 + $0x118] sm:$0xf] %v6604
  %6621 = vst [vmem:[%s7 + $0x120] sm:$0xf] %v6605
  %6622 = vst [vmem:[%s7 + $0x128] sm:$0xf] %v6606
  %6623 = vst [vmem:[%s7 + $0x130] sm:$0xf] %v6607
  %6624 = vst.msk [vmem:[%s7 + $0x138] sm:$0xf] %vm4501, %v6608
  %v6625 = vld [vmem:[#allocation5 + $0x4] sm:$0x77]
  %v6626 = vld [vmem:[#allocation5 + $0xc] sm:$0x77]
  %v6627 = vld [vmem:[#allocation5 + $0x14] sm:$0x77]
  %v6628 = vld [vmem:[#allocation5 + $0x1c] sm:$0x77]
  %6633 = vrot.lane.b32.xlu0 %v6625, 96
  %v6634 = vpop.permute.xlu0 %6633
  %6635 = vrot.lane.b32.xlu0 %v6626, 96
  %v6636 = vpop.permute.xlu0 %6635
  %6637 = vrot.lane.b32.xlu0 %v6627, 96
  %v6638 = vpop.permute.xlu0 %6637
  %6639 = vrot.lane.b32.xlu0 %v6628, 96
  %v6640 = vpop.permute.xlu0 %6639
  %v6641 = vrot.slane %v6634, 4
  %v6642 = vrot.slane %v6636, 4
  %v6643 = vrot.slane %v6638, 4
  %v6644 = vrot.slane %v6640, 4
  %v6645 = vsel %vm114, %v6641, %v6642
  %v6646 = vsel %vm222, %v6634, %v6645
  %v6647 = vsel %vm114, %v6642, %v6643
  %v6648 = vsel %vm222, %v6636, %v6647
  %v6649 = vsel %vm114, %v6643, %v6644
  %v6650 = vsel %vm222, %v6638, %v6649
  %v6651 = vsel %vm222, %v6640, %v6644
  %6656 = vst [vmem:[#allocation6] sm:$0x77] %v6646
  %6657 = vst [vmem:[#allocation6 + $0x8] sm:$0x77] %v6648
  %6658 = vst [vmem:[#allocation6 + $0x10] sm:$0x77] %v6650
  %6659 = vst.msk [vmem:[#allocation6 + $0x18] sm:$0x77] %vm3509, %v6651
  %v6660 = vld [vmem:[#allocation5 + $0x4] sm:$0x88]
  %v6661 = vld [vmem:[#allocation5 + $0xc] sm:$0x88]
  %v6662 = vld [vmem:[#allocation5 + $0x14] sm:$0x88]
  %v6663 = vld [vmem:[#allocation5 + $0x1c] sm:$0x88]
  %v6664 = vld [vmem:[#allocation5 + $0x30] sm:$0x33]
  %v6665 = vld [vmem:[#allocation5 + $0x38] sm:$0x33]
  %v6666 = vld [vmem:[#allocation5 + $0x40] sm:$0x33]
  %v6667 = vld [vmem:[#allocation5 + $0x48] sm:$0x33]
  %6676 = vrot.lane.b32.xlu0 %v6660, 96
  %v6677 = vpop.permute.xlu0 %6676
  %6678 = vrot.lane.b32.xlu0 %v6661, 96
  %v6679 = vpop.permute.xlu0 %6678
  %6680 = vrot.lane.b32.xlu0 %v6662, 96
  %v6681 = vpop.permute.xlu0 %6680
  %6682 = vrot.lane.b32.xlu0 %v6663, 96
  %v6683 = vpop.permute.xlu0 %6682
  %6684 = vrot.lane.b32.xlu0 %v6664, 96
  %v6685 = vpop.permute.xlu0 %6684
  %6686 = vrot.lane.b32.xlu0 %v6665, 96
  %v6687 = vpop.permute.xlu0 %6686
  %6688 = vrot.lane.b32.xlu0 %v6666, 96
  %v6689 = vpop.permute.xlu0 %6688
  %6690 = vrot.lane.b32.xlu0 %v6667, 96
  %v6691 = vpop.permute.xlu0 %6690
  %v6692 = vrot.slane %v6677, 4
  %v6693 = vrot.slane %v6679, 4
  %v6694 = vrot.slane %v6681, 4
  %v6695 = vrot.slane %v6683, 4
  %v6696 = vrot.slane %v6685, 4
  %v6697 = vrot.slane %v6687, 4
  %v6698 = vrot.slane %v6689, 4
  %v6699 = vrot.slane %v6691, 4
  %v6700 = vsel %vm114, %v6692, %v6693
  %v6701 = vsel %vm222, %v6677, %v6700
  %v6702 = vsel %vm114, %v6693, %v6694
  %v6703 = vsel %vm222, %v6679, %v6702
  %v6704 = vsel %vm114, %v6694, %v6695
  %v6705 = vsel %vm222, %v6681, %v6704
  %v6706 = vsel %vm222, %v6683, %v6695
  %v6707 = vsel %vm114, %v6696, %v6697
  %v6708 = vsel %vm222, %v6685, %v6707
  %v6709 = vsel %vm114, %v6697, %v6698
  %v6710 = vsel %vm222, %v6687, %v6709
  %v6711 = vsel %vm114, %v6698, %v6699
  %v6712 = vsel %vm222, %v6689, %v6711
  %v6713 = vsel %vm222, %v6691, %v6699
  %6722 = vst [vmem:[#allocation6] sm:$0x88] %v6701
  %6723 = vst [vmem:[#allocation6 + $0x8] sm:$0x88] %v6703
  %6724 = vst [vmem:[#allocation6 + $0x10] sm:$0x88] %v6705
  %6725 = vst.msk [vmem:[#allocation6 + $0x18] sm:$0x88] %vm3597, %v6706
  %6726 = vst [vmem:[#allocation6 + $0x20] sm:$0x33] %v6708
  %6727 = vst [vmem:[#allocation6 + $0x28] sm:$0x33] %v6710
  %6728 = vst [vmem:[#allocation6 + $0x30] sm:$0x33] %v6712
  %6729 = vst.msk [vmem:[#allocation6 + $0x38] sm:$0x33] %vm2002, %v6713
  %v6730 = vld [vmem:[#allocation5 + $0x4] sm:$0x77]
  %v6731 = vld [vmem:[#allocation5 + $0xc] sm:$0x77]
  %v6732 = vld [vmem:[#allocation5 + $0x14] sm:$0x77]
  %v6733 = vld [vmem:[#allocation5 + $0x1c] sm:$0x77]
  %v6738 = vrot.slane %v6730, 6
  %v6739 = vrot.slane %v6731, 6
  %v6740 = vrot.slane %v6732, 6
  %v6741 = vrot.slane %v6733, 6
  %v6742 = vrot.slane %v6738, 4
  %v6743 = vrot.slane %v6739, 4
  %v6744 = vrot.slane %v6740, 4
  %v6745 = vrot.slane %v6741, 4
  %6746 = vrot.lane.b32.xlu0 %v6738, 80
  %v6747 = vpop.permute.xlu0 %6746
  %6748 = vrot.lane.b32.xlu0 %v6739, 80
  %v6749 = vpop.permute.xlu0 %6748
  %6750 = vrot.lane.b32.xlu0 %v6740, 80
  %v6751 = vpop.permute.xlu0 %6750
  %6752 = vrot.lane.b32.xlu0 %v6741, 80
  %v6753 = vpop.permute.xlu0 %6752
  %6754 = vrot.lane.b32.xlu0 %v6742, 80
  %v6755 = vpop.permute.xlu0 %6754
  %6756 = vrot.lane.b32.xlu0 %v6743, 80
  %v6757 = vpop.permute.xlu0 %6756
  %6758 = vrot.lane.b32.xlu0 %v6744, 80
  %v6759 = vpop.permute.xlu0 %6758
  %6760 = vrot.lane.b32.xlu0 %v6745, 80
  %v6761 = vpop.permute.xlu0 %6760
  %v6762 = vrot.slane %v6747, 4
  %v6763 = vrot.slane %v6749, 4
  %v6764 = vrot.slane %v6751, 4
  %v6765 = vrot.slane %v6753, 4
  %v6766 = vrot.slane %v6755, 4
  %v6767 = vrot.slane %v6757, 4
  %v6768 = vrot.slane %v6759, 4
  %v6769 = vrot.slane %v6761, 4
  %v6770 = vsel %vm114, %v6762, %v6763
  %v6771 = vsel %vm538, %v6747, %v6770
  %v6772 = vsel %vm114, %v6763, %v6764
  %v6773 = vsel %vm538, %v6749, %v6772
  %v6774 = vsel %vm114, %v6764, %v6765
  %v6775 = vsel %vm538, %v6751, %v6774
  %v6776 = vsel %vm538, %v6753, %v6765
  %v6777 = vsel %vm114, %v6766, %v6767
  %v6778 = vsel %vm538, %v6755, %v6777
  %v6779 = vsel %vm114, %v6767, %v6768
  %v6780 = vsel %vm538, %v6757, %v6779
  %v6781 = vsel %vm114, %v6768, %v6769
  %v6782 = vsel %vm538, %v6759, %v6781
  %v6783 = vsel %vm538, %v6761, %v6769
  %6792 = vst [vmem:[#allocation6 + $0x20] sm:$0xcc] %v6771
  %6793 = vst [vmem:[#allocation6 + $0x28] sm:$0xcc] %v6773
  %6794 = vst [vmem:[#allocation6 + $0x30] sm:$0xcc] %v6775
  %6795 = vst.msk [vmem:[#allocation6 + $0x38] sm:$0xcc] %vm2090, %v6776
  %6796 = vst [vmem:[#allocation6 + $0x40] sm:$0x11] %v6778
  %6797 = vst [vmem:[#allocation6 + $0x48] sm:$0x11] %v6780
  %6798 = vst [vmem:[#allocation6 + $0x50] sm:$0x11] %v6782
  %6799 = vst.msk [vmem:[#allocation6 + $0x58] sm:$0x11] %vm3674, %v6783
  %v6800 = vld [vmem:[#allocation5 + $0x30] sm:$0xcc]
  %v6801 = vld [vmem:[#allocation5 + $0x38] sm:$0xcc]
  %v6802 = vld [vmem:[#allocation5 + $0x40] sm:$0xcc]
  %v6803 = vld [vmem:[#allocation5 + $0x48] sm:$0xcc]
  %v6804 = vld [vmem:[#allocation5 + $0x5c] sm:$0x11]
  %v6805 = vld [vmem:[#allocation5 + $0x64] sm:$0x11]
  %v6806 = vld [vmem:[#allocation5 + $0x6c] sm:$0x11]
  %v6807 = vld [vmem:[#allocation5 + $0x74] sm:$0x11]
  %v6816 = vrot.slane %v6800, 5
  %v6817 = vrot.slane %v6816, 4
  %v6818 = vrot.slane %v6804, 5
  %v6819 = vsel %vm3931, %v6817, %v6818
  %v6820 = vrot.slane %v6801, 5
  %v6821 = vrot.slane %v6820, 4
  %v6822 = vrot.slane %v6805, 5
  %v6823 = vsel %vm3931, %v6821, %v6822
  %v6824 = vrot.slane %v6802, 5
  %v6825 = vrot.slane %v6824, 4
  %v6826 = vrot.slane %v6806, 5
  %v6827 = vsel %vm3931, %v6825, %v6826
  %v6828 = vrot.slane %v6803, 5
  %v6829 = vrot.slane %v6828, 4
  %v6830 = vrot.slane %v6807, 5
  %v6831 = vsel %vm3931, %v6829, %v6830
  %6832 = vrot.lane.b32.xlu0 %v6819, 96
  %v6833 = vpop.permute.xlu0 %6832
  %6834 = vrot.lane.b32.xlu0 %v6823, 96
  %v6835 = vpop.permute.xlu0 %6834
  %6836 = vrot.lane.b32.xlu0 %v6827, 96
  %v6837 = vpop.permute.xlu0 %6836
  %6838 = vrot.lane.b32.xlu0 %v6831, 96
  %v6839 = vpop.permute.xlu0 %6838
  %v6840 = vrot.slane %v6833, 4
  %v6841 = vrot.slane %v6835, 4
  %v6842 = vrot.slane %v6837, 4
  %v6843 = vrot.slane %v6839, 4
  %v6844 = vsel %vm114, %v6840, %v6841
  %v6845 = vsel %vm222, %v6833, %v6844
  %v6846 = vsel %vm114, %v6841, %v6842
  %v6847 = vsel %vm222, %v6835, %v6846
  %v6848 = vsel %vm114, %v6842, %v6843
  %v6849 = vsel %vm222, %v6837, %v6848
  %v6850 = vsel %vm222, %v6839, %v6843
  %6855 = vst [vmem:[#allocation6 + $0x40] sm:$0xee] %v6845
  %6856 = vst [vmem:[#allocation6 + $0x48] sm:$0xee] %v6847
  %6857 = vst [vmem:[#allocation6 + $0x50] sm:$0xee] %v6849
  %6858 = vst.msk [vmem:[#allocation6 + $0x58] sm:$0xee] %vm3736, %v6850
  %v6859 = vld [vmem:[#allocation5 + $0x5c] sm:$0xee]
  %v6860 = vld [vmem:[#allocation5 + $0x64] sm:$0xee]
  %v6861 = vld [vmem:[#allocation5 + $0x6c] sm:$0xee]
  %v6862 = vld [vmem:[#allocation5 + $0x74] sm:$0xee]
  %v6867 = vrot.slane %v6859, 5
  %v6868 = vrot.slane %v6867, 4
  %v6869 = vrot.slane %v6860, 5
  %v6870 = vrot.slane %v6869, 4
  %v6871 = vrot.slane %v6861, 5
  %v6872 = vrot.slane %v6871, 4
  %v6873 = vrot.slane %v6862, 5
  %v6874 = vrot.slane %v6873, 4
  %6875 = vrot.lane.b32.xlu0 %v6868, 96
  %v6876 = vpop.permute.xlu0 %6875
  %6877 = vrot.lane.b32.xlu0 %v6870, 96
  %v6878 = vpop.permute.xlu0 %6877
  %6879 = vrot.lane.b32.xlu0 %v6872, 96
  %v6880 = vpop.permute.xlu0 %6879
  %6881 = vrot.lane.b32.xlu0 %v6874, 96
  %v6882 = vpop.permute.xlu0 %6881
  %v6883 = vrot.slane %v6876, 4
  %v6884 = vrot.slane %v6878, 4
  %v6885 = vrot.slane %v6880, 4
  %v6886 = vrot.slane %v6882, 4
  %v6887 = vsel %vm114, %v6883, %v6884
  %v6888 = vsel %vm222, %v6876, %v6887
  %v6889 = vsel %vm114, %v6884, %v6885
  %v6890 = vsel %vm222, %v6878, %v6889
  %v6891 = vsel %vm114, %v6885, %v6886
  %v6892 = vsel %vm222, %v6880, %v6891
  %v6893 = vsel %vm222, %v6882, %v6886
  %6898 = vst [vmem:[#allocation6 + $0x60] sm:$0x77] %v6888
  %6899 = vst [vmem:[#allocation6 + $0x68] sm:$0x77] %v6890
  %6900 = vst [vmem:[#allocation6 + $0x70] sm:$0x77] %v6892
  %6901 = vst.msk [vmem:[#allocation6 + $0x78] sm:$0x77] %vm3509, %v6893
  %v6902 = vld [vmem:[#allocation5 + $0x30] sm:$0xcc]
  %v6903 = vld [vmem:[#allocation5 + $0x38] sm:$0xcc]
  %v6904 = vld [vmem:[#allocation5 + $0x40] sm:$0xcc]
  %v6905 = vld [vmem:[#allocation5 + $0x48] sm:$0xcc]
  %v6906 = vld [vmem:[#allocation5 + $0x5c] sm:$0x11]
  %v6907 = vld [vmem:[#allocation5 + $0x64] sm:$0x11]
  %v6908 = vld [vmem:[#allocation5 + $0x6c] sm:$0x11]
  %v6909 = vld [vmem:[#allocation5 + $0x74] sm:$0x11]
  %v6918 = vrot.slane %v6902, 7
  %v6919 = vrot.slane %v6903, 7
  %v6920 = vrot.slane %v6904, 7
  %v6921 = vrot.slane %v6905, 7
  %v6922 = vrot.slane %v6918, 4
  %v6923 = vrot.slane %v6906, 7
  %v6924 = vsel %vm3529, %v6922, %v6923
  %v6925 = vrot.slane %v6919, 4
  %v6926 = vrot.slane %v6907, 7
  %v6927 = vsel %vm3529, %v6925, %v6926
  %v6928 = vrot.slane %v6920, 4
  %v6929 = vrot.slane %v6908, 7
  %v6930 = vsel %vm3529, %v6928, %v6929
  %v6931 = vrot.slane %v6921, 4
  %v6932 = vrot.slane %v6909, 7
  %v6933 = vsel %vm3529, %v6931, %v6932
  %6934 = vrot.lane.b32.xlu0 %v6918, 80
  %v6935 = vpop.permute.xlu0 %6934
  %6936 = vrot.lane.b32.xlu0 %v6919, 80
  %v6937 = vpop.permute.xlu0 %6936
  %6938 = vrot.lane.b32.xlu0 %v6920, 80
  %v6939 = vpop.permute.xlu0 %6938
  %6940 = vrot.lane.b32.xlu0 %v6921, 80
  %v6941 = vpop.permute.xlu0 %6940
  %6942 = vrot.lane.b32.xlu0 %v6924, 80
  %v6943 = vpop.permute.xlu0 %6942
  %6944 = vrot.lane.b32.xlu0 %v6927, 80
  %v6945 = vpop.permute.xlu0 %6944
  %6946 = vrot.lane.b32.xlu0 %v6930, 80
  %v6947 = vpop.permute.xlu0 %6946
  %6948 = vrot.lane.b32.xlu0 %v6933, 80
  %v6949 = vpop.permute.xlu0 %6948
  %v6950 = vrot.slane %v6935, 4
  %v6951 = vrot.slane %v6937, 4
  %v6952 = vrot.slane %v6939, 4
  %v6953 = vrot.slane %v6941, 4
  %v6954 = vrot.slane %v6943, 4
  %v6955 = vrot.slane %v6945, 4
  %v6956 = vrot.slane %v6947, 4
  %v6957 = vrot.slane %v6949, 4
  %v6958 = vsel %vm114, %v6950, %v6951
  %v6959 = vsel %vm538, %v6935, %v6958
  %v6960 = vsel %vm114, %v6951, %v6952
  %v6961 = vsel %vm538, %v6937, %v6960
  %v6962 = vsel %vm114, %v6952, %v6953
  %v6963 = vsel %vm538, %v6939, %v6962
  %v6964 = vsel %vm538, %v6941, %v6953
  %v6965 = vsel %vm114, %v6954, %v6955
  %v6966 = vsel %vm538, %v6943, %v6965
  %v6967 = vsel %vm114, %v6955, %v6956
  %v6968 = vsel %vm538, %v6945, %v6967
  %v6969 = vsel %vm114, %v6956, %v6957
  %v6970 = vsel %vm538, %v6947, %v6969
  %v6971 = vsel %vm538, %v6949, %v6957
  %6980 = vst [vmem:[#allocation6 + $0x60] sm:$0x88] %v6959
  %6981 = vst [vmem:[#allocation6 + $0x68] sm:$0x88] %v6961
  %6982 = vst [vmem:[#allocation6 + $0x70] sm:$0x88] %v6963
  %6983 = vst.msk [vmem:[#allocation6 + $0x78] sm:$0x88] %vm3597, %v6964
  %6984 = vst [vmem:[#allocation6 + $0x80] sm:$0x33] %v6966
  %6985 = vst [vmem:[#allocation6 + $0x88] sm:$0x33] %v6968
  %6986 = vst [vmem:[#allocation6 + $0x90] sm:$0x33] %v6970
  %6987 = vst.msk [vmem:[#allocation6 + $0x98] sm:$0x33] %vm2002, %v6971
  %v6988 = vld [vmem:[#allocation5 + $0x8] sm:$0x77]
  %v6989 = vld [vmem:[#allocation5 + $0x10] sm:$0x77]
  %v6990 = vld [vmem:[#allocation5 + $0x18] sm:$0x77]
  %v6991 = vld [vmem:[#allocation5 + $0x20] sm:$0x77]
  %v6996 = vrot.slane %v6988, 6
  %v6997 = vrot.slane %v6989, 6
  %v6998 = vrot.slane %v6990, 6
  %v6999 = vrot.slane %v6991, 6
  %v7000 = vrot.slane %v6996, 4
  %v7001 = vrot.slane %v6997, 4
  %v7002 = vrot.slane %v6998, 4
  %v7003 = vrot.slane %v6999, 4
  %7004 = vrot.lane.b32.xlu0 %v6996, 80
  %v7005 = vpop.permute.xlu0 %7004
  %7006 = vrot.lane.b32.xlu0 %v6997, 80
  %v7007 = vpop.permute.xlu0 %7006
  %7008 = vrot.lane.b32.xlu0 %v6998, 80
  %v7009 = vpop.permute.xlu0 %7008
  %7010 = vrot.lane.b32.xlu0 %v6999, 80
  %v7011 = vpop.permute.xlu0 %7010
  %7012 = vrot.lane.b32.xlu0 %v7000, 80
  %v7013 = vpop.permute.xlu0 %7012
  %7014 = vrot.lane.b32.xlu0 %v7001, 80
  %v7015 = vpop.permute.xlu0 %7014
  %7016 = vrot.lane.b32.xlu0 %v7002, 80
  %v7017 = vpop.permute.xlu0 %7016
  %7018 = vrot.lane.b32.xlu0 %v7003, 80
  %v7019 = vpop.permute.xlu0 %7018
  %v7020 = vrot.slane %v7005, 4
  %v7021 = vrot.slane %v7007, 4
  %v7022 = vrot.slane %v7009, 4
  %v7023 = vrot.slane %v7011, 4
  %v7024 = vrot.slane %v7013, 4
  %v7025 = vrot.slane %v7015, 4
  %v7026 = vrot.slane %v7017, 4
  %v7027 = vrot.slane %v7019, 4
  %v7028 = vsel %vm114, %v7020, %v7021
  %v7029 = vsel %vm538, %v7005, %v7028
  %v7030 = vsel %vm114, %v7021, %v7022
  %v7031 = vsel %vm538, %v7007, %v7030
  %v7032 = vsel %vm114, %v7022, %v7023
  %v7033 = vsel %vm538, %v7009, %v7032
  %v7034 = vsel %vm538, %v7011, %v7023
  %v7035 = vsel %vm114, %v7024, %v7025
  %v7036 = vsel %vm538, %v7013, %v7035
  %v7037 = vsel %vm114, %v7025, %v7026
  %v7038 = vsel %vm538, %v7015, %v7037
  %v7039 = vsel %vm114, %v7026, %v7027
  %v7040 = vsel %vm538, %v7017, %v7039
  %v7041 = vsel %vm538, %v7019, %v7027
  %7050 = vst [vmem:[#allocation6 + $0x80] sm:$0xcc] %v7029
  %7051 = vst [vmem:[#allocation6 + $0x88] sm:$0xcc] %v7031
  %7052 = vst [vmem:[#allocation6 + $0x90] sm:$0xcc] %v7033
  %7053 = vst.msk [vmem:[#allocation6 + $0x98] sm:$0xcc] %vm2090, %v7034
  %7054 = vst [vmem:[#allocation6 + $0xa0] sm:$0x11] %v7036
  %7055 = vst [vmem:[#allocation6 + $0xa8] sm:$0x11] %v7038
  %7056 = vst [vmem:[#allocation6 + $0xb0] sm:$0x11] %v7040
  %7057 = vst.msk [vmem:[#allocation6 + $0xb8] sm:$0x11] %vm3674, %v7041
  %v7058 = vld [vmem:[#allocation5 + $0x8] sm:$0x88]
  %v7059 = vld [vmem:[#allocation5 + $0x10] sm:$0x88]
  %v7060 = vld [vmem:[#allocation5 + $0x18] sm:$0x88]
  %v7061 = vld [vmem:[#allocation5 + $0x20] sm:$0x88]
  %v7062 = vld [vmem:[#allocation5 + $0x34] sm:$0x33]
  %v7063 = vld [vmem:[#allocation5 + $0x3c] sm:$0x33]
  %v7064 = vld [vmem:[#allocation5 + $0x44] sm:$0x33]
  %v7065 = vld [vmem:[#allocation5 + $0x4c] sm:$0x33]
  %v7074 = vrot.slane %v7058, 6
  %v7075 = vrot.slane %v7074, 4
  %v7076 = vrot.slane %v7062, 6
  %v7077 = vsel %vm2022, %v7075, %v7076
  %v7078 = vrot.slane %v7059, 6
  %v7079 = vrot.slane %v7078, 4
  %v7080 = vrot.slane %v7063, 6
  %v7081 = vsel %vm2022, %v7079, %v7080
  %v7082 = vrot.slane %v7060, 6
  %v7083 = vrot.slane %v7082, 4
  %v7084 = vrot.slane %v7064, 6
  %v7085 = vsel %vm2022, %v7083, %v7084
  %v7086 = vrot.slane %v7061, 6
  %v7087 = vrot.slane %v7086, 4
  %v7088 = vrot.slane %v7065, 6
  %v7089 = vsel %vm2022, %v7087, %v7088
  %7090 = vrot.lane.b32.xlu0 %v7077, 80
  %v7091 = vpop.permute.xlu0 %7090
  %7092 = vrot.lane.b32.xlu0 %v7081, 80
  %v7093 = vpop.permute.xlu0 %7092
  %7094 = vrot.lane.b32.xlu0 %v7085, 80
  %v7095 = vpop.permute.xlu0 %7094
  %7096 = vrot.lane.b32.xlu0 %v7089, 80
  %v7097 = vpop.permute.xlu0 %7096
  %v7098 = vrot.slane %v7091, 4
  %v7099 = vrot.slane %v7093, 4
  %v7100 = vrot.slane %v7095, 4
  %v7101 = vrot.slane %v7097, 4
  %v7102 = vsel %vm114, %v7098, %v7099
  %v7103 = vsel %vm538, %v7091, %v7102
  %v7104 = vsel %vm114, %v7099, %v7100
  %v7105 = vsel %vm538, %v7093, %v7104
  %v7106 = vsel %vm114, %v7100, %v7101
  %v7107 = vsel %vm538, %v7095, %v7106
  %v7108 = vsel %vm538, %v7097, %v7101
  %7113 = vst [vmem:[#allocation6 + $0xa0] sm:$0xee] %v7103
  %7114 = vst [vmem:[#allocation6 + $0xa8] sm:$0xee] %v7105
  %7115 = vst [vmem:[#allocation6 + $0xb0] sm:$0xee] %v7107
  %7116 = vst.msk [vmem:[#allocation6 + $0xb8] sm:$0xee] %vm3736, %v7108
  %v7117 = vld [vmem:[#allocation5 + $0x8] sm:$0x77]
  %v7118 = vld [vmem:[#allocation5 + $0x10] sm:$0x77]
  %v7119 = vld [vmem:[#allocation5 + $0x18] sm:$0x77]
  %v7120 = vld [vmem:[#allocation5 + $0x20] sm:$0x77]
  %v7121 = vld [vmem:[#allocation5 + $0x28] sm:$0x7]
  %7127 = vrot.lane.b32.xlu0 %v7117, 64
  %v7128 = vpop.permute.xlu0 %7127
  %7129 = vrot.lane.b32.xlu0 %v7118, 64
  %v7130 = vpop.permute.xlu0 %7129
  %7131 = vrot.lane.b32.xlu0 %v7119, 64
  %v7132 = vpop.permute.xlu0 %7131
  %7133 = vrot.lane.b32.xlu0 %v7120, 64
  %v7134 = vpop.permute.xlu0 %7133
  %7135 = vrot.lane.b32.xlu0 %v7121, 64
  %v7136 = vpop.permute.xlu0 %7135
  %v7137 = vrot.slane %v7128, 4
  %v7138 = vrot.slane %v7130, 4
  %v7139 = vrot.slane %v7132, 4
  %v7140 = vrot.slane %v7134, 4
  %v7141 = vrot.slane %v7136, 4
  %v7142 = vsel %vm114, %v7137, %v7138
  %v7143 = vsel %vm869, %v7128, %v7142
  %v7144 = vsel %vm114, %v7138, %v7139
  %v7145 = vsel %vm869, %v7130, %v7144
  %v7146 = vsel %vm114, %v7139, %v7140
  %v7147 = vsel %vm869, %v7132, %v7146
  %v7148 = vsel %vm114, %v7140, %v7141
  %v7149 = vsel %vm869, %v7134, %v7148
  %7154 = vst [vmem:[#allocation6 + $0xc0] sm:$0x77] %v7143
  %7155 = vst [vmem:[#allocation6 + $0xc8] sm:$0x77] %v7145
  %7156 = vst [vmem:[#allocation6 + $0xd0] sm:$0x77] %v7147
  %7157 = vst.msk [vmem:[#allocation6 + $0xd8] sm:$0x77] %vm3509, %v7149
  %v7158 = vld [vmem:[%s5] sm:$0xf]
  %v7159 = vld [vmem:[%s5 + $0x4] sm:$0x3]
  %v7160 = vld [vmem:[#allocation6] sm:$0xff]
  %v7161 = vld [vmem:[#allocation6 + $0x8] sm:$0xff]
  %v7162 = vld [vmem:[#allocation6 + $0x10] sm:$0xff]
  %v7163 = vld [vmem:[#allocation6 + $0x18] sm:$0xff]
  %v7164 = vld [vmem:[#allocation6 + $0x20] sm:$0xff]
  %v7165 = vld [vmem:[#allocation6 + $0x28] sm:$0xff]
  %v7166 = vld [vmem:[#allocation6 + $0x30] sm:$0xff]
  %v7167 = vld [vmem:[#allocation6 + $0x38] sm:$0xff]
  %v7168 = vld [vmem:[#allocation6 + $0x40] sm:$0xff]
  %v7169 = vld [vmem:[#allocation6 + $0x48] sm:$0xff]
  %v7170 = vld [vmem:[#allocation6 + $0x50] sm:$0xff]
  %v7171 = vld [vmem:[#allocation6 + $0x58] sm:$0xff]
  %v7172 = vld [vmem:[#allocation6 + $0x60] sm:$0xff]
  %v7173 = vld [vmem:[#allocation6 + $0x68] sm:$0xff]
  %v7174 = vld [vmem:[#allocation6 + $0x70] sm:$0xff]
  %v7175 = vld [vmem:[#allocation6 + $0x78] sm:$0xff]
  %v7176 = vld [vmem:[#allocation6 + $0x80] sm:$0xff]
  %v7177 = vld [vmem:[#allocation6 + $0x88] sm:$0xff]
  %v7178 = vld [vmem:[#allocation6 + $0x90] sm:$0xff]
  %v7179 = vld [vmem:[#allocation6 + $0x98] sm:$0xff]
  %v7180 = vld [vmem:[#allocation6 + $0xa0] sm:$0xff]
  %v7181 = vld [vmem:[#allocation6 + $0xa8] sm:$0xff]
  %v7182 = vld [vmem:[#allocation6 + $0xb0] sm:$0xff]
  %v7183 = vld [vmem:[#allocation6 + $0xb8] sm:$0xff]
  %v7184 = vld [vmem:[#allocation6 + $0xc0] sm:$0x77]
  %v7185 = vld [vmem:[#allocation6 + $0xc8] sm:$0x77]
  %v7186 = vld [vmem:[#allocation6 + $0xd0] sm:$0x77]
  %v7187 = vld [vmem:[#allocation6 + $0xd8] sm:$0x77]
  %v7188 = vld [vmem:[%s6] sm:$0xff]
  %v7189 = vld [vmem:[%s6 + $0x8] sm:$0xf]
  %7191 = vset.pattern.permute.xlu0 0
  %7192 = vperm.xlu0 %7191, %v7188
  %v7193 = vpop.permute.xlu0 %7192
  %7196 = vset.pattern.permute.xlu0 0
  %7197 = vperm.xlu0 %7196, %v7189
  %v7198 = vpop.permute.xlu0 %7197
  %v7202 = vunpack.c.l.b16 %v7158
  %v7203 = vunpack.c.l.b16 %v7159
  %v7204 = vpack.c.b16 %v7203, %v7202
  %v7233 = vunpack.c.l.b16 %v7160
  %v7234 = vunpack.c.h.b16 %v7160
  %v7235 = vunpack.c.l.b16 %v7161
  %v7236 = vunpack.c.h.b16 %v7161
  %v7237 = vunpack.c.l.b16 %v7162
  %v7238 = vunpack.c.h.b16 %v7162
  %v7239 = vunpack.c.l.b16 %v7163
  %v7240 = vunpack.c.h.b16 %v7163
  %v7241 = vunpack.c.l.b16 %v7164
  %v7242 = vunpack.c.h.b16 %v7164
  %v7243 = vunpack.c.l.b16 %v7165
  %v7244 = vunpack.c.h.b16 %v7165
  %v7245 = vunpack.c.l.b16 %v7166
  %v7246 = vunpack.c.h.b16 %v7166
  %v7247 = vunpack.c.l.b16 %v7167
  %v7248 = vunpack.c.h.b16 %v7167
  %v7249 = vunpack.c.l.b16 %v7168
  %v7250 = vunpack.c.h.b16 %v7168
  %v7251 = vunpack.c.l.b16 %v7169
  %v7252 = vunpack.c.h.b16 %v7169
  %v7253 = vunpack.c.l.b16 %v7170
  %v7254 = vunpack.c.h.b16 %v7170
  %v7255 = vunpack.c.l.b16 %v7171
  %v7256 = vunpack.c.h.b16 %v7171
  %v7257 = vunpack.c.l.b16 %v7172
  %v7258 = vunpack.c.h.b16 %v7172
  %v7259 = vunpack.c.l.b16 %v7173
  %v7260 = vunpack.c.h.b16 %v7173
  %v7261 = vunpack.c.l.b16 %v7174
  %v7262 = vunpack.c.h.b16 %v7174
  %v7263 = vunpack.c.l.b16 %v7175
  %v7264 = vunpack.c.h.b16 %v7175
  %v7265 = vunpack.c.l.b16 %v7176
  %v7266 = vunpack.c.h.b16 %v7176
  %v7267 = vunpack.c.l.b16 %v7177
  %v7268 = vunpack.c.h.b16 %v7177
  %v7269 = vunpack.c.l.b16 %v7178
  %v7270 = vunpack.c.h.b16 %v7178
  %v7271 = vunpack.c.l.b16 %v7179
  %v7272 = vunpack.c.h.b16 %v7179
  %v7273 = vunpack.c.l.b16 %v7180
  %v7274 = vunpack.c.h.b16 %v7180
  %v7275 = vunpack.c.l.b16 %v7181
  %v7276 = vunpack.c.h.b16 %v7181
  %v7277 = vunpack.c.l.b16 %v7182
  %v7278 = vunpack.c.h.b16 %v7182
  %v7279 = vunpack.c.l.b16 %v7183
  %v7280 = vunpack.c.h.b16 %v7183
  %v7281 = vunpack.c.l.b16 %v7184
  %v7282 = vunpack.c.h.b16 %v7184
  %v7283 = vunpack.c.l.b16 %v7185
  %v7284 = vunpack.c.h.b16 %v7185
  %v7285 = vunpack.c.l.b16 %v7186
  %v7286 = vunpack.c.h.b16 %v7186
  %v7287 = vunpack.c.l.b16 %v7187
  %v7288 = vunpack.c.h.b16 %v7187
  %v7289 = vpack.c.b16 %v7241, %v7233
  %v7290 = vpack.c.b16 %v7242, %v7234
  %v7291 = vpack.c.b16 %v7243, %v7235
  %v7292 = vpack.c.b16 %v7244, %v7236
  %v7293 = vpack.c.b16 %v7245, %v7237
  %v7294 = vpack.c.b16 %v7246, %v7238
  %v7295 = vpack.c.b16 %v7247, %v7239
  %v7296 = vpack.c.b16 %v7248, %v7240
  %v7297 = vpack.c.b16 %v7257, %v7249
  %v7298 = vpack.c.b16 %v7258, %v7250
  %v7299 = vpack.c.b16 %v7259, %v7251
  %v7300 = vpack.c.b16 %v7260, %v7252
  %v7301 = vpack.c.b16 %v7261, %v7253
  %v7302 = vpack.c.b16 %v7262, %v7254
  %v7303 = vpack.c.b16 %v7263, %v7255
  %v7304 = vpack.c.b16 %v7264, %v7256
  %v7305 = vpack.c.b16 %v7273, %v7265
  %v7306 = vpack.c.b16 %v7274, %v7266
  %v7307 = vpack.c.b16 %v7275, %v7267
  %v7308 = vpack.c.b16 %v7276, %v7268
  %v7309 = vpack.c.b16 %v7277, %v7269
  %v7310 = vpack.c.b16 %v7278, %v7270
  %v7311 = vpack.c.b16 %v7279, %v7271
  %v7312 = vpack.c.b16 %v7280, %v7272
  %v7313 = vpack.c.b16 %v7281, %v7281
  %v7314 = vpack.c.b16 %v7282, %v7282
  %v7315 = vpack.c.b16 %v7283, %v7283
  %v7316 = vpack.c.b16 %v7284, %v7284
  %v7317 = vpack.c.b16 %v7285, %v7285
  %v7318 = vpack.c.b16 %v7286, %v7286
  %v7319 = vpack.c.b16 %v7287, %v7287
  %v7320 = vpack.c.b16 %v7288, %v7288
  %v7346 = vsel %vm4205, %v7204, 0
  %v7349 = vsel %vm3507, %v7313, 0
  %v7352 = vsel %vm3507, %v7314, 0
  %v7355 = vsel %vm3507, %v7315, 0
  %v7358 = vsel %vm3507, %v7316, 0
  %v7361 = vsel %vm3507, %v7317, 0
  %v7364 = vsel %vm3507, %v7318, 0
  %v7367 = vsel %vm3507, %v7319, 0
  %v7370 = vsel %vm3507, %v7320, 0
  %7372 = vmatprep.subr.bf16.mxu0 0
  %7373 = vmatpush1.bf16.msra.mxu0 0
  %7374 = vmatprep.subr.bf16.mxu0 0
  %7375 = vmatpush1.bf16.msra.mxu0 0
  %7376 = vmatprep.subr.bf16.mxu0 0
  %7377 = vmatpush1.bf16.msra.mxu0 0
  %7378 = vmatprep.subr.bf16.mxu0 0
  %7379 = vmatpush1.bf16.msra.mxu0 0
  %7380 = vmatprep.subr.bf16.mxu0 %v7352
  %7381 = vmatpush1.bf16.msra.mxu0 %v7349
  %7382 = vmatprep.subr.bf16.mxu0 %v7306
  %7383 = vmatpush1.bf16.msra.mxu0 %v7305
  %7384 = vmatprep.subr.bf16.mxu0 %v7298
  %7385 = vmatpush1.bf16.msra.mxu0 %v7297
  %7386 = vmatprep.subr.bf16.mxu0 %v7290
  %7387 = vmatpush1.bf16.msra.mxu0 %v7289
  %7388 = vmatprep.subr.bf16.mxu0 0
  %7389 = vmatpush2.bf16.msra.mxu0 0
  %7390 = vmatprep.subr.bf16.mxu0 0
  %7391 = vmatpush2.bf16.msra.mxu0 0
  %7392 = vmatprep.subr.bf16.mxu0 0
  %7393 = vmatpush2.bf16.msra.mxu0 0
  %7394 = vmatprep.subr.bf16.mxu0 0
  %7395 = vmatpush2.bf16.msra.mxu0 0
  %7396 = vmatprep.subr.bf16.mxu0 0
  %7397 = vmatpush2.bf16.msra.mxu0 0
  %7398 = vmatprep.subr.bf16.mxu0 0
  %7399 = vmatpush2.bf16.msra.mxu0 0
  %7400 = vmatprep.subr.bf16.mxu0 0
  %7401 = vmatpush2.bf16.msra.mxu0 0
  %7402 = vmatprep.subr.bf16.mxu0 0
  %7403 = vmatpush2.bf16.msra.mxu0 0
  %7404 = vmatprep.mubr.bf16.mxu0 0
  %7405 = vmatmul.mubr.bf16.gmra.mxu0 %v7346
  %v7406 = vpop.f32.mrf.mxu0
  %v7407 = vadd.f32 %v7193, %v7406
  %v7408 = vpop.f32.mrf.mxu0
  %v7409 = vadd.f32 %v7193, %v7408
  %v7410 = vpop.f32.mrf.mxu0
  %v7411 = vadd.f32 %v7198, %v7410
  %v7412 = vpop.f32.mrf.mxu0
  %v7413 = vadd.f32 %v7198, %v7412
  %7414 = vdwg.mxu0
  %7415 = vmatprep.subr.bf16.mxu0 0
  %7416 = vmatpush1.bf16.msra.mxu0 0
  %7417 = vmatprep.subr.bf16.mxu0 0
  %7418 = vmatpush1.bf16.msra.mxu0 0
  %7419 = vmatprep.subr.bf16.mxu0 0
  %7420 = vmatpush1.bf16.msra.mxu0 0
  %7421 = vmatprep.subr.bf16.mxu0 0
  %7422 = vmatpush1.bf16.msra.mxu0 0
  %7423 = vmatprep.subr.bf16.mxu0 %v7358
  %7424 = vmatpush1.bf16.msra.mxu0 %v7355
  %7425 = vmatprep.subr.bf16.mxu0 %v7308
  %7426 = vmatpush1.bf16.msra.mxu0 %v7307
  %7427 = vmatprep.subr.bf16.mxu0 %v7300
  %7428 = vmatpush1.bf16.msra.mxu0 %v7299
  %7429 = vmatprep.subr.bf16.mxu0 %v7292
  %7430 = vmatpush1.bf16.msra.mxu0 %v7291
  %7431 = vmatprep.subr.bf16.mxu0 0
  %7432 = vmatpush2.bf16.msra.mxu0 0
  %7433 = vmatprep.subr.bf16.mxu0 0
  %7434 = vmatpush2.bf16.msra.mxu0 0
  %7435 = vmatprep.subr.bf16.mxu0 0
  %7436 = vmatpush2.bf16.msra.mxu0 0
  %7437 = vmatprep.subr.bf16.mxu0 0
  %7438 = vmatpush2.bf16.msra.mxu0 0
  %7439 = vmatprep.subr.bf16.mxu0 0
  %7440 = vmatpush2.bf16.msra.mxu0 0
  %7441 = vmatprep.subr.bf16.mxu0 0
  %7442 = vmatpush2.bf16.msra.mxu0 0
  %7443 = vmatprep.subr.bf16.mxu0 0
  %7444 = vmatpush2.bf16.msra.mxu0 0
  %7445 = vmatprep.subr.bf16.mxu0 0
  %7446 = vmatpush2.bf16.msra.mxu0 0
  %7447 = vmatprep.mubr.bf16.mxu0 0
  %7448 = vmatmul.mubr.bf16.gmra.mxu0 %v7346
  %v7449 = vpop.f32.mrf.mxu0
  %v7450 = vadd.f32 %v7193, %v7449
  %v7451 = vpop.f32.mrf.mxu0
  %v7452 = vadd.f32 %v7193, %v7451
  %v7453 = vpop.f32.mrf.mxu0
  %v7454 = vadd.f32 %v7198, %v7453
  %v7455 = vpop.f32.mrf.mxu0
  %v7456 = vadd.f32 %v7198, %v7455
  %7457 = vdwg.mxu0
  %7458 = vmatprep.subr.bf16.mxu0 0
  %7459 = vmatpush1.bf16.msra.mxu0 0
  %7460 = vmatprep.subr.bf16.mxu0 0
  %7461 = vmatpush1.bf16.msra.mxu0 0
  %7462 = vmatprep.subr.bf16.mxu0 0
  %7463 = vmatpush1.bf16.msra.mxu0 0
  %7464 = vmatprep.subr.bf16.mxu0 0
  %7465 = vmatpush1.bf16.msra.mxu0 0
  %7466 = vmatprep.subr.bf16.mxu0 %v7364
  %7467 = vmatpush1.bf16.msra.mxu0 %v7361
  %7468 = vmatprep.subr.bf16.mxu0 %v7310
  %7469 = vmatpush1.bf16.msra.mxu0 %v7309
  %7470 = vmatprep.subr.bf16.mxu0 %v7302
  %7471 = vmatpush1.bf16.msra.mxu0 %v7301
  %7472 = vmatprep.subr.bf16.mxu0 %v7294
  %7473 = vmatpush1.bf16.msra.mxu0 %v7293
  %7474 = vmatprep.subr.bf16.mxu0 0
  %7475 = vmatpush2.bf16.msra.mxu0 0
  %7476 = vmatprep.subr.bf16.mxu0 0
  %7477 = vmatpush2.bf16.msra.mxu0 0
  %7478 = vmatprep.subr.bf16.mxu0 0
  %7479 = vmatpush2.bf16.msra.mxu0 0
  %7480 = vmatprep.subr.bf16.mxu0 0
  %7481 = vmatpush2.bf16.msra.mxu0 0
  %7482 = vmatprep.subr.bf16.mxu0 0
  %7483 = vmatpush2.bf16.msra.mxu0 0
  %7484 = vmatprep.subr.bf16.mxu0 0
  %7485 = vmatpush2.bf16.msra.mxu0 0
  %7486 = vmatprep.subr.bf16.mxu0 0
  %7487 = vmatpush2.bf16.msra.mxu0 0
  %7488 = vmatprep.subr.bf16.mxu0 0
  %7489 = vmatpush2.bf16.msra.mxu0 0
  %7490 = vmatprep.mubr.bf16.mxu0 0
  %7491 = vmatmul.mubr.bf16.gmra.mxu0 %v7346
  %v7492 = vpop.f32.mrf.mxu0
  %v7493 = vadd.f32 %v7193, %v7492
  %v7494 = vpop.f32.mrf.mxu0
  %v7495 = vadd.f32 %v7193, %v7494
  %v7496 = vpop.f32.mrf.mxu0
  %v7497 = vadd.f32 %v7198, %v7496
  %v7498 = vpop.f32.mrf.mxu0
  %v7499 = vadd.f32 %v7198, %v7498
  %7500 = vdwg.mxu0
  %7501 = vmatprep.subr.bf16.mxu0 0
  %7502 = vmatpush1.bf16.msra.mxu0 0
  %7503 = vmatprep.subr.bf16.mxu0 0
  %7504 = vmatpush1.bf16.msra.mxu0 0
  %7505 = vmatprep.subr.bf16.mxu0 0
  %7506 = vmatpush1.bf16.msra.mxu0 0
  %7507 = vmatprep.subr.bf16.mxu0 0
  %7508 = vmatpush1.bf16.msra.mxu0 0
  %7509 = vmatprep.subr.bf16.mxu0 %v7370
  %7510 = vmatpush1.bf16.msra.mxu0 %v7367
  %7511 = vmatprep.subr.bf16.mxu0 %v7312
  %7512 = vmatpush1.bf16.msra.mxu0 %v7311
  %7513 = vmatprep.subr.bf16.mxu0 %v7304
  %7514 = vmatpush1.bf16.msra.mxu0 %v7303
  %7515 = vmatprep.subr.bf16.mxu0 %v7296
  %7516 = vmatpush1.bf16.msra.mxu0 %v7295
  %7517 = vmatprep.subr.bf16.mxu0 0
  %7518 = vmatpush2.bf16.msra.mxu0 0
  %7519 = vmatprep.subr.bf16.mxu0 0
  %7520 = vmatpush2.bf16.msra.mxu0 0
  %7521 = vmatprep.subr.bf16.mxu0 0
  %7522 = vmatpush2.bf16.msra.mxu0 0
  %7523 = vmatprep.subr.bf16.mxu0 0
  %7524 = vmatpush2.bf16.msra.mxu0 0
  %7525 = vmatprep.subr.bf16.mxu0 0
  %7526 = vmatpush2.bf16.msra.mxu0 0
  %7527 = vmatprep.subr.bf16.mxu0 0
  %7528 = vmatpush2.bf16.msra.mxu0 0
  %7529 = vmatprep.subr.bf16.mxu0 0
  %7530 = vmatpush2.bf16.msra.mxu0 0
  %7531 = vmatprep.subr.bf16.mxu0 0
  %7532 = vmatpush2.bf16.msra.mxu0 0
  %7533 = vmatprep.mubr.bf16.mxu0 0
  %7534 = vmatmul.mubr.bf16.gmra.mxu0 %v7346
  %v7535 = vpop.f32.mrf.mxu0
  %v7536 = vadd.f32 %v7193, %v7535
  %v7537 = vpop.f32.mrf.mxu0
  %v7538 = vadd.f32 %v7193, %v7537
  %v7539 = vpop.f32.mrf.mxu0
  %v7540 = vadd.f32 %v7198, %v7539
  %v7541 = vpop.f32.mrf.mxu0
  %v7542 = vadd.f32 %v7198, %v7541
  %7543 = vdwg.mxu0
  %v7544 = vsub.f32 0.0, %v7407
  %v7545 = vsub.f32 0.0, %v7409
  %v7546 = vsub.f32 0.0, %v7450
  %v7547 = vsub.f32 0.0, %v7452
  %v7548 = vsub.f32 0.0, %v7493
  %v7549 = vsub.f32 0.0, %v7495
  %v7550 = vsub.f32 0.0, %v7536
  %v7551 = vsub.f32 0.0, %v7538
  %v7552 = vsub.f32 0.0, %v7411
  %v7553 = vsub.f32 0.0, %v7413
  %v7554 = vsub.f32 0.0, %v7454
  %v7555 = vsub.f32 0.0, %v7456
  %v7556 = vsub.f32 0.0, %v7497
  %v7557 = vsub.f32 0.0, %v7499
  %v7558 = vsub.f32 0.0, %v7540
  %v7559 = vsub.f32 0.0, %v7542
  %v7560 = vmul.f32 %v7544, 1.442695
  %v7561 = vpow.pop %v7560
  %v7562 = vmul.f32 %v7545, 1.442695
  %v7563 = vpow.pop %v7562
  %v7564 = vmul.f32 %v7546, 1.442695
  %v7565 = vpow.pop %v7564
  %v7566 = vmul.f32 %v7547, 1.442695
  %v7567 = vpow.pop %v7566
  %v7568 = vmul.f32 %v7548, 1.442695
  %v7569 = vpow.pop %v7568
  %v7570 = vmul.f32 %v7549, 1.442695
  %v7571 = vpow.pop %v7570
  %v7572 = vmul.f32 %v7550, 1.442695
  %v7573 = vpow.pop %v7572
  %v7574 = vmul.f32 %v7551, 1.442695
  %v7575 = vpow.pop %v7574
  %v7576 = vmul.f32 %v7552, 1.442695
  %v7577 = vpow.pop %v7576
  %v7578 = vmul.f32 %v7553, 1.442695
  %v7579 = vpow.pop %v7578
  %v7580 = vmul.f32 %v7554, 1.442695
  %v7581 = vpow.pop %v7580
  %v7582 = vmul.f32 %v7555, 1.442695
  %v7583 = vpow.pop %v7582
  %v7584 = vmul.f32 %v7556, 1.442695
  %v7585 = vpow.pop %v7584
  %v7586 = vmul.f32 %v7557, 1.442695
  %v7587 = vpow.pop %v7586
  %v7588 = vmul.f32 %v7558, 1.442695
  %v7589 = vpow.pop %v7588
  %v7590 = vmul.f32 %v7559, 1.442695
  %v7591 = vpow.pop %v7590
  %v7592 = vadd.f32 %v7561, 1.0
  %v7593 = vadd.f32 %v7563, 1.0
  %v7594 = vadd.f32 %v7565, 1.0
  %v7595 = vadd.f32 %v7567, 1.0
  %v7596 = vadd.f32 %v7569, 1.0
  %v7597 = vadd.f32 %v7571, 1.0
  %v7598 = vadd.f32 %v7573, 1.0
  %v7599 = vadd.f32 %v7575, 1.0
  %v7600 = vadd.f32 %v7577, 1.0
  %v7601 = vadd.f32 %v7579, 1.0
  %v7602 = vadd.f32 %v7581, 1.0
  %v7603 = vadd.f32 %v7583, 1.0
  %v7604 = vadd.f32 %v7585, 1.0
  %v7605 = vadd.f32 %v7587, 1.0
  %v7606 = vadd.f32 %v7589, 1.0
  %v7607 = vadd.f32 %v7591, 1.0
  %v7608 = vrcp.pop %v7592
  %v7609 = vrcp.pop %v7593
  %v7610 = vrcp.pop %v7594
  %v7611 = vrcp.pop %v7595
  %v7612 = vrcp.pop %v7596
  %v7613 = vrcp.pop %v7597
  %v7614 = vrcp.pop %v7598
  %v7615 = vrcp.pop %v7599
  %v7616 = vrcp.pop %v7600
  %v7617 = vrcp.pop %v7601
  %v7618 = vrcp.pop %v7602
  %v7619 = vrcp.pop %v7603
  %v7620 = vrcp.pop %v7604
  %v7621 = vrcp.pop %v7605
  %v7622 = vrcp.pop %v7606
  %v7623 = vrcp.pop %v7607
  %v7640 = vrot.slane %v7608, 4
  %v7641 = vrot.slane %v7609, 4
  %v7642 = vrot.slane %v7610, 4
  %v7643 = vrot.slane %v7611, 4
  %v7644 = vrot.slane %v7612, 4
  %v7645 = vrot.slane %v7613, 4
  %v7646 = vrot.slane %v7614, 4
  %v7647 = vrot.slane %v7615, 4
  %v7648 = vrot.slane %v7616, 4
  %v7649 = vsel %vm42, %v7640, %v7648
  %v7650 = vrot.slane %v7617, 4
  %v7651 = vsel %vm42, %v7641, %v7650
  %v7652 = vrot.slane %v7618, 4
  %v7653 = vsel %vm42, %v7642, %v7652
  %v7654 = vrot.slane %v7619, 4
  %v7655 = vsel %vm42, %v7643, %v7654
  %v7656 = vrot.slane %v7620, 4
  %v7657 = vsel %vm42, %v7644, %v7656
  %v7658 = vrot.slane %v7621, 4
  %v7659 = vsel %vm42, %v7645, %v7658
  %v7660 = vrot.slane %v7622, 4
  %v7661 = vsel %vm42, %v7646, %v7660
  %v7662 = vrot.slane %v7623, 4
  %v7663 = vsel %vm42, %v7647, %v7662
  %7680 = vst [vmem:[%s7 + $0x100] sm:$0xf0] %v7640
  %7681 = vst [vmem:[%s7 + $0x108] sm:$0xf0] %v7641
  %7682 = vst [vmem:[%s7 + $0x110] sm:$0xf0] %v7642
  %7683 = vst [vmem:[%s7 + $0x118] sm:$0xf0] %v7643
  %7684 = vst [vmem:[%s7 + $0x120] sm:$0xf0] %v7644
  %7685 = vst [vmem:[%s7 + $0x128] sm:$0xf0] %v7645
  %7686 = vst [vmem:[%s7 + $0x130] sm:$0xf0] %v7646
  %7687 = vst.msk [vmem:[%s7 + $0x138] sm:$0xf0] %vm43, %v7647
  %7688 = vst [vmem:[%s7 + $0x140] sm:$0xff] %v7649
  %7689 = vst [vmem:[%s7 + $0x148] sm:$0xff] %v7651
  %7690 = vst [vmem:[%s7 + $0x150] sm:$0xff] %v7653
  %7691 = vst [vmem:[%s7 + $0x158] sm:$0xff] %v7655
  %7692 = vst [vmem:[%s7 + $0x160] sm:$0xff] %v7657
  %7693 = vst [vmem:[%s7 + $0x168] sm:$0xff] %v7659
  %7694 = vst [vmem:[%s7 + $0x170] sm:$0xff] %v7661
  %7695 = vst.msk [vmem:[%s7 + $0x178] sm:$0xff] %vm4492, %v7663
  // Predicated region
  $region30: #{_decoder_pallas.1} parent=0 // pred_check
    _
  $region31: #{_decoder_pallas.1} parent=0 // pred_check_branch
    %7697 = sbr.rel (0) target = $region33
  $region32: #{_decoder_pallas.1} parent=0 // pred_region
    _
  $region33: #{_decoder_pallas.1} parent=0 // pred_fallthru
    _
  // Predicated region
  $region34: #{_decoder_pallas.1} parent=0 // pred_check
    _
  $region35: #{_decoder_pallas.1} parent=0 // pred_check_branch
    %7699 = sbr.rel (0) target = $region37
  $region36: #{_decoder_pallas.1} parent=0 // pred_region
    _
  $region37: #{_decoder_pallas.1} parent=0 // pred_fallthru
    _

</llo_original>
